<compile_context>
chip_gen: v6e
topology: v6e:2x2x1
jax: 0.10.0
libtpu: 0.0.40
codegen_flags: <defaults>
</compile_context>

<pallas_src>
import functools

import jax
import jax.numpy as jnp
from jax.experimental import pallas as pl
from jax.experimental.pallas import tpu as pltpu


def _zero_map(ndim):
    return lambda i: (0,) * ndim


# ----------------------------------------------------------------------------
# Fused forward kernel
# ----------------------------------------------------------------------------
def _rat_kernel(*refs, num_layers, num_heads, B, S, L, Nb_pad, T, E):
    it = iter(refs)
    x_ref = next(it)           # (B*S, Din)
    se_ref = next(it)          # (K, 768)
    hmask_ref = next(it)       # (E, E) block-diagonal per-head mask
    emb_wT = next(it); emb_b = next(it)
    proj_wT = next(it); proj_b = next(it)
    layers = [tuple(next(it) for _ in range(12)) for _ in range(num_layers)]
    gru_wih = next(it); gru_bih = next(it)
    gru_whh = next(it); gru_bhh = next(it)
    fc_wT = next(it); fc_b = next(it)
    out_ref = next(it)         # (T*B, FC_PAD)
    h_ref = next(it)           # scratch (B*Nb_pad, E)
    tmp_ref = next(it)         # scratch (B*Nb_pad, E)

    f32 = jnp.float32
    Dh = E // num_heads
    scale = 1.0 / (Dh ** 0.5)

    def dot(a, b):
        return jnp.dot(a, b, preferred_element_type=f32)

    def layernorm(z, g, bt):
        mu = jnp.mean(z, axis=-1, keepdims=True)
        var = jnp.mean(jnp.square(z - mu), axis=-1, keepdims=True)
        return (z - mu) * jax.lax.rsqrt(var + 1e-5) * g + bt

    # ---- embedding + article projection (one matmul each) ------------------
    x1 = dot(x_ref[...], emb_wT[...]) + emb_b[...]        # (B*S, E)
    x2 = dot(se_ref[...], proj_wT[...]) + proj_b[...]     # (K, E)

    # ---- assemble concatenated, row-padded slab in VMEM --------------------
    # row layout: row = b*Nb_pad + l ; l < S -> x1[b, l] ; S <= l < L -> x2[l-S]
    h_ref[...] = jnp.zeros_like(h_ref)
    for b in range(B):
        h_ref[b * Nb_pad:b * Nb_pad + S, :] = x1[b * S:(b + 1) * S, :]
        h_ref[b * Nb_pad + S:b * Nb_pad + L, :] = x2
    h = h_ref[...]                                        # (B*Nb_pad, E)

    hmask = hmask_ref[...]                                # (E, E)

    # ---- transformer encoder layers (post-norm, relu, eval mode) -----------
    # attention axis is the torch "sequence" axis = our B (batch_first=False quirk)
    for (qkv_w, qkv_b, out_w, out_b, ln1_g, ln1_b,
         ff1_w, ff1_b, ff2_w, ff2_b, ln2_g, ln2_b) in layers:
        qkv = dot(h, qkv_w[...]) + qkv_b[...]             # (R, 3E)
        q = qkv[:, :E]
        k = qkv[:, E:2 * E]
        v = qkv[:, 2 * E:]
        qs = [q[b * Nb_pad:(b + 1) * Nb_pad, :] for b in range(B)]
        ks = [k[b * Nb_pad:(b + 1) * Nb_pad, :] for b in range(B)]
        vs = [v[b * Nb_pad:(b + 1) * Nb_pad, :] for b in range(B)]

        # per-head scores, reduced over Dh and broadcast back across the
        # head's lanes in a single (Nb_pad, E) @ (E, E) matmul
        s = [[dot(qs[b] * ks[b2], hmask) * scale for b2 in range(B)]
             for b in range(B)]

        for b in range(B):
            m = s[b][0]
            for b2 in range(1, B):
                m = jnp.maximum(m, s[b][b2])
            p_exp = [jnp.exp(s[b][b2] - m) for b2 in range(B)]
            denom = p_exp[0]
            for b2 in range(1, B):
                denom = denom + p_exp[b2]
            inv = 1.0 / denom
            o_b = (p_exp[0] * inv) * vs[0]
            for b2 in range(1, B):
                o_b = o_b + (p_exp[b2] * inv) * vs[b2]
            tmp_ref[b * Nb_pad:(b + 1) * Nb_pad, :] = o_b

        attn = dot(tmp_ref[...], out_w[...]) + out_b[...]
        h = layernorm(h + attn, ln1_g[...], ln1_b[...])

        ff_h = jnp.maximum(dot(h, ff1_w[...]) + ff1_b[...], 0.0)   # (R, F)
        ff = dot(ff_h, ff2_w[...]) + ff2_b[...]
        h = layernorm(h + ff, ln2_g[...], ln2_b[...])

    # ---- context = encoded[:, -1]  (row l = L-1 for each torch-batch b) ----
    for b in range(B):
        tmp_ref[b:b + 1, :] = h[b * Nb_pad + L - 1:b * Nb_pad + L, :]
    ctx = tmp_ref[0:B, :]                                  # (B, E)

    # ---- GRU decoder: constant input projection, T unrolled steps ----------
    gi = dot(ctx, gru_wih[...]) + gru_bih[...]             # (B, 3E)
    gir = gi[:, :E]
    giz = gi[:, E:2 * E]
    gin = gi[:, 2 * E:]
    whh = gru_whh[...]                                     # (E, 3E)
    bhh = gru_bhh[...]                                     # (1, 3E)

    hs = jnp.zeros((B, E), f32)
    for t in range(T):
        gh = dot(hs, whh) + bhh                            # one fused (B,E)@(E,3E)
        r = jax.nn.sigmoid(gir + gh[:, :E])
        z = jax.nn.sigmoid(giz + gh[:, E:2 * E])
        n = jnp.tanh(gin + r * gh[:, 2 * E:])
        hs = (1.0 - z) * n + z * hs
        tmp_ref[t * B:(t + 1) * B, :] = hs                 # rows in (t, b) order

    # ---- fc head: one matmul into a lane-padded (128-wide) output block ----
    out_ref[...] = dot(tmp_ref[0:T * B, :], fc_wT[...]) + fc_b[...]


# ----------------------------------------------------------------------------
# Wrapper: one pallas_call for the whole forward
# ----------------------------------------------------------------------------
def rat_forward(x, params, cfg):
    B, S, Din = x.shape
    E = cfg["embed_dim"]
    H = cfg["num_heads"]
    T = cfg["output_length"]
    Dout = cfg["output_dim"]
    K = params["saved_embeds"].shape[0]
    L = S + K
    Nb_pad = ((L + 7) // 8) * 8        # pad torch-"batch" axis to sublane multiple
    R = B * Nb_pad
    FC_PAD = params["fc_wT"].shape[1]

    inputs = [x.reshape(B * S, Din), params["saved_embeds"], params["head_mask"],
              params["emb_wT"], params["emb_b"],
              params["proj_wT"], params["proj_b"]]
    for p in params["layers"]:
        inputs += [p["qkv_wT"], p["qkv_b"], p["out_wT"], p["out_b"],
                   p["ln1_g"], p["ln1_b"],
                   p["ff1_wT"], p["ff1_b"], p["ff2_wT"], p["ff2_b"],
                   p["ln2_g"], p["ln2_b"]]
    inputs += [params["gru_wihT"], params["gru_bih"],
               params["gru_whhT"], params["gru_bhh"],
               params["fc_wT"], params["fc_b"]]

    kernel = functools.partial(
        _rat_kernel,
        num_layers=len(params["layers"]), num_heads=H,
        B=B, S=S, L=L, Nb_pad=Nb_pad, T=T, E=E,
    )
    out = pl.pallas_call(
        kernel,
        grid=(1,),
        in_specs=[pl.BlockSpec(a.shape, _zero_map(a.ndim)) for a in inputs],
        out_specs=pl.BlockSpec((T * B, FC_PAD), _zero_map(2)),
        out_shape=jax.ShapeDtypeStruct((T * B, FC_PAD), jnp.float32),
        scratch_shapes=[pltpu.VMEM((R, E), jnp.float32),
                        pltpu.VMEM((R, E), jnp.float32)],
    )(*inputs)

    # rows are (t, b) ordered; drop lane padding and restore (B, T, Dout)
    return out.reshape(T, B, FC_PAD)[:, :, :Dout].transpose(1, 0, 2)


# ----------------------------------------------------------------------------
# Deterministic parameter init (shapes match the nn.Module __init__),
# stored directly in kernel layout: W^T matrices and (1, N) biases.
# ----------------------------------------------------------------------------
def init_params(key, cfg):
    E, H, F = cfg["embed_dim"], cfg["num_heads"], cfg["ffn_dim"]
    Din, Dout, K = cfg["input_dim"], cfg["output_dim"], cfg["top_k"]
    keys = iter(jax.random.split(key, 64))

    def dense_t(out_dim, in_dim, scale=0.1):
        # torch nn.Linear layout is (out, in); pre-transpose once here.
        w = jax.random.normal(next(keys), (out_dim, in_dim), jnp.float32) * scale
        b = jax.random.normal(next(keys), (out_dim,), jnp.float32) * scale
        return jnp.transpose(w), b.reshape(1, out_dim)

    params = {}
    params["emb_wT"], params["emb_b"] = dense_t(E, Din)          # nn.Linear(input_dim, E)
    params["proj_wT"], params["proj_b"] = dense_t(E, 768, 0.02)  # nn.Linear(768, E)

    layers = []
    for _ in range(cfg["num_layers"]):
        p = {}
        p["qkv_wT"], p["qkv_b"] = dense_t(3 * E, E)              # MHA in_proj
        p["out_wT"], p["out_b"] = dense_t(E, E)                  # MHA out_proj
        p["ff1_wT"], p["ff1_b"] = dense_t(F, E, 0.05)            # linear1 (E -> 2048)
        p["ff2_wT"], p["ff2_b"] = dense_t(E, F, 0.05)            # linear2 (2048 -> E)
        p["ln1_g"] = jnp.ones((1, E), jnp.float32)
        p["ln1_b"] = jnp.zeros((1, E), jnp.float32)
        p["ln2_g"] = jnp.ones((1, E), jnp.float32)
        p["ln2_b"] = jnp.zeros((1, E), jnp.float32)
        layers.append(p)
    params["layers"] = layers

    params["gru_wihT"], params["gru_bih"] = dense_t(3 * E, E)    # GRU(E, E)
    params["gru_whhT"], params["gru_bhh"] = dense_t(3 * E, E)

    # fc: lane-pad the narrow output (output_dim=2) to 128 -> unmasked stores
    fc_wT, fc_b = dense_t(Dout, E)                               # nn.Linear(E, output_dim)
    FC_PAD = 128
    params["fc_wT"] = jnp.zeros((E, FC_PAD), jnp.float32).at[:, :Dout].set(fc_wT)
    params["fc_b"] = jnp.zeros((1, FC_PAD), jnp.float32).at[:, :Dout].set(fc_b)

    # block-diagonal per-head reduce/broadcast mask (E, E)
    ids = jnp.arange(E) // (E // H)
    params["head_mask"] = (ids[:, None] == ids[None, :]).astype(jnp.float32)

    # TODO(synk): stand-in for MongoDB vector search + SentenceTransformer embeds
    params["saved_embeds"] = jax.random.normal(next(keys), (K, 768), jnp.float32) * 0.1
    return params


# ----------------------------------------------------------------------------
if __name__ == "__main__":
    cfg = dict(
        input_dim=6,
        embed_dim=32,
        num_heads=4,
        num_layers=2,
        output_dim=2,
        output_length=4,
        ffn_dim=2048,   # nn.TransformerEncoderLayer default dim_feedforward
        top_k=5,
    )

    key = jax.random.PRNGKey(0)
    kp, kx = jax.random.split(key)
    params = init_params(kp, cfg)

    B, S = 2, 8
    x = jax.random.normal(kx, (B, S, cfg["input_dim"]), jnp.float32)

    fwd = jax.jit(lambda xx, pp: rat_forward(xx, pp, cfg))
    out = fwd(x, params)
    out = jax.block_until_ready(out)

    assert out.shape == (B, cfg["output_length"], cfg["output_dim"]), out.shape
    assert bool(jnp.all(jnp.isfinite(out)))
    print("KERNEL_OK")
</pallas_src>

<mosaic_0001>
module attributes {stable_mosaic.version = 11 : i64} {
  func.func @_rat_kernel(%arg0: i32, %arg1: memref<16x6xf32, #tpu.memory_space<vmem>>, %arg2: memref<5x768xf32, #tpu.memory_space<vmem>>, %arg3: memref<32x32xf32, #tpu.memory_space<vmem>>, %arg4: memref<6x32xf32, #tpu.memory_space<vmem>>, %arg5: memref<1x32xf32, #tpu.memory_space<vmem>>, %arg6: memref<768x32xf32, #tpu.memory_space<vmem>>, %arg7: memref<1x32xf32, #tpu.memory_space<vmem>>, %arg8: memref<32x96xf32, #tpu.memory_space<vmem>>, %arg9: memref<1x96xf32, #tpu.memory_space<vmem>>, %arg10: memref<32x32xf32, #tpu.memory_space<vmem>>, %arg11: memref<1x32xf32, #tpu.memory_space<vmem>>, %arg12: memref<1x32xf32, #tpu.memory_space<vmem>>, %arg13: memref<1x32xf32, #tpu.memory_space<vmem>>, %arg14: memref<32x2048xf32, #tpu.memory_space<vmem>>, %arg15: memref<1x2048xf32, #tpu.memory_space<vmem>>, %arg16: memref<2048x32xf32, #tpu.memory_space<vmem>>, %arg17: memref<1x32xf32, #tpu.memory_space<vmem>>, %arg18: memref<1x32xf32, #tpu.memory_space<vmem>>, %arg19: memref<1x32xf32, #tpu.memory_space<vmem>>, %arg20: memref<32x96xf32, #tpu.memory_space<vmem>>, %arg21: memref<1x96xf32, #tpu.memory_space<vmem>>, %arg22: memref<32x32xf32, #tpu.memory_space<vmem>>, %arg23: memref<1x32xf32, #tpu.memory_space<vmem>>, %arg24: memref<1x32xf32, #tpu.memory_space<vmem>>, %arg25: memref<1x32xf32, #tpu.memory_space<vmem>>, %arg26: memref<32x2048xf32, #tpu.memory_space<vmem>>, %arg27: memref<1x2048xf32, #tpu.memory_space<vmem>>, %arg28: memref<2048x32xf32, #tpu.memory_space<vmem>>, %arg29: memref<1x32xf32, #tpu.memory_space<vmem>>, %arg30: memref<1x32xf32, #tpu.memory_space<vmem>>, %arg31: memref<1x32xf32, #tpu.memory_space<vmem>>, %arg32: memref<32x96xf32, #tpu.memory_space<vmem>>, %arg33: memref<1x96xf32, #tpu.memory_space<vmem>>, %arg34: memref<32x96xf32, #tpu.memory_space<vmem>>, %arg35: memref<1x96xf32, #tpu.memory_space<vmem>>, %arg36: memref<32x128xf32, #tpu.memory_space<vmem>>, %arg37: memref<1x128xf32, #tpu.memory_space<vmem>>, %arg38: memref<8x128xf32, #tpu.memory_space<vmem>>, %arg39: memref<32x32xf32, #tpu.memory_space<vmem>>, %arg40: memref<32x32xf32, #tpu.memory_space<vmem>>) attributes {dimension_semantics = [#tpu.dimension_semantics<arbitrary>], iteration_bounds = array<i64: 1>, scalar_prefetch = 0 : i64, scratch_operands = 2 : i64, tpu.core_type = #tpu.core_type<tc>, window_params = [{pipeline_mode = #tpu.pipeline_mode<synchronous>, transform_indices = @transform_0, window_bounds = array<i64: 16, 6>}, {pipeline_mode = #tpu.pipeline_mode<synchronous>, transform_indices = @transform_1, window_bounds = array<i64: 5, 768>}, {pipeline_mode = #tpu.pipeline_mode<synchronous>, transform_indices = @transform_2, window_bounds = array<i64: 32, 32>}, {pipeline_mode = #tpu.pipeline_mode<synchronous>, transform_indices = @transform_3, window_bounds = array<i64: 6, 32>}, {pipeline_mode = #tpu.pipeline_mode<synchronous>, transform_indices = @transform_4, window_bounds = array<i64: 1, 32>}, {pipeline_mode = #tpu.pipeline_mode<synchronous>, transform_indices = @transform_5, window_bounds = array<i64: 768, 32>}, {pipeline_mode = #tpu.pipeline_mode<synchronous>, transform_indices = @transform_6, window_bounds = array<i64: 1, 32>}, {pipeline_mode = #tpu.pipeline_mode<synchronous>, transform_indices = @transform_7, window_bounds = array<i64: 32, 96>}, {pipeline_mode = #tpu.pipeline_mode<synchronous>, transform_indices = @transform_8, window_bounds = array<i64: 1, 96>}, {pipeline_mode = #tpu.pipeline_mode<synchronous>, transform_indices = @transform_9, window_bounds = array<i64: 32, 32>}, {pipeline_mode = #tpu.pipeline_mode<synchronous>, transform_indices = @transform_10, window_bounds = array<i64: 1, 32>}, {pipeline_mode = #tpu.pipeline_mode<synchronous>, transform_indices = @transform_11, window_bounds = array<i64: 1, 32>}, {pipeline_mode = #tpu.pipeline_mode<synchronous>, transform_indices = @transform_12, window_bounds = array<i64: 1, 32>}, {pipeline_mode = #tpu.pipeline_mode<synchronous>, transform_indices = @transform_13, window_bounds = array<i64: 32, 2048>}, {pipeline_mode = #tpu.pipeline_mode<synchronous>, transform_indices = @transform_14, window_bounds = array<i64: 1, 2048>}, {pipeline_mode = #tpu.pipeline_mode<synchronous>, transform_indices = @transform_15, window_bounds = array<i64: 2048, 32>}, {pipeline_mode = #tpu.pipeline_mode<synchronous>, transform_indices = @transform_16, window_bounds = array<i64: 1, 32>}, {pipeline_mode = #tpu.pipeline_mode<synchronous>, transform_indices = @transform_17, window_bounds = array<i64: 1, 32>}, {pipeline_mode = #tpu.pipeline_mode<synchronous>, transform_indices = @transform_18, window_bounds = array<i64: 1, 32>}, {pipeline_mode = #tpu.pipeline_mode<synchronous>, transform_indices = @transform_19, window_bounds = array<i64: 32, 96>}, {pipeline_mode = #tpu.pipeline_mode<synchronous>, transform_indices = @transform_20, window_bounds = array<i64: 1, 96>}, {pipeline_mode = #tpu.pipeline_mode<synchronous>, transform_indices = @transform_21, window_bounds = array<i64: 32, 32>}, {pipeline_mode = #tpu.pipeline_mode<synchronous>, transform_indices = @transform_22, window_bounds = array<i64: 1, 32>}, {pipeline_mode = #tpu.pipeline_mode<synchronous>, transform_indices = @transform_23, window_bounds = array<i64: 1, 32>}, {pipeline_mode = #tpu.pipeline_mode<synchronous>, transform_indices = @transform_24, window_bounds = array<i64: 1, 32>}, {pipeline_mode = #tpu.pipeline_mode<synchronous>, transform_indices = @transform_25, window_bounds = array<i64: 32, 2048>}, {pipeline_mode = #tpu.pipeline_mode<synchronous>, transform_indices = @transform_26, window_bounds = array<i64: 1, 2048>}, {pipeline_mode = #tpu.pipeline_mode<synchronous>, transform_indices = @transform_27, window_bounds = array<i64: 2048, 32>}, {pipeline_mode = #tpu.pipeline_mode<synchronous>, transform_indices = @transform_28, window_bounds = array<i64: 1, 32>}, {pipeline_mode = #tpu.pipeline_mode<synchronous>, transform_indices = @transform_29, window_bounds = array<i64: 1, 32>}, {pipeline_mode = #tpu.pipeline_mode<synchronous>, transform_indices = @transform_30, window_bounds = array<i64: 1, 32>}, {pipeline_mode = #tpu.pipeline_mode<synchronous>, transform_indices = @transform_31, window_bounds = array<i64: 32, 96>}, {pipeline_mode = #tpu.pipeline_mode<synchronous>, transform_indices = @transform_32, window_bounds = array<i64: 1, 96>}, {pipeline_mode = #tpu.pipeline_mode<synchronous>, transform_indices = @transform_33, window_bounds = array<i64: 32, 96>}, {pipeline_mode = #tpu.pipeline_mode<synchronous>, transform_indices = @transform_34, window_bounds = array<i64: 1, 96>}, {pipeline_mode = #tpu.pipeline_mode<synchronous>, transform_indices = @transform_35, window_bounds = array<i64: 32, 128>}, {pipeline_mode = #tpu.pipeline_mode<synchronous>, transform_indices = @transform_36, window_bounds = array<i64: 1, 128>}, {pipeline_mode = #tpu.pipeline_mode<synchronous>, transform_indices = @transform_37, window_bounds = array<i64: 8, 128>}]} {
    %c0 = arith.constant 0 : index
    %c0_0 = arith.constant 0 : index
    %0 = vector.load %arg1[%c0, %c0_0] : memref<16x6xf32, #tpu.memory_space<vmem>>, vector<16x6xf32>
    %c0_1 = arith.constant 0 : index
    %c0_2 = arith.constant 0 : index
    %1 = vector.load %arg4[%c0_1, %c0_2] : memref<6x32xf32, #tpu.memory_space<vmem>>, vector<6x32xf32>
    %cst = arith.constant dense<0.000000e+00> : vector<16x32xf32>
    %2 = tpu.matmul %0, %1, %cst {dimension_numbers = #tpu.dot_dimension_numbers<[1], [0], [0], [1], [0, 0, 1, 1], [], []>} : vector<16x6xf32>, vector<6x32xf32>, vector<16x32xf32> -> vector<16x32xf32>
    %c0_3 = arith.constant 0 : index
    %c0_4 = arith.constant 0 : index
    %3 = vector.load %arg5[%c0_3, %c0_4] : memref<1x32xf32, #tpu.memory_space<vmem>>, vector<1x32xf32>
    %4 = vector.broadcast %3 : vector<1x32xf32> to vector<16x32xf32>
    %5 = arith.addf %2, %4 : vector<16x32xf32>
    %c0_5 = arith.constant 0 : index
    %c0_6 = arith.constant 0 : index
    %6 = vector.load %arg2[%c0_5, %c0_6] : memref<5x768xf32, #tpu.memory_space<vmem>>, vector<5x768xf32>
    %c0_7 = arith.constant 0 : index
    %c0_8 = arith.constant 0 : index
    %7 = vector.load %arg6[%c0_7, %c0_8] : memref<768x32xf32, #tpu.memory_space<vmem>>, vector<768x32xf32>
    %cst_9 = arith.constant dense<0.000000e+00> : vector<5x32xf32>
    %8 = tpu.matmul %6, %7, %cst_9 {dimension_numbers = #tpu.dot_dimension_numbers<[1], [0], [0], [1], [0, 0, 1, 1], [], []>} : vector<5x768xf32>, vector<768x32xf32>, vector<5x32xf32> -> vector<5x32xf32>
    %c0_10 = arith.constant 0 : index
    %c0_11 = arith.constant 0 : index
    %9 = vector.load %arg7[%c0_10, %c0_11] : memref<1x32xf32, #tpu.memory_space<vmem>>, vector<1x32xf32>
    %10 = vector.broadcast %9 : vector<1x32xf32> to vector<5x32xf32>
    %11 = arith.addf %8, %10 : vector<5x32xf32>
    %cst_12 = arith.constant 0.000000e+00 : f32
    %12 = vector.broadcast %cst_12 : f32 to vector<32x32xf32>
    %c0_13 = arith.constant 0 : index
    %c0_14 = arith.constant 0 : index
    %13 = vector.load %arg39[%c0_13, %c0_14] : memref<32x32xf32, #tpu.memory_space<vmem>>, vector<32x32xf32>
    tpu.vector_store %arg39[%c0_13, %c0_14], %12 {strides = array<i32>} : memref<32x32xf32, #tpu.memory_space<vmem>>, vector<32x32xf32>,
    %14 = vector.extract_strided_slice %5 {offsets = [0, 0], sizes = [8, 32], strides = [1, 1]} : vector<16x32xf32> to vector<8x32xf32>
    %c0_15 = arith.constant 0 : index
    %c0_16 = arith.constant 0 : index
    %15 = vector.load %arg39[%c0_15, %c0_16] : memref<32x32xf32, #tpu.memory_space<vmem>>, vector<8x32xf32>
    tpu.vector_store %arg39[%c0_15, %c0_16], %14 {strides = array<i32>} : memref<32x32xf32, #tpu.memory_space<vmem>>, vector<8x32xf32>,
    %c8 = arith.constant 8 : index
    %c0_17 = arith.constant 0 : index
    %16 = vector.load %arg39[%c8, %c0_17] : memref<32x32xf32, #tpu.memory_space<vmem>>, vector<5x32xf32>
    tpu.vector_store %arg39[%c8, %c0_17], %11 {strides = array<i32>} : memref<32x32xf32, #tpu.memory_space<vmem>>, vector<5x32xf32>,
    %17 = vector.extract_strided_slice %5 {offsets = [8, 0], sizes = [8, 32], strides = [1, 1]} : vector<16x32xf32> to vector<8x32xf32>
    %c16 = arith.constant 16 : index
    %c0_18 = arith.constant 0 : index
    %18 = vector.load %arg39[%c16, %c0_18] : memref<32x32xf32, #tpu.memory_space<vmem>>, vector<8x32xf32>
    tpu.vector_store %arg39[%c16, %c0_18], %17 {strides = array<i32>} : memref<32x32xf32, #tpu.memory_space<vmem>>, vector<8x32xf32>,
    %c24 = arith.constant 24 : index
    %c0_19 = arith.constant 0 : index
    %19 = vector.load %arg39[%c24, %c0_19] : memref<32x32xf32, #tpu.memory_space<vmem>>, vector<5x32xf32>
    tpu.vector_store %arg39[%c24, %c0_19], %11 {strides = array<i32>} : memref<32x32xf32, #tpu.memory_space<vmem>>, vector<5x32xf32>,
    %c0_20 = arith.constant 0 : index
    %c0_21 = arith.constant 0 : index
    %20 = vector.load %arg39[%c0_20, %c0_21] : memref<32x32xf32, #tpu.memory_space<vmem>>, vector<32x32xf32>
    %c0_22 = arith.constant 0 : index
    %c0_23 = arith.constant 0 : index
    %21 = vector.load %arg3[%c0_22, %c0_23] : memref<32x32xf32, #tpu.memory_space<vmem>>, vector<32x32xf32>
    %c0_24 = arith.constant 0 : index
    %c0_25 = arith.constant 0 : index
    %22 = vector.load %arg8[%c0_24, %c0_25] : memref<32x96xf32, #tpu.memory_space<vmem>>, vector<32x96xf32>
    %cst_26 = arith.constant dense<0.000000e+00> : vector<32x96xf32>
    %23 = tpu.matmul %20, %22, %cst_26 {dimension_numbers = #tpu.dot_dimension_numbers<[1], [0], [0], [1], [0, 0, 1, 1], [], []>} : vector<32x32xf32>, vector<32x96xf32>, vector<32x96xf32> -> vector<32x96xf32>
    %c0_27 = arith.constant 0 : index
    %c0_28 = arith.constant 0 : index
    %24 = vector.load %arg9[%c0_27, %c0_28] : memref<1x96xf32, #tpu.memory_space<vmem>>, vector<1x96xf32>
    %25 = vector.broadcast %24 : vector<1x96xf32> to vector<32x96xf32>
    %26 = arith.addf %23, %25 : vector<32x96xf32>
    %27 = vector.extract_strided_slice %26 {offsets = [0, 0], sizes = [32, 32], strides = [1, 1]} : vector<32x96xf32> to vector<32x32xf32>
    %28 = vector.extract_strided_slice %26 {offsets = [0, 32], sizes = [32, 32], strides = [1, 1]} : vector<32x96xf32> to vector<32x32xf32>
    %29 = vector.extract_strided_slice %26 {offsets = [0, 64], sizes = [32, 32], strides = [1, 1]} : vector<32x96xf32> to vector<32x32xf32>
    %30 = vector.extract_strided_slice %27 {offsets = [0, 0], sizes = [16, 32], strides = [1, 1]} : vector<32x32xf32> to vector<16x32xf32>
    %31 = vector.extract_strided_slice %27 {offsets = [16, 0], sizes = [16, 32], strides = [1, 1]} : vector<32x32xf32> to vector<16x32xf32>
    %32 = vector.extract_strided_slice %28 {offsets = [0, 0], sizes = [16, 32], strides = [1, 1]} : vector<32x32xf32> to vector<16x32xf32>
    %33 = vector.extract_strided_slice %28 {offsets = [16, 0], sizes = [16, 32], strides = [1, 1]} : vector<32x32xf32> to vector<16x32xf32>
    %34 = vector.extract_strided_slice %29 {offsets = [0, 0], sizes = [16, 32], strides = [1, 1]} : vector<32x32xf32> to vector<16x32xf32>
    %35 = vector.extract_strided_slice %29 {offsets = [16, 0], sizes = [16, 32], strides = [1, 1]} : vector<32x32xf32> to vector<16x32xf32>
    %36 = arith.mulf %30, %32 : vector<16x32xf32>
    %cst_29 = arith.constant dense<0.000000e+00> : vector<16x32xf32>
    %37 = tpu.matmul %36, %21, %cst_29 {dimension_numbers = #tpu.dot_dimension_numbers<[1], [0], [0], [1], [0, 0, 1, 1], [], []>} : vector<16x32xf32>, vector<32x32xf32>, vector<16x32xf32> -> vector<16x32xf32>
    %cst_30 = arith.constant 0.353553385 : f32
    %38 = vector.broadcast %cst_30 : f32 to vector<16x32xf32>
    %39 = arith.mulf %37, %38 : vector<16x32xf32>
    %40 = arith.mulf %30, %33 : vector<16x32xf32>
    %cst_31 = arith.constant dense<0.000000e+00> : vector<16x32xf32>
    %41 = tpu.matmul %40, %21, %cst_31 {dimension_numbers = #tpu.dot_dimension_numbers<[1], [0], [0], [1], [0, 0, 1, 1], [], []>} : vector<16x32xf32>, vector<32x32xf32>, vector<16x32xf32> -> vector<16x32xf32>
    %cst_32 = arith.constant 0.353553385 : f32
    %42 = vector.broadcast %cst_32 : f32 to vector<16x32xf32>
    %43 = arith.mulf %41, %42 : vector<16x32xf32>
    %44 = arith.mulf %31, %32 : vector<16x32xf32>
    %cst_33 = arith.constant dense<0.000000e+00> : vector<16x32xf32>
    %45 = tpu.matmul %44, %21, %cst_33 {dimension_numbers = #tpu.dot_dimension_numbers<[1], [0], [0], [1], [0, 0, 1, 1], [], []>} : vector<16x32xf32>, vector<32x32xf32>, vector<16x32xf32> -> vector<16x32xf32>
    %cst_34 = arith.constant 0.353553385 : f32
    %46 = vector.broadcast %cst_34 : f32 to vector<16x32xf32>
    %47 = arith.mulf %45, %46 : vector<16x32xf32>
    %48 = arith.mulf %31, %33 : vector<16x32xf32>
    %cst_35 = arith.constant dense<0.000000e+00> : vector<16x32xf32>
    %49 = tpu.matmul %48, %21, %cst_35 {dimension_numbers = #tpu.dot_dimension_numbers<[1], [0], [0], [1], [0, 0, 1, 1], [], []>} : vector<16x32xf32>, vector<32x32xf32>, vector<16x32xf32> -> vector<16x32xf32>
    %cst_36 = arith.constant 0.353553385 : f32
    %50 = vector.broadcast %cst_36 : f32 to vector<16x32xf32>
    %51 = arith.mulf %49, %50 : vector<16x32xf32>
    %52 = arith.maximumf %39, %43 : vector<16x32xf32>
    %53 = arith.subf %39, %52 : vector<16x32xf32>
    %54 = math.exp %53 : vector<16x32xf32>
    %55 = arith.subf %43, %52 : vector<16x32xf32>
    %56 = math.exp %55 : vector<16x32xf32>
    %57 = arith.addf %54, %56 : vector<16x32xf32>
    %cst_37 = arith.constant 1.000000e+00 : f32
    %58 = vector.broadcast %cst_37 : f32 to vector<16x32xf32>
    %59 = arith.divf %58, %57 : vector<16x32xf32>
    %60 = arith.mulf %54, %59 : vector<16x32xf32>
    %61 = arith.mulf %60, %34 : vector<16x32xf32>
    %62 = arith.mulf %56, %59 : vector<16x32xf32>
    %63 = arith.mulf %62, %35 : vector<16x32xf32>
    %64 = arith.addf %61, %63 : vector<16x32xf32>
    %c0_38 = arith.constant 0 : index
    %c0_39 = arith.constant 0 : index
    %65 = vector.load %arg40[%c0_38, %c0_39] : memref<32x32xf32, #tpu.memory_space<vmem>>, vector<16x32xf32>
    tpu.vector_store %arg40[%c0_38, %c0_39], %64 {strides = array<i32>} : memref<32x32xf32, #tpu.memory_space<vmem>>, vector<16x32xf32>,
    %66 = arith.maximumf %47, %51 : vector<16x32xf32>
    %67 = arith.subf %47, %66 : vector<16x32xf32>
    %68 = math.exp %67 : vector<16x32xf32>
    %69 = arith.subf %51, %66 : vector<16x32xf32>
    %70 = math.exp %69 : vector<16x32xf32>
    %71 = arith.addf %68, %70 : vector<16x32xf32>
    %cst_40 = arith.constant 1.000000e+00 : f32
    %72 = vector.broadcast %cst_40 : f32 to vector<16x32xf32>
    %73 = arith.divf %72, %71 : vector<16x32xf32>
    %74 = arith.mulf %68, %73 : vector<16x32xf32>
    %75 = arith.mulf %74, %34 : vector<16x32xf32>
    %76 = arith.mulf %70, %73 : vector<16x32xf32>
    %77 = arith.mulf %76, %35 : vector<16x32xf32>
    %78 = arith.addf %75, %77 : vector<16x32xf32>
    %c16_41 = arith.constant 16 : index
    %c0_42 = arith.constant 0 : index
    %79 = vector.load %arg40[%c16_41, %c0_42] : memref<32x32xf32, #tpu.memory_space<vmem>>, vector<16x32xf32>
    tpu.vector_store %arg40[%c16_41, %c0_42], %78 {strides = array<i32>} : memref<32x32xf32, #tpu.memory_space<vmem>>, vector<16x32xf32>,
    %c0_43 = arith.constant 0 : index
    %c0_44 = arith.constant 0 : index
    %80 = vector.load %arg40[%c0_43, %c0_44] : memref<32x32xf32, #tpu.memory_space<vmem>>, vector<32x32xf32>
    %c0_45 = arith.constant 0 : index
    %c0_46 = arith.constant 0 : index
    %81 = vector.load %arg10[%c0_45, %c0_46] : memref<32x32xf32, #tpu.memory_space<vmem>>, vector<32x32xf32>
    %cst_47 = arith.constant dense<0.000000e+00> : vector<32x32xf32>
    %82 = tpu.matmul %80, %81, %cst_47 {dimension_numbers = #tpu.dot_dimension_numbers<[1], [0], [0], [1], [0, 0, 1, 1], [], []>} : vector<32x32xf32>, vector<32x32xf32>, vector<32x32xf32> -> vector<32x32xf32>
    %c0_48 = arith.constant 0 : index
    %c0_49 = arith.constant 0 : index
    %83 = vector.load %arg11[%c0_48, %c0_49] : memref<1x32xf32, #tpu.memory_space<vmem>>, vector<1x32xf32>
    %84 = vector.broadcast %83 : vector<1x32xf32> to vector<32x32xf32>
    %85 = arith.addf %82, %84 : vector<32x32xf32>
    %86 = arith.addf %20, %85 : vector<32x32xf32>
    %c0_50 = arith.constant 0 : index
    %c0_51 = arith.constant 0 : index
    %87 = vector.load %arg12[%c0_50, %c0_51] : memref<1x32xf32, #tpu.memory_space<vmem>>, vector<1x32xf32>
    %c0_52 = arith.constant 0 : index
    %c0_53 = arith.constant 0 : index
    %88 = vector.load %arg13[%c0_52, %c0_53] : memref<1x32xf32, #tpu.memory_space<vmem>>, vector<1x32xf32>
    %cst_54 = arith.constant dense<0.000000e+00> : vector<32xf32>
    %89 = vector.multi_reduction <add>, %86, %cst_54 [1] : vector<32x32xf32> to vector<32xf32>
    %90 = vector.shape_cast %89 : vector<32xf32> to vector<32x1xf32>
    %cst_55 = arith.constant 3.200000e+01 : f32
    %91 = vector.broadcast %cst_55 : f32 to vector<32x1xf32>
    %92 = arith.divf %90, %91 : vector<32x1xf32>
    %93 = vector.broadcast %92 : vector<32x1xf32> to vector<32x32xf32>
    %94 = arith.subf %86, %93 : vector<32x32xf32>
    %95 = arith.mulf %94, %94 : vector<32x32xf32>
    %cst_56 = arith.constant dense<0.000000e+00> : vector<32xf32>
    %96 = vector.multi_reduction <add>, %95, %cst_56 [1] : vector<32x32xf32> to vector<32xf32>
    %97 = vector.shape_cast %96 : vector<32xf32> to vector<32x1xf32>
    %cst_57 = arith.constant 3.200000e+01 : f32
    %98 = vector.broadcast %cst_57 : f32 to vector<32x1xf32>
    %99 = arith.divf %97, %98 : vector<32x1xf32>
    %100 = vector.broadcast %92 : vector<32x1xf32> to vector<32x32xf32>
    %101 = arith.subf %86, %100 : vector<32x32xf32>
    %cst_58 = arith.constant 9.99999974E-6 : f32
    %102 = vector.broadcast %cst_58 : f32 to vector<32x1xf32>
    %103 = arith.addf %99, %102 : vector<32x1xf32>
    %104 = math.rsqrt %103 : vector<32x1xf32>
    %105 = vector.broadcast %104 : vector<32x1xf32> to vector<32x32xf32>
    %106 = arith.mulf %101, %105 : vector<32x32xf32>
    %107 = vector.broadcast %87 : vector<1x32xf32> to vector<32x32xf32>
    %108 = arith.mulf %106, %107 : vector<32x32xf32>
    %109 = vector.broadcast %88 : vector<1x32xf32> to vector<32x32xf32>
    %110 = arith.addf %108, %109 : vector<32x32xf32>
    %c0_59 = arith.constant 0 : index
    %c0_60 = arith.constant 0 : index
    %111 = vector.load %arg14[%c0_59, %c0_60] : memref<32x2048xf32, #tpu.memory_space<vmem>>, vector<32x2048xf32>
    %cst_61 = arith.constant dense<0.000000e+00> : vector<32x2048xf32>
    %112 = tpu.matmul %110, %111, %cst_61 {dimension_numbers = #tpu.dot_dimension_numbers<[1], [0], [0], [1], [0, 0, 1, 1], [], []>} : vector<32x32xf32>, vector<32x2048xf32>, vector<32x2048xf32> -> vector<32x2048xf32>
    %c0_62 = arith.constant 0 : index
    %c0_63 = arith.constant 0 : index
    %113 = vector.load %arg15[%c0_62, %c0_63] : memref<1x2048xf32, #tpu.memory_space<vmem>>, vector<1x2048xf32>
    %114 = vector.broadcast %113 : vector<1x2048xf32> to vector<32x2048xf32>
    %115 = arith.addf %112, %114 : vector<32x2048xf32>
    %cst_64 = arith.constant 0.000000e+00 : f32
    %116 = vector.broadcast %cst_64 : f32 to vector<32x2048xf32>
    %117 = arith.maximumf %115, %116 : vector<32x2048xf32>
    %c0_65 = arith.constant 0 : index
    %c0_66 = arith.constant 0 : index
    %118 = vector.load %arg16[%c0_65, %c0_66] : memref<2048x32xf32, #tpu.memory_space<vmem>>, vector<2048x32xf32>
    %cst_67 = arith.constant dense<0.000000e+00> : vector<32x32xf32>
    %119 = tpu.matmul %117, %118, %cst_67 {dimension_numbers = #tpu.dot_dimension_numbers<[1], [0], [0], [1], [0, 0, 1, 1], [], []>} : vector<32x2048xf32>, vector<2048x32xf32>, vector<32x32xf32> -> vector<32x32xf32>
    %c0_68 = arith.constant 0 : index
    %c0_69 = arith.constant 0 : index
    %120 = vector.load %arg17[%c0_68, %c0_69] : memref<1x32xf32, #tpu.memory_space<vmem>>, vector<1x32xf32>
    %121 = vector.broadcast %120 : vector<1x32xf32> to vector<32x32xf32>
    %122 = arith.addf %119, %121 : vector<32x32xf32>
    %123 = arith.addf %110, %122 : vector<32x32xf32>
    %c0_70 = arith.constant 0 : index
    %c0_71 = arith.constant 0 : index
    %124 = vector.load %arg18[%c0_70, %c0_71] : memref<1x32xf32, #tpu.memory_space<vmem>>, vector<1x32xf32>
    %c0_72 = arith.constant 0 : index
    %c0_73 = arith.constant 0 : index
    %125 = vector.load %arg19[%c0_72, %c0_73] : memref<1x32xf32, #tpu.memory_space<vmem>>, vector<1x32xf32>
    %cst_74 = arith.constant dense<0.000000e+00> : vector<32xf32>
    %126 = vector.multi_reduction <add>, %123, %cst_74 [1] : vector<32x32xf32> to vector<32xf32>
    %127 = vector.shape_cast %126 : vector<32xf32> to vector<32x1xf32>
    %cst_75 = arith.constant 3.200000e+01 : f32
    %128 = vector.broadcast %cst_75 : f32 to vector<32x1xf32>
    %129 = arith.divf %127, %128 : vector<32x1xf32>
    %130 = vector.broadcast %129 : vector<32x1xf32> to vector<32x32xf32>
    %131 = arith.subf %123, %130 : vector<32x32xf32>
    %132 = arith.mulf %131, %131 : vector<32x32xf32>
    %cst_76 = arith.constant dense<0.000000e+00> : vector<32xf32>
    %133 = vector.multi_reduction <add>, %132, %cst_76 [1] : vector<32x32xf32> to vector<32xf32>
    %134 = vector.shape_cast %133 : vector<32xf32> to vector<32x1xf32>
    %cst_77 = arith.constant 3.200000e+01 : f32
    %135 = vector.broadcast %cst_77 : f32 to vector<32x1xf32>
    %136 = arith.divf %134, %135 : vector<32x1xf32>
    %137 = vector.broadcast %129 : vector<32x1xf32> to vector<32x32xf32>
    %138 = arith.subf %123, %137 : vector<32x32xf32>
    %cst_78 = arith.constant 9.99999974E-6 : f32
    %139 = vector.broadcast %cst_78 : f32 to vector<32x1xf32>
    %140 = arith.addf %136, %139 : vector<32x1xf32>
    %141 = math.rsqrt %140 : vector<32x1xf32>
    %142 = vector.broadcast %141 : vector<32x1xf32> to vector<32x32xf32>
    %143 = arith.mulf %138, %142 : vector<32x32xf32>
    %144 = vector.broadcast %124 : vector<1x32xf32> to vector<32x32xf32>
    %145 = arith.mulf %143, %144 : vector<32x32xf32>
    %146 = vector.broadcast %125 : vector<1x32xf32> to vector<32x32xf32>
    %147 = arith.addf %145, %146 : vector<32x32xf32>
    %c0_79 = arith.constant 0 : index
    %c0_80 = arith.constant 0 : index
    %148 = vector.load %arg20[%c0_79, %c0_80] : memref<32x96xf32, #tpu.memory_space<vmem>>, vector<32x96xf32>
    %cst_81 = arith.constant dense<0.000000e+00> : vector<32x96xf32>
    %149 = tpu.matmul %147, %148, %cst_81 {dimension_numbers = #tpu.dot_dimension_numbers<[1], [0], [0], [1], [0, 0, 1, 1], [], []>} : vector<32x32xf32>, vector<32x96xf32>, vector<32x96xf32> -> vector<32x96xf32>
    %c0_82 = arith.constant 0 : index
    %c0_83 = arith.constant 0 : index
    %150 = vector.load %arg21[%c0_82, %c0_83] : memref<1x96xf32, #tpu.memory_space<vmem>>, vector<1x96xf32>
    %151 = vector.broadcast %150 : vector<1x96xf32> to vector<32x96xf32>
    %152 = arith.addf %149, %151 : vector<32x96xf32>
    %153 = vector.extract_strided_slice %152 {offsets = [0, 0], sizes = [32, 32], strides = [1, 1]} : vector<32x96xf32> to vector<32x32xf32>
    %154 = vector.extract_strided_slice %152 {offsets = [0, 32], sizes = [32, 32], strides = [1, 1]} : vector<32x96xf32> to vector<32x32xf32>
    %155 = vector.extract_strided_slice %152 {offsets = [0, 64], sizes = [32, 32], strides = [1, 1]} : vector<32x96xf32> to vector<32x32xf32>
    %156 = vector.extract_strided_slice %153 {offsets = [0, 0], sizes = [16, 32], strides = [1, 1]} : vector<32x32xf32> to vector<16x32xf32>
    %157 = vector.extract_strided_slice %153 {offsets = [16, 0], sizes = [16, 32], strides = [1, 1]} : vector<32x32xf32> to vector<16x32xf32>
    %158 = vector.extract_strided_slice %154 {offsets = [0, 0], sizes = [16, 32], strides = [1, 1]} : vector<32x32xf32> to vector<16x32xf32>
    %159 = vector.extract_strided_slice %154 {offsets = [16, 0], sizes = [16, 32], strides = [1, 1]} : vector<32x32xf32> to vector<16x32xf32>
    %160 = vector.extract_strided_slice %155 {offsets = [0, 0], sizes = [16, 32], strides = [1, 1]} : vector<32x32xf32> to vector<16x32xf32>
    %161 = vector.extract_strided_slice %155 {offsets = [16, 0], sizes = [16, 32], strides = [1, 1]} : vector<32x32xf32> to vector<16x32xf32>
    %162 = arith.mulf %156, %158 : vector<16x32xf32>
    %cst_84 = arith.constant dense<0.000000e+00> : vector<16x32xf32>
    %163 = tpu.matmul %162, %21, %cst_84 {dimension_numbers = #tpu.dot_dimension_numbers<[1], [0], [0], [1], [0, 0, 1, 1], [], []>} : vector<16x32xf32>, vector<32x32xf32>, vector<16x32xf32> -> vector<16x32xf32>
    %cst_85 = arith.constant 0.353553385 : f32
    %164 = vector.broadcast %cst_85 : f32 to vector<16x32xf32>
    %165 = arith.mulf %163, %164 : vector<16x32xf32>
    %166 = arith.mulf %156, %159 : vector<16x32xf32>
    %cst_86 = arith.constant dense<0.000000e+00> : vector<16x32xf32>
    %167 = tpu.matmul %166, %21, %cst_86 {dimension_numbers = #tpu.dot_dimension_numbers<[1], [0], [0], [1], [0, 0, 1, 1], [], []>} : vector<16x32xf32>, vector<32x32xf32>, vector<16x32xf32> -> vector<16x32xf32>
    %cst_87 = arith.constant 0.353553385 : f32
    %168 = vector.broadcast %cst_87 : f32 to vector<16x32xf32>
    %169 = arith.mulf %167, %168 : vector<16x32xf32>
    %170 = arith.mulf %157, %158 : vector<16x32xf32>
    %cst_88 = arith.constant dense<0.000000e+00> : vector<16x32xf32>
    %171 = tpu.matmul %170, %21, %cst_88 {dimension_numbers = #tpu.dot_dimension_numbers<[1], [0], [0], [1], [0, 0, 1, 1], [], []>} : vector<16x32xf32>, vector<32x32xf32>, vector<16x32xf32> -> vector<16x32xf32>
    %cst_89 = arith.constant 0.353553385 : f32
    %172 = vector.broadcast %cst_89 : f32 to vector<16x32xf32>
    %173 = arith.mulf %171, %172 : vector<16x32xf32>
    %174 = arith.mulf %157, %159 : vector<16x32xf32>
    %cst_90 = arith.constant dense<0.000000e+00> : vector<16x32xf32>
    %175 = tpu.matmul %174, %21, %cst_90 {dimension_numbers = #tpu.dot_dimension_numbers<[1], [0], [0], [1], [0, 0, 1, 1], [], []>} : vector<16x32xf32>, vector<32x32xf32>, vector<16x32xf32> -> vector<16x32xf32>
    %cst_91 = arith.constant 0.353553385 : f32
    %176 = vector.broadcast %cst_91 : f32 to vector<16x32xf32>
    %177 = arith.mulf %175, %176 : vector<16x32xf32>
    %178 = arith.maximumf %165, %169 : vector<16x32xf32>
    %179 = arith.subf %165, %178 : vector<16x32xf32>
    %180 = math.exp %179 : vector<16x32xf32>
    %181 = arith.subf %169, %178 : vector<16x32xf32>
    %182 = math.exp %181 : vector<16x32xf32>
    %183 = arith.addf %180, %182 : vector<16x32xf32>
    %cst_92 = arith.constant 1.000000e+00 : f32
    %184 = vector.broadcast %cst_92 : f32 to vector<16x32xf32>
    %185 = arith.divf %184, %183 : vector<16x32xf32>
    %186 = arith.mulf %180, %185 : vector<16x32xf32>
    %187 = arith.mulf %186, %160 : vector<16x32xf32>
    %188 = arith.mulf %182, %185 : vector<16x32xf32>
    %189 = arith.mulf %188, %161 : vector<16x32xf32>
    %190 = arith.addf %187, %189 : vector<16x32xf32>
    %c0_93 = arith.constant 0 : index
    %c0_94 = arith.constant 0 : index
    %191 = vector.load %arg40[%c0_93, %c0_94] : memref<32x32xf32, #tpu.memory_space<vmem>>, vector<16x32xf32>
    tpu.vector_store %arg40[%c0_93, %c0_94], %190 {strides = array<i32>} : memref<32x32xf32, #tpu.memory_space<vmem>>, vector<16x32xf32>,
    %192 = arith.maximumf %173, %177 : vector<16x32xf32>
    %193 = arith.subf %173, %192 : vector<16x32xf32>
    %194 = math.exp %193 : vector<16x32xf32>
    %195 = arith.subf %177, %192 : vector<16x32xf32>
    %196 = math.exp %195 : vector<16x32xf32>
    %197 = arith.addf %194, %196 : vector<16x32xf32>
    %cst_95 = arith.constant 1.000000e+00 : f32
    %198 = vector.broadcast %cst_95 : f32 to vector<16x32xf32>
    %199 = arith.divf %198, %197 : vector<16x32xf32>
    %200 = arith.mulf %194, %199 : vector<16x32xf32>
    %201 = arith.mulf %200, %160 : vector<16x32xf32>
    %202 = arith.mulf %196, %199 : vector<16x32xf32>
    %203 = arith.mulf %202, %161 : vector<16x32xf32>
    %204 = arith.addf %201, %203 : vector<16x32xf32>
    %c16_96 = arith.constant 16 : index
    %c0_97 = arith.constant 0 : index
    %205 = vector.load %arg40[%c16_96, %c0_97] : memref<32x32xf32, #tpu.memory_space<vmem>>, vector<16x32xf32>
    tpu.vector_store %arg40[%c16_96, %c0_97], %204 {strides = array<i32>} : memref<32x32xf32, #tpu.memory_space<vmem>>, vector<16x32xf32>,
    %c0_98 = arith.constant 0 : index
    %c0_99 = arith.constant 0 : index
    %206 = vector.load %arg40[%c0_98, %c0_99] : memref<32x32xf32, #tpu.memory_space<vmem>>, vector<32x32xf32>
    %c0_100 = arith.constant 0 : index
    %c0_101 = arith.constant 0 : index
    %207 = vector.load %arg22[%c0_100, %c0_101] : memref<32x32xf32, #tpu.memory_space<vmem>>, vector<32x32xf32>
    %cst_102 = arith.constant dense<0.000000e+00> : vector<32x32xf32>
    %208 = tpu.matmul %206, %207, %cst_102 {dimension_numbers = #tpu.dot_dimension_numbers<[1], [0], [0], [1], [0, 0, 1, 1], [], []>} : vector<32x32xf32>, vector<32x32xf32>, vector<32x32xf32> -> vector<32x32xf32>
    %c0_103 = arith.constant 0 : index
    %c0_104 = arith.constant 0 : index
    %209 = vector.load %arg23[%c0_103, %c0_104] : memref<1x32xf32, #tpu.memory_space<vmem>>, vector<1x32xf32>
    %210 = vector.broadcast %209 : vector<1x32xf32> to vector<32x32xf32>
    %211 = arith.addf %208, %210 : vector<32x32xf32>
    %212 = arith.addf %147, %211 : vector<32x32xf32>
    %c0_105 = arith.constant 0 : index
    %c0_106 = arith.constant 0 : index
    %213 = vector.load %arg24[%c0_105, %c0_106] : memref<1x32xf32, #tpu.memory_space<vmem>>, vector<1x32xf32>
    %c0_107 = arith.constant 0 : index
    %c0_108 = arith.constant 0 : index
    %214 = vector.load %arg25[%c0_107, %c0_108] : memref<1x32xf32, #tpu.memory_space<vmem>>, vector<1x32xf32>
    %cst_109 = arith.constant dense<0.000000e+00> : vector<32xf32>
    %215 = vector.multi_reduction <add>, %212, %cst_109 [1] : vector<32x32xf32> to vector<32xf32>
    %216 = vector.shape_cast %215 : vector<32xf32> to vector<32x1xf32>
    %cst_110 = arith.constant 3.200000e+01 : f32
    %217 = vector.broadcast %cst_110 : f32 to vector<32x1xf32>
    %218 = arith.divf %216, %217 : vector<32x1xf32>
    %219 = vector.broadcast %218 : vector<32x1xf32> to vector<32x32xf32>
    %220 = arith.subf %212, %219 : vector<32x32xf32>
    %221 = arith.mulf %220, %220 : vector<32x32xf32>
    %cst_111 = arith.constant dense<0.000000e+00> : vector<32xf32>
    %222 = vector.multi_reduction <add>, %221, %cst_111 [1] : vector<32x32xf32> to vector<32xf32>
    %223 = vector.shape_cast %222 : vector<32xf32> to vector<32x1xf32>
    %cst_112 = arith.constant 3.200000e+01 : f32
    %224 = vector.broadcast %cst_112 : f32 to vector<32x1xf32>
    %225 = arith.divf %223, %224 : vector<32x1xf32>
    %226 = vector.broadcast %218 : vector<32x1xf32> to vector<32x32xf32>
    %227 = arith.subf %212, %226 : vector<32x32xf32>
    %cst_113 = arith.constant 9.99999974E-6 : f32
    %228 = vector.broadcast %cst_113 : f32 to vector<32x1xf32>
    %229 = arith.addf %225, %228 : vector<32x1xf32>
    %230 = math.rsqrt %229 : vector<32x1xf32>
    %231 = vector.broadcast %230 : vector<32x1xf32> to vector<32x32xf32>
    %232 = arith.mulf %227, %231 : vector<32x32xf32>
    %233 = vector.broadcast %213 : vector<1x32xf32> to vector<32x32xf32>
    %234 = arith.mulf %232, %233 : vector<32x32xf32>
    %235 = vector.broadcast %214 : vector<1x32xf32> to vector<32x32xf32>
    %236 = arith.addf %234, %235 : vector<32x32xf32>
    %c0_114 = arith.constant 0 : index
    %c0_115 = arith.constant 0 : index
    %237 = vector.load %arg26[%c0_114, %c0_115] : memref<32x2048xf32, #tpu.memory_space<vmem>>, vector<32x2048xf32>
    %cst_116 = arith.constant dense<0.000000e+00> : vector<32x2048xf32>
    %238 = tpu.matmul %236, %237, %cst_116 {dimension_numbers = #tpu.dot_dimension_numbers<[1], [0], [0], [1], [0, 0, 1, 1], [], []>} : vector<32x32xf32>, vector<32x2048xf32>, vector<32x2048xf32> -> vector<32x2048xf32>
    %c0_117 = arith.constant 0 : index
    %c0_118 = arith.constant 0 : index
    %239 = vector.load %arg27[%c0_117, %c0_118] : memref<1x2048xf32, #tpu.memory_space<vmem>>, vector<1x2048xf32>
    %240 = vector.broadcast %239 : vector<1x2048xf32> to vector<32x2048xf32>
    %241 = arith.addf %238, %240 : vector<32x2048xf32>
    %cst_119 = arith.constant 0.000000e+00 : f32
    %242 = vector.broadcast %cst_119 : f32 to vector<32x2048xf32>
    %243 = arith.maximumf %241, %242 : vector<32x2048xf32>
    %c0_120 = arith.constant 0 : index
    %c0_121 = arith.constant 0 : index
    %244 = vector.load %arg28[%c0_120, %c0_121] : memref<2048x32xf32, #tpu.memory_space<vmem>>, vector<2048x32xf32>
    %cst_122 = arith.constant dense<0.000000e+00> : vector<32x32xf32>
    %245 = tpu.matmul %243, %244, %cst_122 {dimension_numbers = #tpu.dot_dimension_numbers<[1], [0], [0], [1], [0, 0, 1, 1], [], []>} : vector<32x2048xf32>, vector<2048x32xf32>, vector<32x32xf32> -> vector<32x32xf32>
    %c0_123 = arith.constant 0 : index
    %c0_124 = arith.constant 0 : index
    %246 = vector.load %arg29[%c0_123, %c0_124] : memref<1x32xf32, #tpu.memory_space<vmem>>, vector<1x32xf32>
    %247 = vector.broadcast %246 : vector<1x32xf32> to vector<32x32xf32>
    %248 = arith.addf %245, %247 : vector<32x32xf32>
    %249 = arith.addf %236, %248 : vector<32x32xf32>
    %c0_125 = arith.constant 0 : index
    %c0_126 = arith.constant 0 : index
    %250 = vector.load %arg30[%c0_125, %c0_126] : memref<1x32xf32, #tpu.memory_space<vmem>>, vector<1x32xf32>
    %c0_127 = arith.constant 0 : index
    %c0_128 = arith.constant 0 : index
    %251 = vector.load %arg31[%c0_127, %c0_128] : memref<1x32xf32, #tpu.memory_space<vmem>>, vector<1x32xf32>
    %cst_129 = arith.constant dense<0.000000e+00> : vector<32xf32>
    %252 = vector.multi_reduction <add>, %249, %cst_129 [1] : vector<32x32xf32> to vector<32xf32>
    %253 = vector.shape_cast %252 : vector<32xf32> to vector<32x1xf32>
    %cst_130 = arith.constant 3.200000e+01 : f32
    %254 = vector.broadcast %cst_130 : f32 to vector<32x1xf32>
    %255 = arith.divf %253, %254 : vector<32x1xf32>
    %256 = vector.broadcast %255 : vector<32x1xf32> to vector<32x32xf32>
    %257 = arith.subf %249, %256 : vector<32x32xf32>
    %258 = arith.mulf %257, %257 : vector<32x32xf32>
    %cst_131 = arith.constant dense<0.000000e+00> : vector<32xf32>
    %259 = vector.multi_reduction <add>, %258, %cst_131 [1] : vector<32x32xf32> to vector<32xf32>
    %260 = vector.shape_cast %259 : vector<32xf32> to vector<32x1xf32>
    %cst_132 = arith.constant 3.200000e+01 : f32
    %261 = vector.broadcast %cst_132 : f32 to vector<32x1xf32>
    %262 = arith.divf %260, %261 : vector<32x1xf32>
    %263 = vector.broadcast %255 : vector<32x1xf32> to vector<32x32xf32>
    %264 = arith.subf %249, %263 : vector<32x32xf32>
    %cst_133 = arith.constant 9.99999974E-6 : f32
    %265 = vector.broadcast %cst_133 : f32 to vector<32x1xf32>
    %266 = arith.addf %262, %265 : vector<32x1xf32>
    %267 = math.rsqrt %266 : vector<32x1xf32>
    %268 = vector.broadcast %267 : vector<32x1xf32> to vector<32x32xf32>
    %269 = arith.mulf %264, %268 : vector<32x32xf32>
    %270 = vector.broadcast %250 : vector<1x32xf32> to vector<32x32xf32>
    %271 = arith.mulf %269, %270 : vector<32x32xf32>
    %272 = vector.broadcast %251 : vector<1x32xf32> to vector<32x32xf32>
    %273 = arith.addf %271, %272 : vector<32x32xf32>
    %274 = vector.extract_strided_slice %273 {offsets = [12, 0], sizes = [1, 32], strides = [1, 1]} : vector<32x32xf32> to vector<1x32xf32>
    %c0_134 = arith.constant 0 : index
    %c0_135 = arith.constant 0 : index
    %275 = vector.load %arg40[%c0_134, %c0_135] : memref<32x32xf32, #tpu.memory_space<vmem>>, vector<1x32xf32>
    tpu.vector_store %arg40[%c0_134, %c0_135], %274 {strides = array<i32>} : memref<32x32xf32, #tpu.memory_space<vmem>>, vector<1x32xf32>,
    %276 = vector.extract_strided_slice %273 {offsets = [28, 0], sizes = [1, 32], strides = [1, 1]} : vector<32x32xf32> to vector<1x32xf32>
    %c1 = arith.constant 1 : index
    %c0_136 = arith.constant 0 : index
    %277 = vector.load %arg40[%c1, %c0_136] : memref<32x32xf32, #tpu.memory_space<vmem>>, vector<1x32xf32>
    tpu.vector_store %arg40[%c1, %c0_136], %276 {strides = array<i32>} : memref<32x32xf32, #tpu.memory_space<vmem>>, vector<1x32xf32>,
    %c0_137 = arith.constant 0 : index
    %c0_138 = arith.constant 0 : index
    %278 = vector.load %arg40[%c0_137, %c0_138] : memref<32x32xf32, #tpu.memory_space<vmem>>, vector<2x32xf32>
    %c0_139 = arith.constant 0 : index
    %c0_140 = arith.constant 0 : index
    %279 = vector.load %arg32[%c0_139, %c0_140] : memref<32x96xf32, #tpu.memory_space<vmem>>, vector<32x96xf32>
    %cst_141 = arith.constant dense<0.000000e+00> : vector<2x96xf32>
    %280 = tpu.matmul %278, %279, %cst_141 {dimension_numbers = #tpu.dot_dimension_numbers<[1], [0], [0], [1], [0, 0, 1, 1], [], []>} : vector<2x32xf32>, vector<32x96xf32>, vector<2x96xf32> -> vector<2x96xf32>
    %c0_142 = arith.constant 0 : index
    %c0_143 = arith.constant 0 : index
    %281 = vector.load %arg33[%c0_142, %c0_143] : memref<1x96xf32, #tpu.memory_space<vmem>>, vector<1x96xf32>
    %282 = vector.broadcast %281 : vector<1x96xf32> to vector<2x96xf32>
    %283 = arith.addf %280, %282 : vector<2x96xf32>
    %284 = vector.extract_strided_slice %283 {offsets = [0, 0], sizes = [2, 32], strides = [1, 1]} : vector<2x96xf32> to vector<2x32xf32>
    %285 = vector.extract_strided_slice %283 {offsets = [0, 32], sizes = [2, 32], strides = [1, 1]} : vector<2x96xf32> to vector<2x32xf32>
    %286 = vector.extract_strided_slice %283 {offsets = [0, 64], sizes = [2, 32], strides = [1, 1]} : vector<2x96xf32> to vector<2x32xf32>
    %c0_144 = arith.constant 0 : index
    %c0_145 = arith.constant 0 : index
    %287 = vector.load %arg34[%c0_144, %c0_145] : memref<32x96xf32, #tpu.memory_space<vmem>>, vector<32x96xf32>
    %c0_146 = arith.constant 0 : index
    %c0_147 = arith.constant 0 : index
    %288 = vector.load %arg35[%c0_146, %c0_147] : memref<1x96xf32, #tpu.memory_space<vmem>>, vector<1x96xf32>
    %cst_148 = arith.constant 0.000000e+00 : f32
    %289 = vector.broadcast %cst_148 : f32 to vector<2x32xf32>
    %cst_149 = arith.constant dense<0.000000e+00> : vector<2x96xf32>
    %290 = tpu.matmul %289, %287, %cst_149 {dimension_numbers = #tpu.dot_dimension_numbers<[1], [0], [0], [1], [0, 0, 1, 1], [], []>} : vector<2x32xf32>, vector<32x96xf32>, vector<2x96xf32> -> vector<2x96xf32>
    %291 = vector.broadcast %288 : vector<1x96xf32> to vector<2x96xf32>
    %292 = arith.addf %290, %291 : vector<2x96xf32>
    %293 = vector.extract_strided_slice %292 {offsets = [0, 0], sizes = [2, 32], strides = [1, 1]} : vector<2x96xf32> to vector<2x32xf32>
    %294 = arith.addf %284, %293 : vector<2x32xf32>
    %295 = arith.negf %294 : vector<2x32xf32>
    %296 = math.exp %295 : vector<2x32xf32>
    %cst_150 = arith.constant 1.000000e+00 : f32
    %297 = vector.broadcast %cst_150 : f32 to vector<2x32xf32>
    %298 = arith.addf %297, %296 : vector<2x32xf32>
    %299 = arith.divf %297, %298 : vector<2x32xf32>
    %300 = vector.extract_strided_slice %292 {offsets = [0, 32], sizes = [2, 32], strides = [1, 1]} : vector<2x96xf32> to vector<2x32xf32>
    %301 = arith.addf %285, %300 : vector<2x32xf32>
    %302 = arith.negf %301 : vector<2x32xf32>
    %303 = math.exp %302 : vector<2x32xf32>
    %cst_151 = arith.constant 1.000000e+00 : f32
    %304 = vector.broadcast %cst_151 : f32 to vector<2x32xf32>
    %305 = arith.addf %304, %303 : vector<2x32xf32>
    %306 = arith.divf %304, %305 : vector<2x32xf32>
    %307 = vector.extract_strided_slice %292 {offsets = [0, 64], sizes = [2, 32], strides = [1, 1]} : vector<2x96xf32> to vector<2x32xf32>
    %308 = arith.mulf %299, %307 : vector<2x32xf32>
    %309 = arith.addf %286, %308 : vector<2x32xf32>
    %310 = math.tanh %309 : vector<2x32xf32>
    %cst_152 = arith.constant 1.000000e+00 : f32
    %311 = vector.broadcast %cst_152 : f32 to vector<2x32xf32>
    %312 = arith.subf %311, %306 : vector<2x32xf32>
    %313 = arith.mulf %312, %310 : vector<2x32xf32>
    %314 = arith.mulf %306, %289 : vector<2x32xf32>
    %315 = arith.addf %313, %314 : vector<2x32xf32>
    %c0_153 = arith.constant 0 : index
    %c0_154 = arith.constant 0 : index
    %316 = vector.load %arg40[%c0_153, %c0_154] : memref<32x32xf32, #tpu.memory_space<vmem>>, vector<2x32xf32>
    tpu.vector_store %arg40[%c0_153, %c0_154], %315 {strides = array<i32>} : memref<32x32xf32, #tpu.memory_space<vmem>>, vector<2x32xf32>,
    %cst_155 = arith.constant dense<0.000000e+00> : vector<2x96xf32>
    %317 = tpu.matmul %315, %287, %cst_155 {dimension_numbers = #tpu.dot_dimension_numbers<[1], [0], [0], [1], [0, 0, 1, 1], [], []>} : vector<2x32xf32>, vector<32x96xf32>, vector<2x96xf32> -> vector<2x96xf32>
    %318 = vector.broadcast %288 : vector<1x96xf32> to vector<2x96xf32>
    %319 = arith.addf %317, %318 : vector<2x96xf32>
    %320 = vector.extract_strided_slice %319 {offsets = [0, 0], sizes = [2, 32], strides = [1, 1]} : vector<2x96xf32> to vector<2x32xf32>
    %321 = arith.addf %284, %320 : vector<2x32xf32>
    %322 = arith.negf %321 : vector<2x32xf32>
    %323 = math.exp %322 : vector<2x32xf32>
    %cst_156 = arith.constant 1.000000e+00 : f32
    %324 = vector.broadcast %cst_156 : f32 to vector<2x32xf32>
    %325 = arith.addf %324, %323 : vector<2x32xf32>
    %326 = arith.divf %324, %325 : vector<2x32xf32>
    %327 = vector.extract_strided_slice %319 {offsets = [0, 32], sizes = [2, 32], strides = [1, 1]} : vector<2x96xf32> to vector<2x32xf32>
    %328 = arith.addf %285, %327 : vector<2x32xf32>
    %329 = arith.negf %328 : vector<2x32xf32>
    %330 = math.exp %329 : vector<2x32xf32>
    %cst_157 = arith.constant 1.000000e+00 : f32
    %331 = vector.broadcast %cst_157 : f32 to vector<2x32xf32>
    %332 = arith.addf %331, %330 : vector<2x32xf32>
    %333 = arith.divf %331, %332 : vector<2x32xf32>
    %334 = vector.extract_strided_slice %319 {offsets = [0, 64], sizes = [2, 32], strides = [1, 1]} : vector<2x96xf32> to vector<2x32xf32>
    %335 = arith.mulf %326, %334 : vector<2x32xf32>
    %336 = arith.addf %286, %335 : vector<2x32xf32>
    %337 = math.tanh %336 : vector<2x32xf32>
    %cst_158 = arith.constant 1.000000e+00 : f32
    %338 = vector.broadcast %cst_158 : f32 to vector<2x32xf32>
    %339 = arith.subf %338, %333 : vector<2x32xf32>
    %340 = arith.mulf %339, %337 : vector<2x32xf32>
    %341 = arith.mulf %333, %315 : vector<2x32xf32>
    %342 = arith.addf %340, %341 : vector<2x32xf32>
    %c2 = arith.constant 2 : index
    %c0_159 = arith.constant 0 : index
    %343 = vector.load %arg40[%c2, %c0_159] : memref<32x32xf32, #tpu.memory_space<vmem>>, vector<2x32xf32>
    tpu.vector_store %arg40[%c2, %c0_159], %342 {strides = array<i32>} : memref<32x32xf32, #tpu.memory_space<vmem>>, vector<2x32xf32>,
    %cst_160 = arith.constant dense<0.000000e+00> : vector<2x96xf32>
    %344 = tpu.matmul %342, %287, %cst_160 {dimension_numbers = #tpu.dot_dimension_numbers<[1], [0], [0], [1], [0, 0, 1, 1], [], []>} : vector<2x32xf32>, vector<32x96xf32>, vector<2x96xf32> -> vector<2x96xf32>
    %345 = vector.broadcast %288 : vector<1x96xf32> to vector<2x96xf32>
    %346 = arith.addf %344, %345 : vector<2x96xf32>
    %347 = vector.extract_strided_slice %346 {offsets = [0, 0], sizes = [2, 32], strides = [1, 1]} : vector<2x96xf32> to vector<2x32xf32>
    %348 = arith.addf %284, %347 : vector<2x32xf32>
    %349 = arith.negf %348 : vector<2x32xf32>
    %350 = math.exp %349 : vector<2x32xf32>
    %cst_161 = arith.constant 1.000000e+00 : f32
    %351 = vector.broadcast %cst_161 : f32 to vector<2x32xf32>
    %352 = arith.addf %351, %350 : vector<2x32xf32>
    %353 = arith.divf %351, %352 : vector<2x32xf32>
    %354 = vector.extract_strided_slice %346 {offsets = [0, 32], sizes = [2, 32], strides = [1, 1]} : vector<2x96xf32> to vector<2x32xf32>
    %355 = arith.addf %285, %354 : vector<2x32xf32>
    %356 = arith.negf %355 : vector<2x32xf32>
    %357 = math.exp %356 : vector<2x32xf32>
    %cst_162 = arith.constant 1.000000e+00 : f32
    %358 = vector.broadcast %cst_162 : f32 to vector<2x32xf32>
    %359 = arith.addf %358, %357 : vector<2x32xf32>
    %360 = arith.divf %358, %359 : vector<2x32xf32>
    %361 = vector.extract_strided_slice %346 {offsets = [0, 64], sizes = [2, 32], strides = [1, 1]} : vector<2x96xf32> to vector<2x32xf32>
    %362 = arith.mulf %353, %361 : vector<2x32xf32>
    %363 = arith.addf %286, %362 : vector<2x32xf32>
    %364 = math.tanh %363 : vector<2x32xf32>
    %cst_163 = arith.constant 1.000000e+00 : f32
    %365 = vector.broadcast %cst_163 : f32 to vector<2x32xf32>
    %366 = arith.subf %365, %360 : vector<2x32xf32>
    %367 = arith.mulf %366, %364 : vector<2x32xf32>
    %368 = arith.mulf %360, %342 : vector<2x32xf32>
    %369 = arith.addf %367, %368 : vector<2x32xf32>
    %c4 = arith.constant 4 : index
    %c0_164 = arith.constant 0 : index
    %370 = vector.load %arg40[%c4, %c0_164] : memref<32x32xf32, #tpu.memory_space<vmem>>, vector<2x32xf32>
    tpu.vector_store %arg40[%c4, %c0_164], %369 {strides = array<i32>} : memref<32x32xf32, #tpu.memory_space<vmem>>, vector<2x32xf32>,
    %cst_165 = arith.constant dense<0.000000e+00> : vector<2x96xf32>
    %371 = tpu.matmul %369, %287, %cst_165 {dimension_numbers = #tpu.dot_dimension_numbers<[1], [0], [0], [1], [0, 0, 1, 1], [], []>} : vector<2x32xf32>, vector<32x96xf32>, vector<2x96xf32> -> vector<2x96xf32>
    %372 = vector.broadcast %288 : vector<1x96xf32> to vector<2x96xf32>
    %373 = arith.addf %371, %372 : vector<2x96xf32>
    %374 = vector.extract_strided_slice %373 {offsets = [0, 0], sizes = [2, 32], strides = [1, 1]} : vector<2x96xf32> to vector<2x32xf32>
    %375 = arith.addf %284, %374 : vector<2x32xf32>
    %376 = arith.negf %375 : vector<2x32xf32>
    %377 = math.exp %376 : vector<2x32xf32>
    %cst_166 = arith.constant 1.000000e+00 : f32
    %378 = vector.broadcast %cst_166 : f32 to vector<2x32xf32>
    %379 = arith.addf %378, %377 : vector<2x32xf32>
    %380 = arith.divf %378, %379 : vector<2x32xf32>
    %381 = vector.extract_strided_slice %373 {offsets = [0, 32], sizes = [2, 32], strides = [1, 1]} : vector<2x96xf32> to vector<2x32xf32>
    %382 = arith.addf %285, %381 : vector<2x32xf32>
    %383 = arith.negf %382 : vector<2x32xf32>
    %384 = math.exp %383 : vector<2x32xf32>
    %cst_167 = arith.constant 1.000000e+00 : f32
    %385 = vector.broadcast %cst_167 : f32 to vector<2x32xf32>
    %386 = arith.addf %385, %384 : vector<2x32xf32>
    %387 = arith.divf %385, %386 : vector<2x32xf32>
    %388 = vector.extract_strided_slice %373 {offsets = [0, 64], sizes = [2, 32], strides = [1, 1]} : vector<2x96xf32> to vector<2x32xf32>
    %389 = arith.mulf %380, %388 : vector<2x32xf32>
    %390 = arith.addf %286, %389 : vector<2x32xf32>
    %391 = math.tanh %390 : vector<2x32xf32>
    %cst_168 = arith.constant 1.000000e+00 : f32
    %392 = vector.broadcast %cst_168 : f32 to vector<2x32xf32>
    %393 = arith.subf %392, %387 : vector<2x32xf32>
    %394 = arith.mulf %393, %391 : vector<2x32xf32>
    %395 = arith.mulf %387, %369 : vector<2x32xf32>
    %396 = arith.addf %394, %395 : vector<2x32xf32>
    %c6 = arith.constant 6 : index
    %c0_169 = arith.constant 0 : index
    %397 = vector.load %arg40[%c6, %c0_169] : memref<32x32xf32, #tpu.memory_space<vmem>>, vector<2x32xf32>
    tpu.vector_store %arg40[%c6, %c0_169], %396 {strides = array<i32>} : memref<32x32xf32, #tpu.memory_space<vmem>>, vector<2x32xf32>,
    %c0_170 = arith.constant 0 : index
    %c0_171 = arith.constant 0 : index
    %398 = vector.load %arg40[%c0_170, %c0_171] : memref<32x32xf32, #tpu.memory_space<vmem>>, vector<8x32xf32>
    %c0_172 = arith.constant 0 : index
    %c0_173 = arith.constant 0 : index
    %399 = vector.load %arg36[%c0_172, %c0_173] : memref<32x128xf32, #tpu.memory_space<vmem>>, vector<32x128xf32>
    %cst_174 = arith.constant dense<0.000000e+00> : vector<8x128xf32>
    %400 = tpu.matmul %398, %399, %cst_174 {dimension_numbers = #tpu.dot_dimension_numbers<[1], [0], [0], [1], [0, 0, 1, 1], [], []>} : vector<8x32xf32>, vector<32x128xf32>, vector<8x128xf32> -> vector<8x128xf32>
    %c0_175 = arith.constant 0 : index
    %c0_176 = arith.constant 0 : index
    %401 = vector.load %arg37[%c0_175, %c0_176] : memref<1x128xf32, #tpu.memory_space<vmem>>, vector<1x128xf32>
    %402 = vector.broadcast %401 : vector<1x128xf32> to vector<8x128xf32>
    %403 = arith.addf %400, %402 : vector<8x128xf32>
    %c0_177 = arith.constant 0 : index
    %c0_178 = arith.constant 0 : index
    %404 = vector.load %arg38[%c0_177, %c0_178] : memref<8x128xf32, #tpu.memory_space<vmem>>, vector<8x128xf32>
    tpu.vector_store %arg38[%c0_177, %c0_178], %403 {strides = array<i32>} : memref<8x128xf32, #tpu.memory_space<vmem>>, vector<8x128xf32>,
    return
  }
  func.func @transform_0(%arg0: i32) -> (i32, i32) {
    %c0_i32 = arith.constant 0 : i32
    %c0_i32_0 = arith.constant 0 : i32
    %c0_i32_1 = arith.constant 0 : i32
    return %c0_i32, %c0_i32_0 : i32, i32
  }
  func.func @transform_1(%arg0: i32) -> (i32, i32) {
    %c0_i32 = arith.constant 0 : i32
    %c0_i32_0 = arith.constant 0 : i32
    %c0_i32_1 = arith.constant 0 : i32
    return %c0_i32, %c0_i32_0 : i32, i32
  }
  func.func @transform_2(%arg0: i32) -> (i32, i32) {
    %c0_i32 = arith.constant 0 : i32
    %c0_i32_0 = arith.constant 0 : i32
    %c0_i32_1 = arith.constant 0 : i32
    return %c0_i32, %c0_i32_0 : i32, i32
  }
  func.func @transform_3(%arg0: i32) -> (i32, i32) {
    %c0_i32 = arith.constant 0 : i32
    %c0_i32_0 = arith.constant 0 : i32
    %c0_i32_1 = arith.constant 0 : i32
    return %c0_i32, %c0_i32_0 : i32, i32
  }
  func.func @transform_4(%arg0: i32) -> (i32, i32) {
    %c0_i32 = arith.constant 0 : i32
    %c0_i32_0 = arith.constant 0 : i32
    %c0_i32_1 = arith.constant 0 : i32
    return %c0_i32, %c0_i32_0 : i32, i32
  }
  func.func @transform_5(%arg0: i32) -> (i32, i32) {
    %c0_i32 = arith.constant 0 : i32
    %c0_i32_0 = arith.constant 0 : i32
    %c0_i32_1 = arith.constant 0 : i32
    return %c0_i32, %c0_i32_0 : i32, i32
  }
  func.func @transform_6(%arg0: i32) -> (i32, i32) {
    %c0_i32 = arith.constant 0 : i32
    %c0_i32_0 = arith.constant 0 : i32
    %c0_i32_1 = arith.constant 0 : i32
    return %c0_i32, %c0_i32_0 : i32, i32
  }
  func.func @transform_7(%arg0: i32) -> (i32, i32) {
    %c0_i32 = arith.constant 0 : i32
    %c0_i32_0 = arith.constant 0 : i32
    %c0_i32_1 = arith.constant 0 : i32
    return %c0_i32, %c0_i32_0 : i32, i32
  }
  func.func @transform_8(%arg0: i32) -> (i32, i32) {
    %c0_i32 = arith.constant 0 : i32
    %c0_i32_0 = arith.constant 0 : i32
    %c0_i32_1 = arith.constant 0 : i32
    return %c0_i32, %c0_i32_0 : i32, i32
  }
  func.func @transform_9(%arg0: i32) -> (i32, i32) {
    %c0_i32 = arith.constant 0 : i32
    %c0_i32_0 = arith.constant 0 : i32
    %c0_i32_1 = arith.constant 0 : i32
    return %c0_i32, %c0_i32_0 : i32, i32
  }
  func.func @transform_10(%arg0: i32) -> (i32, i32) {
    %c0_i32 = arith.constant 0 : i32
    %c0_i32_0 = arith.constant 0 : i32
    %c0_i32_1 = arith.constant 0 : i32
    return %c0_i32, %c0_i32_0 : i32, i32
  }
  func.func @transform_11(%arg0: i32) -> (i32, i32) {
    %c0_i32 = arith.constant 0 : i32
    %c0_i32_0 = arith.constant 0 : i32
    %c0_i32_1 = arith.constant 0 : i32
    return %c0_i32, %c0_i32_0 : i32, i32
  }
  func.func @transform_12(%arg0: i32) -> (i32, i32) {
    %c0_i32 = arith.constant 0 : i32
    %c0_i32_0 = arith.constant 0 : i32
    %c0_i32_1 = arith.constant 0 : i32
    return %c0_i32, %c0_i32_0 : i32, i32
  }
  func.func @transform_13(%arg0: i32) -> (i32, i32) {
    %c0_i32 = arith.constant 0 : i32
    %c0_i32_0 = arith.constant 0 : i32
    %c0_i32_1 = arith.constant 0 : i32
    return %c0_i32, %c0_i32_0 : i32, i32
  }
  func.func @transform_14(%arg0: i32) -> (i32, i32) {
    %c0_i32 = arith.constant 0 : i32
    %c0_i32_0 = arith.constant 0 : i32
    %c0_i32_1 = arith.constant 0 : i32
    return %c0_i32, %c0_i32_0 : i32, i32
  }
  func.func @transform_15(%arg0: i32) -> (i32, i32) {
    %c0_i32 = arith.constant 0 : i32
    %c0_i32_0 = arith.constant 0 : i32
    %c0_i32_1 = arith.constant 0 : i32
    return %c0_i32, %c0_i32_0 : i32, i32
  }
  func.func @transform_16(%arg0: i32) -> (i32, i32) {
    %c0_i32 = arith.constant 0 : i32
    %c0_i32_0 = arith.constant 0 : i32
    %c0_i32_1 = arith.constant 0 : i32
    return %c0_i32, %c0_i32_0 : i32, i32
  }
  func.func @transform_17(%arg0: i32) -> (i32, i32) {
    %c0_i32 = arith.constant 0 : i32
    %c0_i32_0 = arith.constant 0 : i32
    %c0_i32_1 = arith.constant 0 : i32
    return %c0_i32, %c0_i32_0 : i32, i32
  }
  func.func @transform_18(%arg0: i32) -> (i32, i32) {
    %c0_i32 = arith.constant 0 : i32
    %c0_i32_0 = arith.constant 0 : i32
    %c0_i32_1 = arith.constant 0 : i32
    return %c0_i32, %c0_i32_0 : i32, i32
  }
  func.func @transform_19(%arg0: i32) -> (i32, i32) {
    %c0_i32 = arith.constant 0 : i32
    %c0_i32_0 = arith.constant 0 : i32
    %c0_i32_1 = arith.constant 0 : i32
    return %c0_i32, %c0_i32_0 : i32, i32
  }
  func.func @transform_20(%arg0: i32) -> (i32, i32) {
    %c0_i32 = arith.constant 0 : i32
    %c0_i32_0 = arith.constant 0 : i32
    %c0_i32_1 = arith.constant 0 : i32
    return %c0_i32, %c0_i32_0 : i32, i32
  }
  func.func @transform_21(%arg0: i32) -> (i32, i32) {
    %c0_i32 = arith.constant 0 : i32
    %c0_i32_0 = arith.constant 0 : i32
    %c0_i32_1 = arith.constant 0 : i32
    return %c0_i32, %c0_i32_0 : i32, i32
  }
  func.func @transform_22(%arg0: i32) -> (i32, i32) {
    %c0_i32 = arith.constant 0 : i32
    %c0_i32_0 = arith.constant 0 : i32
    %c0_i32_1 = arith.constant 0 : i32
    return %c0_i32, %c0_i32_0 : i32, i32
  }
  func.func @transform_23(%arg0: i32) -> (i32, i32) {
    %c0_i32 = arith.constant 0 : i32
    %c0_i32_0 = arith.constant 0 : i32
    %c0_i32_1 = arith.constant 0 : i32
    return %c0_i32, %c0_i32_0 : i32, i32
  }
  func.func @transform_24(%arg0: i32) -> (i32, i32) {
    %c0_i32 = arith.constant 0 : i32
    %c0_i32_0 = arith.constant 0 : i32
    %c0_i32_1 = arith.constant 0 : i32
    return %c0_i32, %c0_i32_0 : i32, i32
  }
  func.func @transform_25(%arg0: i32) -> (i32, i32) {
    %c0_i32 = arith.constant 0 : i32
    %c0_i32_0 = arith.constant 0 : i32
    %c0_i32_1 = arith.constant 0 : i32
    return %c0_i32, %c0_i32_0 : i32, i32
  }
  func.func @transform_26(%arg0: i32) -> (i32, i32) {
    %c0_i32 = arith.constant 0 : i32
    %c0_i32_0 = arith.constant 0 : i32
    %c0_i32_1 = arith.constant 0 : i32
    return %c0_i32, %c0_i32_0 : i32, i32
  }
  func.func @transform_27(%arg0: i32) -> (i32, i32) {
    %c0_i32 = arith.constant 0 : i32
    %c0_i32_0 = arith.constant 0 : i32
    %c0_i32_1 = arith.constant 0 : i32
    return %c0_i32, %c0_i32_0 : i32, i32
  }
  func.func @transform_28(%arg0: i32) -> (i32, i32) {
    %c0_i32 = arith.constant 0 : i32
    %c0_i32_0 = arith.constant 0 : i32
    %c0_i32_1 = arith.constant 0 : i32
    return %c0_i32, %c0_i32_0 : i32, i32
  }
  func.func @transform_29(%arg0: i32) -> (i32, i32) {
    %c0_i32 = arith.constant 0 : i32
    %c0_i32_0 = arith.constant 0 : i32
    %c0_i32_1 = arith.constant 0 : i32
    return %c0_i32, %c0_i32_0 : i32, i32
  }
  func.func @transform_30(%arg0: i32) -> (i32, i32) {
    %c0_i32 = arith.constant 0 : i32
    %c0_i32_0 = arith.constant 0 : i32
    %c0_i32_1 = arith.constant 0 : i32
    return %c0_i32, %c0_i32_0 : i32, i32
  }
  func.func @transform_31(%arg0: i32) -> (i32, i32) {
    %c0_i32 = arith.constant 0 : i32
    %c0_i32_0 = arith.constant 0 : i32
    %c0_i32_1 = arith.constant 0 : i32
    return %c0_i32, %c0_i32_0 : i32, i32
  }
  func.func @transform_32(%arg0: i32) -> (i32, i32) {
    %c0_i32 = arith.constant 0 : i32
    %c0_i32_0 = arith.constant 0 : i32
    %c0_i32_1 = arith.constant 0 : i32
    return %c0_i32, %c0_i32_0 : i32, i32
  }
  func.func @transform_33(%arg0: i32) -> (i32, i32) {
    %c0_i32 = arith.constant 0 : i32
    %c0_i32_0 = arith.constant 0 : i32
    %c0_i32_1 = arith.constant 0 : i32
    return %c0_i32, %c0_i32_0 : i32, i32
  }
  func.func @transform_34(%arg0: i32) -> (i32, i32) {
    %c0_i32 = arith.constant 0 : i32
    %c0_i32_0 = arith.constant 0 : i32
    %c0_i32_1 = arith.constant 0 : i32
    return %c0_i32, %c0_i32_0 : i32, i32
  }
  func.func @transform_35(%arg0: i32) -> (i32, i32) {
    %c0_i32 = arith.constant 0 : i32
    %c0_i32_0 = arith.constant 0 : i32
    %c0_i32_1 = arith.constant 0 : i32
    return %c0_i32, %c0_i32_0 : i32, i32
  }
  func.func @transform_36(%arg0: i32) -> (i32, i32) {
    %c0_i32 = arith.constant 0 : i32
    %c0_i32_0 = arith.constant 0 : i32
    %c0_i32_1 = arith.constant 0 : i32
    return %c0_i32, %c0_i32_0 : i32, i32
  }
  func.func @transform_37(%arg0: i32) -> (i32, i32) {
    %c0_i32 = arith.constant 0 : i32
    %c0_i32_0 = arith.constant 0 : i32
    %c0_i32_1 = arith.constant 0 : i32
    return %c0_i32, %c0_i32_0 : i32, i32
  }
}

</mosaic_0001>

<llo_original>
// kernel: _lambda_.1
$region0: #{_lambda_.1}
  #allocation0 [shape = 'u32[]', space=smem, size = 0x4, offset = 0x4, fixed_abs, tag = 'smem constant byte address 0x4 - core index']
  #allocation1 [shape = 'u32[144,128]{1,0:T(1,128)}', space=vmem, size = 0x12000, scoped, tag = 'internal scratch']
  #allocation2 [shape = 'f32[32,32]{1,0:T(8,128)}', space=vmem, size = 0x4000, scoped, tag = 'scratch operand']
  #allocation3 [shape = 'f32[32,32]{1,0:T(8,128)}', space=vmem, size = 0x4000, scoped, tag = 'scratch operand']
  %s0 = inlined_call_operand.smem [shape: u32[38], index: -1, kind: input, shape index: {}]
  %s1 = sld [smem:[%s0]]
  %s2 = scalar_lea.smem %s0, 1
  %s3 = sld [smem:[%s2]]
  %s4 = scalar_lea.smem %s0, 2
  %s5 = sld [smem:[%s4]]
  %s6 = scalar_lea.smem %s0, 3
  %s7 = sld [smem:[%s6]]
  %s8 = scalar_lea.smem %s0, 4
  %s9 = sld [smem:[%s8]]
  %s10 = scalar_lea.smem %s0, 5
  %s11 = sld [smem:[%s10]]
  %s12 = scalar_lea.smem %s0, 6
  %s13 = sld [smem:[%s12]]
  %s14 = scalar_lea.smem %s0, 7
  %s15 = sld [smem:[%s14]]
  %s16 = scalar_lea.smem %s0, 8
  %s17 = sld [smem:[%s16]]
  %s18 = scalar_lea.smem %s0, 9
  %s19 = sld [smem:[%s18]]
  %s20 = scalar_lea.smem %s0, 10
  %s21 = sld [smem:[%s20]]
  %s22 = scalar_lea.smem %s0, 11
  %s23 = sld [smem:[%s22]]
  %s24 = scalar_lea.smem %s0, 12
  %s25 = sld [smem:[%s24]]
  %s26 = scalar_lea.smem %s0, 13
  %s27 = sld [smem:[%s26]]
  %s28 = scalar_lea.smem %s0, 14
  %s29 = sld [smem:[%s28]]
  %s30 = scalar_lea.smem %s0, 15
  %s31 = sld [smem:[%s30]]
  %s32 = scalar_lea.smem %s0, 16
  %s33 = sld [smem:[%s32]]
  %s34 = scalar_lea.smem %s0, 17
  %s35 = sld [smem:[%s34]]
  %s36 = scalar_lea.smem %s0, 18
  %s37 = sld [smem:[%s36]]
  %s38 = scalar_lea.smem %s0, 19
  %s39 = sld [smem:[%s38]]
  %s40 = scalar_lea.smem %s0, 20
  %s41 = sld [smem:[%s40]]
  %s42 = scalar_lea.smem %s0, 21
  %s43 = sld [smem:[%s42]]
  %s44 = scalar_lea.smem %s0, 22
  %s45 = sld [smem:[%s44]]
  %s46 = scalar_lea.smem %s0, 23
  %s47 = sld [smem:[%s46]]
  %s48 = scalar_lea.smem %s0, 24
  %s49 = sld [smem:[%s48]]
  %s50 = scalar_lea.smem %s0, 25
  %s51 = sld [smem:[%s50]]
  %s52 = scalar_lea.smem %s0, 26
  %s53 = sld [smem:[%s52]]
  %s54 = scalar_lea.smem %s0, 27
  %s55 = sld [smem:[%s54]]
  %s56 = scalar_lea.smem %s0, 28
  %s57 = sld [smem:[%s56]]
  %s58 = scalar_lea.smem %s0, 29
  %s59 = sld [smem:[%s58]]
  %s60 = scalar_lea.smem %s0, 30
  %s61 = sld [smem:[%s60]]
  %s62 = scalar_lea.smem %s0, 31
  %s63 = sld [smem:[%s62]]
  %s64 = scalar_lea.smem %s0, 32
  %s65 = sld [smem:[%s64]]
  %s66 = scalar_lea.smem %s0, 33
  %s67 = sld [smem:[%s66]]
  %s68 = scalar_lea.smem %s0, 34
  %s69 = sld [smem:[%s68]]
  %s70 = scalar_lea.smem %s0, 35
  %s71 = sld [smem:[%s70]]
  %s72 = scalar_lea.smem %s0, 36
  %s73 = sld [smem:[%s72]]
  %s74 = scalar_lea.smem %s0, 37
  %s75 = sld [smem:[%s74]]
  %s76 = sld [smem:[#allocation0]]
  $region158: #{_lambda_.1} parent=0
    _
  %s78 = ssub.s32 1, %s76
  %s79 = scalar_select 0, %s78, %s76
  // Predicated region
  $region2: #{_lambda_.1} parent=0 // pred_check
    _
  $region3: #{_lambda_.1} parent=0 // pred_check_branch
    %81 = sbr.rel (0) target = $region5
  $region4: #{_lambda_.1} parent=0 // pred_region
    _
  $region5: #{_lambda_.1} parent=0 // pred_fallthru
    _
  // Predicated region
  $region6: #{_lambda_.1} parent=0 // pred_check
    _
  $region7: #{_lambda_.1} parent=0 // pred_check_branch
    %83 = sbr.rel (0) target = $region9
  $region8: #{_lambda_.1} parent=0 // pred_region
    _
  $region9: #{_lambda_.1} parent=0 // pred_fallthru
    _
  // Predicated region
  $region10: #{_lambda_.1} parent=0 // pred_check
    _
  $region11: #{_lambda_.1} parent=0 // pred_check_branch
    %85 = sbr.rel (0) target = $region13
  $region12: #{_lambda_.1} parent=0 // pred_region
    _
  $region13: #{_lambda_.1} parent=0 // pred_fallthru
    _
  // Predicated region
  $region14: #{_lambda_.1} parent=0 // pred_check
    _
  $region15: #{_lambda_.1} parent=0 // pred_check_branch
    %87 = sbr.rel (0) target = $region17
  $region16: #{_lambda_.1} parent=0 // pred_region
    _
  $region17: #{_lambda_.1} parent=0 // pred_fallthru
    _
  // Predicated region
  $region18: #{_lambda_.1} parent=0 // pred_check
    _
  $region19: #{_lambda_.1} parent=0 // pred_check_branch
    %89 = sbr.rel (0) target = $region21
  $region20: #{_lambda_.1} parent=0 // pred_region
    _
  $region21: #{_lambda_.1} parent=0 // pred_fallthru
    _
  // Predicated region
  $region22: #{_lambda_.1} parent=0 // pred_check
    _
  $region23: #{_lambda_.1} parent=0 // pred_check_branch
    %91 = sbr.rel (0) target = $region25
  $region24: #{_lambda_.1} parent=0 // pred_region
    _
  $region25: #{_lambda_.1} parent=0 // pred_fallthru
    _
  // Predicated region
  $region26: #{_lambda_.1} parent=0 // pred_check
    _
  $region27: #{_lambda_.1} parent=0 // pred_check_branch
    %93 = sbr.rel (0) target = $region29
  $region28: #{_lambda_.1} parent=0 // pred_region
    _
  $region29: #{_lambda_.1} parent=0 // pred_fallthru
    _
  // Predicated region
  $region30: #{_lambda_.1} parent=0 // pred_check
    _
  $region31: #{_lambda_.1} parent=0 // pred_check_branch
    %95 = sbr.rel (0) target = $region33
  $region32: #{_lambda_.1} parent=0 // pred_region
    _
  $region33: #{_lambda_.1} parent=0 // pred_fallthru
    _
  // Predicated region
  $region34: #{_lambda_.1} parent=0 // pred_check
    _
  $region35: #{_lambda_.1} parent=0 // pred_check_branch
    %97 = sbr.rel (0) target = $region37
  $region36: #{_lambda_.1} parent=0 // pred_region
    _
  $region37: #{_lambda_.1} parent=0 // pred_fallthru
    _
  // Predicated region
  $region38: #{_lambda_.1} parent=0 // pred_check
    _
  $region39: #{_lambda_.1} parent=0 // pred_check_branch
    %99 = sbr.rel (0) target = $region41
  $region40: #{_lambda_.1} parent=0 // pred_region
    _
  $region41: #{_lambda_.1} parent=0 // pred_fallthru
    _
  // Predicated region
  $region42: #{_lambda_.1} parent=0 // pred_check
    _
  $region43: #{_lambda_.1} parent=0 // pred_check_branch
    %101 = sbr.rel (0) target = $region45
  $region44: #{_lambda_.1} parent=0 // pred_region
    _
  $region45: #{_lambda_.1} parent=0 // pred_fallthru
    _
  // Predicated region
  $region46: #{_lambda_.1} parent=0 // pred_check
    _
  $region47: #{_lambda_.1} parent=0 // pred_check_branch
    %103 = sbr.rel (0) target = $region49
  $region48: #{_lambda_.1} parent=0 // pred_region
    _
  $region49: #{_lambda_.1} parent=0 // pred_fallthru
    _
  // Predicated region
  $region50: #{_lambda_.1} parent=0 // pred_check
    _
  $region51: #{_lambda_.1} parent=0 // pred_check_branch
    %105 = sbr.rel (0) target = $region53
  $region52: #{_lambda_.1} parent=0 // pred_region
    _
  $region53: #{_lambda_.1} parent=0 // pred_fallthru
    _
  // Predicated region
  $region54: #{_lambda_.1} parent=0 // pred_check
    _
  $region55: #{_lambda_.1} parent=0 // pred_check_branch
    %107 = sbr.rel (0) target = $region57
  $region56: #{_lambda_.1} parent=0 // pred_region
    _
  $region57: #{_lambda_.1} parent=0 // pred_fallthru
    _
  // Predicated region
  $region58: #{_lambda_.1} parent=0 // pred_check
    _
  $region59: #{_lambda_.1} parent=0 // pred_check_branch
    %109 = sbr.rel (0) target = $region61
  $region60: #{_lambda_.1} parent=0 // pred_region
    _
  $region61: #{_lambda_.1} parent=0 // pred_fallthru
    _
  // Predicated region
  $region62: #{_lambda_.1} parent=0 // pred_check
    _
  $region63: #{_lambda_.1} parent=0 // pred_check_branch
    %111 = sbr.rel (0) target = $region65
  $region64: #{_lambda_.1} parent=0 // pred_region
    _
  $region65: #{_lambda_.1} parent=0 // pred_fallthru
    _
  // Predicated region
  $region66: #{_lambda_.1} parent=0 // pred_check
    _
  $region67: #{_lambda_.1} parent=0 // pred_check_branch
    %113 = sbr.rel (0) target = $region69
  $region68: #{_lambda_.1} parent=0 // pred_region
    _
  $region69: #{_lambda_.1} parent=0 // pred_fallthru
    _
  // Predicated region
  $region70: #{_lambda_.1} parent=0 // pred_check
    _
  $region71: #{_lambda_.1} parent=0 // pred_check_branch
    %115 = sbr.rel (0) target = $region73
  $region72: #{_lambda_.1} parent=0 // pred_region
    _
  $region73: #{_lambda_.1} parent=0 // pred_fallthru
    _
  // Predicated region
  $region74: #{_lambda_.1} parent=0 // pred_check
    _
  $region75: #{_lambda_.1} parent=0 // pred_check_branch
    %117 = sbr.rel (0) target = $region77
  $region76: #{_lambda_.1} parent=0 // pred_region
    _
  $region77: #{_lambda_.1} parent=0 // pred_fallthru
    _
  // Predicated region
  $region78: #{_lambda_.1} parent=0 // pred_check
    _
  $region79: #{_lambda_.1} parent=0 // pred_check_branch
    %119 = sbr.rel (0) target = $region81
  $region80: #{_lambda_.1} parent=0 // pred_region
    _
  $region81: #{_lambda_.1} parent=0 // pred_fallthru
    _
  // Predicated region
  $region82: #{_lambda_.1} parent=0 // pred_check
    _
  $region83: #{_lambda_.1} parent=0 // pred_check_branch
    %121 = sbr.rel (0) target = $region85
  $region84: #{_lambda_.1} parent=0 // pred_region
    _
  $region85: #{_lambda_.1} parent=0 // pred_fallthru
    _
  // Predicated region
  $region86: #{_lambda_.1} parent=0 // pred_check
    _
  $region87: #{_lambda_.1} parent=0 // pred_check_branch
    %123 = sbr.rel (0) target = $region89
  $region88: #{_lambda_.1} parent=0 // pred_region
    _
  $region89: #{_lambda_.1} parent=0 // pred_fallthru
    _
  // Predicated region
  $region90: #{_lambda_.1} parent=0 // pred_check
    _
  $region91: #{_lambda_.1} parent=0 // pred_check_branch
    %125 = sbr.rel (0) target = $region93
  $region92: #{_lambda_.1} parent=0 // pred_region
    _
  $region93: #{_lambda_.1} parent=0 // pred_fallthru
    _
  // Predicated region
  $region94: #{_lambda_.1} parent=0 // pred_check
    _
  $region95: #{_lambda_.1} parent=0 // pred_check_branch
    %127 = sbr.rel (0) target = $region97
  $region96: #{_lambda_.1} parent=0 // pred_region
    _
  $region97: #{_lambda_.1} parent=0 // pred_fallthru
    _
  // Predicated region
  $region98: #{_lambda_.1} parent=0 // pred_check
    _
  $region99: #{_lambda_.1} parent=0 // pred_check_branch
    %129 = sbr.rel (0) target = $region101
  $region100: #{_lambda_.1} parent=0 // pred_region
    _
  $region101: #{_lambda_.1} parent=0 // pred_fallthru
    _
  // Predicated region
  $region102: #{_lambda_.1} parent=0 // pred_check
    _
  $region103: #{_lambda_.1} parent=0 // pred_check_branch
    %131 = sbr.rel (0) target = $region105
  $region104: #{_lambda_.1} parent=0 // pred_region
    _
  $region105: #{_lambda_.1} parent=0 // pred_fallthru
    _
  // Predicated region
  $region106: #{_lambda_.1} parent=0 // pred_check
    _
  $region107: #{_lambda_.1} parent=0 // pred_check_branch
    %133 = sbr.rel (0) target = $region109
  $region108: #{_lambda_.1} parent=0 // pred_region
    _
  $region109: #{_lambda_.1} parent=0 // pred_fallthru
    _
  // Predicated region
  $region110: #{_lambda_.1} parent=0 // pred_check
    _
  $region111: #{_lambda_.1} parent=0 // pred_check_branch
    %135 = sbr.rel (0) target = $region113
  $region112: #{_lambda_.1} parent=0 // pred_region
    _
  $region113: #{_lambda_.1} parent=0 // pred_fallthru
    _
  // Predicated region
  $region114: #{_lambda_.1} parent=0 // pred_check
    _
  $region115: #{_lambda_.1} parent=0 // pred_check_branch
    %137 = sbr.rel (0) target = $region117
  $region116: #{_lambda_.1} parent=0 // pred_region
    _
  $region117: #{_lambda_.1} parent=0 // pred_fallthru
    _
  // Predicated region
  $region118: #{_lambda_.1} parent=0 // pred_check
    _
  $region119: #{_lambda_.1} parent=0 // pred_check_branch
    %139 = sbr.rel (0) target = $region121
  $region120: #{_lambda_.1} parent=0 // pred_region
    _
  $region121: #{_lambda_.1} parent=0 // pred_fallthru
    _
  // Predicated region
  $region122: #{_lambda_.1} parent=0 // pred_check
    _
  $region123: #{_lambda_.1} parent=0 // pred_check_branch
    %141 = sbr.rel (0) target = $region125
  $region124: #{_lambda_.1} parent=0 // pred_region
    _
  $region125: #{_lambda_.1} parent=0 // pred_fallthru
    _
  // Predicated region
  $region126: #{_lambda_.1} parent=0 // pred_check
    _
  $region127: #{_lambda_.1} parent=0 // pred_check_branch
    %143 = sbr.rel (0) target = $region129
  $region128: #{_lambda_.1} parent=0 // pred_region
    _
  $region129: #{_lambda_.1} parent=0 // pred_fallthru
    _
  // Predicated region
  $region130: #{_lambda_.1} parent=0 // pred_check
    _
  $region131: #{_lambda_.1} parent=0 // pred_check_branch
    %145 = sbr.rel (0) target = $region133
  $region132: #{_lambda_.1} parent=0 // pred_region
    _
  $region133: #{_lambda_.1} parent=0 // pred_fallthru
    _
  // Predicated region
  $region134: #{_lambda_.1} parent=0 // pred_check
    _
  $region135: #{_lambda_.1} parent=0 // pred_check_branch
    %147 = sbr.rel (0) target = $region137
  $region136: #{_lambda_.1} parent=0 // pred_region
    _
  $region137: #{_lambda_.1} parent=0 // pred_fallthru
    _
  // Predicated region
  $region138: #{_lambda_.1} parent=0 // pred_check
    _
  $region139: #{_lambda_.1} parent=0 // pred_check_branch
    %149 = sbr.rel (0) target = $region141
  $region140: #{_lambda_.1} parent=0 // pred_region
    _
  $region141: #{_lambda_.1} parent=0 // pred_fallthru
    _
  // Predicated region
  $region142: #{_lambda_.1} parent=0 // pred_check
    _
  $region143: #{_lambda_.1} parent=0 // pred_check_branch
    %151 = sbr.rel (0) target = $region145
  $region144: #{_lambda_.1} parent=0 // pred_region
    _
  $region145: #{_lambda_.1} parent=0 // pred_fallthru
    _
  // Predicated region
  $region146: #{_lambda_.1} parent=0 // pred_check
    _
  $region147: #{_lambda_.1} parent=0 // pred_check_branch
    %153 = sbr.rel (0) target = $region149
  $region148: #{_lambda_.1} parent=0 // pred_region
    _
  $region149: #{_lambda_.1} parent=0 // pred_fallthru
    _
  %v154 = vld [vmem:[%s1] sm:$0xff]
  %v155 = vld [vmem:[%s1 + $0x8] sm:$0xff]
  %v156 = vld [vmem:[%s7] sm:$0x3f]
  %v157 = vld [vmem:[%s9] sm:$0x1]
  %v159 = vlaneseq
  %v160 = vshrl.u32 %v159, 7
  %v161 = vsub.s32 0, %v160
  %v162 = vrot.slane %v157, %v161
  %vm164 = vcmask 48128
  %v166 = vsel %vm164, %v154, 0
  %v169 = vsel %vm164, %v155, 0
  %vm171 = vcmask 1045504
  %v173 = vsel %vm171, %v156, 0
  %175 = vmatprep.subr.mxu0 0.0
  %176 = vmatpush1.msra.mxu0 0.0
  %177 = vmatprep.subr.mxu0 0.0
  %178 = vmatpush1.msra.mxu0 0.0
  %179 = vmatprep.subr.mxu0 0.0
  %180 = vmatpush1.msra.mxu0 0.0
  %181 = vmatprep.subr.mxu0 0.0
  %182 = vmatpush1.msra.mxu0 0.0
  %183 = vmatprep.subr.mxu0 0.0
  %184 = vmatpush1.msra.mxu0 0.0
  %185 = vmatprep.subr.mxu0 0.0
  %186 = vmatpush1.msra.mxu0 0.0
  %187 = vmatprep.subr.mxu0 0.0
  %188 = vmatpush1.msra.mxu0 0.0
  %189 = vmatprep.subr.mxu0 0.0
  %190 = vmatpush1.msra.mxu0 0.0
  %191 = vmatprep.subr.mxu0 0.0
  %192 = vmatpush1.msra.mxu0 0.0
  %193 = vmatprep.subr.mxu0 0.0
  %194 = vmatpush1.msra.mxu0 0.0
  %195 = vmatprep.subr.mxu0 0.0
  %196 = vmatpush1.msra.mxu0 0.0
  %197 = vmatprep.subr.mxu0 0.0
  %198 = vmatpush1.msra.mxu0 0.0
  %199 = vmatprep.subr.mxu0 0.0
  %200 = vmatpush1.msra.mxu0 0.0
  %201 = vmatprep.subr.mxu0 0.0
  %202 = vmatpush1.msra.mxu0 0.0
  %203 = vmatprep.subr.mxu0 0.0
  %204 = vmatpush1.msra.mxu0 0.0
  %205 = vmatprep.subr.mxu0 0.0
  %206 = vmatpush1.msra.mxu0 %v173
  %207 = vmatprep.subr.mxu0 0.0
  %208 = vmatpush2.msra.mxu0 0.0
  %209 = vmatprep.subr.mxu0 0.0
  %210 = vmatpush2.msra.mxu0 0.0
  %211 = vmatprep.subr.mxu0 0.0
  %212 = vmatpush2.msra.mxu0 0.0
  %213 = vmatprep.subr.mxu0 0.0
  %214 = vmatpush2.msra.mxu0 0.0
  %215 = vmatprep.subr.mxu0 0.0
  %216 = vmatpush2.msra.mxu0 0.0
  %217 = vmatprep.subr.mxu0 0.0
  %218 = vmatpush2.msra.mxu0 0.0
  %219 = vmatprep.subr.mxu0 0.0
  %220 = vmatpush2.msra.mxu0 0.0
  %221 = vmatprep.subr.mxu0 0.0
  %222 = vmatpush2.msra.mxu0 0.0
  %223 = vmatprep.subr.mxu0 0.0
  %224 = vmatpush2.msra.mxu0 0.0
  %225 = vmatprep.subr.mxu0 0.0
  %226 = vmatpush2.msra.mxu0 0.0
  %227 = vmatprep.subr.mxu0 0.0
  %228 = vmatpush2.msra.mxu0 0.0
  %229 = vmatprep.subr.mxu0 0.0
  %230 = vmatpush2.msra.mxu0 0.0
  %231 = vmatprep.subr.mxu0 0.0
  %232 = vmatpush2.msra.mxu0 0.0
  %233 = vmatprep.subr.mxu0 0.0
  %234 = vmatpush2.msra.mxu0 0.0
  %235 = vmatprep.subr.mxu0 0.0
  %236 = vmatpush2.msra.mxu0 0.0
  %237 = vmatprep.subr.mxu0 0.0
  %238 = vmatpush2.msra.mxu0 0.0
  %239 = vmatprep.mubr.f32.mxu0 0.0
  %240 = vmatmul.mubr.f32.gmra.mxu0 %v166
  %v241 = vpop.f32.mrf.mxu0
  %v242 = vadd.f32 %v162, %v241
  %v243 = vpop.f32.mrf.mxu0
  %244 = vmatprep.mubr.f32.mxu0 0.0
  %245 = vmatmul.mubr.f32.gmra.mxu0 %v169
  %v246 = vpop.f32.mrf.mxu0
  %v247 = vadd.f32 %v162, %v246
  %v248 = vpop.f32.mrf.mxu0
  %249 = vdwg.mxu0
  %v250 = vld [vmem:[%s3] sm:$0x1f]
  %v251 = vld [vmem:[%s3 + $0x8] sm:$0x1f]
  %v252 = vld [vmem:[%s3 + $0x10] sm:$0x1f]
  %v253 = vld [vmem:[%s3 + $0x18] sm:$0x1f]
  %v254 = vld [vmem:[%s3 + $0x20] sm:$0x1f]
  %v255 = vld [vmem:[%s3 + $0x28] sm:$0x1f]
  %v256 = vld [vmem:[%s11] sm:$0xff]
  %v257 = vld [vmem:[%s11 + $0x8] sm:$0xff]
  %v258 = vld [vmem:[%s11 + $0x10] sm:$0xff]
  %v259 = vld [vmem:[%s11 + $0x18] sm:$0xff]
  %v260 = vld [vmem:[%s11 + $0x20] sm:$0xff]
  %v261 = vld [vmem:[%s11 + $0x28] sm:$0xff]
  %v262 = vld [vmem:[%s11 + $0x30] sm:$0xff]
  %v263 = vld [vmem:[%s11 + $0x38] sm:$0xff]
  %v264 = vld [vmem:[%s11 + $0x40] sm:$0xff]
  %v265 = vld [vmem:[%s11 + $0x48] sm:$0xff]
  %v266 = vld [vmem:[%s11 + $0x50] sm:$0xff]
  %v267 = vld [vmem:[%s11 + $0x58] sm:$0xff]
  %v268 = vld [vmem:[%s11 + $0x60] sm:$0xff]
  %v269 = vld [vmem:[%s11 + $0x68] sm:$0xff]
  %v270 = vld [vmem:[%s11 + $0x70] sm:$0xff]
  %v271 = vld [vmem:[%s11 + $0x78] sm:$0xff]
  %v272 = vld [vmem:[%s11 + $0x80] sm:$0xff]
  %v273 = vld [vmem:[%s11 + $0x88] sm:$0xff]
  %v274 = vld [vmem:[%s11 + $0x90] sm:$0xff]
  %v275 = vld [vmem:[%s11 + $0x98] sm:$0xff]
  %v276 = vld [vmem:[%s11 + $0xa0] sm:$0xff]
  %v277 = vld [vmem:[%s11 + $0xa8] sm:$0xff]
  %v278 = vld [vmem:[%s11 + $0xb0] sm:$0xff]
  %v279 = vld [vmem:[%s11 + $0xb8] sm:$0xff]
  %v280 = vld [vmem:[%s11 + $0xc0] sm:$0xff]
  %v281 = vld [vmem:[%s11 + $0xc8] sm:$0xff]
  %v282 = vld [vmem:[%s11 + $0xd0] sm:$0xff]
  %v283 = vld [vmem:[%s11 + $0xd8] sm:$0xff]
  %v284 = vld [vmem:[%s11 + $0xe0] sm:$0xff]
  %v285 = vld [vmem:[%s11 + $0xe8] sm:$0xff]
  %v286 = vld [vmem:[%s11 + $0xf0] sm:$0xff]
  %v287 = vld [vmem:[%s11 + $0xf8] sm:$0xff]
  %v288 = vld [vmem:[%s11 + $0x100] sm:$0xff]
  %v289 = vld [vmem:[%s11 + $0x108] sm:$0xff]
  %v290 = vld [vmem:[%s11 + $0x110] sm:$0xff]
  %v291 = vld [vmem:[%s11 + $0x118] sm:$0xff]
  %v292 = vld [vmem:[%s11 + $0x120] sm:$0xff]
  %v293 = vld [vmem:[%s11 + $0x128] sm:$0xff]
  %v294 = vld [vmem:[%s11 + $0x130] sm:$0xff]
  %v295 = vld [vmem:[%s11 + $0x138] sm:$0xff]
  %v296 = vld [vmem:[%s11 + $0x140] sm:$0xff]
  %v297 = vld [vmem:[%s11 + $0x148] sm:$0xff]
  %v298 = vld [vmem:[%s11 + $0x150] sm:$0xff]
  %v299 = vld [vmem:[%s11 + $0x158] sm:$0xff]
  %v300 = vld [vmem:[%s11 + $0x160] sm:$0xff]
  %v301 = vld [vmem:[%s11 + $0x168] sm:$0xff]
  %v302 = vld [vmem:[%s11 + $0x170] sm:$0xff]
  %v303 = vld [vmem:[%s11 + $0x178] sm:$0xff]
  %v304 = vld [vmem:[%s11 + $0x180] sm:$0xff]
  %v305 = vld [vmem:[%s11 + $0x188] sm:$0xff]
  %v306 = vld [vmem:[%s11 + $0x190] sm:$0xff]
  %v307 = vld [vmem:[%s11 + $0x198] sm:$0xff]
  %v308 = vld [vmem:[%s11 + $0x1a0] sm:$0xff]
  %v309 = vld [vmem:[%s11 + $0x1a8] sm:$0xff]
  %v310 = vld [vmem:[%s11 + $0x1b0] sm:$0xff]
  %v311 = vld [vmem:[%s11 + $0x1b8] sm:$0xff]
  %v312 = vld [vmem:[%s11 + $0x1c0] sm:$0xff]
  %v313 = vld [vmem:[%s11 + $0x1c8] sm:$0xff]
  %v314 = vld [vmem:[%s11 + $0x1d0] sm:$0xff]
  %v315 = vld [vmem:[%s11 + $0x1d8] sm:$0xff]
  %v316 = vld [vmem:[%s11 + $0x1e0] sm:$0xff]
  %v317 = vld [vmem:[%s11 + $0x1e8] sm:$0xff]
  %v318 = vld [vmem:[%s11 + $0x1f0] sm:$0xff]
  %v319 = vld [vmem:[%s11 + $0x1f8] sm:$0xff]
  %v320 = vld [vmem:[%s11 + $0x200] sm:$0xff]
  %v321 = vld [vmem:[%s11 + $0x208] sm:$0xff]
  %v322 = vld [vmem:[%s11 + $0x210] sm:$0xff]
  %v323 = vld [vmem:[%s11 + $0x218] sm:$0xff]
  %v324 = vld [vmem:[%s11 + $0x220] sm:$0xff]
  %v325 = vld [vmem:[%s11 + $0x228] sm:$0xff]
  %v326 = vld [vmem:[%s11 + $0x230] sm:$0xff]
  %v327 = vld [vmem:[%s11 + $0x238] sm:$0xff]
  %v328 = vld [vmem:[%s11 + $0x240] sm:$0xff]
  %v329 = vld [vmem:[%s11 + $0x248] sm:$0xff]
  %v330 = vld [vmem:[%s11 + $0x250] sm:$0xff]
  %v331 = vld [vmem:[%s11 + $0x258] sm:$0xff]
  %v332 = vld [vmem:[%s11 + $0x260] sm:$0xff]
  %v333 = vld [vmem:[%s11 + $0x268] sm:$0xff]
  %v334 = vld [vmem:[%s11 + $0x270] sm:$0xff]
  %v335 = vld [vmem:[%s11 + $0x278] sm:$0xff]
  %v336 = vld [vmem:[%s11 + $0x280] sm:$0xff]
  %v337 = vld [vmem:[%s11 + $0x288] sm:$0xff]
  %v338 = vld [vmem:[%s11 + $0x290] sm:$0xff]
  %v339 = vld [vmem:[%s11 + $0x298] sm:$0xff]
  %v340 = vld [vmem:[%s11 + $0x2a0] sm:$0xff]
  %v341 = vld [vmem:[%s11 + $0x2a8] sm:$0xff]
  %v342 = vld [vmem:[%s11 + $0x2b0] sm:$0xff]
  %v343 = vld [vmem:[%s11 + $0x2b8] sm:$0xff]
  %v344 = vld [vmem:[%s11 + $0x2c0] sm:$0xff]
  %v345 = vld [vmem:[%s11 + $0x2c8] sm:$0xff]
  %v346 = vld [vmem:[%s11 + $0x2d0] sm:$0xff]
  %v347 = vld [vmem:[%s11 + $0x2d8] sm:$0xff]
  %v348 = vld [vmem:[%s11 + $0x2e0] sm:$0xff]
  %v349 = vld [vmem:[%s11 + $0x2e8] sm:$0xff]
  %v350 = vld [vmem:[%s11 + $0x2f0] sm:$0xff]
  %v351 = vld [vmem:[%s11 + $0x2f8] sm:$0xff]
  %v352 = vld [vmem:[%s13] sm:$0x1]
  %v354 = vlaneseq
  %v355 = vshrl.u32 %v354, 7
  %v356 = vsub.s32 0, %v355
  %v357 = vrot.slane %v352, %v356
  %359 = vmatprep.subr.mxu0 0.0
  %360 = vmatpush1.msra.mxu0 %v271
  %361 = vmatprep.subr.mxu0 0.0
  %362 = vmatpush1.msra.mxu0 %v270
  %363 = vmatprep.subr.mxu0 0.0
  %364 = vmatpush1.msra.mxu0 %v269
  %365 = vmatprep.subr.mxu0 0.0
  %366 = vmatpush1.msra.mxu0 %v268
  %367 = vmatprep.subr.mxu0 0.0
  %368 = vmatpush1.msra.mxu0 %v267
  %369 = vmatprep.subr.mxu0 0.0
  %370 = vmatpush1.msra.mxu0 %v266
  %371 = vmatprep.subr.mxu0 0.0
  %372 = vmatpush1.msra.mxu0 %v265
  %373 = vmatprep.subr.mxu0 0.0
  %374 = vmatpush1.msra.mxu0 %v264
  %375 = vmatprep.subr.mxu0 0.0
  %376 = vmatpush1.msra.mxu0 %v263
  %377 = vmatprep.subr.mxu0 0.0
  %378 = vmatpush1.msra.mxu0 %v262
  %379 = vmatprep.subr.mxu0 0.0
  %380 = vmatpush1.msra.mxu0 %v261
  %381 = vmatprep.subr.mxu0 0.0
  %382 = vmatpush1.msra.mxu0 %v260
  %383 = vmatprep.subr.mxu0 0.0
  %384 = vmatpush1.msra.mxu0 %v259
  %385 = vmatprep.subr.mxu0 0.0
  %386 = vmatpush1.msra.mxu0 %v258
  %387 = vmatprep.subr.mxu0 0.0
  %388 = vmatpush1.msra.mxu0 %v257
  %389 = vmatprep.subr.mxu0 0.0
  %390 = vmatpush1.msra.mxu0 %v256
  %391 = vmatprep.subr.mxu0 0.0
  %392 = vmatpush2.msra.mxu0 %v287
  %393 = vmatprep.subr.mxu0 0.0
  %394 = vmatpush2.msra.mxu0 %v286
  %395 = vmatprep.subr.mxu0 0.0
  %396 = vmatpush2.msra.mxu0 %v285
  %397 = vmatprep.subr.mxu0 0.0
  %398 = vmatpush2.msra.mxu0 %v284
  %399 = vmatprep.subr.mxu0 0.0
  %400 = vmatpush2.msra.mxu0 %v283
  %401 = vmatprep.subr.mxu0 0.0
  %402 = vmatpush2.msra.mxu0 %v282
  %403 = vmatprep.subr.mxu0 0.0
  %404 = vmatpush2.msra.mxu0 %v281
  %405 = vmatprep.subr.mxu0 0.0
  %406 = vmatpush2.msra.mxu0 %v280
  %407 = vmatprep.subr.mxu0 0.0
  %408 = vmatpush2.msra.mxu0 %v279
  %409 = vmatprep.subr.mxu0 0.0
  %410 = vmatpush2.msra.mxu0 %v278
  %411 = vmatprep.subr.mxu0 0.0
  %412 = vmatpush2.msra.mxu0 %v277
  %413 = vmatprep.subr.mxu0 0.0
  %414 = vmatpush2.msra.mxu0 %v276
  %415 = vmatprep.subr.mxu0 0.0
  %416 = vmatpush2.msra.mxu0 %v275
  %417 = vmatprep.subr.mxu0 0.0
  %418 = vmatpush2.msra.mxu0 %v274
  %419 = vmatprep.subr.mxu0 0.0
  %420 = vmatpush2.msra.mxu0 %v273
  %421 = vmatprep.subr.mxu0 0.0
  %422 = vmatpush2.msra.mxu0 %v272
  %423 = vmatprep.mubr.f32.mxu0 %v251
  %424 = vmatmul.mubr.f32.gmra.mxu0 %v250
  %v425 = vpop.f32.mrf.mxu0
  %v426 = vadd.f32 %v357, %v425
  %v427 = vpop.f32.mrf.mxu0
  %428 = vdwg.mxu0
  %429 = vmatprep.subr.mxu0 0.0
  %430 = vmatpush1.msra.mxu0 %v303
  %431 = vmatprep.subr.mxu0 0.0
  %432 = vmatpush1.msra.mxu0 %v302
  %433 = vmatprep.subr.mxu0 0.0
  %434 = vmatpush1.msra.mxu0 %v301
  %435 = vmatprep.subr.mxu0 0.0
  %436 = vmatpush1.msra.mxu0 %v300
  %437 = vmatprep.subr.mxu0 0.0
  %438 = vmatpush1.msra.mxu0 %v299
  %439 = vmatprep.subr.mxu0 0.0
  %440 = vmatpush1.msra.mxu0 %v298
  %441 = vmatprep.subr.mxu0 0.0
  %442 = vmatpush1.msra.mxu0 %v297
  %443 = vmatprep.subr.mxu0 0.0
  %444 = vmatpush1.msra.mxu0 %v296
  %445 = vmatprep.subr.mxu0 0.0
  %446 = vmatpush1.msra.mxu0 %v295
  %447 = vmatprep.subr.mxu0 0.0
  %448 = vmatpush1.msra.mxu0 %v294
  %449 = vmatprep.subr.mxu0 0.0
  %450 = vmatpush1.msra.mxu0 %v293
  %451 = vmatprep.subr.mxu0 0.0
  %452 = vmatpush1.msra.mxu0 %v292
  %453 = vmatprep.subr.mxu0 0.0
  %454 = vmatpush1.msra.mxu0 %v291
  %455 = vmatprep.subr.mxu0 0.0
  %456 = vmatpush1.msra.mxu0 %v290
  %457 = vmatprep.subr.mxu0 0.0
  %458 = vmatpush1.msra.mxu0 %v289
  %459 = vmatprep.subr.mxu0 0.0
  %460 = vmatpush1.msra.mxu0 %v288
  %461 = vmatprep.subr.mxu0 0.0
  %462 = vmatpush2.msra.mxu0 %v319
  %463 = vmatprep.subr.mxu0 0.0
  %464 = vmatpush2.msra.mxu0 %v318
  %465 = vmatprep.subr.mxu0 0.0
  %466 = vmatpush2.msra.mxu0 %v317
  %467 = vmatprep.subr.mxu0 0.0
  %468 = vmatpush2.msra.mxu0 %v316
  %469 = vmatprep.subr.mxu0 0.0
  %470 = vmatpush2.msra.mxu0 %v315
  %471 = vmatprep.subr.mxu0 0.0
  %472 = vmatpush2.msra.mxu0 %v314
  %473 = vmatprep.subr.mxu0 0.0
  %474 = vmatpush2.msra.mxu0 %v313
  %475 = vmatprep.subr.mxu0 0.0
  %476 = vmatpush2.msra.mxu0 %v312
  %477 = vmatprep.subr.mxu0 0.0
  %478 = vmatpush2.msra.mxu0 %v311
  %479 = vmatprep.subr.mxu0 0.0
  %480 = vmatpush2.msra.mxu0 %v310
  %481 = vmatprep.subr.mxu0 0.0
  %482 = vmatpush2.msra.mxu0 %v309
  %483 = vmatprep.subr.mxu0 0.0
  %484 = vmatpush2.msra.mxu0 %v308
  %485 = vmatprep.subr.mxu0 0.0
  %486 = vmatpush2.msra.mxu0 %v307
  %487 = vmatprep.subr.mxu0 0.0
  %488 = vmatpush2.msra.mxu0 %v306
  %489 = vmatprep.subr.mxu0 0.0
  %490 = vmatpush2.msra.mxu0 %v305
  %491 = vmatprep.subr.mxu0 0.0
  %492 = vmatpush2.msra.mxu0 %v304
  %493 = vmatprep.mubr.f32.mxu0 %v253
  %494 = vmatmul.mubr.f32.gmra.mxu0 %v252
  %v495 = vpop.f32.mrf.mxu0
  %v496 = vadd.f32 %v426, %v495
  %v497 = vpop.f32.mrf.mxu0
  %498 = vdwg.mxu0
  %499 = vmatprep.subr.mxu0 0.0
  %500 = vmatpush1.msra.mxu0 %v335
  %501 = vmatprep.subr.mxu0 0.0
  %502 = vmatpush1.msra.mxu0 %v334
  %503 = vmatprep.subr.mxu0 0.0
  %504 = vmatpush1.msra.mxu0 %v333
  %505 = vmatprep.subr.mxu0 0.0
  %506 = vmatpush1.msra.mxu0 %v332
  %507 = vmatprep.subr.mxu0 0.0
  %508 = vmatpush1.msra.mxu0 %v331
  %509 = vmatprep.subr.mxu0 0.0
  %510 = vmatpush1.msra.mxu0 %v330
  %511 = vmatprep.subr.mxu0 0.0
  %512 = vmatpush1.msra.mxu0 %v329
  %513 = vmatprep.subr.mxu0 0.0
  %514 = vmatpush1.msra.mxu0 %v328
  %515 = vmatprep.subr.mxu0 0.0
  %516 = vmatpush1.msra.mxu0 %v327
  %517 = vmatprep.subr.mxu0 0.0
  %518 = vmatpush1.msra.mxu0 %v326
  %519 = vmatprep.subr.mxu0 0.0
  %520 = vmatpush1.msra.mxu0 %v325
  %521 = vmatprep.subr.mxu0 0.0
  %522 = vmatpush1.msra.mxu0 %v324
  %523 = vmatprep.subr.mxu0 0.0
  %524 = vmatpush1.msra.mxu0 %v323
  %525 = vmatprep.subr.mxu0 0.0
  %526 = vmatpush1.msra.mxu0 %v322
  %527 = vmatprep.subr.mxu0 0.0
  %528 = vmatpush1.msra.mxu0 %v321
  %529 = vmatprep.subr.mxu0 0.0
  %530 = vmatpush1.msra.mxu0 %v320
  %531 = vmatprep.subr.mxu0 0.0
  %532 = vmatpush2.msra.mxu0 %v351
  %533 = vmatprep.subr.mxu0 0.0
  %534 = vmatpush2.msra.mxu0 %v350
  %535 = vmatprep.subr.mxu0 0.0
  %536 = vmatpush2.msra.mxu0 %v349
  %537 = vmatprep.subr.mxu0 0.0
  %538 = vmatpush2.msra.mxu0 %v348
  %539 = vmatprep.subr.mxu0 0.0
  %540 = vmatpush2.msra.mxu0 %v347
  %541 = vmatprep.subr.mxu0 0.0
  %542 = vmatpush2.msra.mxu0 %v346
  %543 = vmatprep.subr.mxu0 0.0
  %544 = vmatpush2.msra.mxu0 %v345
  %545 = vmatprep.subr.mxu0 0.0
  %546 = vmatpush2.msra.mxu0 %v344
  %547 = vmatprep.subr.mxu0 0.0
  %548 = vmatpush2.msra.mxu0 %v343
  %549 = vmatprep.subr.mxu0 0.0
  %550 = vmatpush2.msra.mxu0 %v342
  %551 = vmatprep.subr.mxu0 0.0
  %552 = vmatpush2.msra.mxu0 %v341
  %553 = vmatprep.subr.mxu0 0.0
  %554 = vmatpush2.msra.mxu0 %v340
  %555 = vmatprep.subr.mxu0 0.0
  %556 = vmatpush2.msra.mxu0 %v339
  %557 = vmatprep.subr.mxu0 0.0
  %558 = vmatpush2.msra.mxu0 %v338
  %559 = vmatprep.subr.mxu0 0.0
  %560 = vmatpush2.msra.mxu0 %v337
  %561 = vmatprep.subr.mxu0 0.0
  %562 = vmatpush2.msra.mxu0 %v336
  %563 = vmatprep.mubr.f32.mxu0 %v255
  %564 = vmatmul.mubr.f32.gmra.mxu0 %v254
  %v565 = vpop.f32.mrf.mxu0
  %v566 = vadd.f32 %v496, %v565
  %v567 = vpop.f32.mrf.mxu0
  %568 = vdwg.mxu0
  %vm569 = vcmask 261120
  %570 = vst.msk [vmem:[#allocation2] sm:$0xff] %vm569, 0.0
  %571 = vst.msk [vmem:[#allocation2 + $0x8] sm:$0xff] %vm569, 0.0
  %572 = vst.msk [vmem:[#allocation2 + $0x10] sm:$0xff] %vm569, 0.0
  %573 = vst.msk [vmem:[#allocation2 + $0x18] sm:$0xff] %vm569, 0.0
  %574 = vst.msk [vmem:[#allocation2] sm:$0xff] %vm569, %v242
  %vm575 = vcmask 258048
  %576 = vst.msk [vmem:[#allocation2 + $0x8] sm:$0x1f] %vm575, %v566
  %577 = vst.msk [vmem:[#allocation2 + $0x10] sm:$0xff] %vm569, %v247
  %578 = vst.msk [vmem:[#allocation2 + $0x18] sm:$0x1f] %vm575, %v566
  %v579 = vld [vmem:[#allocation2] sm:$0xff]
  %v580 = vld [vmem:[#allocation2 + $0x8] sm:$0xff]
  %v581 = vld [vmem:[#allocation2 + $0x10] sm:$0xff]
  %v582 = vld [vmem:[#allocation2 + $0x18] sm:$0xff]
  %v583 = vld [vmem:[%s5] sm:$0xff]
  %v584 = vld [vmem:[%s5 + $0x8] sm:$0xff]
  %v585 = vld [vmem:[%s5 + $0x10] sm:$0xff]
  %v586 = vld [vmem:[%s5 + $0x18] sm:$0xff]
  %v587 = vld [vmem:[%s15] sm:$0xff]
  %v588 = vld [vmem:[%s15 + $0x8] sm:$0xff]
  %v589 = vld [vmem:[%s15 + $0x10] sm:$0xff]
  %v590 = vld [vmem:[%s15 + $0x18] sm:$0xff]
  %v591 = vld [vmem:[%s17] sm:$0x1]
  %v593 = vlaneseq
  %v594 = vshrl.u32 %v593, 7
  %v595 = vsub.s32 0, %v594
  %v596 = vrot.slane %v591, %v595
  %v599 = vsel %vm569, %v579, 0
  %v602 = vsel %vm569, %v580, 0
  %v605 = vsel %vm569, %v581, 0
  %v608 = vsel %vm569, %v582, 0
  %610 = vmatprep.subr.mxu0 0.0
  %611 = vmatpush1.msra.mxu0 0.0
  %612 = vmatprep.subr.mxu0 0.0
  %613 = vmatpush1.msra.mxu0 0.0
  %614 = vmatprep.subr.mxu0 0.0
  %615 = vmatpush1.msra.mxu0 0.0
  %616 = vmatprep.subr.mxu0 0.0
  %617 = vmatpush1.msra.mxu0 0.0
  %618 = vmatprep.subr.mxu0 0.0
  %619 = vmatpush1.msra.mxu0 0.0
  %620 = vmatprep.subr.mxu0 0.0
  %621 = vmatpush1.msra.mxu0 0.0
  %622 = vmatprep.subr.mxu0 0.0
  %623 = vmatpush1.msra.mxu0 0.0
  %624 = vmatprep.subr.mxu0 0.0
  %625 = vmatpush1.msra.mxu0 0.0
  %626 = vmatprep.subr.mxu0 0.0
  %627 = vmatpush1.msra.mxu0 0.0
  %628 = vmatprep.subr.mxu0 0.0
  %629 = vmatpush1.msra.mxu0 0.0
  %630 = vmatprep.subr.mxu0 0.0
  %631 = vmatpush1.msra.mxu0 0.0
  %632 = vmatprep.subr.mxu0 0.0
  %633 = vmatpush1.msra.mxu0 0.0
  %634 = vmatprep.subr.mxu0 0.0
  %635 = vmatpush1.msra.mxu0 %v590
  %636 = vmatprep.subr.mxu0 0.0
  %637 = vmatpush1.msra.mxu0 %v589
  %638 = vmatprep.subr.mxu0 0.0
  %639 = vmatpush1.msra.mxu0 %v588
  %640 = vmatprep.subr.mxu0 0.0
  %641 = vmatpush1.msra.mxu0 %v587
  %642 = vmatprep.subr.mxu0 0.0
  %643 = vmatpush2.msra.mxu0 0.0
  %644 = vmatprep.subr.mxu0 0.0
  %645 = vmatpush2.msra.mxu0 0.0
  %646 = vmatprep.subr.mxu0 0.0
  %647 = vmatpush2.msra.mxu0 0.0
  %648 = vmatprep.subr.mxu0 0.0
  %649 = vmatpush2.msra.mxu0 0.0
  %650 = vmatprep.subr.mxu0 0.0
  %651 = vmatpush2.msra.mxu0 0.0
  %652 = vmatprep.subr.mxu0 0.0
  %653 = vmatpush2.msra.mxu0 0.0
  %654 = vmatprep.subr.mxu0 0.0
  %655 = vmatpush2.msra.mxu0 0.0
  %656 = vmatprep.subr.mxu0 0.0
  %657 = vmatpush2.msra.mxu0 0.0
  %658 = vmatprep.subr.mxu0 0.0
  %659 = vmatpush2.msra.mxu0 0.0
  %660 = vmatprep.subr.mxu0 0.0
  %661 = vmatpush2.msra.mxu0 0.0
  %662 = vmatprep.subr.mxu0 0.0
  %663 = vmatpush2.msra.mxu0 0.0
  %664 = vmatprep.subr.mxu0 0.0
  %665 = vmatpush2.msra.mxu0 0.0
  %666 = vmatprep.subr.mxu0 0.0
  %667 = vmatpush2.msra.mxu0 0.0
  %668 = vmatprep.subr.mxu0 0.0
  %669 = vmatpush2.msra.mxu0 0.0
  %670 = vmatprep.subr.mxu0 0.0
  %671 = vmatpush2.msra.mxu0 0.0
  %672 = vmatprep.subr.mxu0 0.0
  %673 = vmatpush2.msra.mxu0 0.0
  %674 = vmatprep.mubr.f32.mxu0 0.0
  %675 = vmatmul.mubr.f32.gmra.mxu0 %v599
  %v676 = vpop.f32.mrf.mxu0
  %v677 = vadd.f32 %v596, %v676
  %v678 = vpop.f32.mrf.mxu0
  %679 = vmatprep.mubr.f32.mxu0 0.0
  %680 = vmatmul.mubr.f32.gmra.mxu0 %v602
  %v681 = vpop.f32.mrf.mxu0
  %v682 = vadd.f32 %v596, %v681
  %v683 = vpop.f32.mrf.mxu0
  %684 = vmatprep.mubr.f32.mxu0 0.0
  %685 = vmatmul.mubr.f32.gmra.mxu0 %v605
  %v686 = vpop.f32.mrf.mxu0
  %v687 = vadd.f32 %v596, %v686
  %v688 = vpop.f32.mrf.mxu0
  %689 = vmatprep.mubr.f32.mxu0 0.0
  %690 = vmatmul.mubr.f32.gmra.mxu0 %v608
  %v691 = vpop.f32.mrf.mxu0
  %v692 = vadd.f32 %v596, %v691
  %v693 = vpop.f32.mrf.mxu0
  %694 = vdwg.mxu0
  %697 = vrot.lane.b32.xlu0 %v677, 96
  %v698 = vpop.permute.xlu0 %697
  %699 = vrot.lane.b32.xlu0 %v682, 96
  %v700 = vpop.permute.xlu0 %699
  %v703 = vmul.f32 %v677, %v698
  %v704 = vmul.f32 %v682, %v700
  %v706 = vsel %vm569, %v703, 0
  %v709 = vsel %vm569, %v704, 0
  %711 = vmatprep.subr.mxu0 0.0
  %712 = vmatpush1.msra.mxu0 0.0
  %713 = vmatprep.subr.mxu0 0.0
  %714 = vmatpush1.msra.mxu0 0.0
  %715 = vmatprep.subr.mxu0 0.0
  %716 = vmatpush1.msra.mxu0 0.0
  %717 = vmatprep.subr.mxu0 0.0
  %718 = vmatpush1.msra.mxu0 0.0
  %719 = vmatprep.subr.mxu0 0.0
  %720 = vmatpush1.msra.mxu0 0.0
  %721 = vmatprep.subr.mxu0 0.0
  %722 = vmatpush1.msra.mxu0 0.0
  %723 = vmatprep.subr.mxu0 0.0
  %724 = vmatpush1.msra.mxu0 0.0
  %725 = vmatprep.subr.mxu0 0.0
  %726 = vmatpush1.msra.mxu0 0.0
  %727 = vmatprep.subr.mxu0 0.0
  %728 = vmatpush1.msra.mxu0 0.0
  %729 = vmatprep.subr.mxu0 0.0
  %730 = vmatpush1.msra.mxu0 0.0
  %731 = vmatprep.subr.mxu0 0.0
  %732 = vmatpush1.msra.mxu0 0.0
  %733 = vmatprep.subr.mxu0 0.0
  %734 = vmatpush1.msra.mxu0 0.0
  %735 = vmatprep.subr.mxu0 0.0
  %736 = vmatpush1.msra.mxu0 %v586
  %737 = vmatprep.subr.mxu0 0.0
  %738 = vmatpush1.msra.mxu0 %v585
  %739 = vmatprep.subr.mxu0 0.0
  %740 = vmatpush1.msra.mxu0 %v584
  %741 = vmatprep.subr.mxu0 0.0
  %742 = vmatpush1.msra.mxu0 %v583
  %743 = vmatprep.subr.mxu0 0.0
  %744 = vmatpush2.msra.mxu0 0.0
  %745 = vmatprep.subr.mxu0 0.0
  %746 = vmatpush2.msra.mxu0 0.0
  %747 = vmatprep.subr.mxu0 0.0
  %748 = vmatpush2.msra.mxu0 0.0
  %749 = vmatprep.subr.mxu0 0.0
  %750 = vmatpush2.msra.mxu0 0.0
  %751 = vmatprep.subr.mxu0 0.0
  %752 = vmatpush2.msra.mxu0 0.0
  %753 = vmatprep.subr.mxu0 0.0
  %754 = vmatpush2.msra.mxu0 0.0
  %755 = vmatprep.subr.mxu0 0.0
  %756 = vmatpush2.msra.mxu0 0.0
  %757 = vmatprep.subr.mxu0 0.0
  %758 = vmatpush2.msra.mxu0 0.0
  %759 = vmatprep.subr.mxu0 0.0
  %760 = vmatpush2.msra.mxu0 0.0
  %761 = vmatprep.subr.mxu0 0.0
  %762 = vmatpush2.msra.mxu0 0.0
  %763 = vmatprep.subr.mxu0 0.0
  %764 = vmatpush2.msra.mxu0 0.0
  %765 = vmatprep.subr.mxu0 0.0
  %766 = vmatpush2.msra.mxu0 0.0
  %767 = vmatprep.subr.mxu0 0.0
  %768 = vmatpush2.msra.mxu0 0.0
  %769 = vmatprep.subr.mxu0 0.0
  %770 = vmatpush2.msra.mxu0 0.0
  %771 = vmatprep.subr.mxu0 0.0
  %772 = vmatpush2.msra.mxu0 0.0
  %773 = vmatprep.subr.mxu0 0.0
  %774 = vmatpush2.msra.mxu0 0.0
  %775 = vmatprep.mubr.f32.mxu0 0.0
  %776 = vmatmul.mubr.f32.gmra.mxu0 %v706
  %v777 = vpop.f32.mrf.mxu0
  %v778 = vadd.f32 0.0, %v777
  %v779 = vpop.f32.mrf.mxu0
  %780 = vmatprep.mubr.f32.mxu0 0.0
  %781 = vmatmul.mubr.f32.gmra.mxu0 %v709
  %v782 = vpop.f32.mrf.mxu0
  %v783 = vadd.f32 0.0, %v782
  %v784 = vpop.f32.mrf.mxu0
  %785 = vdwg.mxu0
  %v786 = vmul.f32 %v778, 0.35355338
  %v787 = vmul.f32 %v783, 0.35355338
  %790 = vrot.lane.b32.xlu0 %v687, 96
  %v791 = vpop.permute.xlu0 %790
  %792 = vrot.lane.b32.xlu0 %v692, 96
  %v793 = vpop.permute.xlu0 %792
  %v796 = vmul.f32 %v677, %v791
  %v797 = vmul.f32 %v682, %v793
  %v799 = vsel %vm569, %v796, 0
  %v802 = vsel %vm569, %v797, 0
  %804 = vmatprep.subr.mxu0 0.0
  %805 = vmatpush1.msra.mxu0 0.0
  %806 = vmatprep.subr.mxu0 0.0
  %807 = vmatpush1.msra.mxu0 0.0
  %808 = vmatprep.subr.mxu0 0.0
  %809 = vmatpush1.msra.mxu0 0.0
  %810 = vmatprep.subr.mxu0 0.0
  %811 = vmatpush1.msra.mxu0 0.0
  %812 = vmatprep.subr.mxu0 0.0
  %813 = vmatpush1.msra.mxu0 0.0
  %814 = vmatprep.subr.mxu0 0.0
  %815 = vmatpush1.msra.mxu0 0.0
  %816 = vmatprep.subr.mxu0 0.0
  %817 = vmatpush1.msra.mxu0 0.0
  %818 = vmatprep.subr.mxu0 0.0
  %819 = vmatpush1.msra.mxu0 0.0
  %820 = vmatprep.subr.mxu0 0.0
  %821 = vmatpush1.msra.mxu0 0.0
  %822 = vmatprep.subr.mxu0 0.0
  %823 = vmatpush1.msra.mxu0 0.0
  %824 = vmatprep.subr.mxu0 0.0
  %825 = vmatpush1.msra.mxu0 0.0
  %826 = vmatprep.subr.mxu0 0.0
  %827 = vmatpush1.msra.mxu0 0.0
  %828 = vmatprep.subr.mxu0 0.0
  %829 = vmatpush1.msra.mxu0 %v586
  %830 = vmatprep.subr.mxu0 0.0
  %831 = vmatpush1.msra.mxu0 %v585
  %832 = vmatprep.subr.mxu0 0.0
  %833 = vmatpush1.msra.mxu0 %v584
  %834 = vmatprep.subr.mxu0 0.0
  %835 = vmatpush1.msra.mxu0 %v583
  %836 = vmatprep.subr.mxu0 0.0
  %837 = vmatpush2.msra.mxu0 0.0
  %838 = vmatprep.subr.mxu0 0.0
  %839 = vmatpush2.msra.mxu0 0.0
  %840 = vmatprep.subr.mxu0 0.0
  %841 = vmatpush2.msra.mxu0 0.0
  %842 = vmatprep.subr.mxu0 0.0
  %843 = vmatpush2.msra.mxu0 0.0
  %844 = vmatprep.subr.mxu0 0.0
  %845 = vmatpush2.msra.mxu0 0.0
  %846 = vmatprep.subr.mxu0 0.0
  %847 = vmatpush2.msra.mxu0 0.0
  %848 = vmatprep.subr.mxu0 0.0
  %849 = vmatpush2.msra.mxu0 0.0
  %850 = vmatprep.subr.mxu0 0.0
  %851 = vmatpush2.msra.mxu0 0.0
  %852 = vmatprep.subr.mxu0 0.0
  %853 = vmatpush2.msra.mxu0 0.0
  %854 = vmatprep.subr.mxu0 0.0
  %855 = vmatpush2.msra.mxu0 0.0
  %856 = vmatprep.subr.mxu0 0.0
  %857 = vmatpush2.msra.mxu0 0.0
  %858 = vmatprep.subr.mxu0 0.0
  %859 = vmatpush2.msra.mxu0 0.0
  %860 = vmatprep.subr.mxu0 0.0
  %861 = vmatpush2.msra.mxu0 0.0
  %862 = vmatprep.subr.mxu0 0.0
  %863 = vmatpush2.msra.mxu0 0.0
  %864 = vmatprep.subr.mxu0 0.0
  %865 = vmatpush2.msra.mxu0 0.0
  %866 = vmatprep.subr.mxu0 0.0
  %867 = vmatpush2.msra.mxu0 0.0
  %868 = vmatprep.mubr.f32.mxu0 0.0
  %869 = vmatmul.mubr.f32.gmra.mxu0 %v799
  %v870 = vpop.f32.mrf.mxu0
  %v871 = vadd.f32 0.0, %v870
  %v872 = vpop.f32.mrf.mxu0
  %873 = vmatprep.mubr.f32.mxu0 0.0
  %874 = vmatmul.mubr.f32.gmra.mxu0 %v802
  %v875 = vpop.f32.mrf.mxu0
  %v876 = vadd.f32 0.0, %v875
  %v877 = vpop.f32.mrf.mxu0
  %878 = vdwg.mxu0
  %v879 = vmul.f32 %v871, 0.35355338
  %v880 = vmul.f32 %v876, 0.35355338
  %v881 = vmul.f32 %v687, %v698
  %v882 = vmul.f32 %v692, %v700
  %v884 = vsel %vm569, %v881, 0
  %v887 = vsel %vm569, %v882, 0
  %889 = vmatprep.subr.mxu0 0.0
  %890 = vmatpush1.msra.mxu0 0.0
  %891 = vmatprep.subr.mxu0 0.0
  %892 = vmatpush1.msra.mxu0 0.0
  %893 = vmatprep.subr.mxu0 0.0
  %894 = vmatpush1.msra.mxu0 0.0
  %895 = vmatprep.subr.mxu0 0.0
  %896 = vmatpush1.msra.mxu0 0.0
  %897 = vmatprep.subr.mxu0 0.0
  %898 = vmatpush1.msra.mxu0 0.0
  %899 = vmatprep.subr.mxu0 0.0
  %900 = vmatpush1.msra.mxu0 0.0
  %901 = vmatprep.subr.mxu0 0.0
  %902 = vmatpush1.msra.mxu0 0.0
  %903 = vmatprep.subr.mxu0 0.0
  %904 = vmatpush1.msra.mxu0 0.0
  %905 = vmatprep.subr.mxu0 0.0
  %906 = vmatpush1.msra.mxu0 0.0
  %907 = vmatprep.subr.mxu0 0.0
  %908 = vmatpush1.msra.mxu0 0.0
  %909 = vmatprep.subr.mxu0 0.0
  %910 = vmatpush1.msra.mxu0 0.0
  %911 = vmatprep.subr.mxu0 0.0
  %912 = vmatpush1.msra.mxu0 0.0
  %913 = vmatprep.subr.mxu0 0.0
  %914 = vmatpush1.msra.mxu0 %v586
  %915 = vmatprep.subr.mxu0 0.0
  %916 = vmatpush1.msra.mxu0 %v585
  %917 = vmatprep.subr.mxu0 0.0
  %918 = vmatpush1.msra.mxu0 %v584
  %919 = vmatprep.subr.mxu0 0.0
  %920 = vmatpush1.msra.mxu0 %v583
  %921 = vmatprep.subr.mxu0 0.0
  %922 = vmatpush2.msra.mxu0 0.0
  %923 = vmatprep.subr.mxu0 0.0
  %924 = vmatpush2.msra.mxu0 0.0
  %925 = vmatprep.subr.mxu0 0.0
  %926 = vmatpush2.msra.mxu0 0.0
  %927 = vmatprep.subr.mxu0 0.0
  %928 = vmatpush2.msra.mxu0 0.0
  %929 = vmatprep.subr.mxu0 0.0
  %930 = vmatpush2.msra.mxu0 0.0
  %931 = vmatprep.subr.mxu0 0.0
  %932 = vmatpush2.msra.mxu0 0.0
  %933 = vmatprep.subr.mxu0 0.0
  %934 = vmatpush2.msra.mxu0 0.0
  %935 = vmatprep.subr.mxu0 0.0
  %936 = vmatpush2.msra.mxu0 0.0
  %937 = vmatprep.subr.mxu0 0.0
  %938 = vmatpush2.msra.mxu0 0.0
  %939 = vmatprep.subr.mxu0 0.0
  %940 = vmatpush2.msra.mxu0 0.0
  %941 = vmatprep.subr.mxu0 0.0
  %942 = vmatpush2.msra.mxu0 0.0
  %943 = vmatprep.subr.mxu0 0.0
  %944 = vmatpush2.msra.mxu0 0.0
  %945 = vmatprep.subr.mxu0 0.0
  %946 = vmatpush2.msra.mxu0 0.0
  %947 = vmatprep.subr.mxu0 0.0
  %948 = vmatpush2.msra.mxu0 0.0
  %949 = vmatprep.subr.mxu0 0.0
  %950 = vmatpush2.msra.mxu0 0.0
  %951 = vmatprep.subr.mxu0 0.0
  %952 = vmatpush2.msra.mxu0 0.0
  %953 = vmatprep.mubr.f32.mxu0 0.0
  %954 = vmatmul.mubr.f32.gmra.mxu0 %v884
  %v955 = vpop.f32.mrf.mxu0
  %v956 = vadd.f32 0.0, %v955
  %v957 = vpop.f32.mrf.mxu0
  %958 = vmatprep.mubr.f32.mxu0 0.0
  %959 = vmatmul.mubr.f32.gmra.mxu0 %v887
  %v960 = vpop.f32.mrf.mxu0
  %v961 = vadd.f32 0.0, %v960
  %v962 = vpop.f32.mrf.mxu0
  %963 = vdwg.mxu0
  %v964 = vmul.f32 %v956, 0.35355338
  %v965 = vmul.f32 %v961, 0.35355338
  %v966 = vmul.f32 %v687, %v791
  %v967 = vmul.f32 %v692, %v793
  %v969 = vsel %vm569, %v966, 0
  %v972 = vsel %vm569, %v967, 0
  %974 = vmatprep.subr.mxu0 0.0
  %975 = vmatpush1.msra.mxu0 0.0
  %976 = vmatprep.subr.mxu0 0.0
  %977 = vmatpush1.msra.mxu0 0.0
  %978 = vmatprep.subr.mxu0 0.0
  %979 = vmatpush1.msra.mxu0 0.0
  %980 = vmatprep.subr.mxu0 0.0
  %981 = vmatpush1.msra.mxu0 0.0
  %982 = vmatprep.subr.mxu0 0.0
  %983 = vmatpush1.msra.mxu0 0.0
  %984 = vmatprep.subr.mxu0 0.0
  %985 = vmatpush1.msra.mxu0 0.0
  %986 = vmatprep.subr.mxu0 0.0
  %987 = vmatpush1.msra.mxu0 0.0
  %988 = vmatprep.subr.mxu0 0.0
  %989 = vmatpush1.msra.mxu0 0.0
  %990 = vmatprep.subr.mxu0 0.0
  %991 = vmatpush1.msra.mxu0 0.0
  %992 = vmatprep.subr.mxu0 0.0
  %993 = vmatpush1.msra.mxu0 0.0
  %994 = vmatprep.subr.mxu0 0.0
  %995 = vmatpush1.msra.mxu0 0.0
  %996 = vmatprep.subr.mxu0 0.0
  %997 = vmatpush1.msra.mxu0 0.0
  %998 = vmatprep.subr.mxu0 0.0
  %999 = vmatpush1.msra.mxu0 %v586
  %1000 = vmatprep.subr.mxu0 0.0
  %1001 = vmatpush1.msra.mxu0 %v585
  %1002 = vmatprep.subr.mxu0 0.0
  %1003 = vmatpush1.msra.mxu0 %v584
  %1004 = vmatprep.subr.mxu0 0.0
  %1005 = vmatpush1.msra.mxu0 %v583
  %1006 = vmatprep.subr.mxu0 0.0
  %1007 = vmatpush2.msra.mxu0 0.0
  %1008 = vmatprep.subr.mxu0 0.0
  %1009 = vmatpush2.msra.mxu0 0.0
  %1010 = vmatprep.subr.mxu0 0.0
  %1011 = vmatpush2.msra.mxu0 0.0
  %1012 = vmatprep.subr.mxu0 0.0
  %1013 = vmatpush2.msra.mxu0 0.0
  %1014 = vmatprep.subr.mxu0 0.0
  %1015 = vmatpush2.msra.mxu0 0.0
  %1016 = vmatprep.subr.mxu0 0.0
  %1017 = vmatpush2.msra.mxu0 0.0
  %1018 = vmatprep.subr.mxu0 0.0
  %1019 = vmatpush2.msra.mxu0 0.0
  %1020 = vmatprep.subr.mxu0 0.0
  %1021 = vmatpush2.msra.mxu0 0.0
  %1022 = vmatprep.subr.mxu0 0.0
  %1023 = vmatpush2.msra.mxu0 0.0
  %1024 = vmatprep.subr.mxu0 0.0
  %1025 = vmatpush2.msra.mxu0 0.0
  %1026 = vmatprep.subr.mxu0 0.0
  %1027 = vmatpush2.msra.mxu0 0.0
  %1028 = vmatprep.subr.mxu0 0.0
  %1029 = vmatpush2.msra.mxu0 0.0
  %1030 = vmatprep.subr.mxu0 0.0
  %1031 = vmatpush2.msra.mxu0 0.0
  %1032 = vmatprep.subr.mxu0 0.0
  %1033 = vmatpush2.msra.mxu0 0.0
  %1034 = vmatprep.subr.mxu0 0.0
  %1035 = vmatpush2.msra.mxu0 0.0
  %1036 = vmatprep.subr.mxu0 0.0
  %1037 = vmatpush2.msra.mxu0 0.0
  %1038 = vmatprep.mubr.f32.mxu0 0.0
  %1039 = vmatmul.mubr.f32.gmra.mxu0 %v969
  %v1040 = vpop.f32.mrf.mxu0
  %v1041 = vadd.f32 0.0, %v1040
  %v1042 = vpop.f32.mrf.mxu0
  %1043 = vmatprep.mubr.f32.mxu0 0.0
  %1044 = vmatmul.mubr.f32.gmra.mxu0 %v972
  %v1045 = vpop.f32.mrf.mxu0
  %v1046 = vadd.f32 0.0, %v1045
  %v1047 = vpop.f32.mrf.mxu0
  %1048 = vdwg.mxu0
  %v1049 = vmul.f32 %v1041, 0.35355338
  %v1050 = vmul.f32 %v1046, 0.35355338
  %v1051 = vmax.f32 %v786, %v879
  %v1052 = vmax.f32 %v787, %v880
  %v1053 = vsub.f32 %v786, %v1051
  %v1054 = vsub.f32 %v787, %v1052
  %v1055 = vmul.f32 %v1053, 1.442695
  %v1056 = vpow.pop %v1055
  %v1057 = vmul.f32 %v1054, 1.442695
  %v1058 = vpow.pop %v1057
  %v1059 = vsub.f32 %v879, %v1051
  %v1060 = vsub.f32 %v880, %v1052
  %v1061 = vmul.f32 %v1059, 1.442695
  %v1062 = vpow.pop %v1061
  %v1063 = vmul.f32 %v1060, 1.442695
  %v1064 = vpow.pop %v1063
  %v1065 = vadd.f32 %v1056, %v1062
  %v1066 = vadd.f32 %v1058, %v1064
  %v1067 = vrcp.pop %v1065
  %v1068 = vmul.f32 1.0, %v1067
  %v1069 = vrcp.pop %v1066
  %v1070 = vmul.f32 1.0, %v1069
  %v1071 = vmul.f32 %v1056, %v1068
  %v1072 = vmul.f32 %v1058, %v1070
  %1073 = vrot.lane.b32.xlu0 %v677, 64
  %v1074 = vpop.permute.xlu0 %1073
  %1075 = vrot.lane.b32.xlu0 %v682, 64
  %v1076 = vpop.permute.xlu0 %1075
  %v1079 = vmul.f32 %v1071, %v1074
  %v1080 = vmul.f32 %v1072, %v1076
  %v1081 = vmul.f32 %v1062, %v1068
  %v1082 = vmul.f32 %v1064, %v1070
  %1083 = vrot.lane.b32.xlu0 %v687, 64
  %v1084 = vpop.permute.xlu0 %1083
  %1085 = vrot.lane.b32.xlu0 %v692, 64
  %v1086 = vpop.permute.xlu0 %1085
  %v1089 = vmul.f32 %v1081, %v1084
  %v1090 = vmul.f32 %v1082, %v1086
  %v1091 = vadd.f32 %v1079, %v1089
  %v1092 = vadd.f32 %v1080, %v1090
  %1093 = vst.msk [vmem:[#allocation3] sm:$0xff] %vm569, %v1091
  %1094 = vst.msk [vmem:[#allocation3 + $0x8] sm:$0xff] %vm569, %v1092
  %v1095 = vmax.f32 %v964, %v1049
  %v1096 = vmax.f32 %v965, %v1050
  %v1097 = vsub.f32 %v964, %v1095
  %v1098 = vsub.f32 %v965, %v1096
  %v1099 = vmul.f32 %v1097, 1.442695
  %v1100 = vpow.pop %v1099
  %v1101 = vmul.f32 %v1098, 1.442695
  %v1102 = vpow.pop %v1101
  %v1103 = vsub.f32 %v1049, %v1095
  %v1104 = vsub.f32 %v1050, %v1096
  %v1105 = vmul.f32 %v1103, 1.442695
  %v1106 = vpow.pop %v1105
  %v1107 = vmul.f32 %v1104, 1.442695
  %v1108 = vpow.pop %v1107
  %v1109 = vadd.f32 %v1100, %v1106
  %v1110 = vadd.f32 %v1102, %v1108
  %v1111 = vrcp.pop %v1109
  %v1112 = vmul.f32 1.0, %v1111
  %v1113 = vrcp.pop %v1110
  %v1114 = vmul.f32 1.0, %v1113
  %v1115 = vmul.f32 %v1100, %v1112
  %v1116 = vmul.f32 %v1102, %v1114
  %v1117 = vmul.f32 %v1115, %v1074
  %v1118 = vmul.f32 %v1116, %v1076
  %v1119 = vmul.f32 %v1106, %v1112
  %v1120 = vmul.f32 %v1108, %v1114
  %v1121 = vmul.f32 %v1119, %v1084
  %v1122 = vmul.f32 %v1120, %v1086
  %v1123 = vadd.f32 %v1117, %v1121
  %v1124 = vadd.f32 %v1118, %v1122
  %1125 = vst.msk [vmem:[#allocation3 + $0x10] sm:$0xff] %vm569, %v1123
  %1126 = vst.msk [vmem:[#allocation3 + $0x18] sm:$0xff] %vm569, %v1124
  %v1127 = vld [vmem:[#allocation3] sm:$0xff]
  %v1128 = vld [vmem:[#allocation3 + $0x8] sm:$0xff]
  %v1129 = vld [vmem:[#allocation3 + $0x10] sm:$0xff]
  %v1130 = vld [vmem:[#allocation3 + $0x18] sm:$0xff]
  %v1131 = vld [vmem:[%s19] sm:$0xff]
  %v1132 = vld [vmem:[%s19 + $0x8] sm:$0xff]
  %v1133 = vld [vmem:[%s19 + $0x10] sm:$0xff]
  %v1134 = vld [vmem:[%s19 + $0x18] sm:$0xff]
  %v1135 = vld [vmem:[%s21] sm:$0x1]
  %v1137 = vlaneseq
  %v1138 = vshrl.u32 %v1137, 7
  %v1139 = vsub.s32 0, %v1138
  %v1140 = vrot.slane %v1135, %v1139
  %v1143 = vsel %vm569, %v1127, 0
  %v1146 = vsel %vm569, %v1128, 0
  %v1149 = vsel %vm569, %v1129, 0
  %v1152 = vsel %vm569, %v1130, 0
  %1154 = vmatprep.subr.mxu0 0.0
  %1155 = vmatpush1.msra.mxu0 0.0
  %1156 = vmatprep.subr.mxu0 0.0
  %1157 = vmatpush1.msra.mxu0 0.0
  %1158 = vmatprep.subr.mxu0 0.0
  %1159 = vmatpush1.msra.mxu0 0.0
  %1160 = vmatprep.subr.mxu0 0.0
  %1161 = vmatpush1.msra.mxu0 0.0
  %1162 = vmatprep.subr.mxu0 0.0
  %1163 = vmatpush1.msra.mxu0 0.0
  %1164 = vmatprep.subr.mxu0 0.0
  %1165 = vmatpush1.msra.mxu0 0.0
  %1166 = vmatprep.subr.mxu0 0.0
  %1167 = vmatpush1.msra.mxu0 0.0
  %1168 = vmatprep.subr.mxu0 0.0
  %1169 = vmatpush1.msra.mxu0 0.0
  %1170 = vmatprep.subr.mxu0 0.0
  %1171 = vmatpush1.msra.mxu0 0.0
  %1172 = vmatprep.subr.mxu0 0.0
  %1173 = vmatpush1.msra.mxu0 0.0
  %1174 = vmatprep.subr.mxu0 0.0
  %1175 = vmatpush1.msra.mxu0 0.0
  %1176 = vmatprep.subr.mxu0 0.0
  %1177 = vmatpush1.msra.mxu0 0.0
  %1178 = vmatprep.subr.mxu0 0.0
  %1179 = vmatpush1.msra.mxu0 %v1134
  %1180 = vmatprep.subr.mxu0 0.0
  %1181 = vmatpush1.msra.mxu0 %v1133
  %1182 = vmatprep.subr.mxu0 0.0
  %1183 = vmatpush1.msra.mxu0 %v1132
  %1184 = vmatprep.subr.mxu0 0.0
  %1185 = vmatpush1.msra.mxu0 %v1131
  %1186 = vmatprep.subr.mxu0 0.0
  %1187 = vmatpush2.msra.mxu0 0.0
  %1188 = vmatprep.subr.mxu0 0.0
  %1189 = vmatpush2.msra.mxu0 0.0
  %1190 = vmatprep.subr.mxu0 0.0
  %1191 = vmatpush2.msra.mxu0 0.0
  %1192 = vmatprep.subr.mxu0 0.0
  %1193 = vmatpush2.msra.mxu0 0.0
  %1194 = vmatprep.subr.mxu0 0.0
  %1195 = vmatpush2.msra.mxu0 0.0
  %1196 = vmatprep.subr.mxu0 0.0
  %1197 = vmatpush2.msra.mxu0 0.0
  %1198 = vmatprep.subr.mxu0 0.0
  %1199 = vmatpush2.msra.mxu0 0.0
  %1200 = vmatprep.subr.mxu0 0.0
  %1201 = vmatpush2.msra.mxu0 0.0
  %1202 = vmatprep.subr.mxu0 0.0
  %1203 = vmatpush2.msra.mxu0 0.0
  %1204 = vmatprep.subr.mxu0 0.0
  %1205 = vmatpush2.msra.mxu0 0.0
  %1206 = vmatprep.subr.mxu0 0.0
  %1207 = vmatpush2.msra.mxu0 0.0
  %1208 = vmatprep.subr.mxu0 0.0
  %1209 = vmatpush2.msra.mxu0 0.0
  %1210 = vmatprep.subr.mxu0 0.0
  %1211 = vmatpush2.msra.mxu0 0.0
  %1212 = vmatprep.subr.mxu0 0.0
  %1213 = vmatpush2.msra.mxu0 0.0
  %1214 = vmatprep.subr.mxu0 0.0
  %1215 = vmatpush2.msra.mxu0 0.0
  %1216 = vmatprep.subr.mxu0 0.0
  %1217 = vmatpush2.msra.mxu0 0.0
  %1218 = vmatprep.mubr.f32.mxu0 0.0
  %1219 = vmatmul.mubr.f32.gmra.mxu0 %v1143
  %v1220 = vpop.f32.mrf.mxu0
  %v1221 = vadd.f32 %v1140, %v1220
  %v1222 = vpop.f32.mrf.mxu0
  %1223 = vmatprep.mubr.f32.mxu0 0.0
  %1224 = vmatmul.mubr.f32.gmra.mxu0 %v1146
  %v1225 = vpop.f32.mrf.mxu0
  %v1226 = vadd.f32 %v1140, %v1225
  %v1227 = vpop.f32.mrf.mxu0
  %1228 = vmatprep.mubr.f32.mxu0 0.0
  %1229 = vmatmul.mubr.f32.gmra.mxu0 %v1149
  %v1230 = vpop.f32.mrf.mxu0
  %v1231 = vadd.f32 %v1140, %v1230
  %v1232 = vpop.f32.mrf.mxu0
  %1233 = vmatprep.mubr.f32.mxu0 0.0
  %1234 = vmatmul.mubr.f32.gmra.mxu0 %v1152
  %v1235 = vpop.f32.mrf.mxu0
  %v1236 = vadd.f32 %v1140, %v1235
  %v1237 = vpop.f32.mrf.mxu0
  %1238 = vdwg.mxu0
  %v1239 = vadd.f32 %v579, %v1221
  %v1240 = vadd.f32 %v580, %v1226
  %v1241 = vadd.f32 %v581, %v1231
  %v1242 = vadd.f32 %v582, %v1236
  %v1243 = vld [vmem:[%s23] sm:$0x1]
  %v1244 = vld [vmem:[%s25] sm:$0x1]
  %v1245 = vsel %vm569, %v1239, 0.0
  %1246 = vadd.xlane.f32.xlu0 %v1245
  %v1247 = vpop.xlane.xlu0 %1246
  %v1248 = vsel %vm569, %v1240, 0.0
  %1249 = vadd.xlane.f32.xlu0 %v1248
  %v1250 = vpop.xlane.xlu0 %1249
  %v1251 = vsel %vm569, %v1241, 0.0
  %1252 = vadd.xlane.f32.xlu0 %v1251
  %v1253 = vpop.xlane.xlu0 %1252
  %v1254 = vsel %vm569, %v1242, 0.0
  %1255 = vadd.xlane.f32.xlu0 %v1254
  %v1256 = vpop.xlane.xlu0 %1255
  %v1257 = vrcp.pop 32.0
  %v1258 = vmul.f32 %v1247, %v1257
  %v1259 = vmul.f32 %v1250, %v1257
  %v1260 = vmul.f32 %v1253, %v1257
  %v1261 = vmul.f32 %v1256, %v1257
  %v1262 = vsub.f32 %v1239, %v1258
  %v1263 = vsub.f32 %v1240, %v1259
  %v1264 = vsub.f32 %v1241, %v1260
  %v1265 = vsub.f32 %v1242, %v1261
  %v1266 = vmul.f32 %v1262, %v1262
  %v1267 = vmul.f32 %v1263, %v1263
  %v1268 = vmul.f32 %v1264, %v1264
  %v1269 = vmul.f32 %v1265, %v1265
  %v1270 = vsel %vm569, %v1266, 0.0
  %1271 = vadd.xlane.f32.xlu0 %v1270
  %v1272 = vpop.xlane.xlu0 %1271
  %v1273 = vsel %vm569, %v1267, 0.0
  %1274 = vadd.xlane.f32.xlu0 %v1273
  %v1275 = vpop.xlane.xlu0 %1274
  %v1276 = vsel %vm569, %v1268, 0.0
  %1277 = vadd.xlane.f32.xlu0 %v1276
  %v1278 = vpop.xlane.xlu0 %1277
  %v1279 = vsel %vm569, %v1269, 0.0
  %1280 = vadd.xlane.f32.xlu0 %v1279
  %v1281 = vpop.xlane.xlu0 %1280
  %v1282 = vmul.f32 %v1272, %v1257
  %v1283 = vmul.f32 %v1275, %v1257
  %v1284 = vmul.f32 %v1278, %v1257
  %v1285 = vmul.f32 %v1281, %v1257
  %v1286 = vadd.f32 %v1282, 1e-05
  %v1287 = vadd.f32 %v1283, 1e-05
  %v1288 = vadd.f32 %v1284, 1e-05
  %v1289 = vadd.f32 %v1285, 1e-05
  %v1290 = vrsqrt.pop %v1286
  %v1291 = vrsqrt.pop %v1287
  %v1292 = vrsqrt.pop %v1288
  %v1293 = vrsqrt.pop %v1289
  %v1294 = vmul.f32 %v1262, %v1290
  %v1295 = vmul.f32 %v1263, %v1291
  %v1296 = vmul.f32 %v1264, %v1292
  %v1297 = vmul.f32 %v1265, %v1293
  %v1299 = vlaneseq
  %v1300 = vshrl.u32 %v1299, 7
  %v1301 = vsub.s32 0, %v1300
  %v1302 = vrot.slane %v1243, %v1301
  %v1304 = vmul.f32 %v1294, %v1302
  %v1305 = vmul.f32 %v1295, %v1302
  %v1306 = vmul.f32 %v1296, %v1302
  %v1307 = vmul.f32 %v1297, %v1302
  %v1309 = vlaneseq
  %v1310 = vshrl.u32 %v1309, 7
  %v1311 = vsub.s32 0, %v1310
  %v1312 = vrot.slane %v1244, %v1311
  %v1314 = vadd.f32 %v1304, %v1312
  %v1315 = vadd.f32 %v1305, %v1312
  %v1316 = vadd.f32 %v1306, %v1312
  %v1317 = vadd.f32 %v1307, %v1312
  %v1318 = vld [vmem:[%s27] sm:$0xff]
  %v1319 = vld [vmem:[%s27 + $0x8] sm:$0xff]
  %v1320 = vld [vmem:[%s27 + $0x10] sm:$0xff]
  %v1321 = vld [vmem:[%s27 + $0x18] sm:$0xff]
  %v1322 = vld [vmem:[%s27 + $0x20] sm:$0xff]
  %v1323 = vld [vmem:[%s27 + $0x28] sm:$0xff]
  %v1324 = vld [vmem:[%s27 + $0x30] sm:$0xff]
  %v1325 = vld [vmem:[%s27 + $0x38] sm:$0xff]
  %v1326 = vld [vmem:[%s27 + $0x40] sm:$0xff]
  %v1327 = vld [vmem:[%s27 + $0x48] sm:$0xff]
  %v1328 = vld [vmem:[%s27 + $0x50] sm:$0xff]
  %v1329 = vld [vmem:[%s27 + $0x58] sm:$0xff]
  %v1330 = vld [vmem:[%s27 + $0x60] sm:$0xff]
  %v1331 = vld [vmem:[%s27 + $0x68] sm:$0xff]
  %v1332 = vld [vmem:[%s27 + $0x70] sm:$0xff]
  %v1333 = vld [vmem:[%s27 + $0x78] sm:$0xff]
  %v1334 = vld [vmem:[%s27 + $0x80] sm:$0xff]
  %v1335 = vld [vmem:[%s27 + $0x88] sm:$0xff]
  %v1336 = vld [vmem:[%s27 + $0x90] sm:$0xff]
  %v1337 = vld [vmem:[%s27 + $0x98] sm:$0xff]
  %v1338 = vld [vmem:[%s27 + $0xa0] sm:$0xff]
  %v1339 = vld [vmem:[%s27 + $0xa8] sm:$0xff]
  %v1340 = vld [vmem:[%s27 + $0xb0] sm:$0xff]
  %v1341 = vld [vmem:[%s27 + $0xb8] sm:$0xff]
  %v1342 = vld [vmem:[%s27 + $0xc0] sm:$0xff]
  %v1343 = vld [vmem:[%s27 + $0xc8] sm:$0xff]
  %v1344 = vld [vmem:[%s27 + $0xd0] sm:$0xff]
  %v1345 = vld [vmem:[%s27 + $0xd8] sm:$0xff]
  %v1346 = vld [vmem:[%s27 + $0xe0] sm:$0xff]
  %v1347 = vld [vmem:[%s27 + $0xe8] sm:$0xff]
  %v1348 = vld [vmem:[%s27 + $0xf0] sm:$0xff]
  %v1349 = vld [vmem:[%s27 + $0xf8] sm:$0xff]
  %v1350 = vld [vmem:[%s27 + $0x100] sm:$0xff]
  %v1351 = vld [vmem:[%s27 + $0x108] sm:$0xff]
  %v1352 = vld [vmem:[%s27 + $0x110] sm:$0xff]
  %v1353 = vld [vmem:[%s27 + $0x118] sm:$0xff]
  %v1354 = vld [vmem:[%s27 + $0x120] sm:$0xff]
  %v1355 = vld [vmem:[%s27 + $0x128] sm:$0xff]
  %v1356 = vld [vmem:[%s27 + $0x130] sm:$0xff]
  %v1357 = vld [vmem:[%s27 + $0x138] sm:$0xff]
  %v1358 = vld [vmem:[%s27 + $0x140] sm:$0xff]
  %v1359 = vld [vmem:[%s27 + $0x148] sm:$0xff]
  %v1360 = vld [vmem:[%s27 + $0x150] sm:$0xff]
  %v1361 = vld [vmem:[%s27 + $0x158] sm:$0xff]
  %v1362 = vld [vmem:[%s27 + $0x160] sm:$0xff]
  %v1363 = vld [vmem:[%s27 + $0x168] sm:$0xff]
  %v1364 = vld [vmem:[%s27 + $0x170] sm:$0xff]
  %v1365 = vld [vmem:[%s27 + $0x178] sm:$0xff]
  %v1366 = vld [vmem:[%s27 + $0x180] sm:$0xff]
  %v1367 = vld [vmem:[%s27 + $0x188] sm:$0xff]
  %v1368 = vld [vmem:[%s27 + $0x190] sm:$0xff]
  %v1369 = vld [vmem:[%s27 + $0x198] sm:$0xff]
  %v1370 = vld [vmem:[%s27 + $0x1a0] sm:$0xff]
  %v1371 = vld [vmem:[%s27 + $0x1a8] sm:$0xff]
  %v1372 = vld [vmem:[%s27 + $0x1b0] sm:$0xff]
  %v1373 = vld [vmem:[%s27 + $0x1b8] sm:$0xff]
  %v1374 = vld [vmem:[%s27 + $0x1c0] sm:$0xff]
  %v1375 = vld [vmem:[%s27 + $0x1c8] sm:$0xff]
  %v1376 = vld [vmem:[%s27 + $0x1d0] sm:$0xff]
  %v1377 = vld [vmem:[%s27 + $0x1d8] sm:$0xff]
  %v1378 = vld [vmem:[%s27 + $0x1e0] sm:$0xff]
  %v1379 = vld [vmem:[%s27 + $0x1e8] sm:$0xff]
  %v1380 = vld [vmem:[%s27 + $0x1f0] sm:$0xff]
  %v1381 = vld [vmem:[%s27 + $0x1f8] sm:$0xff]
  %v1382 = vld [vmem:[%s29] sm:$0xff]
  %v1383 = vld [vmem:[%s29 + $0x8] sm:$0xff]
  %v1386 = vlaneseq
  %v1387 = vshrl.u32 %v1386, 7
  %v1388 = vsub.s32 0, %v1387
  %v1389 = vrot.slane %v1382, %v1388
  %v1390 = vlaneseq
  %v1391 = vshrl.u32 %v1390, 7
  %v1392 = vsub.s32 1, %v1391
  %v1393 = vrot.slane %v1382, %v1392
  %v1394 = vlaneseq
  %v1395 = vshrl.u32 %v1394, 7
  %v1396 = vsub.s32 2, %v1395
  %v1397 = vrot.slane %v1382, %v1396
  %v1398 = vlaneseq
  %v1399 = vshrl.u32 %v1398, 7
  %v1400 = vsub.s32 3, %v1399
  %v1401 = vrot.slane %v1382, %v1400
  %v1402 = vlaneseq
  %v1403 = vshrl.u32 %v1402, 7
  %v1404 = vsub.s32 4, %v1403
  %v1405 = vrot.slane %v1382, %v1404
  %v1406 = vlaneseq
  %v1407 = vshrl.u32 %v1406, 7
  %v1408 = vsub.s32 5, %v1407
  %v1409 = vrot.slane %v1382, %v1408
  %v1410 = vlaneseq
  %v1411 = vshrl.u32 %v1410, 7
  %v1412 = vsub.s32 6, %v1411
  %v1413 = vrot.slane %v1382, %v1412
  %v1414 = vlaneseq
  %v1415 = vshrl.u32 %v1414, 7
  %v1416 = vsub.s32 7, %v1415
  %v1417 = vrot.slane %v1382, %v1416
  %v1418 = vlaneseq
  %v1419 = vshrl.u32 %v1418, 7
  %v1420 = vsub.s32 0, %v1419
  %v1421 = vrot.slane %v1383, %v1420
  %v1422 = vlaneseq
  %v1423 = vshrl.u32 %v1422, 7
  %v1424 = vsub.s32 1, %v1423
  %v1425 = vrot.slane %v1383, %v1424
  %v1426 = vlaneseq
  %v1427 = vshrl.u32 %v1426, 7
  %v1428 = vsub.s32 2, %v1427
  %v1429 = vrot.slane %v1383, %v1428
  %v1430 = vlaneseq
  %v1431 = vshrl.u32 %v1430, 7
  %v1432 = vsub.s32 3, %v1431
  %v1433 = vrot.slane %v1383, %v1432
  %v1434 = vlaneseq
  %v1435 = vshrl.u32 %v1434, 7
  %v1436 = vsub.s32 4, %v1435
  %v1437 = vrot.slane %v1383, %v1436
  %v1438 = vlaneseq
  %v1439 = vshrl.u32 %v1438, 7
  %v1440 = vsub.s32 5, %v1439
  %v1441 = vrot.slane %v1383, %v1440
  %v1442 = vlaneseq
  %v1443 = vshrl.u32 %v1442, 7
  %v1444 = vsub.s32 6, %v1443
  %v1445 = vrot.slane %v1383, %v1444
  %v1446 = vlaneseq
  %v1447 = vshrl.u32 %v1446, 7
  %v1448 = vsub.s32 7, %v1447
  %v1449 = vrot.slane %v1383, %v1448
  %v1467 = vsel %vm569, %v1314, 0
  %v1470 = vsel %vm569, %v1315, 0
  %v1473 = vsel %vm569, %v1316, 0
  %v1476 = vsel %vm569, %v1317, 0
  %1478 = vmatprep.subr.mxu0 0.0
  %1479 = vmatpush1.msra.mxu0 0.0
  %1480 = vmatprep.subr.mxu0 0.0
  %1481 = vmatpush1.msra.mxu0 0.0
  %1482 = vmatprep.subr.mxu0 0.0
  %1483 = vmatpush1.msra.mxu0 0.0
  %1484 = vmatprep.subr.mxu0 0.0
  %1485 = vmatpush1.msra.mxu0 0.0
  %1486 = vmatprep.subr.mxu0 0.0
  %1487 = vmatpush1.msra.mxu0 0.0
  %1488 = vmatprep.subr.mxu0 0.0
  %1489 = vmatpush1.msra.mxu0 0.0
  %1490 = vmatprep.subr.mxu0 0.0
  %1491 = vmatpush1.msra.mxu0 0.0
  %1492 = vmatprep.subr.mxu0 0.0
  %1493 = vmatpush1.msra.mxu0 0.0
  %1494 = vmatprep.subr.mxu0 0.0
  %1495 = vmatpush1.msra.mxu0 0.0
  %1496 = vmatprep.subr.mxu0 0.0
  %1497 = vmatpush1.msra.mxu0 0.0
  %1498 = vmatprep.subr.mxu0 0.0
  %1499 = vmatpush1.msra.mxu0 0.0
  %1500 = vmatprep.subr.mxu0 0.0
  %1501 = vmatpush1.msra.mxu0 0.0
  %1502 = vmatprep.subr.mxu0 %v1367
  %1503 = vmatpush1.msra.mxu0 %v1366
  %1504 = vmatprep.subr.mxu0 %v1351
  %1505 = vmatpush1.msra.mxu0 %v1350
  %1506 = vmatprep.subr.mxu0 %v1335
  %1507 = vmatpush1.msra.mxu0 %v1334
  %1508 = vmatprep.subr.mxu0 %v1319
  %1509 = vmatpush1.msra.mxu0 %v1318
  %1510 = vmatprep.subr.mxu0 0.0
  %1511 = vmatpush2.msra.mxu0 0.0
  %1512 = vmatprep.subr.mxu0 0.0
  %1513 = vmatpush2.msra.mxu0 0.0
  %1514 = vmatprep.subr.mxu0 0.0
  %1515 = vmatpush2.msra.mxu0 0.0
  %1516 = vmatprep.subr.mxu0 0.0
  %1517 = vmatpush2.msra.mxu0 0.0
  %1518 = vmatprep.subr.mxu0 0.0
  %1519 = vmatpush2.msra.mxu0 0.0
  %1520 = vmatprep.subr.mxu0 0.0
  %1521 = vmatpush2.msra.mxu0 0.0
  %1522 = vmatprep.subr.mxu0 0.0
  %1523 = vmatpush2.msra.mxu0 0.0
  %1524 = vmatprep.subr.mxu0 0.0
  %1525 = vmatpush2.msra.mxu0 0.0
  %1526 = vmatprep.subr.mxu0 0.0
  %1527 = vmatpush2.msra.mxu0 0.0
  %1528 = vmatprep.subr.mxu0 0.0
  %1529 = vmatpush2.msra.mxu0 0.0
  %1530 = vmatprep.subr.mxu0 0.0
  %1531 = vmatpush2.msra.mxu0 0.0
  %1532 = vmatprep.subr.mxu0 0.0
  %1533 = vmatpush2.msra.mxu0 0.0
  %1534 = vmatprep.subr.mxu0 0.0
  %1535 = vmatpush2.msra.mxu0 0.0
  %1536 = vmatprep.subr.mxu0 0.0
  %1537 = vmatpush2.msra.mxu0 0.0
  %1538 = vmatprep.subr.mxu0 0.0
  %1539 = vmatpush2.msra.mxu0 0.0
  %1540 = vmatprep.subr.mxu0 0.0
  %1541 = vmatpush2.msra.mxu0 0.0
  %1542 = vmatprep.mubr.f32.mxu0 0.0
  %1543 = vmatmul.mubr.f32.gmra.mxu0 %v1467
  %v1544 = vpop.f32.mrf.mxu0
  %v1545 = vadd.f32 %v1389, %v1544
  %v1546 = vpop.f32.mrf.mxu0
  %v1547 = vadd.f32 %v1393, %v1546
  %1548 = vmatprep.mubr.f32.mxu0 0.0
  %1549 = vmatmul.mubr.f32.gmra.mxu0 %v1470
  %v1550 = vpop.f32.mrf.mxu0
  %v1551 = vadd.f32 %v1389, %v1550
  %v1552 = vpop.f32.mrf.mxu0
  %v1553 = vadd.f32 %v1393, %v1552
  %1554 = vmatprep.mubr.f32.mxu0 0.0
  %1555 = vmatmul.mubr.f32.gmra.mxu0 %v1473
  %v1556 = vpop.f32.mrf.mxu0
  %v1557 = vadd.f32 %v1389, %v1556
  %v1558 = vpop.f32.mrf.mxu0
  %v1559 = vadd.f32 %v1393, %v1558
  %1560 = vmatprep.mubr.f32.mxu0 0.0
  %1561 = vmatmul.mubr.f32.gmra.mxu0 %v1476
  %v1562 = vpop.f32.mrf.mxu0
  %v1563 = vadd.f32 %v1389, %v1562
  %v1564 = vpop.f32.mrf.mxu0
  %v1565 = vadd.f32 %v1393, %v1564
  %1566 = vdwg.mxu0
  %1567 = vmatprep.subr.mxu0 0.0
  %1568 = vmatpush1.msra.mxu0 0.0
  %1569 = vmatprep.subr.mxu0 0.0
  %1570 = vmatpush1.msra.mxu0 0.0
  %1571 = vmatprep.subr.mxu0 0.0
  %1572 = vmatpush1.msra.mxu0 0.0
  %1573 = vmatprep.subr.mxu0 0.0
  %1574 = vmatpush1.msra.mxu0 0.0
  %1575 = vmatprep.subr.mxu0 0.0
  %1576 = vmatpush1.msra.mxu0 0.0
  %1577 = vmatprep.subr.mxu0 0.0
  %1578 = vmatpush1.msra.mxu0 0.0
  %1579 = vmatprep.subr.mxu0 0.0
  %1580 = vmatpush1.msra.mxu0 0.0
  %1581 = vmatprep.subr.mxu0 0.0
  %1582 = vmatpush1.msra.mxu0 0.0
  %1583 = vmatprep.subr.mxu0 0.0
  %1584 = vmatpush1.msra.mxu0 0.0
  %1585 = vmatprep.subr.mxu0 0.0
  %1586 = vmatpush1.msra.mxu0 0.0
  %1587 = vmatprep.subr.mxu0 0.0
  %1588 = vmatpush1.msra.mxu0 0.0
  %1589 = vmatprep.subr.mxu0 0.0
  %1590 = vmatpush1.msra.mxu0 0.0
  %1591 = vmatprep.subr.mxu0 %v1369
  %1592 = vmatpush1.msra.mxu0 %v1368
  %1593 = vmatprep.subr.mxu0 %v1353
  %1594 = vmatpush1.msra.mxu0 %v1352
  %1595 = vmatprep.subr.mxu0 %v1337
  %1596 = vmatpush1.msra.mxu0 %v1336
  %1597 = vmatprep.subr.mxu0 %v1321
  %1598 = vmatpush1.msra.mxu0 %v1320
  %1599 = vmatprep.subr.mxu0 0.0
  %1600 = vmatpush2.msra.mxu0 0.0
  %1601 = vmatprep.subr.mxu0 0.0
  %1602 = vmatpush2.msra.mxu0 0.0
  %1603 = vmatprep.subr.mxu0 0.0
  %1604 = vmatpush2.msra.mxu0 0.0
  %1605 = vmatprep.subr.mxu0 0.0
  %1606 = vmatpush2.msra.mxu0 0.0
  %1607 = vmatprep.subr.mxu0 0.0
  %1608 = vmatpush2.msra.mxu0 0.0
  %1609 = vmatprep.subr.mxu0 0.0
  %1610 = vmatpush2.msra.mxu0 0.0
  %1611 = vmatprep.subr.mxu0 0.0
  %1612 = vmatpush2.msra.mxu0 0.0
  %1613 = vmatprep.subr.mxu0 0.0
  %1614 = vmatpush2.msra.mxu0 0.0
  %1615 = vmatprep.subr.mxu0 0.0
  %1616 = vmatpush2.msra.mxu0 0.0
  %1617 = vmatprep.subr.mxu0 0.0
  %1618 = vmatpush2.msra.mxu0 0.0
  %1619 = vmatprep.subr.mxu0 0.0
  %1620 = vmatpush2.msra.mxu0 0.0
  %1621 = vmatprep.subr.mxu0 0.0
  %1622 = vmatpush2.msra.mxu0 0.0
  %1623 = vmatprep.subr.mxu0 0.0
  %1624 = vmatpush2.msra.mxu0 0.0
  %1625 = vmatprep.subr.mxu0 0.0
  %1626 = vmatpush2.msra.mxu0 0.0
  %1627 = vmatprep.subr.mxu0 0.0
  %1628 = vmatpush2.msra.mxu0 0.0
  %1629 = vmatprep.subr.mxu0 0.0
  %1630 = vmatpush2.msra.mxu0 0.0
  %1631 = vmatprep.mubr.f32.mxu0 0.0
  %1632 = vmatmul.mubr.f32.gmra.mxu0 %v1467
  %v1633 = vpop.f32.mrf.mxu0
  %v1634 = vadd.f32 %v1397, %v1633
  %v1635 = vpop.f32.mrf.mxu0
  %v1636 = vadd.f32 %v1401, %v1635
  %1637 = vmatprep.mubr.f32.mxu0 0.0
  %1638 = vmatmul.mubr.f32.gmra.mxu0 %v1470
  %v1639 = vpop.f32.mrf.mxu0
  %v1640 = vadd.f32 %v1397, %v1639
  %v1641 = vpop.f32.mrf.mxu0
  %v1642 = vadd.f32 %v1401, %v1641
  %1643 = vmatprep.mubr.f32.mxu0 0.0
  %1644 = vmatmul.mubr.f32.gmra.mxu0 %v1473
  %v1645 = vpop.f32.mrf.mxu0
  %v1646 = vadd.f32 %v1397, %v1645
  %v1647 = vpop.f32.mrf.mxu0
  %v1648 = vadd.f32 %v1401, %v1647
  %1649 = vmatprep.mubr.f32.mxu0 0.0
  %1650 = vmatmul.mubr.f32.gmra.mxu0 %v1476
  %v1651 = vpop.f32.mrf.mxu0
  %v1652 = vadd.f32 %v1397, %v1651
  %v1653 = vpop.f32.mrf.mxu0
  %v1654 = vadd.f32 %v1401, %v1653
  %1655 = vdwg.mxu0
  %1656 = vmatprep.subr.mxu0 0.0
  %1657 = vmatpush1.msra.mxu0 0.0
  %1658 = vmatprep.subr.mxu0 0.0
  %1659 = vmatpush1.msra.mxu0 0.0
  %1660 = vmatprep.subr.mxu0 0.0
  %1661 = vmatpush1.msra.mxu0 0.0
  %1662 = vmatprep.subr.mxu0 0.0
  %1663 = vmatpush1.msra.mxu0 0.0
  %1664 = vmatprep.subr.mxu0 0.0
  %1665 = vmatpush1.msra.mxu0 0.0
  %1666 = vmatprep.subr.mxu0 0.0
  %1667 = vmatpush1.msra.mxu0 0.0
  %1668 = vmatprep.subr.mxu0 0.0
  %1669 = vmatpush1.msra.mxu0 0.0
  %1670 = vmatprep.subr.mxu0 0.0
  %1671 = vmatpush1.msra.mxu0 0.0
  %1672 = vmatprep.subr.mxu0 0.0
  %1673 = vmatpush1.msra.mxu0 0.0
  %1674 = vmatprep.subr.mxu0 0.0
  %1675 = vmatpush1.msra.mxu0 0.0
  %1676 = vmatprep.subr.mxu0 0.0
  %1677 = vmatpush1.msra.mxu0 0.0
  %1678 = vmatprep.subr.mxu0 0.0
  %1679 = vmatpush1.msra.mxu0 0.0
  %1680 = vmatprep.subr.mxu0 %v1371
  %1681 = vmatpush1.msra.mxu0 %v1370
  %1682 = vmatprep.subr.mxu0 %v1355
  %1683 = vmatpush1.msra.mxu0 %v1354
  %1684 = vmatprep.subr.mxu0 %v1339
  %1685 = vmatpush1.msra.mxu0 %v1338
  %1686 = vmatprep.subr.mxu0 %v1323
  %1687 = vmatpush1.msra.mxu0 %v1322
  %1688 = vmatprep.subr.mxu0 0.0
  %1689 = vmatpush2.msra.mxu0 0.0
  %1690 = vmatprep.subr.mxu0 0.0
  %1691 = vmatpush2.msra.mxu0 0.0
  %1692 = vmatprep.subr.mxu0 0.0
  %1693 = vmatpush2.msra.mxu0 0.0
  %1694 = vmatprep.subr.mxu0 0.0
  %1695 = vmatpush2.msra.mxu0 0.0
  %1696 = vmatprep.subr.mxu0 0.0
  %1697 = vmatpush2.msra.mxu0 0.0
  %1698 = vmatprep.subr.mxu0 0.0
  %1699 = vmatpush2.msra.mxu0 0.0
  %1700 = vmatprep.subr.mxu0 0.0
  %1701 = vmatpush2.msra.mxu0 0.0
  %1702 = vmatprep.subr.mxu0 0.0
  %1703 = vmatpush2.msra.mxu0 0.0
  %1704 = vmatprep.subr.mxu0 0.0
  %1705 = vmatpush2.msra.mxu0 0.0
  %1706 = vmatprep.subr.mxu0 0.0
  %1707 = vmatpush2.msra.mxu0 0.0
  %1708 = vmatprep.subr.mxu0 0.0
  %1709 = vmatpush2.msra.mxu0 0.0
  %1710 = vmatprep.subr.mxu0 0.0
  %1711 = vmatpush2.msra.mxu0 0.0
  %1712 = vmatprep.subr.mxu0 0.0
  %1713 = vmatpush2.msra.mxu0 0.0
  %1714 = vmatprep.subr.mxu0 0.0
  %1715 = vmatpush2.msra.mxu0 0.0
  %1716 = vmatprep.subr.mxu0 0.0
  %1717 = vmatpush2.msra.mxu0 0.0
  %1718 = vmatprep.subr.mxu0 0.0
  %1719 = vmatpush2.msra.mxu0 0.0
  %1720 = vmatprep.mubr.f32.mxu0 0.0
  %1721 = vmatmul.mubr.f32.gmra.mxu0 %v1467
  %v1722 = vpop.f32.mrf.mxu0
  %v1723 = vadd.f32 %v1405, %v1722
  %v1724 = vpop.f32.mrf.mxu0
  %v1725 = vadd.f32 %v1409, %v1724
  %1726 = vmatprep.mubr.f32.mxu0 0.0
  %1727 = vmatmul.mubr.f32.gmra.mxu0 %v1470
  %v1728 = vpop.f32.mrf.mxu0
  %v1729 = vadd.f32 %v1405, %v1728
  %v1730 = vpop.f32.mrf.mxu0
  %v1731 = vadd.f32 %v1409, %v1730
  %1732 = vmatprep.mubr.f32.mxu0 0.0
  %1733 = vmatmul.mubr.f32.gmra.mxu0 %v1473
  %v1734 = vpop.f32.mrf.mxu0
  %v1735 = vadd.f32 %v1405, %v1734
  %v1736 = vpop.f32.mrf.mxu0
  %v1737 = vadd.f32 %v1409, %v1736
  %1738 = vmatprep.mubr.f32.mxu0 0.0
  %1739 = vmatmul.mubr.f32.gmra.mxu0 %v1476
  %v1740 = vpop.f32.mrf.mxu0
  %v1741 = vadd.f32 %v1405, %v1740
  %v1742 = vpop.f32.mrf.mxu0
  %v1743 = vadd.f32 %v1409, %v1742
  %1744 = vdwg.mxu0
  %1745 = vmatprep.subr.mxu0 0.0
  %1746 = vmatpush1.msra.mxu0 0.0
  %1747 = vmatprep.subr.mxu0 0.0
  %1748 = vmatpush1.msra.mxu0 0.0
  %1749 = vmatprep.subr.mxu0 0.0
  %1750 = vmatpush1.msra.mxu0 0.0
  %1751 = vmatprep.subr.mxu0 0.0
  %1752 = vmatpush1.msra.mxu0 0.0
  %1753 = vmatprep.subr.mxu0 0.0
  %1754 = vmatpush1.msra.mxu0 0.0
  %1755 = vmatprep.subr.mxu0 0.0
  %1756 = vmatpush1.msra.mxu0 0.0
  %1757 = vmatprep.subr.mxu0 0.0
  %1758 = vmatpush1.msra.mxu0 0.0
  %1759 = vmatprep.subr.mxu0 0.0
  %1760 = vmatpush1.msra.mxu0 0.0
  %1761 = vmatprep.subr.mxu0 0.0
  %1762 = vmatpush1.msra.mxu0 0.0
  %1763 = vmatprep.subr.mxu0 0.0
  %1764 = vmatpush1.msra.mxu0 0.0
  %1765 = vmatprep.subr.mxu0 0.0
  %1766 = vmatpush1.msra.mxu0 0.0
  %1767 = vmatprep.subr.mxu0 0.0
  %1768 = vmatpush1.msra.mxu0 0.0
  %1769 = vmatprep.subr.mxu0 %v1373
  %1770 = vmatpush1.msra.mxu0 %v1372
  %1771 = vmatprep.subr.mxu0 %v1357
  %1772 = vmatpush1.msra.mxu0 %v1356
  %1773 = vmatprep.subr.mxu0 %v1341
  %1774 = vmatpush1.msra.mxu0 %v1340
  %1775 = vmatprep.subr.mxu0 %v1325
  %1776 = vmatpush1.msra.mxu0 %v1324
  %1777 = vmatprep.subr.mxu0 0.0
  %1778 = vmatpush2.msra.mxu0 0.0
  %1779 = vmatprep.subr.mxu0 0.0
  %1780 = vmatpush2.msra.mxu0 0.0
  %1781 = vmatprep.subr.mxu0 0.0
  %1782 = vmatpush2.msra.mxu0 0.0
  %1783 = vmatprep.subr.mxu0 0.0
  %1784 = vmatpush2.msra.mxu0 0.0
  %1785 = vmatprep.subr.mxu0 0.0
  %1786 = vmatpush2.msra.mxu0 0.0
  %1787 = vmatprep.subr.mxu0 0.0
  %1788 = vmatpush2.msra.mxu0 0.0
  %1789 = vmatprep.subr.mxu0 0.0
  %1790 = vmatpush2.msra.mxu0 0.0
  %1791 = vmatprep.subr.mxu0 0.0
  %1792 = vmatpush2.msra.mxu0 0.0
  %1793 = vmatprep.subr.mxu0 0.0
  %1794 = vmatpush2.msra.mxu0 0.0
  %1795 = vmatprep.subr.mxu0 0.0
  %1796 = vmatpush2.msra.mxu0 0.0
  %1797 = vmatprep.subr.mxu0 0.0
  %1798 = vmatpush2.msra.mxu0 0.0
  %1799 = vmatprep.subr.mxu0 0.0
  %1800 = vmatpush2.msra.mxu0 0.0
  %1801 = vmatprep.subr.mxu0 0.0
  %1802 = vmatpush2.msra.mxu0 0.0
  %1803 = vmatprep.subr.mxu0 0.0
  %1804 = vmatpush2.msra.mxu0 0.0
  %1805 = vmatprep.subr.mxu0 0.0
  %1806 = vmatpush2.msra.mxu0 0.0
  %1807 = vmatprep.subr.mxu0 0.0
  %1808 = vmatpush2.msra.mxu0 0.0
  %1809 = vmatprep.mubr.f32.mxu0 0.0
  %1810 = vmatmul.mubr.f32.gmra.mxu0 %v1467
  %v1811 = vpop.f32.mrf.mxu0
  %v1812 = vadd.f32 %v1413, %v1811
  %v1813 = vpop.f32.mrf.mxu0
  %v1814 = vadd.f32 %v1417, %v1813
  %1815 = vmatprep.mubr.f32.mxu0 0.0
  %1816 = vmatmul.mubr.f32.gmra.mxu0 %v1470
  %v1817 = vpop.f32.mrf.mxu0
  %v1818 = vadd.f32 %v1413, %v1817
  %v1819 = vpop.f32.mrf.mxu0
  %v1820 = vadd.f32 %v1417, %v1819
  %1821 = vmatprep.mubr.f32.mxu0 0.0
  %1822 = vmatmul.mubr.f32.gmra.mxu0 %v1473
  %v1823 = vpop.f32.mrf.mxu0
  %v1824 = vadd.f32 %v1413, %v1823
  %v1825 = vpop.f32.mrf.mxu0
  %v1826 = vadd.f32 %v1417, %v1825
  %1827 = vmatprep.mubr.f32.mxu0 0.0
  %1828 = vmatmul.mubr.f32.gmra.mxu0 %v1476
  %v1829 = vpop.f32.mrf.mxu0
  %v1830 = vadd.f32 %v1413, %v1829
  %v1831 = vpop.f32.mrf.mxu0
  %v1832 = vadd.f32 %v1417, %v1831
  %1833 = vdwg.mxu0
  %1834 = vmatprep.subr.mxu0 0.0
  %1835 = vmatpush1.msra.mxu0 0.0
  %1836 = vmatprep.subr.mxu0 0.0
  %1837 = vmatpush1.msra.mxu0 0.0
  %1838 = vmatprep.subr.mxu0 0.0
  %1839 = vmatpush1.msra.mxu0 0.0
  %1840 = vmatprep.subr.mxu0 0.0
  %1841 = vmatpush1.msra.mxu0 0.0
  %1842 = vmatprep.subr.mxu0 0.0
  %1843 = vmatpush1.msra.mxu0 0.0
  %1844 = vmatprep.subr.mxu0 0.0
  %1845 = vmatpush1.msra.mxu0 0.0
  %1846 = vmatprep.subr.mxu0 0.0
  %1847 = vmatpush1.msra.mxu0 0.0
  %1848 = vmatprep.subr.mxu0 0.0
  %1849 = vmatpush1.msra.mxu0 0.0
  %1850 = vmatprep.subr.mxu0 0.0
  %1851 = vmatpush1.msra.mxu0 0.0
  %1852 = vmatprep.subr.mxu0 0.0
  %1853 = vmatpush1.msra.mxu0 0.0
  %1854 = vmatprep.subr.mxu0 0.0
  %1855 = vmatpush1.msra.mxu0 0.0
  %1856 = vmatprep.subr.mxu0 0.0
  %1857 = vmatpush1.msra.mxu0 0.0
  %1858 = vmatprep.subr.mxu0 %v1375
  %1859 = vmatpush1.msra.mxu0 %v1374
  %1860 = vmatprep.subr.mxu0 %v1359
  %1861 = vmatpush1.msra.mxu0 %v1358
  %1862 = vmatprep.subr.mxu0 %v1343
  %1863 = vmatpush1.msra.mxu0 %v1342
  %1864 = vmatprep.subr.mxu0 %v1327
  %1865 = vmatpush1.msra.mxu0 %v1326
  %1866 = vmatprep.subr.mxu0 0.0
  %1867 = vmatpush2.msra.mxu0 0.0
  %1868 = vmatprep.subr.mxu0 0.0
  %1869 = vmatpush2.msra.mxu0 0.0
  %1870 = vmatprep.subr.mxu0 0.0
  %1871 = vmatpush2.msra.mxu0 0.0
  %1872 = vmatprep.subr.mxu0 0.0
  %1873 = vmatpush2.msra.mxu0 0.0
  %1874 = vmatprep.subr.mxu0 0.0
  %1875 = vmatpush2.msra.mxu0 0.0
  %1876 = vmatprep.subr.mxu0 0.0
  %1877 = vmatpush2.msra.mxu0 0.0
  %1878 = vmatprep.subr.mxu0 0.0
  %1879 = vmatpush2.msra.mxu0 0.0
  %1880 = vmatprep.subr.mxu0 0.0
  %1881 = vmatpush2.msra.mxu0 0.0
  %1882 = vmatprep.subr.mxu0 0.0
  %1883 = vmatpush2.msra.mxu0 0.0
  %1884 = vmatprep.subr.mxu0 0.0
  %1885 = vmatpush2.msra.mxu0 0.0
  %1886 = vmatprep.subr.mxu0 0.0
  %1887 = vmatpush2.msra.mxu0 0.0
  %1888 = vmatprep.subr.mxu0 0.0
  %1889 = vmatpush2.msra.mxu0 0.0
  %1890 = vmatprep.subr.mxu0 0.0
  %1891 = vmatpush2.msra.mxu0 0.0
  %1892 = vmatprep.subr.mxu0 0.0
  %1893 = vmatpush2.msra.mxu0 0.0
  %1894 = vmatprep.subr.mxu0 0.0
  %1895 = vmatpush2.msra.mxu0 0.0
  %1896 = vmatprep.subr.mxu0 0.0
  %1897 = vmatpush2.msra.mxu0 0.0
  %1898 = vmatprep.mubr.f32.mxu0 0.0
  %1899 = vmatmul.mubr.f32.gmra.mxu0 %v1467
  %v1900 = vpop.f32.mrf.mxu0
  %v1901 = vadd.f32 %v1421, %v1900
  %v1902 = vpop.f32.mrf.mxu0
  %v1903 = vadd.f32 %v1425, %v1902
  %1904 = vmatprep.mubr.f32.mxu0 0.0
  %1905 = vmatmul.mubr.f32.gmra.mxu0 %v1470
  %v1906 = vpop.f32.mrf.mxu0
  %v1907 = vadd.f32 %v1421, %v1906
  %v1908 = vpop.f32.mrf.mxu0
  %v1909 = vadd.f32 %v1425, %v1908
  %1910 = vmatprep.mubr.f32.mxu0 0.0
  %1911 = vmatmul.mubr.f32.gmra.mxu0 %v1473
  %v1912 = vpop.f32.mrf.mxu0
  %v1913 = vadd.f32 %v1421, %v1912
  %v1914 = vpop.f32.mrf.mxu0
  %v1915 = vadd.f32 %v1425, %v1914
  %1916 = vmatprep.mubr.f32.mxu0 0.0
  %1917 = vmatmul.mubr.f32.gmra.mxu0 %v1476
  %v1918 = vpop.f32.mrf.mxu0
  %v1919 = vadd.f32 %v1421, %v1918
  %v1920 = vpop.f32.mrf.mxu0
  %v1921 = vadd.f32 %v1425, %v1920
  %1922 = vdwg.mxu0
  %1923 = vmatprep.subr.mxu0 0.0
  %1924 = vmatpush1.msra.mxu0 0.0
  %1925 = vmatprep.subr.mxu0 0.0
  %1926 = vmatpush1.msra.mxu0 0.0
  %1927 = vmatprep.subr.mxu0 0.0
  %1928 = vmatpush1.msra.mxu0 0.0
  %1929 = vmatprep.subr.mxu0 0.0
  %1930 = vmatpush1.msra.mxu0 0.0
  %1931 = vmatprep.subr.mxu0 0.0
  %1932 = vmatpush1.msra.mxu0 0.0
  %1933 = vmatprep.subr.mxu0 0.0
  %1934 = vmatpush1.msra.mxu0 0.0
  %1935 = vmatprep.subr.mxu0 0.0
  %1936 = vmatpush1.msra.mxu0 0.0
  %1937 = vmatprep.subr.mxu0 0.0
  %1938 = vmatpush1.msra.mxu0 0.0
  %1939 = vmatprep.subr.mxu0 0.0
  %1940 = vmatpush1.msra.mxu0 0.0
  %1941 = vmatprep.subr.mxu0 0.0
  %1942 = vmatpush1.msra.mxu0 0.0
  %1943 = vmatprep.subr.mxu0 0.0
  %1944 = vmatpush1.msra.mxu0 0.0
  %1945 = vmatprep.subr.mxu0 0.0
  %1946 = vmatpush1.msra.mxu0 0.0
  %1947 = vmatprep.subr.mxu0 %v1377
  %1948 = vmatpush1.msra.mxu0 %v1376
  %1949 = vmatprep.subr.mxu0 %v1361
  %1950 = vmatpush1.msra.mxu0 %v1360
  %1951 = vmatprep.subr.mxu0 %v1345
  %1952 = vmatpush1.msra.mxu0 %v1344
  %1953 = vmatprep.subr.mxu0 %v1329
  %1954 = vmatpush1.msra.mxu0 %v1328
  %1955 = vmatprep.subr.mxu0 0.0
  %1956 = vmatpush2.msra.mxu0 0.0
  %1957 = vmatprep.subr.mxu0 0.0
  %1958 = vmatpush2.msra.mxu0 0.0
  %1959 = vmatprep.subr.mxu0 0.0
  %1960 = vmatpush2.msra.mxu0 0.0
  %1961 = vmatprep.subr.mxu0 0.0
  %1962 = vmatpush2.msra.mxu0 0.0
  %1963 = vmatprep.subr.mxu0 0.0
  %1964 = vmatpush2.msra.mxu0 0.0
  %1965 = vmatprep.subr.mxu0 0.0
  %1966 = vmatpush2.msra.mxu0 0.0
  %1967 = vmatprep.subr.mxu0 0.0
  %1968 = vmatpush2.msra.mxu0 0.0
  %1969 = vmatprep.subr.mxu0 0.0
  %1970 = vmatpush2.msra.mxu0 0.0
  %1971 = vmatprep.subr.mxu0 0.0
  %1972 = vmatpush2.msra.mxu0 0.0
  %1973 = vmatprep.subr.mxu0 0.0
  %1974 = vmatpush2.msra.mxu0 0.0
  %1975 = vmatprep.subr.mxu0 0.0
  %1976 = vmatpush2.msra.mxu0 0.0
  %1977 = vmatprep.subr.mxu0 0.0
  %1978 = vmatpush2.msra.mxu0 0.0
  %1979 = vmatprep.subr.mxu0 0.0
  %1980 = vmatpush2.msra.mxu0 0.0
  %1981 = vmatprep.subr.mxu0 0.0
  %1982 = vmatpush2.msra.mxu0 0.0
  %1983 = vmatprep.subr.mxu0 0.0
  %1984 = vmatpush2.msra.mxu0 0.0
  %1985 = vmatprep.subr.mxu0 0.0
  %1986 = vmatpush2.msra.mxu0 0.0
  %1987 = vmatprep.mubr.f32.mxu0 0.0
  %1988 = vmatmul.mubr.f32.gmra.mxu0 %v1467
  %v1989 = vpop.f32.mrf.mxu0
  %v1990 = vadd.f32 %v1429, %v1989
  %v1991 = vpop.f32.mrf.mxu0
  %v1992 = vadd.f32 %v1433, %v1991
  %1993 = vmatprep.mubr.f32.mxu0 0.0
  %1994 = vmatmul.mubr.f32.gmra.mxu0 %v1470
  %v1995 = vpop.f32.mrf.mxu0
  %v1996 = vadd.f32 %v1429, %v1995
  %v1997 = vpop.f32.mrf.mxu0
  %v1998 = vadd.f32 %v1433, %v1997
  %1999 = vmatprep.mubr.f32.mxu0 0.0
  %2000 = vmatmul.mubr.f32.gmra.mxu0 %v1473
  %v2001 = vpop.f32.mrf.mxu0
  %v2002 = vadd.f32 %v1429, %v2001
  %v2003 = vpop.f32.mrf.mxu0
  %v2004 = vadd.f32 %v1433, %v2003
  %2005 = vmatprep.mubr.f32.mxu0 0.0
  %2006 = vmatmul.mubr.f32.gmra.mxu0 %v1476
  %v2007 = vpop.f32.mrf.mxu0
  %v2008 = vadd.f32 %v1429, %v2007
  %v2009 = vpop.f32.mrf.mxu0
  %v2010 = vadd.f32 %v1433, %v2009
  %2011 = vdwg.mxu0
  %2012 = vmatprep.subr.mxu0 0.0
  %2013 = vmatpush1.msra.mxu0 0.0
  %2014 = vmatprep.subr.mxu0 0.0
  %2015 = vmatpush1.msra.mxu0 0.0
  %2016 = vmatprep.subr.mxu0 0.0
  %2017 = vmatpush1.msra.mxu0 0.0
  %2018 = vmatprep.subr.mxu0 0.0
  %2019 = vmatpush1.msra.mxu0 0.0
  %2020 = vmatprep.subr.mxu0 0.0
  %2021 = vmatpush1.msra.mxu0 0.0
  %2022 = vmatprep.subr.mxu0 0.0
  %2023 = vmatpush1.msra.mxu0 0.0
  %2024 = vmatprep.subr.mxu0 0.0
  %2025 = vmatpush1.msra.mxu0 0.0
  %2026 = vmatprep.subr.mxu0 0.0
  %2027 = vmatpush1.msra.mxu0 0.0
  %2028 = vmatprep.subr.mxu0 0.0
  %2029 = vmatpush1.msra.mxu0 0.0
  %2030 = vmatprep.subr.mxu0 0.0
  %2031 = vmatpush1.msra.mxu0 0.0
  %2032 = vmatprep.subr.mxu0 0.0
  %2033 = vmatpush1.msra.mxu0 0.0
  %2034 = vmatprep.subr.mxu0 0.0
  %2035 = vmatpush1.msra.mxu0 0.0
  %2036 = vmatprep.subr.mxu0 %v1379
  %2037 = vmatpush1.msra.mxu0 %v1378
  %2038 = vmatprep.subr.mxu0 %v1363
  %2039 = vmatpush1.msra.mxu0 %v1362
  %2040 = vmatprep.subr.mxu0 %v1347
  %2041 = vmatpush1.msra.mxu0 %v1346
  %2042 = vmatprep.subr.mxu0 %v1331
  %2043 = vmatpush1.msra.mxu0 %v1330
  %2044 = vmatprep.subr.mxu0 0.0
  %2045 = vmatpush2.msra.mxu0 0.0
  %2046 = vmatprep.subr.mxu0 0.0
  %2047 = vmatpush2.msra.mxu0 0.0
  %2048 = vmatprep.subr.mxu0 0.0
  %2049 = vmatpush2.msra.mxu0 0.0
  %2050 = vmatprep.subr.mxu0 0.0
  %2051 = vmatpush2.msra.mxu0 0.0
  %2052 = vmatprep.subr.mxu0 0.0
  %2053 = vmatpush2.msra.mxu0 0.0
  %2054 = vmatprep.subr.mxu0 0.0
  %2055 = vmatpush2.msra.mxu0 0.0
  %2056 = vmatprep.subr.mxu0 0.0
  %2057 = vmatpush2.msra.mxu0 0.0
  %2058 = vmatprep.subr.mxu0 0.0
  %2059 = vmatpush2.msra.mxu0 0.0
  %2060 = vmatprep.subr.mxu0 0.0
  %2061 = vmatpush2.msra.mxu0 0.0
  %2062 = vmatprep.subr.mxu0 0.0
  %2063 = vmatpush2.msra.mxu0 0.0
  %2064 = vmatprep.subr.mxu0 0.0
  %2065 = vmatpush2.msra.mxu0 0.0
  %2066 = vmatprep.subr.mxu0 0.0
  %2067 = vmatpush2.msra.mxu0 0.0
  %2068 = vmatprep.subr.mxu0 0.0
  %2069 = vmatpush2.msra.mxu0 0.0
  %2070 = vmatprep.subr.mxu0 0.0
  %2071 = vmatpush2.msra.mxu0 0.0
  %2072 = vmatprep.subr.mxu0 0.0
  %2073 = vmatpush2.msra.mxu0 0.0
  %2074 = vmatprep.subr.mxu0 0.0
  %2075 = vmatpush2.msra.mxu0 0.0
  %2076 = vmatprep.mubr.f32.mxu0 0.0
  %2077 = vmatmul.mubr.f32.gmra.mxu0 %v1467
  %v2078 = vpop.f32.mrf.mxu0
  %v2079 = vadd.f32 %v1437, %v2078
  %v2080 = vpop.f32.mrf.mxu0
  %v2081 = vadd.f32 %v1441, %v2080
  %2082 = vmatprep.mubr.f32.mxu0 0.0
  %2083 = vmatmul.mubr.f32.gmra.mxu0 %v1470
  %v2084 = vpop.f32.mrf.mxu0
  %v2085 = vadd.f32 %v1437, %v2084
  %v2086 = vpop.f32.mrf.mxu0
  %v2087 = vadd.f32 %v1441, %v2086
  %2088 = vmatprep.mubr.f32.mxu0 0.0
  %2089 = vmatmul.mubr.f32.gmra.mxu0 %v1473
  %v2090 = vpop.f32.mrf.mxu0
  %v2091 = vadd.f32 %v1437, %v2090
  %v2092 = vpop.f32.mrf.mxu0
  %v2093 = vadd.f32 %v1441, %v2092
  %2094 = vmatprep.mubr.f32.mxu0 0.0
  %2095 = vmatmul.mubr.f32.gmra.mxu0 %v1476
  %v2096 = vpop.f32.mrf.mxu0
  %v2097 = vadd.f32 %v1437, %v2096
  %v2098 = vpop.f32.mrf.mxu0
  %v2099 = vadd.f32 %v1441, %v2098
  %2100 = vdwg.mxu0
  %2101 = vmatprep.subr.mxu0 0.0
  %2102 = vmatpush1.msra.mxu0 0.0
  %2103 = vmatprep.subr.mxu0 0.0
  %2104 = vmatpush1.msra.mxu0 0.0
  %2105 = vmatprep.subr.mxu0 0.0
  %2106 = vmatpush1.msra.mxu0 0.0
  %2107 = vmatprep.subr.mxu0 0.0
  %2108 = vmatpush1.msra.mxu0 0.0
  %2109 = vmatprep.subr.mxu0 0.0
  %2110 = vmatpush1.msra.mxu0 0.0
  %2111 = vmatprep.subr.mxu0 0.0
  %2112 = vmatpush1.msra.mxu0 0.0
  %2113 = vmatprep.subr.mxu0 0.0
  %2114 = vmatpush1.msra.mxu0 0.0
  %2115 = vmatprep.subr.mxu0 0.0
  %2116 = vmatpush1.msra.mxu0 0.0
  %2117 = vmatprep.subr.mxu0 0.0
  %2118 = vmatpush1.msra.mxu0 0.0
  %2119 = vmatprep.subr.mxu0 0.0
  %2120 = vmatpush1.msra.mxu0 0.0
  %2121 = vmatprep.subr.mxu0 0.0
  %2122 = vmatpush1.msra.mxu0 0.0
  %2123 = vmatprep.subr.mxu0 0.0
  %2124 = vmatpush1.msra.mxu0 0.0
  %2125 = vmatprep.subr.mxu0 %v1381
  %2126 = vmatpush1.msra.mxu0 %v1380
  %2127 = vmatprep.subr.mxu0 %v1365
  %2128 = vmatpush1.msra.mxu0 %v1364
  %2129 = vmatprep.subr.mxu0 %v1349
  %2130 = vmatpush1.msra.mxu0 %v1348
  %2131 = vmatprep.subr.mxu0 %v1333
  %2132 = vmatpush1.msra.mxu0 %v1332
  %2133 = vmatprep.subr.mxu0 0.0
  %2134 = vmatpush2.msra.mxu0 0.0
  %2135 = vmatprep.subr.mxu0 0.0
  %2136 = vmatpush2.msra.mxu0 0.0
  %2137 = vmatprep.subr.mxu0 0.0
  %2138 = vmatpush2.msra.mxu0 0.0
  %2139 = vmatprep.subr.mxu0 0.0
  %2140 = vmatpush2.msra.mxu0 0.0
  %2141 = vmatprep.subr.mxu0 0.0
  %2142 = vmatpush2.msra.mxu0 0.0
  %2143 = vmatprep.subr.mxu0 0.0
  %2144 = vmatpush2.msra.mxu0 0.0
  %2145 = vmatprep.subr.mxu0 0.0
  %2146 = vmatpush2.msra.mxu0 0.0
  %2147 = vmatprep.subr.mxu0 0.0
  %2148 = vmatpush2.msra.mxu0 0.0
  %2149 = vmatprep.subr.mxu0 0.0
  %2150 = vmatpush2.msra.mxu0 0.0
  %2151 = vmatprep.subr.mxu0 0.0
  %2152 = vmatpush2.msra.mxu0 0.0
  %2153 = vmatprep.subr.mxu0 0.0
  %2154 = vmatpush2.msra.mxu0 0.0
  %2155 = vmatprep.subr.mxu0 0.0
  %2156 = vmatpush2.msra.mxu0 0.0
  %2157 = vmatprep.subr.mxu0 0.0
  %2158 = vmatpush2.msra.mxu0 0.0
  %2159 = vmatprep.subr.mxu0 0.0
  %2160 = vmatpush2.msra.mxu0 0.0
  %2161 = vmatprep.subr.mxu0 0.0
  %2162 = vmatpush2.msra.mxu0 0.0
  %2163 = vmatprep.subr.mxu0 0.0
  %2164 = vmatpush2.msra.mxu0 0.0
  %2165 = vmatprep.mubr.f32.mxu0 0.0
  %2166 = vmatmul.mubr.f32.gmra.mxu0 %v1467
  %v2167 = vpop.f32.mrf.mxu0
  %v2168 = vadd.f32 %v1445, %v2167
  %v2169 = vpop.f32.mrf.mxu0
  %v2170 = vadd.f32 %v1449, %v2169
  %2171 = vmatprep.mubr.f32.mxu0 0.0
  %2172 = vmatmul.mubr.f32.gmra.mxu0 %v1470
  %v2173 = vpop.f32.mrf.mxu0
  %v2174 = vadd.f32 %v1445, %v2173
  %v2175 = vpop.f32.mrf.mxu0
  %v2176 = vadd.f32 %v1449, %v2175
  %2177 = vmatprep.mubr.f32.mxu0 0.0
  %2178 = vmatmul.mubr.f32.gmra.mxu0 %v1473
  %v2179 = vpop.f32.mrf.mxu0
  %v2180 = vadd.f32 %v1445, %v2179
  %v2181 = vpop.f32.mrf.mxu0
  %v2182 = vadd.f32 %v1449, %v2181
  %2183 = vmatprep.mubr.f32.mxu0 0.0
  %2184 = vmatmul.mubr.f32.gmra.mxu0 %v1476
  %v2185 = vpop.f32.mrf.mxu0
  %v2186 = vadd.f32 %v1445, %v2185
  %v2187 = vpop.f32.mrf.mxu0
  %v2188 = vadd.f32 %v1449, %v2187
  %2189 = vdwg.mxu0
  %v2190 = vmax.f32 %v1545, 0.0
  %v2191 = vmax.f32 %v1547, 0.0
  %v2192 = vmax.f32 %v1634, 0.0
  %v2193 = vmax.f32 %v1636, 0.0
  %v2194 = vmax.f32 %v1723, 0.0
  %v2195 = vmax.f32 %v1725, 0.0
  %v2196 = vmax.f32 %v1812, 0.0
  %v2197 = vmax.f32 %v1814, 0.0
  %v2198 = vmax.f32 %v1901, 0.0
  %v2199 = vmax.f32 %v1903, 0.0
  %v2200 = vmax.f32 %v1990, 0.0
  %v2201 = vmax.f32 %v1992, 0.0
  %v2202 = vmax.f32 %v2079, 0.0
  %v2203 = vmax.f32 %v2081, 0.0
  %v2204 = vmax.f32 %v2168, 0.0
  %v2205 = vmax.f32 %v2170, 0.0
  %v2206 = vmax.f32 %v1551, 0.0
  %v2207 = vmax.f32 %v1553, 0.0
  %v2208 = vmax.f32 %v1640, 0.0
  %v2209 = vmax.f32 %v1642, 0.0
  %v2210 = vmax.f32 %v1729, 0.0
  %v2211 = vmax.f32 %v1731, 0.0
  %v2212 = vmax.f32 %v1818, 0.0
  %v2213 = vmax.f32 %v1820, 0.0
  %v2214 = vmax.f32 %v1907, 0.0
  %v2215 = vmax.f32 %v1909, 0.0
  %v2216 = vmax.f32 %v1996, 0.0
  %v2217 = vmax.f32 %v1998, 0.0
  %v2218 = vmax.f32 %v2085, 0.0
  %v2219 = vmax.f32 %v2087, 0.0
  %v2220 = vmax.f32 %v2174, 0.0
  %v2221 = vmax.f32 %v2176, 0.0
  %v2222 = vmax.f32 %v1557, 0.0
  %v2223 = vmax.f32 %v1559, 0.0
  %v2224 = vmax.f32 %v1646, 0.0
  %v2225 = vmax.f32 %v1648, 0.0
  %v2226 = vmax.f32 %v1735, 0.0
  %v2227 = vmax.f32 %v1737, 0.0
  %v2228 = vmax.f32 %v1824, 0.0
  %v2229 = vmax.f32 %v1826, 0.0
  %v2230 = vmax.f32 %v1913, 0.0
  %v2231 = vmax.f32 %v1915, 0.0
  %v2232 = vmax.f32 %v2002, 0.0
  %v2233 = vmax.f32 %v2004, 0.0
  %v2234 = vmax.f32 %v2091, 0.0
  %v2235 = vmax.f32 %v2093, 0.0
  %v2236 = vmax.f32 %v2180, 0.0
  %v2237 = vmax.f32 %v2182, 0.0
  %v2238 = vmax.f32 %v1563, 0.0
  %v2239 = vmax.f32 %v1565, 0.0
  %v2240 = vmax.f32 %v1652, 0.0
  %v2241 = vmax.f32 %v1654, 0.0
  %v2242 = vmax.f32 %v1741, 0.0
  %v2243 = vmax.f32 %v1743, 0.0
  %v2244 = vmax.f32 %v1830, 0.0
  %v2245 = vmax.f32 %v1832, 0.0
  %v2246 = vmax.f32 %v1919, 0.0
  %v2247 = vmax.f32 %v1921, 0.0
  %v2248 = vmax.f32 %v2008, 0.0
  %v2249 = vmax.f32 %v2010, 0.0
  %v2250 = vmax.f32 %v2097, 0.0
  %v2251 = vmax.f32 %v2099, 0.0
  %v2252 = vmax.f32 %v2186, 0.0
  %v2253 = vmax.f32 %v2188, 0.0
  %v2254 = vld [vmem:[%s31] sm:$0xff]
  %v2255 = vld [vmem:[%s31 + $0x8] sm:$0xff]
  %v2256 = vld [vmem:[%s31 + $0x10] sm:$0xff]
  %v2257 = vld [vmem:[%s31 + $0x18] sm:$0xff]
  %v2258 = vld [vmem:[%s31 + $0x20] sm:$0xff]
  %v2259 = vld [vmem:[%s31 + $0x28] sm:$0xff]
  %v2260 = vld [vmem:[%s31 + $0x30] sm:$0xff]
  %v2261 = vld [vmem:[%s31 + $0x38] sm:$0xff]
  %v2262 = vld [vmem:[%s31 + $0x40] sm:$0xff]
  %v2263 = vld [vmem:[%s31 + $0x48] sm:$0xff]
  %v2264 = vld [vmem:[%s31 + $0x50] sm:$0xff]
  %v2265 = vld [vmem:[%s31 + $0x58] sm:$0xff]
  %v2266 = vld [vmem:[%s31 + $0x60] sm:$0xff]
  %v2267 = vld [vmem:[%s31 + $0x68] sm:$0xff]
  %v2268 = vld [vmem:[%s31 + $0x70] sm:$0xff]
  %v2269 = vld [vmem:[%s31 + $0x78] sm:$0xff]
  %v2270 = vld [vmem:[%s31 + $0x80] sm:$0xff]
  %v2271 = vld [vmem:[%s31 + $0x88] sm:$0xff]
  %v2272 = vld [vmem:[%s31 + $0x90] sm:$0xff]
  %v2273 = vld [vmem:[%s31 + $0x98] sm:$0xff]
  %v2274 = vld [vmem:[%s31 + $0xa0] sm:$0xff]
  %v2275 = vld [vmem:[%s31 + $0xa8] sm:$0xff]
  %v2276 = vld [vmem:[%s31 + $0xb0] sm:$0xff]
  %v2277 = vld [vmem:[%s31 + $0xb8] sm:$0xff]
  %v2278 = vld [vmem:[%s31 + $0xc0] sm:$0xff]
  %v2279 = vld [vmem:[%s31 + $0xc8] sm:$0xff]
  %v2280 = vld [vmem:[%s31 + $0xd0] sm:$0xff]
  %v2281 = vld [vmem:[%s31 + $0xd8] sm:$0xff]
  %v2282 = vld [vmem:[%s31 + $0xe0] sm:$0xff]
  %v2283 = vld [vmem:[%s31 + $0xe8] sm:$0xff]
  %v2284 = vld [vmem:[%s31 + $0xf0] sm:$0xff]
  %v2285 = vld [vmem:[%s31 + $0xf8] sm:$0xff]
  %v2286 = vld [vmem:[%s31 + $0x100] sm:$0xff]
  %v2287 = vld [vmem:[%s31 + $0x108] sm:$0xff]
  %v2288 = vld [vmem:[%s31 + $0x110] sm:$0xff]
  %v2289 = vld [vmem:[%s31 + $0x118] sm:$0xff]
  %v2290 = vld [vmem:[%s31 + $0x120] sm:$0xff]
  %v2291 = vld [vmem:[%s31 + $0x128] sm:$0xff]
  %v2292 = vld [vmem:[%s31 + $0x130] sm:$0xff]
  %v2293 = vld [vmem:[%s31 + $0x138] sm:$0xff]
  %v2294 = vld [vmem:[%s31 + $0x140] sm:$0xff]
  %v2295 = vld [vmem:[%s31 + $0x148] sm:$0xff]
  %v2296 = vld [vmem:[%s31 + $0x150] sm:$0xff]
  %v2297 = vld [vmem:[%s31 + $0x158] sm:$0xff]
  %v2298 = vld [vmem:[%s31 + $0x160] sm:$0xff]
  %v2299 = vld [vmem:[%s31 + $0x168] sm:$0xff]
  %v2300 = vld [vmem:[%s31 + $0x170] sm:$0xff]
  %v2301 = vld [vmem:[%s31 + $0x178] sm:$0xff]
  %v2302 = vld [vmem:[%s31 + $0x180] sm:$0xff]
  %v2303 = vld [vmem:[%s31 + $0x188] sm:$0xff]
  %v2304 = vld [vmem:[%s31 + $0x190] sm:$0xff]
  %v2305 = vld [vmem:[%s31 + $0x198] sm:$0xff]
  %v2306 = vld [vmem:[%s31 + $0x1a0] sm:$0xff]
  %v2307 = vld [vmem:[%s31 + $0x1a8] sm:$0xff]
  %v2308 = vld [vmem:[%s31 + $0x1b0] sm:$0xff]
  %v2309 = vld [vmem:[%s31 + $0x1b8] sm:$0xff]
  %v2310 = vld [vmem:[%s31 + $0x1c0] sm:$0xff]
  %v2311 = vld [vmem:[%s31 + $0x1c8] sm:$0xff]
  %v2312 = vld [vmem:[%s31 + $0x1d0] sm:$0xff]
  %v2313 = vld [vmem:[%s31 + $0x1d8] sm:$0xff]
  %v2314 = vld [vmem:[%s31 + $0x1e0] sm:$0xff]
  %v2315 = vld [vmem:[%s31 + $0x1e8] sm:$0xff]
  %v2316 = vld [vmem:[%s31 + $0x1f0] sm:$0xff]
  %v2317 = vld [vmem:[%s31 + $0x1f8] sm:$0xff]
  %v2318 = vld [vmem:[%s31 + $0x200] sm:$0xff]
  %v2319 = vld [vmem:[%s31 + $0x208] sm:$0xff]
  %v2320 = vld [vmem:[%s31 + $0x210] sm:$0xff]
  %v2321 = vld [vmem:[%s31 + $0x218] sm:$0xff]
  %v2322 = vld [vmem:[%s31 + $0x220] sm:$0xff]
  %v2323 = vld [vmem:[%s31 + $0x228] sm:$0xff]
  %v2324 = vld [vmem:[%s31 + $0x230] sm:$0xff]
  %v2325 = vld [vmem:[%s31 + $0x238] sm:$0xff]
  %v2326 = vld [vmem:[%s31 + $0x240] sm:$0xff]
  %v2327 = vld [vmem:[%s31 + $0x248] sm:$0xff]
  %v2328 = vld [vmem:[%s31 + $0x250] sm:$0xff]
  %v2329 = vld [vmem:[%s31 + $0x258] sm:$0xff]
  %v2330 = vld [vmem:[%s31 + $0x260] sm:$0xff]
  %v2331 = vld [vmem:[%s31 + $0x268] sm:$0xff]
  %v2332 = vld [vmem:[%s31 + $0x270] sm:$0xff]
  %v2333 = vld [vmem:[%s31 + $0x278] sm:$0xff]
  %v2334 = vld [vmem:[%s31 + $0x280] sm:$0xff]
  %v2335 = vld [vmem:[%s31 + $0x288] sm:$0xff]
  %v2336 = vld [vmem:[%s31 + $0x290] sm:$0xff]
  %v2337 = vld [vmem:[%s31 + $0x298] sm:$0xff]
  %v2338 = vld [vmem:[%s31 + $0x2a0] sm:$0xff]
  %v2339 = vld [vmem:[%s31 + $0x2a8] sm:$0xff]
  %v2340 = vld [vmem:[%s31 + $0x2b0] sm:$0xff]
  %v2341 = vld [vmem:[%s31 + $0x2b8] sm:$0xff]
  %v2342 = vld [vmem:[%s31 + $0x2c0] sm:$0xff]
  %v2343 = vld [vmem:[%s31 + $0x2c8] sm:$0xff]
  %v2344 = vld [vmem:[%s31 + $0x2d0] sm:$0xff]
  %v2345 = vld [vmem:[%s31 + $0x2d8] sm:$0xff]
  %v2346 = vld [vmem:[%s31 + $0x2e0] sm:$0xff]
  %v2347 = vld [vmem:[%s31 + $0x2e8] sm:$0xff]
  %v2348 = vld [vmem:[%s31 + $0x2f0] sm:$0xff]
  %v2349 = vld [vmem:[%s31 + $0x2f8] sm:$0xff]
  %v2350 = vld [vmem:[%s31 + $0x300] sm:$0xff]
  %v2351 = vld [vmem:[%s31 + $0x308] sm:$0xff]
  %v2352 = vld [vmem:[%s31 + $0x310] sm:$0xff]
  %v2353 = vld [vmem:[%s31 + $0x318] sm:$0xff]
  %v2354 = vld [vmem:[%s31 + $0x320] sm:$0xff]
  %v2355 = vld [vmem:[%s31 + $0x328] sm:$0xff]
  %v2356 = vld [vmem:[%s31 + $0x330] sm:$0xff]
  %v2357 = vld [vmem:[%s31 + $0x338] sm:$0xff]
  %v2358 = vld [vmem:[%s31 + $0x340] sm:$0xff]
  %v2359 = vld [vmem:[%s31 + $0x348] sm:$0xff]
  %v2360 = vld [vmem:[%s31 + $0x350] sm:$0xff]
  %v2361 = vld [vmem:[%s31 + $0x358] sm:$0xff]
  %v2362 = vld [vmem:[%s31 + $0x360] sm:$0xff]
  %v2363 = vld [vmem:[%s31 + $0x368] sm:$0xff]
  %v2364 = vld [vmem:[%s31 + $0x370] sm:$0xff]
  %v2365 = vld [vmem:[%s31 + $0x378] sm:$0xff]
  %v2366 = vld [vmem:[%s31 + $0x380] sm:$0xff]
  %v2367 = vld [vmem:[%s31 + $0x388] sm:$0xff]
  %v2368 = vld [vmem:[%s31 + $0x390] sm:$0xff]
  %v2369 = vld [vmem:[%s31 + $0x398] sm:$0xff]
  %v2370 = vld [vmem:[%s31 + $0x3a0] sm:$0xff]
  %v2371 = vld [vmem:[%s31 + $0x3a8] sm:$0xff]
  %v2372 = vld [vmem:[%s31 + $0x3b0] sm:$0xff]
  %v2373 = vld [vmem:[%s31 + $0x3b8] sm:$0xff]
  %v2374 = vld [vmem:[%s31 + $0x3c0] sm:$0xff]
  %v2375 = vld [vmem:[%s31 + $0x3c8] sm:$0xff]
  %v2376 = vld [vmem:[%s31 + $0x3d0] sm:$0xff]
  %v2377 = vld [vmem:[%s31 + $0x3d8] sm:$0xff]
  %v2378 = vld [vmem:[%s31 + $0x3e0] sm:$0xff]
  %v2379 = vld [vmem:[%s31 + $0x3e8] sm:$0xff]
  %v2380 = vld [vmem:[%s31 + $0x3f0] sm:$0xff]
  %v2381 = vld [vmem:[%s31 + $0x3f8] sm:$0xff]
  %v2382 = vld [vmem:[%s31 + $0x400] sm:$0xff]
  %v2383 = vld [vmem:[%s31 + $0x408] sm:$0xff]
  %v2384 = vld [vmem:[%s31 + $0x410] sm:$0xff]
  %v2385 = vld [vmem:[%s31 + $0x418] sm:$0xff]
  %v2386 = vld [vmem:[%s31 + $0x420] sm:$0xff]
  %v2387 = vld [vmem:[%s31 + $0x428] sm:$0xff]
  %v2388 = vld [vmem:[%s31 + $0x430] sm:$0xff]
  %v2389 = vld [vmem:[%s31 + $0x438] sm:$0xff]
  %v2390 = vld [vmem:[%s31 + $0x440] sm:$0xff]
  %v2391 = vld [vmem:[%s31 + $0x448] sm:$0xff]
  %v2392 = vld [vmem:[%s31 + $0x450] sm:$0xff]
  %v2393 = vld [vmem:[%s31 + $0x458] sm:$0xff]
  %v2394 = vld [vmem:[%s31 + $0x460] sm:$0xff]
  %v2395 = vld [vmem:[%s31 + $0x468] sm:$0xff]
  %v2396 = vld [vmem:[%s31 + $0x470] sm:$0xff]
  %v2397 = vld [vmem:[%s31 + $0x478] sm:$0xff]
  %v2398 = vld [vmem:[%s31 + $0x480] sm:$0xff]
  %v2399 = vld [vmem:[%s31 + $0x488] sm:$0xff]
  %v2400 = vld [vmem:[%s31 + $0x490] sm:$0xff]
  %v2401 = vld [vmem:[%s31 + $0x498] sm:$0xff]
  %v2402 = vld [vmem:[%s31 + $0x4a0] sm:$0xff]
  %v2403 = vld [vmem:[%s31 + $0x4a8] sm:$0xff]
  %v2404 = vld [vmem:[%s31 + $0x4b0] sm:$0xff]
  %v2405 = vld [vmem:[%s31 + $0x4b8] sm:$0xff]
  %v2406 = vld [vmem:[%s31 + $0x4c0] sm:$0xff]
  %v2407 = vld [vmem:[%s31 + $0x4c8] sm:$0xff]
  %v2408 = vld [vmem:[%s31 + $0x4d0] sm:$0xff]
  %v2409 = vld [vmem:[%s31 + $0x4d8] sm:$0xff]
  %v2410 = vld [vmem:[%s31 + $0x4e0] sm:$0xff]
  %v2411 = vld [vmem:[%s31 + $0x4e8] sm:$0xff]
  %v2412 = vld [vmem:[%s31 + $0x4f0] sm:$0xff]
  %v2413 = vld [vmem:[%s31 + $0x4f8] sm:$0xff]
  %v2414 = vld [vmem:[%s31 + $0x500] sm:$0xff]
  %v2415 = vld [vmem:[%s31 + $0x508] sm:$0xff]
  %v2416 = vld [vmem:[%s31 + $0x510] sm:$0xff]
  %v2417 = vld [vmem:[%s31 + $0x518] sm:$0xff]
  %v2418 = vld [vmem:[%s31 + $0x520] sm:$0xff]
  %v2419 = vld [vmem:[%s31 + $0x528] sm:$0xff]
  %v2420 = vld [vmem:[%s31 + $0x530] sm:$0xff]
  %v2421 = vld [vmem:[%s31 + $0x538] sm:$0xff]
  %v2422 = vld [vmem:[%s31 + $0x540] sm:$0xff]
  %v2423 = vld [vmem:[%s31 + $0x548] sm:$0xff]
  %v2424 = vld [vmem:[%s31 + $0x550] sm:$0xff]
  %v2425 = vld [vmem:[%s31 + $0x558] sm:$0xff]
  %v2426 = vld [vmem:[%s31 + $0x560] sm:$0xff]
  %v2427 = vld [vmem:[%s31 + $0x568] sm:$0xff]
  %v2428 = vld [vmem:[%s31 + $0x570] sm:$0xff]
  %v2429 = vld [vmem:[%s31 + $0x578] sm:$0xff]
  %v2430 = vld [vmem:[%s31 + $0x580] sm:$0xff]
  %v2431 = vld [vmem:[%s31 + $0x588] sm:$0xff]
  %v2432 = vld [vmem:[%s31 + $0x590] sm:$0xff]
  %v2433 = vld [vmem:[%s31 + $0x598] sm:$0xff]
  %v2434 = vld [vmem:[%s31 + $0x5a0] sm:$0xff]
  %v2435 = vld [vmem:[%s31 + $0x5a8] sm:$0xff]
  %v2436 = vld [vmem:[%s31 + $0x5b0] sm:$0xff]
  %v2437 = vld [vmem:[%s31 + $0x5b8] sm:$0xff]
  %v2438 = vld [vmem:[%s31 + $0x5c0] sm:$0xff]
  %v2439 = vld [vmem:[%s31 + $0x5c8] sm:$0xff]
  %v2440 = vld [vmem:[%s31 + $0x5d0] sm:$0xff]
  %v2441 = vld [vmem:[%s31 + $0x5d8] sm:$0xff]
  %v2442 = vld [vmem:[%s31 + $0x5e0] sm:$0xff]
  %v2443 = vld [vmem:[%s31 + $0x5e8] sm:$0xff]
  %v2444 = vld [vmem:[%s31 + $0x5f0] sm:$0xff]
  %v2445 = vld [vmem:[%s31 + $0x5f8] sm:$0xff]
  %v2446 = vld [vmem:[%s31 + $0x600] sm:$0xff]
  %v2447 = vld [vmem:[%s31 + $0x608] sm:$0xff]
  %v2448 = vld [vmem:[%s31 + $0x610] sm:$0xff]
  %v2449 = vld [vmem:[%s31 + $0x618] sm:$0xff]
  %v2450 = vld [vmem:[%s31 + $0x620] sm:$0xff]
  %v2451 = vld [vmem:[%s31 + $0x628] sm:$0xff]
  %v2452 = vld [vmem:[%s31 + $0x630] sm:$0xff]
  %v2453 = vld [vmem:[%s31 + $0x638] sm:$0xff]
  %v2454 = vld [vmem:[%s31 + $0x640] sm:$0xff]
  %v2455 = vld [vmem:[%s31 + $0x648] sm:$0xff]
  %v2456 = vld [vmem:[%s31 + $0x650] sm:$0xff]
  %v2457 = vld [vmem:[%s31 + $0x658] sm:$0xff]
  %v2458 = vld [vmem:[%s31 + $0x660] sm:$0xff]
  %v2459 = vld [vmem:[%s31 + $0x668] sm:$0xff]
  %v2460 = vld [vmem:[%s31 + $0x670] sm:$0xff]
  %v2461 = vld [vmem:[%s31 + $0x678] sm:$0xff]
  %v2462 = vld [vmem:[%s31 + $0x680] sm:$0xff]
  %v2463 = vld [vmem:[%s31 + $0x688] sm:$0xff]
  %v2464 = vld [vmem:[%s31 + $0x690] sm:$0xff]
  %v2465 = vld [vmem:[%s31 + $0x698] sm:$0xff]
  %v2466 = vld [vmem:[%s31 + $0x6a0] sm:$0xff]
  %v2467 = vld [vmem:[%s31 + $0x6a8] sm:$0xff]
  %v2468 = vld [vmem:[%s31 + $0x6b0] sm:$0xff]
  %v2469 = vld [vmem:[%s31 + $0x6b8] sm:$0xff]
  %v2470 = vld [vmem:[%s31 + $0x6c0] sm:$0xff]
  %v2471 = vld [vmem:[%s31 + $0x6c8] sm:$0xff]
  %v2472 = vld [vmem:[%s31 + $0x6d0] sm:$0xff]
  %v2473 = vld [vmem:[%s31 + $0x6d8] sm:$0xff]
  %v2474 = vld [vmem:[%s31 + $0x6e0] sm:$0xff]
  %v2475 = vld [vmem:[%s31 + $0x6e8] sm:$0xff]
  %v2476 = vld [vmem:[%s31 + $0x6f0] sm:$0xff]
  %v2477 = vld [vmem:[%s31 + $0x6f8] sm:$0xff]
  %v2478 = vld [vmem:[%s31 + $0x700] sm:$0xff]
  %v2479 = vld [vmem:[%s31 + $0x708] sm:$0xff]
  %v2480 = vld [vmem:[%s31 + $0x710] sm:$0xff]
  %v2481 = vld [vmem:[%s31 + $0x718] sm:$0xff]
  %v2482 = vld [vmem:[%s31 + $0x720] sm:$0xff]
  %v2483 = vld [vmem:[%s31 + $0x728] sm:$0xff]
  %v2484 = vld [vmem:[%s31 + $0x730] sm:$0xff]
  %v2485 = vld [vmem:[%s31 + $0x738] sm:$0xff]
  %v2486 = vld [vmem:[%s31 + $0x740] sm:$0xff]
  %v2487 = vld [vmem:[%s31 + $0x748] sm:$0xff]
  %v2488 = vld [vmem:[%s31 + $0x750] sm:$0xff]
  %v2489 = vld [vmem:[%s31 + $0x758] sm:$0xff]
  %v2490 = vld [vmem:[%s31 + $0x760] sm:$0xff]
  %v2491 = vld [vmem:[%s31 + $0x768] sm:$0xff]
  %v2492 = vld [vmem:[%s31 + $0x770] sm:$0xff]
  %v2493 = vld [vmem:[%s31 + $0x778] sm:$0xff]
  %v2494 = vld [vmem:[%s31 + $0x780] sm:$0xff]
  %v2495 = vld [vmem:[%s31 + $0x788] sm:$0xff]
  %v2496 = vld [vmem:[%s31 + $0x790] sm:$0xff]
  %v2497 = vld [vmem:[%s31 + $0x798] sm:$0xff]
  %v2498 = vld [vmem:[%s31 + $0x7a0] sm:$0xff]
  %v2499 = vld [vmem:[%s31 + $0x7a8] sm:$0xff]
  %v2500 = vld [vmem:[%s31 + $0x7b0] sm:$0xff]
  %v2501 = vld [vmem:[%s31 + $0x7b8] sm:$0xff]
  %v2502 = vld [vmem:[%s31 + $0x7c0] sm:$0xff]
  %v2503 = vld [vmem:[%s31 + $0x7c8] sm:$0xff]
  %v2504 = vld [vmem:[%s31 + $0x7d0] sm:$0xff]
  %v2505 = vld [vmem:[%s31 + $0x7d8] sm:$0xff]
  %v2506 = vld [vmem:[%s31 + $0x7e0] sm:$0xff]
  %v2507 = vld [vmem:[%s31 + $0x7e8] sm:$0xff]
  %v2508 = vld [vmem:[%s31 + $0x7f0] sm:$0xff]
  %v2509 = vld [vmem:[%s31 + $0x7f8] sm:$0xff]
  %v2510 = vld [vmem:[%s33] sm:$0x1]
  %v2512 = vlaneseq
  %v2513 = vshrl.u32 %v2512, 7
  %v2514 = vsub.s32 0, %v2513
  %v2515 = vrot.slane %v2510, %v2514
  %2517 = vmatprep.subr.mxu0 0.0
  %2518 = vmatpush1.msra.mxu0 %v2269
  %2519 = vmatprep.subr.mxu0 0.0
  %2520 = vmatpush1.msra.mxu0 %v2268
  %2521 = vmatprep.subr.mxu0 0.0
  %2522 = vmatpush1.msra.mxu0 %v2267
  %2523 = vmatprep.subr.mxu0 0.0
  %2524 = vmatpush1.msra.mxu0 %v2266
  %2525 = vmatprep.subr.mxu0 0.0
  %2526 = vmatpush1.msra.mxu0 %v2265
  %2527 = vmatprep.subr.mxu0 0.0
  %2528 = vmatpush1.msra.mxu0 %v2264
  %2529 = vmatprep.subr.mxu0 0.0
  %2530 = vmatpush1.msra.mxu0 %v2263
  %2531 = vmatprep.subr.mxu0 0.0
  %2532 = vmatpush1.msra.mxu0 %v2262
  %2533 = vmatprep.subr.mxu0 0.0
  %2534 = vmatpush1.msra.mxu0 %v2261
  %2535 = vmatprep.subr.mxu0 0.0
  %2536 = vmatpush1.msra.mxu0 %v2260
  %2537 = vmatprep.subr.mxu0 0.0
  %2538 = vmatpush1.msra.mxu0 %v2259
  %2539 = vmatprep.subr.mxu0 0.0
  %2540 = vmatpush1.msra.mxu0 %v2258
  %2541 = vmatprep.subr.mxu0 0.0
  %2542 = vmatpush1.msra.mxu0 %v2257
  %2543 = vmatprep.subr.mxu0 0.0
  %2544 = vmatpush1.msra.mxu0 %v2256
  %2545 = vmatprep.subr.mxu0 0.0
  %2546 = vmatpush1.msra.mxu0 %v2255
  %2547 = vmatprep.subr.mxu0 0.0
  %2548 = vmatpush1.msra.mxu0 %v2254
  %2549 = vmatprep.subr.mxu0 0.0
  %2550 = vmatpush2.msra.mxu0 %v2285
  %2551 = vmatprep.subr.mxu0 0.0
  %2552 = vmatpush2.msra.mxu0 %v2284
  %2553 = vmatprep.subr.mxu0 0.0
  %2554 = vmatpush2.msra.mxu0 %v2283
  %2555 = vmatprep.subr.mxu0 0.0
  %2556 = vmatpush2.msra.mxu0 %v2282
  %2557 = vmatprep.subr.mxu0 0.0
  %2558 = vmatpush2.msra.mxu0 %v2281
  %2559 = vmatprep.subr.mxu0 0.0
  %2560 = vmatpush2.msra.mxu0 %v2280
  %2561 = vmatprep.subr.mxu0 0.0
  %2562 = vmatpush2.msra.mxu0 %v2279
  %2563 = vmatprep.subr.mxu0 0.0
  %2564 = vmatpush2.msra.mxu0 %v2278
  %2565 = vmatprep.subr.mxu0 0.0
  %2566 = vmatpush2.msra.mxu0 %v2277
  %2567 = vmatprep.subr.mxu0 0.0
  %2568 = vmatpush2.msra.mxu0 %v2276
  %2569 = vmatprep.subr.mxu0 0.0
  %2570 = vmatpush2.msra.mxu0 %v2275
  %2571 = vmatprep.subr.mxu0 0.0
  %2572 = vmatpush2.msra.mxu0 %v2274
  %2573 = vmatprep.subr.mxu0 0.0
  %2574 = vmatpush2.msra.mxu0 %v2273
  %2575 = vmatprep.subr.mxu0 0.0
  %2576 = vmatpush2.msra.mxu0 %v2272
  %2577 = vmatprep.subr.mxu0 0.0
  %2578 = vmatpush2.msra.mxu0 %v2271
  %2579 = vmatprep.subr.mxu0 0.0
  %2580 = vmatpush2.msra.mxu0 %v2270
  %2581 = vmatprep.mubr.f32.mxu0 %v2191
  %2582 = vmatmul.mubr.f32.gmra.mxu0 %v2190
  %v2583 = vpop.f32.mrf.mxu0
  %v2584 = vadd.f32 %v2515, %v2583
  %v2585 = vpop.f32.mrf.mxu0
  %2586 = vmatprep.mubr.f32.mxu0 %v2207
  %2587 = vmatmul.mubr.f32.gmra.mxu0 %v2206
  %v2588 = vpop.f32.mrf.mxu0
  %v2589 = vadd.f32 %v2515, %v2588
  %v2590 = vpop.f32.mrf.mxu0
  %2591 = vmatprep.mubr.f32.mxu0 %v2223
  %2592 = vmatmul.mubr.f32.gmra.mxu0 %v2222
  %v2593 = vpop.f32.mrf.mxu0
  %v2594 = vadd.f32 %v2515, %v2593
  %v2595 = vpop.f32.mrf.mxu0
  %2596 = vmatprep.mubr.f32.mxu0 %v2239
  %2597 = vmatmul.mubr.f32.gmra.mxu0 %v2238
  %v2598 = vpop.f32.mrf.mxu0
  %v2599 = vadd.f32 %v2515, %v2598
  %v2600 = vpop.f32.mrf.mxu0
  %2601 = vdwg.mxu0
  %2602 = vmatprep.subr.mxu0 0.0
  %2603 = vmatpush1.msra.mxu0 %v2301
  %2604 = vmatprep.subr.mxu0 0.0
  %2605 = vmatpush1.msra.mxu0 %v2300
  %2606 = vmatprep.subr.mxu0 0.0
  %2607 = vmatpush1.msra.mxu0 %v2299
  %2608 = vmatprep.subr.mxu0 0.0
  %2609 = vmatpush1.msra.mxu0 %v2298
  %2610 = vmatprep.subr.mxu0 0.0
  %2611 = vmatpush1.msra.mxu0 %v2297
  %2612 = vmatprep.subr.mxu0 0.0
  %2613 = vmatpush1.msra.mxu0 %v2296
  %2614 = vmatprep.subr.mxu0 0.0
  %2615 = vmatpush1.msra.mxu0 %v2295
  %2616 = vmatprep.subr.mxu0 0.0
  %2617 = vmatpush1.msra.mxu0 %v2294
  %2618 = vmatprep.subr.mxu0 0.0
  %2619 = vmatpush1.msra.mxu0 %v2293
  %2620 = vmatprep.subr.mxu0 0.0
  %2621 = vmatpush1.msra.mxu0 %v2292
  %2622 = vmatprep.subr.mxu0 0.0
  %2623 = vmatpush1.msra.mxu0 %v2291
  %2624 = vmatprep.subr.mxu0 0.0
  %2625 = vmatpush1.msra.mxu0 %v2290
  %2626 = vmatprep.subr.mxu0 0.0
  %2627 = vmatpush1.msra.mxu0 %v2289
  %2628 = vmatprep.subr.mxu0 0.0
  %2629 = vmatpush1.msra.mxu0 %v2288
  %2630 = vmatprep.subr.mxu0 0.0
  %2631 = vmatpush1.msra.mxu0 %v2287
  %2632 = vmatprep.subr.mxu0 0.0
  %2633 = vmatpush1.msra.mxu0 %v2286
  %2634 = vmatprep.subr.mxu0 0.0
  %2635 = vmatpush2.msra.mxu0 %v2317
  %2636 = vmatprep.subr.mxu0 0.0
  %2637 = vmatpush2.msra.mxu0 %v2316
  %2638 = vmatprep.subr.mxu0 0.0
  %2639 = vmatpush2.msra.mxu0 %v2315
  %2640 = vmatprep.subr.mxu0 0.0
  %2641 = vmatpush2.msra.mxu0 %v2314
  %2642 = vmatprep.subr.mxu0 0.0
  %2643 = vmatpush2.msra.mxu0 %v2313
  %2644 = vmatprep.subr.mxu0 0.0
  %2645 = vmatpush2.msra.mxu0 %v2312
  %2646 = vmatprep.subr.mxu0 0.0
  %2647 = vmatpush2.msra.mxu0 %v2311
  %2648 = vmatprep.subr.mxu0 0.0
  %2649 = vmatpush2.msra.mxu0 %v2310
  %2650 = vmatprep.subr.mxu0 0.0
  %2651 = vmatpush2.msra.mxu0 %v2309
  %2652 = vmatprep.subr.mxu0 0.0
  %2653 = vmatpush2.msra.mxu0 %v2308
  %2654 = vmatprep.subr.mxu0 0.0
  %2655 = vmatpush2.msra.mxu0 %v2307
  %2656 = vmatprep.subr.mxu0 0.0
  %2657 = vmatpush2.msra.mxu0 %v2306
  %2658 = vmatprep.subr.mxu0 0.0
  %2659 = vmatpush2.msra.mxu0 %v2305
  %2660 = vmatprep.subr.mxu0 0.0
  %2661 = vmatpush2.msra.mxu0 %v2304
  %2662 = vmatprep.subr.mxu0 0.0
  %2663 = vmatpush2.msra.mxu0 %v2303
  %2664 = vmatprep.subr.mxu0 0.0
  %2665 = vmatpush2.msra.mxu0 %v2302
  %2666 = vmatprep.mubr.f32.mxu0 %v2193
  %2667 = vmatmul.mubr.f32.gmra.mxu0 %v2192
  %v2668 = vpop.f32.mrf.mxu0
  %v2669 = vadd.f32 %v2584, %v2668
  %v2670 = vpop.f32.mrf.mxu0
  %2671 = vmatprep.mubr.f32.mxu0 %v2209
  %2672 = vmatmul.mubr.f32.gmra.mxu0 %v2208
  %v2673 = vpop.f32.mrf.mxu0
  %v2674 = vadd.f32 %v2589, %v2673
  %v2675 = vpop.f32.mrf.mxu0
  %2676 = vmatprep.mubr.f32.mxu0 %v2225
  %2677 = vmatmul.mubr.f32.gmra.mxu0 %v2224
  %v2678 = vpop.f32.mrf.mxu0
  %v2679 = vadd.f32 %v2594, %v2678
  %v2680 = vpop.f32.mrf.mxu0
  %2681 = vmatprep.mubr.f32.mxu0 %v2241
  %2682 = vmatmul.mubr.f32.gmra.mxu0 %v2240
  %v2683 = vpop.f32.mrf.mxu0
  %v2684 = vadd.f32 %v2599, %v2683
  %v2685 = vpop.f32.mrf.mxu0
  %2686 = vdwg.mxu0
  %2687 = vmatprep.subr.mxu0 0.0
  %2688 = vmatpush1.msra.mxu0 %v2333
  %2689 = vmatprep.subr.mxu0 0.0
  %2690 = vmatpush1.msra.mxu0 %v2332
  %2691 = vmatprep.subr.mxu0 0.0
  %2692 = vmatpush1.msra.mxu0 %v2331
  %2693 = vmatprep.subr.mxu0 0.0
  %2694 = vmatpush1.msra.mxu0 %v2330
  %2695 = vmatprep.subr.mxu0 0.0
  %2696 = vmatpush1.msra.mxu0 %v2329
  %2697 = vmatprep.subr.mxu0 0.0
  %2698 = vmatpush1.msra.mxu0 %v2328
  %2699 = vmatprep.subr.mxu0 0.0
  %2700 = vmatpush1.msra.mxu0 %v2327
  %2701 = vmatprep.subr.mxu0 0.0
  %2702 = vmatpush1.msra.mxu0 %v2326
  %2703 = vmatprep.subr.mxu0 0.0
  %2704 = vmatpush1.msra.mxu0 %v2325
  %2705 = vmatprep.subr.mxu0 0.0
  %2706 = vmatpush1.msra.mxu0 %v2324
  %2707 = vmatprep.subr.mxu0 0.0
  %2708 = vmatpush1.msra.mxu0 %v2323
  %2709 = vmatprep.subr.mxu0 0.0
  %2710 = vmatpush1.msra.mxu0 %v2322
  %2711 = vmatprep.subr.mxu0 0.0
  %2712 = vmatpush1.msra.mxu0 %v2321
  %2713 = vmatprep.subr.mxu0 0.0
  %2714 = vmatpush1.msra.mxu0 %v2320
  %2715 = vmatprep.subr.mxu0 0.0
  %2716 = vmatpush1.msra.mxu0 %v2319
  %2717 = vmatprep.subr.mxu0 0.0
  %2718 = vmatpush1.msra.mxu0 %v2318
  %2719 = vmatprep.subr.mxu0 0.0
  %2720 = vmatpush2.msra.mxu0 %v2349
  %2721 = vmatprep.subr.mxu0 0.0
  %2722 = vmatpush2.msra.mxu0 %v2348
  %2723 = vmatprep.subr.mxu0 0.0
  %2724 = vmatpush2.msra.mxu0 %v2347
  %2725 = vmatprep.subr.mxu0 0.0
  %2726 = vmatpush2.msra.mxu0 %v2346
  %2727 = vmatprep.subr.mxu0 0.0
  %2728 = vmatpush2.msra.mxu0 %v2345
  %2729 = vmatprep.subr.mxu0 0.0
  %2730 = vmatpush2.msra.mxu0 %v2344
  %2731 = vmatprep.subr.mxu0 0.0
  %2732 = vmatpush2.msra.mxu0 %v2343
  %2733 = vmatprep.subr.mxu0 0.0
  %2734 = vmatpush2.msra.mxu0 %v2342
  %2735 = vmatprep.subr.mxu0 0.0
  %2736 = vmatpush2.msra.mxu0 %v2341
  %2737 = vmatprep.subr.mxu0 0.0
  %2738 = vmatpush2.msra.mxu0 %v2340
  %2739 = vmatprep.subr.mxu0 0.0
  %2740 = vmatpush2.msra.mxu0 %v2339
  %2741 = vmatprep.subr.mxu0 0.0
  %2742 = vmatpush2.msra.mxu0 %v2338
  %2743 = vmatprep.subr.mxu0 0.0
  %2744 = vmatpush2.msra.mxu0 %v2337
  %2745 = vmatprep.subr.mxu0 0.0
  %2746 = vmatpush2.msra.mxu0 %v2336
  %2747 = vmatprep.subr.mxu0 0.0
  %2748 = vmatpush2.msra.mxu0 %v2335
  %2749 = vmatprep.subr.mxu0 0.0
  %2750 = vmatpush2.msra.mxu0 %v2334
  %2751 = vmatprep.mubr.f32.mxu0 %v2195
  %2752 = vmatmul.mubr.f32.gmra.mxu0 %v2194
  %v2753 = vpop.f32.mrf.mxu0
  %v2754 = vadd.f32 %v2669, %v2753
  %v2755 = vpop.f32.mrf.mxu0
  %2756 = vmatprep.mubr.f32.mxu0 %v2211
  %2757 = vmatmul.mubr.f32.gmra.mxu0 %v2210
  %v2758 = vpop.f32.mrf.mxu0
  %v2759 = vadd.f32 %v2674, %v2758
  %v2760 = vpop.f32.mrf.mxu0
  %2761 = vmatprep.mubr.f32.mxu0 %v2227
  %2762 = vmatmul.mubr.f32.gmra.mxu0 %v2226
  %v2763 = vpop.f32.mrf.mxu0
  %v2764 = vadd.f32 %v2679, %v2763
  %v2765 = vpop.f32.mrf.mxu0
  %2766 = vmatprep.mubr.f32.mxu0 %v2243
  %2767 = vmatmul.mubr.f32.gmra.mxu0 %v2242
  %v2768 = vpop.f32.mrf.mxu0
  %v2769 = vadd.f32 %v2684, %v2768
  %v2770 = vpop.f32.mrf.mxu0
  %2771 = vdwg.mxu0
  %2772 = vmatprep.subr.mxu0 0.0
  %2773 = vmatpush1.msra.mxu0 %v2365
  %2774 = vmatprep.subr.mxu0 0.0
  %2775 = vmatpush1.msra.mxu0 %v2364
  %2776 = vmatprep.subr.mxu0 0.0
  %2777 = vmatpush1.msra.mxu0 %v2363
  %2778 = vmatprep.subr.mxu0 0.0
  %2779 = vmatpush1.msra.mxu0 %v2362
  %2780 = vmatprep.subr.mxu0 0.0
  %2781 = vmatpush1.msra.mxu0 %v2361
  %2782 = vmatprep.subr.mxu0 0.0
  %2783 = vmatpush1.msra.mxu0 %v2360
  %2784 = vmatprep.subr.mxu0 0.0
  %2785 = vmatpush1.msra.mxu0 %v2359
  %2786 = vmatprep.subr.mxu0 0.0
  %2787 = vmatpush1.msra.mxu0 %v2358
  %2788 = vmatprep.subr.mxu0 0.0
  %2789 = vmatpush1.msra.mxu0 %v2357
  %2790 = vmatprep.subr.mxu0 0.0
  %2791 = vmatpush1.msra.mxu0 %v2356
  %2792 = vmatprep.subr.mxu0 0.0
  %2793 = vmatpush1.msra.mxu0 %v2355
  %2794 = vmatprep.subr.mxu0 0.0
  %2795 = vmatpush1.msra.mxu0 %v2354
  %2796 = vmatprep.subr.mxu0 0.0
  %2797 = vmatpush1.msra.mxu0 %v2353
  %2798 = vmatprep.subr.mxu0 0.0
  %2799 = vmatpush1.msra.mxu0 %v2352
  %2800 = vmatprep.subr.mxu0 0.0
  %2801 = vmatpush1.msra.mxu0 %v2351
  %2802 = vmatprep.subr.mxu0 0.0
  %2803 = vmatpush1.msra.mxu0 %v2350
  %2804 = vmatprep.subr.mxu0 0.0
  %2805 = vmatpush2.msra.mxu0 %v2381
  %2806 = vmatprep.subr.mxu0 0.0
  %2807 = vmatpush2.msra.mxu0 %v2380
  %2808 = vmatprep.subr.mxu0 0.0
  %2809 = vmatpush2.msra.mxu0 %v2379
  %2810 = vmatprep.subr.mxu0 0.0
  %2811 = vmatpush2.msra.mxu0 %v2378
  %2812 = vmatprep.subr.mxu0 0.0
  %2813 = vmatpush2.msra.mxu0 %v2377
  %2814 = vmatprep.subr.mxu0 0.0
  %2815 = vmatpush2.msra.mxu0 %v2376
  %2816 = vmatprep.subr.mxu0 0.0
  %2817 = vmatpush2.msra.mxu0 %v2375
  %2818 = vmatprep.subr.mxu0 0.0
  %2819 = vmatpush2.msra.mxu0 %v2374
  %2820 = vmatprep.subr.mxu0 0.0
  %2821 = vmatpush2.msra.mxu0 %v2373
  %2822 = vmatprep.subr.mxu0 0.0
  %2823 = vmatpush2.msra.mxu0 %v2372
  %2824 = vmatprep.subr.mxu0 0.0
  %2825 = vmatpush2.msra.mxu0 %v2371
  %2826 = vmatprep.subr.mxu0 0.0
  %2827 = vmatpush2.msra.mxu0 %v2370
  %2828 = vmatprep.subr.mxu0 0.0
  %2829 = vmatpush2.msra.mxu0 %v2369
  %2830 = vmatprep.subr.mxu0 0.0
  %2831 = vmatpush2.msra.mxu0 %v2368
  %2832 = vmatprep.subr.mxu0 0.0
  %2833 = vmatpush2.msra.mxu0 %v2367
  %2834 = vmatprep.subr.mxu0 0.0
  %2835 = vmatpush2.msra.mxu0 %v2366
  %2836 = vmatprep.mubr.f32.mxu0 %v2197
  %2837 = vmatmul.mubr.f32.gmra.mxu0 %v2196
  %v2838 = vpop.f32.mrf.mxu0
  %v2839 = vadd.f32 %v2754, %v2838
  %v2840 = vpop.f32.mrf.mxu0
  %2841 = vmatprep.mubr.f32.mxu0 %v2213
  %2842 = vmatmul.mubr.f32.gmra.mxu0 %v2212
  %v2843 = vpop.f32.mrf.mxu0
  %v2844 = vadd.f32 %v2759, %v2843
  %v2845 = vpop.f32.mrf.mxu0
  %2846 = vmatprep.mubr.f32.mxu0 %v2229
  %2847 = vmatmul.mubr.f32.gmra.mxu0 %v2228
  %v2848 = vpop.f32.mrf.mxu0
  %v2849 = vadd.f32 %v2764, %v2848
  %v2850 = vpop.f32.mrf.mxu0
  %2851 = vmatprep.mubr.f32.mxu0 %v2245
  %2852 = vmatmul.mubr.f32.gmra.mxu0 %v2244
  %v2853 = vpop.f32.mrf.mxu0
  %v2854 = vadd.f32 %v2769, %v2853
  %v2855 = vpop.f32.mrf.mxu0
  %2856 = vdwg.mxu0
  %2857 = vmatprep.subr.mxu0 0.0
  %2858 = vmatpush1.msra.mxu0 %v2397
  %2859 = vmatprep.subr.mxu0 0.0
  %2860 = vmatpush1.msra.mxu0 %v2396
  %2861 = vmatprep.subr.mxu0 0.0
  %2862 = vmatpush1.msra.mxu0 %v2395
  %2863 = vmatprep.subr.mxu0 0.0
  %2864 = vmatpush1.msra.mxu0 %v2394
  %2865 = vmatprep.subr.mxu0 0.0
  %2866 = vmatpush1.msra.mxu0 %v2393
  %2867 = vmatprep.subr.mxu0 0.0
  %2868 = vmatpush1.msra.mxu0 %v2392
  %2869 = vmatprep.subr.mxu0 0.0
  %2870 = vmatpush1.msra.mxu0 %v2391
  %2871 = vmatprep.subr.mxu0 0.0
  %2872 = vmatpush1.msra.mxu0 %v2390
  %2873 = vmatprep.subr.mxu0 0.0
  %2874 = vmatpush1.msra.mxu0 %v2389
  %2875 = vmatprep.subr.mxu0 0.0
  %2876 = vmatpush1.msra.mxu0 %v2388
  %2877 = vmatprep.subr.mxu0 0.0
  %2878 = vmatpush1.msra.mxu0 %v2387
  %2879 = vmatprep.subr.mxu0 0.0
  %2880 = vmatpush1.msra.mxu0 %v2386
  %2881 = vmatprep.subr.mxu0 0.0
  %2882 = vmatpush1.msra.mxu0 %v2385
  %2883 = vmatprep.subr.mxu0 0.0
  %2884 = vmatpush1.msra.mxu0 %v2384
  %2885 = vmatprep.subr.mxu0 0.0
  %2886 = vmatpush1.msra.mxu0 %v2383
  %2887 = vmatprep.subr.mxu0 0.0
  %2888 = vmatpush1.msra.mxu0 %v2382
  %2889 = vmatprep.subr.mxu0 0.0
  %2890 = vmatpush2.msra.mxu0 %v2413
  %2891 = vmatprep.subr.mxu0 0.0
  %2892 = vmatpush2.msra.mxu0 %v2412
  %2893 = vmatprep.subr.mxu0 0.0
  %2894 = vmatpush2.msra.mxu0 %v2411
  %2895 = vmatprep.subr.mxu0 0.0
  %2896 = vmatpush2.msra.mxu0 %v2410
  %2897 = vmatprep.subr.mxu0 0.0
  %2898 = vmatpush2.msra.mxu0 %v2409
  %2899 = vmatprep.subr.mxu0 0.0
  %2900 = vmatpush2.msra.mxu0 %v2408
  %2901 = vmatprep.subr.mxu0 0.0
  %2902 = vmatpush2.msra.mxu0 %v2407
  %2903 = vmatprep.subr.mxu0 0.0
  %2904 = vmatpush2.msra.mxu0 %v2406
  %2905 = vmatprep.subr.mxu0 0.0
  %2906 = vmatpush2.msra.mxu0 %v2405
  %2907 = vmatprep.subr.mxu0 0.0
  %2908 = vmatpush2.msra.mxu0 %v2404
  %2909 = vmatprep.subr.mxu0 0.0
  %2910 = vmatpush2.msra.mxu0 %v2403
  %2911 = vmatprep.subr.mxu0 0.0
  %2912 = vmatpush2.msra.mxu0 %v2402
  %2913 = vmatprep.subr.mxu0 0.0
  %2914 = vmatpush2.msra.mxu0 %v2401
  %2915 = vmatprep.subr.mxu0 0.0
  %2916 = vmatpush2.msra.mxu0 %v2400
  %2917 = vmatprep.subr.mxu0 0.0
  %2918 = vmatpush2.msra.mxu0 %v2399
  %2919 = vmatprep.subr.mxu0 0.0
  %2920 = vmatpush2.msra.mxu0 %v2398
  %2921 = vmatprep.mubr.f32.mxu0 %v2199
  %2922 = vmatmul.mubr.f32.gmra.mxu0 %v2198
  %v2923 = vpop.f32.mrf.mxu0
  %v2924 = vadd.f32 %v2839, %v2923
  %v2925 = vpop.f32.mrf.mxu0
  %2926 = vmatprep.mubr.f32.mxu0 %v2215
  %2927 = vmatmul.mubr.f32.gmra.mxu0 %v2214
  %v2928 = vpop.f32.mrf.mxu0
  %v2929 = vadd.f32 %v2844, %v2928
  %v2930 = vpop.f32.mrf.mxu0
  %2931 = vmatprep.mubr.f32.mxu0 %v2231
  %2932 = vmatmul.mubr.f32.gmra.mxu0 %v2230
  %v2933 = vpop.f32.mrf.mxu0
  %v2934 = vadd.f32 %v2849, %v2933
  %v2935 = vpop.f32.mrf.mxu0
  %2936 = vmatprep.mubr.f32.mxu0 %v2247
  %2937 = vmatmul.mubr.f32.gmra.mxu0 %v2246
  %v2938 = vpop.f32.mrf.mxu0
  %v2939 = vadd.f32 %v2854, %v2938
  %v2940 = vpop.f32.mrf.mxu0
  %2941 = vdwg.mxu0
  %2942 = vmatprep.subr.mxu0 0.0
  %2943 = vmatpush1.msra.mxu0 %v2429
  %2944 = vmatprep.subr.mxu0 0.0
  %2945 = vmatpush1.msra.mxu0 %v2428
  %2946 = vmatprep.subr.mxu0 0.0
  %2947 = vmatpush1.msra.mxu0 %v2427
  %2948 = vmatprep.subr.mxu0 0.0
  %2949 = vmatpush1.msra.mxu0 %v2426
  %2950 = vmatprep.subr.mxu0 0.0
  %2951 = vmatpush1.msra.mxu0 %v2425
  %2952 = vmatprep.subr.mxu0 0.0
  %2953 = vmatpush1.msra.mxu0 %v2424
  %2954 = vmatprep.subr.mxu0 0.0
  %2955 = vmatpush1.msra.mxu0 %v2423
  %2956 = vmatprep.subr.mxu0 0.0
  %2957 = vmatpush1.msra.mxu0 %v2422
  %2958 = vmatprep.subr.mxu0 0.0
  %2959 = vmatpush1.msra.mxu0 %v2421
  %2960 = vmatprep.subr.mxu0 0.0
  %2961 = vmatpush1.msra.mxu0 %v2420
  %2962 = vmatprep.subr.mxu0 0.0
  %2963 = vmatpush1.msra.mxu0 %v2419
  %2964 = vmatprep.subr.mxu0 0.0
  %2965 = vmatpush1.msra.mxu0 %v2418
  %2966 = vmatprep.subr.mxu0 0.0
  %2967 = vmatpush1.msra.mxu0 %v2417
  %2968 = vmatprep.subr.mxu0 0.0
  %2969 = vmatpush1.msra.mxu0 %v2416
  %2970 = vmatprep.subr.mxu0 0.0
  %2971 = vmatpush1.msra.mxu0 %v2415
  %2972 = vmatprep.subr.mxu0 0.0
  %2973 = vmatpush1.msra.mxu0 %v2414
  %2974 = vmatprep.subr.mxu0 0.0
  %2975 = vmatpush2.msra.mxu0 %v2445
  %2976 = vmatprep.subr.mxu0 0.0
  %2977 = vmatpush2.msra.mxu0 %v2444
  %2978 = vmatprep.subr.mxu0 0.0
  %2979 = vmatpush2.msra.mxu0 %v2443
  %2980 = vmatprep.subr.mxu0 0.0
  %2981 = vmatpush2.msra.mxu0 %v2442
  %2982 = vmatprep.subr.mxu0 0.0
  %2983 = vmatpush2.msra.mxu0 %v2441
  %2984 = vmatprep.subr.mxu0 0.0
  %2985 = vmatpush2.msra.mxu0 %v2440
  %2986 = vmatprep.subr.mxu0 0.0
  %2987 = vmatpush2.msra.mxu0 %v2439
  %2988 = vmatprep.subr.mxu0 0.0
  %2989 = vmatpush2.msra.mxu0 %v2438
  %2990 = vmatprep.subr.mxu0 0.0
  %2991 = vmatpush2.msra.mxu0 %v2437
  %2992 = vmatprep.subr.mxu0 0.0
  %2993 = vmatpush2.msra.mxu0 %v2436
  %2994 = vmatprep.subr.mxu0 0.0
  %2995 = vmatpush2.msra.mxu0 %v2435
  %2996 = vmatprep.subr.mxu0 0.0
  %2997 = vmatpush2.msra.mxu0 %v2434
  %2998 = vmatprep.subr.mxu0 0.0
  %2999 = vmatpush2.msra.mxu0 %v2433
  %3000 = vmatprep.subr.mxu0 0.0
  %3001 = vmatpush2.msra.mxu0 %v2432
  %3002 = vmatprep.subr.mxu0 0.0
  %3003 = vmatpush2.msra.mxu0 %v2431
  %3004 = vmatprep.subr.mxu0 0.0
  %3005 = vmatpush2.msra.mxu0 %v2430
  %3006 = vmatprep.mubr.f32.mxu0 %v2201
  %3007 = vmatmul.mubr.f32.gmra.mxu0 %v2200
  %v3008 = vpop.f32.mrf.mxu0
  %v3009 = vadd.f32 %v2924, %v3008
  %v3010 = vpop.f32.mrf.mxu0
  %3011 = vmatprep.mubr.f32.mxu0 %v2217
  %3012 = vmatmul.mubr.f32.gmra.mxu0 %v2216
  %v3013 = vpop.f32.mrf.mxu0
  %v3014 = vadd.f32 %v2929, %v3013
  %v3015 = vpop.f32.mrf.mxu0
  %3016 = vmatprep.mubr.f32.mxu0 %v2233
  %3017 = vmatmul.mubr.f32.gmra.mxu0 %v2232
  %v3018 = vpop.f32.mrf.mxu0
  %v3019 = vadd.f32 %v2934, %v3018
  %v3020 = vpop.f32.mrf.mxu0
  %3021 = vmatprep.mubr.f32.mxu0 %v2249
  %3022 = vmatmul.mubr.f32.gmra.mxu0 %v2248
  %v3023 = vpop.f32.mrf.mxu0
  %v3024 = vadd.f32 %v2939, %v3023
  %v3025 = vpop.f32.mrf.mxu0
  %3026 = vdwg.mxu0
  %3027 = vmatprep.subr.mxu0 0.0
  %3028 = vmatpush1.msra.mxu0 %v2461
  %3029 = vmatprep.subr.mxu0 0.0
  %3030 = vmatpush1.msra.mxu0 %v2460
  %3031 = vmatprep.subr.mxu0 0.0
  %3032 = vmatpush1.msra.mxu0 %v2459
  %3033 = vmatprep.subr.mxu0 0.0
  %3034 = vmatpush1.msra.mxu0 %v2458
  %3035 = vmatprep.subr.mxu0 0.0
  %3036 = vmatpush1.msra.mxu0 %v2457
  %3037 = vmatprep.subr.mxu0 0.0
  %3038 = vmatpush1.msra.mxu0 %v2456
  %3039 = vmatprep.subr.mxu0 0.0
  %3040 = vmatpush1.msra.mxu0 %v2455
  %3041 = vmatprep.subr.mxu0 0.0
  %3042 = vmatpush1.msra.mxu0 %v2454
  %3043 = vmatprep.subr.mxu0 0.0
  %3044 = vmatpush1.msra.mxu0 %v2453
  %3045 = vmatprep.subr.mxu0 0.0
  %3046 = vmatpush1.msra.mxu0 %v2452
  %3047 = vmatprep.subr.mxu0 0.0
  %3048 = vmatpush1.msra.mxu0 %v2451
  %3049 = vmatprep.subr.mxu0 0.0
  %3050 = vmatpush1.msra.mxu0 %v2450
  %3051 = vmatprep.subr.mxu0 0.0
  %3052 = vmatpush1.msra.mxu0 %v2449
  %3053 = vmatprep.subr.mxu0 0.0
  %3054 = vmatpush1.msra.mxu0 %v2448
  %3055 = vmatprep.subr.mxu0 0.0
  %3056 = vmatpush1.msra.mxu0 %v2447
  %3057 = vmatprep.subr.mxu0 0.0
  %3058 = vmatpush1.msra.mxu0 %v2446
  %3059 = vmatprep.subr.mxu0 0.0
  %3060 = vmatpush2.msra.mxu0 %v2477
  %3061 = vmatprep.subr.mxu0 0.0
  %3062 = vmatpush2.msra.mxu0 %v2476
  %3063 = vmatprep.subr.mxu0 0.0
  %3064 = vmatpush2.msra.mxu0 %v2475
  %3065 = vmatprep.subr.mxu0 0.0
  %3066 = vmatpush2.msra.mxu0 %v2474
  %3067 = vmatprep.subr.mxu0 0.0
  %3068 = vmatpush2.msra.mxu0 %v2473
  %3069 = vmatprep.subr.mxu0 0.0
  %3070 = vmatpush2.msra.mxu0 %v2472
  %3071 = vmatprep.subr.mxu0 0.0
  %3072 = vmatpush2.msra.mxu0 %v2471
  %3073 = vmatprep.subr.mxu0 0.0
  %3074 = vmatpush2.msra.mxu0 %v2470
  %3075 = vmatprep.subr.mxu0 0.0
  %3076 = vmatpush2.msra.mxu0 %v2469
  %3077 = vmatprep.subr.mxu0 0.0
  %3078 = vmatpush2.msra.mxu0 %v2468
  %3079 = vmatprep.subr.mxu0 0.0
  %3080 = vmatpush2.msra.mxu0 %v2467
  %3081 = vmatprep.subr.mxu0 0.0
  %3082 = vmatpush2.msra.mxu0 %v2466
  %3083 = vmatprep.subr.mxu0 0.0
  %3084 = vmatpush2.msra.mxu0 %v2465
  %3085 = vmatprep.subr.mxu0 0.0
  %3086 = vmatpush2.msra.mxu0 %v2464
  %3087 = vmatprep.subr.mxu0 0.0
  %3088 = vmatpush2.msra.mxu0 %v2463
  %3089 = vmatprep.subr.mxu0 0.0
  %3090 = vmatpush2.msra.mxu0 %v2462
  %3091 = vmatprep.mubr.f32.mxu0 %v2203
  %3092 = vmatmul.mubr.f32.gmra.mxu0 %v2202
  %v3093 = vpop.f32.mrf.mxu0
  %v3094 = vadd.f32 %v3009, %v3093
  %v3095 = vpop.f32.mrf.mxu0
  %3096 = vmatprep.mubr.f32.mxu0 %v2219
  %3097 = vmatmul.mubr.f32.gmra.mxu0 %v2218
  %v3098 = vpop.f32.mrf.mxu0
  %v3099 = vadd.f32 %v3014, %v3098
  %v3100 = vpop.f32.mrf.mxu0
  %3101 = vmatprep.mubr.f32.mxu0 %v2235
  %3102 = vmatmul.mubr.f32.gmra.mxu0 %v2234
  %v3103 = vpop.f32.mrf.mxu0
  %v3104 = vadd.f32 %v3019, %v3103
  %v3105 = vpop.f32.mrf.mxu0
  %3106 = vmatprep.mubr.f32.mxu0 %v2251
  %3107 = vmatmul.mubr.f32.gmra.mxu0 %v2250
  %v3108 = vpop.f32.mrf.mxu0
  %v3109 = vadd.f32 %v3024, %v3108
  %v3110 = vpop.f32.mrf.mxu0
  %3111 = vdwg.mxu0
  %3112 = vmatprep.subr.mxu0 0.0
  %3113 = vmatpush1.msra.mxu0 %v2493
  %3114 = vmatprep.subr.mxu0 0.0
  %3115 = vmatpush1.msra.mxu0 %v2492
  %3116 = vmatprep.subr.mxu0 0.0
  %3117 = vmatpush1.msra.mxu0 %v2491
  %3118 = vmatprep.subr.mxu0 0.0
  %3119 = vmatpush1.msra.mxu0 %v2490
  %3120 = vmatprep.subr.mxu0 0.0
  %3121 = vmatpush1.msra.mxu0 %v2489
  %3122 = vmatprep.subr.mxu0 0.0
  %3123 = vmatpush1.msra.mxu0 %v2488
  %3124 = vmatprep.subr.mxu0 0.0
  %3125 = vmatpush1.msra.mxu0 %v2487
  %3126 = vmatprep.subr.mxu0 0.0
  %3127 = vmatpush1.msra.mxu0 %v2486
  %3128 = vmatprep.subr.mxu0 0.0
  %3129 = vmatpush1.msra.mxu0 %v2485
  %3130 = vmatprep.subr.mxu0 0.0
  %3131 = vmatpush1.msra.mxu0 %v2484
  %3132 = vmatprep.subr.mxu0 0.0
  %3133 = vmatpush1.msra.mxu0 %v2483
  %3134 = vmatprep.subr.mxu0 0.0
  %3135 = vmatpush1.msra.mxu0 %v2482
  %3136 = vmatprep.subr.mxu0 0.0
  %3137 = vmatpush1.msra.mxu0 %v2481
  %3138 = vmatprep.subr.mxu0 0.0
  %3139 = vmatpush1.msra.mxu0 %v2480
  %3140 = vmatprep.subr.mxu0 0.0
  %3141 = vmatpush1.msra.mxu0 %v2479
  %3142 = vmatprep.subr.mxu0 0.0
  %3143 = vmatpush1.msra.mxu0 %v2478
  %3144 = vmatprep.subr.mxu0 0.0
  %3145 = vmatpush2.msra.mxu0 %v2509
  %3146 = vmatprep.subr.mxu0 0.0
  %3147 = vmatpush2.msra.mxu0 %v2508
  %3148 = vmatprep.subr.mxu0 0.0
  %3149 = vmatpush2.msra.mxu0 %v2507
  %3150 = vmatprep.subr.mxu0 0.0
  %3151 = vmatpush2.msra.mxu0 %v2506
  %3152 = vmatprep.subr.mxu0 0.0
  %3153 = vmatpush2.msra.mxu0 %v2505
  %3154 = vmatprep.subr.mxu0 0.0
  %3155 = vmatpush2.msra.mxu0 %v2504
  %3156 = vmatprep.subr.mxu0 0.0
  %3157 = vmatpush2.msra.mxu0 %v2503
  %3158 = vmatprep.subr.mxu0 0.0
  %3159 = vmatpush2.msra.mxu0 %v2502
  %3160 = vmatprep.subr.mxu0 0.0
  %3161 = vmatpush2.msra.mxu0 %v2501
  %3162 = vmatprep.subr.mxu0 0.0
  %3163 = vmatpush2.msra.mxu0 %v2500
  %3164 = vmatprep.subr.mxu0 0.0
  %3165 = vmatpush2.msra.mxu0 %v2499
  %3166 = vmatprep.subr.mxu0 0.0
  %3167 = vmatpush2.msra.mxu0 %v2498
  %3168 = vmatprep.subr.mxu0 0.0
  %3169 = vmatpush2.msra.mxu0 %v2497
  %3170 = vmatprep.subr.mxu0 0.0
  %3171 = vmatpush2.msra.mxu0 %v2496
  %3172 = vmatprep.subr.mxu0 0.0
  %3173 = vmatpush2.msra.mxu0 %v2495
  %3174 = vmatprep.subr.mxu0 0.0
  %3175 = vmatpush2.msra.mxu0 %v2494
  %3176 = vmatprep.mubr.f32.mxu0 %v2205
  %3177 = vmatmul.mubr.f32.gmra.mxu0 %v2204
  %v3178 = vpop.f32.mrf.mxu0
  %v3179 = vadd.f32 %v3094, %v3178
  %v3180 = vpop.f32.mrf.mxu0
  %3181 = vmatprep.mubr.f32.mxu0 %v2221
  %3182 = vmatmul.mubr.f32.gmra.mxu0 %v2220
  %v3183 = vpop.f32.mrf.mxu0
  %v3184 = vadd.f32 %v3099, %v3183
  %v3185 = vpop.f32.mrf.mxu0
  %3186 = vmatprep.mubr.f32.mxu0 %v2237
  %3187 = vmatmul.mubr.f32.gmra.mxu0 %v2236
  %v3188 = vpop.f32.mrf.mxu0
  %v3189 = vadd.f32 %v3104, %v3188
  %v3190 = vpop.f32.mrf.mxu0
  %3191 = vmatprep.mubr.f32.mxu0 %v2253
  %3192 = vmatmul.mubr.f32.gmra.mxu0 %v2252
  %v3193 = vpop.f32.mrf.mxu0
  %v3194 = vadd.f32 %v3109, %v3193
  %v3195 = vpop.f32.mrf.mxu0
  %3196 = vdwg.mxu0
  %v3197 = vadd.f32 %v1314, %v3179
  %v3198 = vadd.f32 %v1315, %v3184
  %v3199 = vadd.f32 %v1316, %v3189
  %v3200 = vadd.f32 %v1317, %v3194
  %v3201 = vld [vmem:[%s35] sm:$0x1]
  %v3202 = vld [vmem:[%s37] sm:$0x1]
  %v3203 = vsel %vm569, %v3197, 0.0
  %3204 = vadd.xlane.f32.xlu0 %v3203
  %v3205 = vpop.xlane.xlu0 %3204
  %v3206 = vsel %vm569, %v3198, 0.0
  %3207 = vadd.xlane.f32.xlu0 %v3206
  %v3208 = vpop.xlane.xlu0 %3207
  %v3209 = vsel %vm569, %v3199, 0.0
  %3210 = vadd.xlane.f32.xlu0 %v3209
  %v3211 = vpop.xlane.xlu0 %3210
  %v3212 = vsel %vm569, %v3200, 0.0
  %3213 = vadd.xlane.f32.xlu0 %v3212
  %v3214 = vpop.xlane.xlu0 %3213
  %v3215 = vmul.f32 %v3205, %v1257
  %v3216 = vmul.f32 %v3208, %v1257
  %v3217 = vmul.f32 %v3211, %v1257
  %v3218 = vmul.f32 %v3214, %v1257
  %v3219 = vsub.f32 %v3197, %v3215
  %v3220 = vsub.f32 %v3198, %v3216
  %v3221 = vsub.f32 %v3199, %v3217
  %v3222 = vsub.f32 %v3200, %v3218
  %v3223 = vmul.f32 %v3219, %v3219
  %v3224 = vmul.f32 %v3220, %v3220
  %v3225 = vmul.f32 %v3221, %v3221
  %v3226 = vmul.f32 %v3222, %v3222
  %v3227 = vsel %vm569, %v3223, 0.0
  %3228 = vadd.xlane.f32.xlu0 %v3227
  %v3229 = vpop.xlane.xlu0 %3228
  %v3230 = vsel %vm569, %v3224, 0.0
  %3231 = vadd.xlane.f32.xlu0 %v3230
  %v3232 = vpop.xlane.xlu0 %3231
  %v3233 = vsel %vm569, %v3225, 0.0
  %3234 = vadd.xlane.f32.xlu0 %v3233
  %v3235 = vpop.xlane.xlu0 %3234
  %v3236 = vsel %vm569, %v3226, 0.0
  %3237 = vadd.xlane.f32.xlu0 %v3236
  %v3238 = vpop.xlane.xlu0 %3237
  %v3239 = vmul.f32 %v3229, %v1257
  %v3240 = vmul.f32 %v3232, %v1257
  %v3241 = vmul.f32 %v3235, %v1257
  %v3242 = vmul.f32 %v3238, %v1257
  %v3243 = vadd.f32 %v3239, 1e-05
  %v3244 = vadd.f32 %v3240, 1e-05
  %v3245 = vadd.f32 %v3241, 1e-05
  %v3246 = vadd.f32 %v3242, 1e-05
  %v3247 = vrsqrt.pop %v3243
  %v3248 = vrsqrt.pop %v3244
  %v3249 = vrsqrt.pop %v3245
  %v3250 = vrsqrt.pop %v3246
  %v3251 = vmul.f32 %v3219, %v3247
  %v3252 = vmul.f32 %v3220, %v3248
  %v3253 = vmul.f32 %v3221, %v3249
  %v3254 = vmul.f32 %v3222, %v3250
  %v3256 = vlaneseq
  %v3257 = vshrl.u32 %v3256, 7
  %v3258 = vsub.s32 0, %v3257
  %v3259 = vrot.slane %v3201, %v3258
  %v3261 = vmul.f32 %v3251, %v3259
  %v3262 = vmul.f32 %v3252, %v3259
  %v3263 = vmul.f32 %v3253, %v3259
  %v3264 = vmul.f32 %v3254, %v3259
  %v3266 = vlaneseq
  %v3267 = vshrl.u32 %v3266, 7
  %v3268 = vsub.s32 0, %v3267
  %v3269 = vrot.slane %v3202, %v3268
  %v3271 = vadd.f32 %v3261, %v3269
  %v3272 = vadd.f32 %v3262, %v3269
  %v3273 = vadd.f32 %v3263, %v3269
  %v3274 = vadd.f32 %v3264, %v3269
  %v3275 = vld [vmem:[%s39] sm:$0xff]
  %v3276 = vld [vmem:[%s39 + $0x8] sm:$0xff]
  %v3277 = vld [vmem:[%s39 + $0x10] sm:$0xff]
  %v3278 = vld [vmem:[%s39 + $0x18] sm:$0xff]
  %v3279 = vld [vmem:[%s41] sm:$0x1]
  %v3281 = vlaneseq
  %v3282 = vshrl.u32 %v3281, 7
  %v3283 = vsub.s32 0, %v3282
  %v3284 = vrot.slane %v3279, %v3283
  %v3287 = vsel %vm569, %v3271, 0
  %v3290 = vsel %vm569, %v3272, 0
  %v3293 = vsel %vm569, %v3273, 0
  %v3296 = vsel %vm569, %v3274, 0
  %3298 = vmatprep.subr.mxu0 0.0
  %3299 = vmatpush1.msra.mxu0 0.0
  %3300 = vmatprep.subr.mxu0 0.0
  %3301 = vmatpush1.msra.mxu0 0.0
  %3302 = vmatprep.subr.mxu0 0.0
  %3303 = vmatpush1.msra.mxu0 0.0
  %3304 = vmatprep.subr.mxu0 0.0
  %3305 = vmatpush1.msra.mxu0 0.0
  %3306 = vmatprep.subr.mxu0 0.0
  %3307 = vmatpush1.msra.mxu0 0.0
  %3308 = vmatprep.subr.mxu0 0.0
  %3309 = vmatpush1.msra.mxu0 0.0
  %3310 = vmatprep.subr.mxu0 0.0
  %3311 = vmatpush1.msra.mxu0 0.0
  %3312 = vmatprep.subr.mxu0 0.0
  %3313 = vmatpush1.msra.mxu0 0.0
  %3314 = vmatprep.subr.mxu0 0.0
  %3315 = vmatpush1.msra.mxu0 0.0
  %3316 = vmatprep.subr.mxu0 0.0
  %3317 = vmatpush1.msra.mxu0 0.0
  %3318 = vmatprep.subr.mxu0 0.0
  %3319 = vmatpush1.msra.mxu0 0.0
  %3320 = vmatprep.subr.mxu0 0.0
  %3321 = vmatpush1.msra.mxu0 0.0
  %3322 = vmatprep.subr.mxu0 0.0
  %3323 = vmatpush1.msra.mxu0 %v3278
  %3324 = vmatprep.subr.mxu0 0.0
  %3325 = vmatpush1.msra.mxu0 %v3277
  %3326 = vmatprep.subr.mxu0 0.0
  %3327 = vmatpush1.msra.mxu0 %v3276
  %3328 = vmatprep.subr.mxu0 0.0
  %3329 = vmatpush1.msra.mxu0 %v3275
  %3330 = vmatprep.subr.mxu0 0.0
  %3331 = vmatpush2.msra.mxu0 0.0
  %3332 = vmatprep.subr.mxu0 0.0
  %3333 = vmatpush2.msra.mxu0 0.0
  %3334 = vmatprep.subr.mxu0 0.0
  %3335 = vmatpush2.msra.mxu0 0.0
  %3336 = vmatprep.subr.mxu0 0.0
  %3337 = vmatpush2.msra.mxu0 0.0
  %3338 = vmatprep.subr.mxu0 0.0
  %3339 = vmatpush2.msra.mxu0 0.0
  %3340 = vmatprep.subr.mxu0 0.0
  %3341 = vmatpush2.msra.mxu0 0.0
  %3342 = vmatprep.subr.mxu0 0.0
  %3343 = vmatpush2.msra.mxu0 0.0
  %3344 = vmatprep.subr.mxu0 0.0
  %3345 = vmatpush2.msra.mxu0 0.0
  %3346 = vmatprep.subr.mxu0 0.0
  %3347 = vmatpush2.msra.mxu0 0.0
  %3348 = vmatprep.subr.mxu0 0.0
  %3349 = vmatpush2.msra.mxu0 0.0
  %3350 = vmatprep.subr.mxu0 0.0
  %3351 = vmatpush2.msra.mxu0 0.0
  %3352 = vmatprep.subr.mxu0 0.0
  %3353 = vmatpush2.msra.mxu0 0.0
  %3354 = vmatprep.subr.mxu0 0.0
  %3355 = vmatpush2.msra.mxu0 0.0
  %3356 = vmatprep.subr.mxu0 0.0
  %3357 = vmatpush2.msra.mxu0 0.0
  %3358 = vmatprep.subr.mxu0 0.0
  %3359 = vmatpush2.msra.mxu0 0.0
  %3360 = vmatprep.subr.mxu0 0.0
  %3361 = vmatpush2.msra.mxu0 0.0
  %3362 = vmatprep.mubr.f32.mxu0 0.0
  %3363 = vmatmul.mubr.f32.gmra.mxu0 %v3287
  %v3364 = vpop.f32.mrf.mxu0
  %v3365 = vadd.f32 %v3284, %v3364
  %v3366 = vpop.f32.mrf.mxu0
  %3367 = vmatprep.mubr.f32.mxu0 0.0
  %3368 = vmatmul.mubr.f32.gmra.mxu0 %v3290
  %v3369 = vpop.f32.mrf.mxu0
  %v3370 = vadd.f32 %v3284, %v3369
  %v3371 = vpop.f32.mrf.mxu0
  %3372 = vmatprep.mubr.f32.mxu0 0.0
  %3373 = vmatmul.mubr.f32.gmra.mxu0 %v3293
  %v3374 = vpop.f32.mrf.mxu0
  %v3375 = vadd.f32 %v3284, %v3374
  %v3376 = vpop.f32.mrf.mxu0
  %3377 = vmatprep.mubr.f32.mxu0 0.0
  %3378 = vmatmul.mubr.f32.gmra.mxu0 %v3296
  %v3379 = vpop.f32.mrf.mxu0
  %v3380 = vadd.f32 %v3284, %v3379
  %v3381 = vpop.f32.mrf.mxu0
  %3382 = vdwg.mxu0
  %3385 = vrot.lane.b32.xlu0 %v3365, 96
  %v3386 = vpop.permute.xlu0 %3385
  %3387 = vrot.lane.b32.xlu0 %v3370, 96
  %v3388 = vpop.permute.xlu0 %3387
  %v3391 = vmul.f32 %v3365, %v3386
  %v3392 = vmul.f32 %v3370, %v3388
  %v3394 = vsel %vm569, %v3391, 0
  %v3397 = vsel %vm569, %v3392, 0
  %3399 = vmatprep.subr.mxu0 0.0
  %3400 = vmatpush1.msra.mxu0 0.0
  %3401 = vmatprep.subr.mxu0 0.0
  %3402 = vmatpush1.msra.mxu0 0.0
  %3403 = vmatprep.subr.mxu0 0.0
  %3404 = vmatpush1.msra.mxu0 0.0
  %3405 = vmatprep.subr.mxu0 0.0
  %3406 = vmatpush1.msra.mxu0 0.0
  %3407 = vmatprep.subr.mxu0 0.0
  %3408 = vmatpush1.msra.mxu0 0.0
  %3409 = vmatprep.subr.mxu0 0.0
  %3410 = vmatpush1.msra.mxu0 0.0
  %3411 = vmatprep.subr.mxu0 0.0
  %3412 = vmatpush1.msra.mxu0 0.0
  %3413 = vmatprep.subr.mxu0 0.0
  %3414 = vmatpush1.msra.mxu0 0.0
  %3415 = vmatprep.subr.mxu0 0.0
  %3416 = vmatpush1.msra.mxu0 0.0
  %3417 = vmatprep.subr.mxu0 0.0
  %3418 = vmatpush1.msra.mxu0 0.0
  %3419 = vmatprep.subr.mxu0 0.0
  %3420 = vmatpush1.msra.mxu0 0.0
  %3421 = vmatprep.subr.mxu0 0.0
  %3422 = vmatpush1.msra.mxu0 0.0
  %3423 = vmatprep.subr.mxu0 0.0
  %3424 = vmatpush1.msra.mxu0 %v586
  %3425 = vmatprep.subr.mxu0 0.0
  %3426 = vmatpush1.msra.mxu0 %v585
  %3427 = vmatprep.subr.mxu0 0.0
  %3428 = vmatpush1.msra.mxu0 %v584
  %3429 = vmatprep.subr.mxu0 0.0
  %3430 = vmatpush1.msra.mxu0 %v583
  %3431 = vmatprep.subr.mxu0 0.0
  %3432 = vmatpush2.msra.mxu0 0.0
  %3433 = vmatprep.subr.mxu0 0.0
  %3434 = vmatpush2.msra.mxu0 0.0
  %3435 = vmatprep.subr.mxu0 0.0
  %3436 = vmatpush2.msra.mxu0 0.0
  %3437 = vmatprep.subr.mxu0 0.0
  %3438 = vmatpush2.msra.mxu0 0.0
  %3439 = vmatprep.subr.mxu0 0.0
  %3440 = vmatpush2.msra.mxu0 0.0
  %3441 = vmatprep.subr.mxu0 0.0
  %3442 = vmatpush2.msra.mxu0 0.0
  %3443 = vmatprep.subr.mxu0 0.0
  %3444 = vmatpush2.msra.mxu0 0.0
  %3445 = vmatprep.subr.mxu0 0.0
  %3446 = vmatpush2.msra.mxu0 0.0
  %3447 = vmatprep.subr.mxu0 0.0
  %3448 = vmatpush2.msra.mxu0 0.0
  %3449 = vmatprep.subr.mxu0 0.0
  %3450 = vmatpush2.msra.mxu0 0.0
  %3451 = vmatprep.subr.mxu0 0.0
  %3452 = vmatpush2.msra.mxu0 0.0
  %3453 = vmatprep.subr.mxu0 0.0
  %3454 = vmatpush2.msra.mxu0 0.0
  %3455 = vmatprep.subr.mxu0 0.0
  %3456 = vmatpush2.msra.mxu0 0.0
  %3457 = vmatprep.subr.mxu0 0.0
  %3458 = vmatpush2.msra.mxu0 0.0
  %3459 = vmatprep.subr.mxu0 0.0
  %3460 = vmatpush2.msra.mxu0 0.0
  %3461 = vmatprep.subr.mxu0 0.0
  %3462 = vmatpush2.msra.mxu0 0.0
  %3463 = vmatprep.mubr.f32.mxu0 0.0
  %3464 = vmatmul.mubr.f32.gmra.mxu0 %v3394
  %v3465 = vpop.f32.mrf.mxu0
  %v3466 = vadd.f32 0.0, %v3465
  %v3467 = vpop.f32.mrf.mxu0
  %3468 = vmatprep.mubr.f32.mxu0 0.0
  %3469 = vmatmul.mubr.f32.gmra.mxu0 %v3397
  %v3470 = vpop.f32.mrf.mxu0
  %v3471 = vadd.f32 0.0, %v3470
  %v3472 = vpop.f32.mrf.mxu0
  %3473 = vdwg.mxu0
  %v3474 = vmul.f32 %v3466, 0.35355338
  %v3475 = vmul.f32 %v3471, 0.35355338
  %3478 = vrot.lane.b32.xlu0 %v3375, 96
  %v3479 = vpop.permute.xlu0 %3478
  %3480 = vrot.lane.b32.xlu0 %v3380, 96
  %v3481 = vpop.permute.xlu0 %3480
  %v3484 = vmul.f32 %v3365, %v3479
  %v3485 = vmul.f32 %v3370, %v3481
  %v3487 = vsel %vm569, %v3484, 0
  %v3490 = vsel %vm569, %v3485, 0
  %3492 = vmatprep.subr.mxu0 0.0
  %3493 = vmatpush1.msra.mxu0 0.0
  %3494 = vmatprep.subr.mxu0 0.0
  %3495 = vmatpush1.msra.mxu0 0.0
  %3496 = vmatprep.subr.mxu0 0.0
  %3497 = vmatpush1.msra.mxu0 0.0
  %3498 = vmatprep.subr.mxu0 0.0
  %3499 = vmatpush1.msra.mxu0 0.0
  %3500 = vmatprep.subr.mxu0 0.0
  %3501 = vmatpush1.msra.mxu0 0.0
  %3502 = vmatprep.subr.mxu0 0.0
  %3503 = vmatpush1.msra.mxu0 0.0
  %3504 = vmatprep.subr.mxu0 0.0
  %3505 = vmatpush1.msra.mxu0 0.0
  %3506 = vmatprep.subr.mxu0 0.0
  %3507 = vmatpush1.msra.mxu0 0.0
  %3508 = vmatprep.subr.mxu0 0.0
  %3509 = vmatpush1.msra.mxu0 0.0
  %3510 = vmatprep.subr.mxu0 0.0
  %3511 = vmatpush1.msra.mxu0 0.0
  %3512 = vmatprep.subr.mxu0 0.0
  %3513 = vmatpush1.msra.mxu0 0.0
  %3514 = vmatprep.subr.mxu0 0.0
  %3515 = vmatpush1.msra.mxu0 0.0
  %3516 = vmatprep.subr.mxu0 0.0
  %3517 = vmatpush1.msra.mxu0 %v586
  %3518 = vmatprep.subr.mxu0 0.0
  %3519 = vmatpush1.msra.mxu0 %v585
  %3520 = vmatprep.subr.mxu0 0.0
  %3521 = vmatpush1.msra.mxu0 %v584
  %3522 = vmatprep.subr.mxu0 0.0
  %3523 = vmatpush1.msra.mxu0 %v583
  %3524 = vmatprep.subr.mxu0 0.0
  %3525 = vmatpush2.msra.mxu0 0.0
  %3526 = vmatprep.subr.mxu0 0.0
  %3527 = vmatpush2.msra.mxu0 0.0
  %3528 = vmatprep.subr.mxu0 0.0
  %3529 = vmatpush2.msra.mxu0 0.0
  %3530 = vmatprep.subr.mxu0 0.0
  %3531 = vmatpush2.msra.mxu0 0.0
  %3532 = vmatprep.subr.mxu0 0.0
  %3533 = vmatpush2.msra.mxu0 0.0
  %3534 = vmatprep.subr.mxu0 0.0
  %3535 = vmatpush2.msra.mxu0 0.0
  %3536 = vmatprep.subr.mxu0 0.0
  %3537 = vmatpush2.msra.mxu0 0.0
  %3538 = vmatprep.subr.mxu0 0.0
  %3539 = vmatpush2.msra.mxu0 0.0
  %3540 = vmatprep.subr.mxu0 0.0
  %3541 = vmatpush2.msra.mxu0 0.0
  %3542 = vmatprep.subr.mxu0 0.0
  %3543 = vmatpush2.msra.mxu0 0.0
  %3544 = vmatprep.subr.mxu0 0.0
  %3545 = vmatpush2.msra.mxu0 0.0
  %3546 = vmatprep.subr.mxu0 0.0
  %3547 = vmatpush2.msra.mxu0 0.0
  %3548 = vmatprep.subr.mxu0 0.0
  %3549 = vmatpush2.msra.mxu0 0.0
  %3550 = vmatprep.subr.mxu0 0.0
  %3551 = vmatpush2.msra.mxu0 0.0
  %3552 = vmatprep.subr.mxu0 0.0
  %3553 = vmatpush2.msra.mxu0 0.0
  %3554 = vmatprep.subr.mxu0 0.0
  %3555 = vmatpush2.msra.mxu0 0.0
  %3556 = vmatprep.mubr.f32.mxu0 0.0
  %3557 = vmatmul.mubr.f32.gmra.mxu0 %v3487
  %v3558 = vpop.f32.mrf.mxu0
  %v3559 = vadd.f32 0.0, %v3558
  %v3560 = vpop.f32.mrf.mxu0
  %3561 = vmatprep.mubr.f32.mxu0 0.0
  %3562 = vmatmul.mubr.f32.gmra.mxu0 %v3490
  %v3563 = vpop.f32.mrf.mxu0
  %v3564 = vadd.f32 0.0, %v3563
  %v3565 = vpop.f32.mrf.mxu0
  %3566 = vdwg.mxu0
  %v3567 = vmul.f32 %v3559, 0.35355338
  %v3568 = vmul.f32 %v3564, 0.35355338
  %v3569 = vmul.f32 %v3375, %v3386
  %v3570 = vmul.f32 %v3380, %v3388
  %v3572 = vsel %vm569, %v3569, 0
  %v3575 = vsel %vm569, %v3570, 0
  %3577 = vmatprep.subr.mxu0 0.0
  %3578 = vmatpush1.msra.mxu0 0.0
  %3579 = vmatprep.subr.mxu0 0.0
  %3580 = vmatpush1.msra.mxu0 0.0
  %3581 = vmatprep.subr.mxu0 0.0
  %3582 = vmatpush1.msra.mxu0 0.0
  %3583 = vmatprep.subr.mxu0 0.0
  %3584 = vmatpush1.msra.mxu0 0.0
  %3585 = vmatprep.subr.mxu0 0.0
  %3586 = vmatpush1.msra.mxu0 0.0
  %3587 = vmatprep.subr.mxu0 0.0
  %3588 = vmatpush1.msra.mxu0 0.0
  %3589 = vmatprep.subr.mxu0 0.0
  %3590 = vmatpush1.msra.mxu0 0.0
  %3591 = vmatprep.subr.mxu0 0.0
  %3592 = vmatpush1.msra.mxu0 0.0
  %3593 = vmatprep.subr.mxu0 0.0
  %3594 = vmatpush1.msra.mxu0 0.0
  %3595 = vmatprep.subr.mxu0 0.0
  %3596 = vmatpush1.msra.mxu0 0.0
  %3597 = vmatprep.subr.mxu0 0.0
  %3598 = vmatpush1.msra.mxu0 0.0
  %3599 = vmatprep.subr.mxu0 0.0
  %3600 = vmatpush1.msra.mxu0 0.0
  %3601 = vmatprep.subr.mxu0 0.0
  %3602 = vmatpush1.msra.mxu0 %v586
  %3603 = vmatprep.subr.mxu0 0.0
  %3604 = vmatpush1.msra.mxu0 %v585
  %3605 = vmatprep.subr.mxu0 0.0
  %3606 = vmatpush1.msra.mxu0 %v584
  %3607 = vmatprep.subr.mxu0 0.0
  %3608 = vmatpush1.msra.mxu0 %v583
  %3609 = vmatprep.subr.mxu0 0.0
  %3610 = vmatpush2.msra.mxu0 0.0
  %3611 = vmatprep.subr.mxu0 0.0
  %3612 = vmatpush2.msra.mxu0 0.0
  %3613 = vmatprep.subr.mxu0 0.0
  %3614 = vmatpush2.msra.mxu0 0.0
  %3615 = vmatprep.subr.mxu0 0.0
  %3616 = vmatpush2.msra.mxu0 0.0
  %3617 = vmatprep.subr.mxu0 0.0
  %3618 = vmatpush2.msra.mxu0 0.0
  %3619 = vmatprep.subr.mxu0 0.0
  %3620 = vmatpush2.msra.mxu0 0.0
  %3621 = vmatprep.subr.mxu0 0.0
  %3622 = vmatpush2.msra.mxu0 0.0
  %3623 = vmatprep.subr.mxu0 0.0
  %3624 = vmatpush2.msra.mxu0 0.0
  %3625 = vmatprep.subr.mxu0 0.0
  %3626 = vmatpush2.msra.mxu0 0.0
  %3627 = vmatprep.subr.mxu0 0.0
  %3628 = vmatpush2.msra.mxu0 0.0
  %3629 = vmatprep.subr.mxu0 0.0
  %3630 = vmatpush2.msra.mxu0 0.0
  %3631 = vmatprep.subr.mxu0 0.0
  %3632 = vmatpush2.msra.mxu0 0.0
  %3633 = vmatprep.subr.mxu0 0.0
  %3634 = vmatpush2.msra.mxu0 0.0
  %3635 = vmatprep.subr.mxu0 0.0
  %3636 = vmatpush2.msra.mxu0 0.0
  %3637 = vmatprep.subr.mxu0 0.0
  %3638 = vmatpush2.msra.mxu0 0.0
  %3639 = vmatprep.subr.mxu0 0.0
  %3640 = vmatpush2.msra.mxu0 0.0
  %3641 = vmatprep.mubr.f32.mxu0 0.0
  %3642 = vmatmul.mubr.f32.gmra.mxu0 %v3572
  %v3643 = vpop.f32.mrf.mxu0
  %v3644 = vadd.f32 0.0, %v3643
  %v3645 = vpop.f32.mrf.mxu0
  %3646 = vmatprep.mubr.f32.mxu0 0.0
  %3647 = vmatmul.mubr.f32.gmra.mxu0 %v3575
  %v3648 = vpop.f32.mrf.mxu0
  %v3649 = vadd.f32 0.0, %v3648
  %v3650 = vpop.f32.mrf.mxu0
  %3651 = vdwg.mxu0
  %v3652 = vmul.f32 %v3644, 0.35355338
  %v3653 = vmul.f32 %v3649, 0.35355338
  %v3654 = vmul.f32 %v3375, %v3479
  %v3655 = vmul.f32 %v3380, %v3481
  %v3657 = vsel %vm569, %v3654, 0
  %v3660 = vsel %vm569, %v3655, 0
  %3662 = vmatprep.subr.mxu0 0.0
  %3663 = vmatpush1.msra.mxu0 0.0
  %3664 = vmatprep.subr.mxu0 0.0
  %3665 = vmatpush1.msra.mxu0 0.0
  %3666 = vmatprep.subr.mxu0 0.0
  %3667 = vmatpush1.msra.mxu0 0.0
  %3668 = vmatprep.subr.mxu0 0.0
  %3669 = vmatpush1.msra.mxu0 0.0
  %3670 = vmatprep.subr.mxu0 0.0
  %3671 = vmatpush1.msra.mxu0 0.0
  %3672 = vmatprep.subr.mxu0 0.0
  %3673 = vmatpush1.msra.mxu0 0.0
  %3674 = vmatprep.subr.mxu0 0.0
  %3675 = vmatpush1.msra.mxu0 0.0
  %3676 = vmatprep.subr.mxu0 0.0
  %3677 = vmatpush1.msra.mxu0 0.0
  %3678 = vmatprep.subr.mxu0 0.0
  %3679 = vmatpush1.msra.mxu0 0.0
  %3680 = vmatprep.subr.mxu0 0.0
  %3681 = vmatpush1.msra.mxu0 0.0
  %3682 = vmatprep.subr.mxu0 0.0
  %3683 = vmatpush1.msra.mxu0 0.0
  %3684 = vmatprep.subr.mxu0 0.0
  %3685 = vmatpush1.msra.mxu0 0.0
  %3686 = vmatprep.subr.mxu0 0.0
  %3687 = vmatpush1.msra.mxu0 %v586
  %3688 = vmatprep.subr.mxu0 0.0
  %3689 = vmatpush1.msra.mxu0 %v585
  %3690 = vmatprep.subr.mxu0 0.0
  %3691 = vmatpush1.msra.mxu0 %v584
  %3692 = vmatprep.subr.mxu0 0.0
  %3693 = vmatpush1.msra.mxu0 %v583
  %3694 = vmatprep.subr.mxu0 0.0
  %3695 = vmatpush2.msra.mxu0 0.0
  %3696 = vmatprep.subr.mxu0 0.0
  %3697 = vmatpush2.msra.mxu0 0.0
  %3698 = vmatprep.subr.mxu0 0.0
  %3699 = vmatpush2.msra.mxu0 0.0
  %3700 = vmatprep.subr.mxu0 0.0
  %3701 = vmatpush2.msra.mxu0 0.0
  %3702 = vmatprep.subr.mxu0 0.0
  %3703 = vmatpush2.msra.mxu0 0.0
  %3704 = vmatprep.subr.mxu0 0.0
  %3705 = vmatpush2.msra.mxu0 0.0
  %3706 = vmatprep.subr.mxu0 0.0
  %3707 = vmatpush2.msra.mxu0 0.0
  %3708 = vmatprep.subr.mxu0 0.0
  %3709 = vmatpush2.msra.mxu0 0.0
  %3710 = vmatprep.subr.mxu0 0.0
  %3711 = vmatpush2.msra.mxu0 0.0
  %3712 = vmatprep.subr.mxu0 0.0
  %3713 = vmatpush2.msra.mxu0 0.0
  %3714 = vmatprep.subr.mxu0 0.0
  %3715 = vmatpush2.msra.mxu0 0.0
  %3716 = vmatprep.subr.mxu0 0.0
  %3717 = vmatpush2.msra.mxu0 0.0
  %3718 = vmatprep.subr.mxu0 0.0
  %3719 = vmatpush2.msra.mxu0 0.0
  %3720 = vmatprep.subr.mxu0 0.0
  %3721 = vmatpush2.msra.mxu0 0.0
  %3722 = vmatprep.subr.mxu0 0.0
  %3723 = vmatpush2.msra.mxu0 0.0
  %3724 = vmatprep.subr.mxu0 0.0
  %3725 = vmatpush2.msra.mxu0 0.0
  %3726 = vmatprep.mubr.f32.mxu0 0.0
  %3727 = vmatmul.mubr.f32.gmra.mxu0 %v3657
  %v3728 = vpop.f32.mrf.mxu0
  %v3729 = vadd.f32 0.0, %v3728
  %v3730 = vpop.f32.mrf.mxu0
  %3731 = vmatprep.mubr.f32.mxu0 0.0
  %3732 = vmatmul.mubr.f32.gmra.mxu0 %v3660
  %v3733 = vpop.f32.mrf.mxu0
  %v3734 = vadd.f32 0.0, %v3733
  %v3735 = vpop.f32.mrf.mxu0
  %3736 = vdwg.mxu0
  %v3737 = vmul.f32 %v3729, 0.35355338
  %v3738 = vmul.f32 %v3734, 0.35355338
  %v3739 = vmax.f32 %v3474, %v3567
  %v3740 = vmax.f32 %v3475, %v3568
  %v3741 = vsub.f32 %v3474, %v3739
  %v3742 = vsub.f32 %v3475, %v3740
  %v3743 = vmul.f32 %v3741, 1.442695
  %v3744 = vpow.pop %v3743
  %v3745 = vmul.f32 %v3742, 1.442695
  %v3746 = vpow.pop %v3745
  %v3747 = vsub.f32 %v3567, %v3739
  %v3748 = vsub.f32 %v3568, %v3740
  %v3749 = vmul.f32 %v3747, 1.442695
  %v3750 = vpow.pop %v3749
  %v3751 = vmul.f32 %v3748, 1.442695
  %v3752 = vpow.pop %v3751
  %v3753 = vadd.f32 %v3744, %v3750
  %v3754 = vadd.f32 %v3746, %v3752
  %v3755 = vrcp.pop %v3753
  %v3756 = vmul.f32 1.0, %v3755
  %v3757 = vrcp.pop %v3754
  %v3758 = vmul.f32 1.0, %v3757
  %v3759 = vmul.f32 %v3744, %v3756
  %v3760 = vmul.f32 %v3746, %v3758
  %3761 = vrot.lane.b32.xlu0 %v3365, 64
  %v3762 = vpop.permute.xlu0 %3761
  %3763 = vrot.lane.b32.xlu0 %v3370, 64
  %v3764 = vpop.permute.xlu0 %3763
  %v3767 = vmul.f32 %v3759, %v3762
  %v3768 = vmul.f32 %v3760, %v3764
  %v3769 = vmul.f32 %v3750, %v3756
  %v3770 = vmul.f32 %v3752, %v3758
  %3771 = vrot.lane.b32.xlu0 %v3375, 64
  %v3772 = vpop.permute.xlu0 %3771
  %3773 = vrot.lane.b32.xlu0 %v3380, 64
  %v3774 = vpop.permute.xlu0 %3773
  %v3777 = vmul.f32 %v3769, %v3772
  %v3778 = vmul.f32 %v3770, %v3774
  %v3779 = vadd.f32 %v3767, %v3777
  %v3780 = vadd.f32 %v3768, %v3778
  %3781 = vst.msk [vmem:[#allocation3] sm:$0xff] %vm569, %v3779
  %3782 = vst.msk [vmem:[#allocation3 + $0x8] sm:$0xff] %vm569, %v3780
  %v3783 = vmax.f32 %v3652, %v3737
  %v3784 = vmax.f32 %v3653, %v3738
  %v3785 = vsub.f32 %v3652, %v3783
  %v3786 = vsub.f32 %v3653, %v3784
  %v3787 = vmul.f32 %v3785, 1.442695
  %v3788 = vpow.pop %v3787
  %v3789 = vmul.f32 %v3786, 1.442695
  %v3790 = vpow.pop %v3789
  %v3791 = vsub.f32 %v3737, %v3783
  %v3792 = vsub.f32 %v3738, %v3784
  %v3793 = vmul.f32 %v3791, 1.442695
  %v3794 = vpow.pop %v3793
  %v3795 = vmul.f32 %v3792, 1.442695
  %v3796 = vpow.pop %v3795
  %v3797 = vadd.f32 %v3788, %v3794
  %v3798 = vadd.f32 %v3790, %v3796
  %v3799 = vrcp.pop %v3797
  %v3800 = vmul.f32 1.0, %v3799
  %v3801 = vrcp.pop %v3798
  %v3802 = vmul.f32 1.0, %v3801
  %v3803 = vmul.f32 %v3788, %v3800
  %v3804 = vmul.f32 %v3790, %v3802
  %v3805 = vmul.f32 %v3803, %v3762
  %v3806 = vmul.f32 %v3804, %v3764
  %v3807 = vmul.f32 %v3794, %v3800
  %v3808 = vmul.f32 %v3796, %v3802
  %v3809 = vmul.f32 %v3807, %v3772
  %v3810 = vmul.f32 %v3808, %v3774
  %v3811 = vadd.f32 %v3805, %v3809
  %v3812 = vadd.f32 %v3806, %v3810
  %3813 = vst.msk [vmem:[#allocation3 + $0x10] sm:$0xff] %vm569, %v3811
  %3814 = vst.msk [vmem:[#allocation3 + $0x18] sm:$0xff] %vm569, %v3812
  %v3815 = vld [vmem:[#allocation3] sm:$0xff]
  %v3816 = vld [vmem:[#allocation3 + $0x8] sm:$0xff]
  %v3817 = vld [vmem:[#allocation3 + $0x10] sm:$0xff]
  %v3818 = vld [vmem:[#allocation3 + $0x18] sm:$0xff]
  %v3819 = vld [vmem:[%s43] sm:$0xff]
  %v3820 = vld [vmem:[%s43 + $0x8] sm:$0xff]
  %v3821 = vld [vmem:[%s43 + $0x10] sm:$0xff]
  %v3822 = vld [vmem:[%s43 + $0x18] sm:$0xff]
  %v3823 = vld [vmem:[%s45] sm:$0x1]
  %v3825 = vlaneseq
  %v3826 = vshrl.u32 %v3825, 7
  %v3827 = vsub.s32 0, %v3826
  %v3828 = vrot.slane %v3823, %v3827
  %v3831 = vsel %vm569, %v3815, 0
  %v3834 = vsel %vm569, %v3816, 0
  %v3837 = vsel %vm569, %v3817, 0
  %v3840 = vsel %vm569, %v3818, 0
  %3842 = vmatprep.subr.mxu0 0.0
  %3843 = vmatpush1.msra.mxu0 0.0
  %3844 = vmatprep.subr.mxu0 0.0
  %3845 = vmatpush1.msra.mxu0 0.0
  %3846 = vmatprep.subr.mxu0 0.0
  %3847 = vmatpush1.msra.mxu0 0.0
  %3848 = vmatprep.subr.mxu0 0.0
  %3849 = vmatpush1.msra.mxu0 0.0
  %3850 = vmatprep.subr.mxu0 0.0
  %3851 = vmatpush1.msra.mxu0 0.0
  %3852 = vmatprep.subr.mxu0 0.0
  %3853 = vmatpush1.msra.mxu0 0.0
  %3854 = vmatprep.subr.mxu0 0.0
  %3855 = vmatpush1.msra.mxu0 0.0
  %3856 = vmatprep.subr.mxu0 0.0
  %3857 = vmatpush1.msra.mxu0 0.0
  %3858 = vmatprep.subr.mxu0 0.0
  %3859 = vmatpush1.msra.mxu0 0.0
  %3860 = vmatprep.subr.mxu0 0.0
  %3861 = vmatpush1.msra.mxu0 0.0
  %3862 = vmatprep.subr.mxu0 0.0
  %3863 = vmatpush1.msra.mxu0 0.0
  %3864 = vmatprep.subr.mxu0 0.0
  %3865 = vmatpush1.msra.mxu0 0.0
  %3866 = vmatprep.subr.mxu0 0.0
  %3867 = vmatpush1.msra.mxu0 %v3822
  %3868 = vmatprep.subr.mxu0 0.0
  %3869 = vmatpush1.msra.mxu0 %v3821
  %3870 = vmatprep.subr.mxu0 0.0
  %3871 = vmatpush1.msra.mxu0 %v3820
  %3872 = vmatprep.subr.mxu0 0.0
  %3873 = vmatpush1.msra.mxu0 %v3819
  %3874 = vmatprep.subr.mxu0 0.0
  %3875 = vmatpush2.msra.mxu0 0.0
  %3876 = vmatprep.subr.mxu0 0.0
  %3877 = vmatpush2.msra.mxu0 0.0
  %3878 = vmatprep.subr.mxu0 0.0
  %3879 = vmatpush2.msra.mxu0 0.0
  %3880 = vmatprep.subr.mxu0 0.0
  %3881 = vmatpush2.msra.mxu0 0.0
  %3882 = vmatprep.subr.mxu0 0.0
  %3883 = vmatpush2.msra.mxu0 0.0
  %3884 = vmatprep.subr.mxu0 0.0
  %3885 = vmatpush2.msra.mxu0 0.0
  %3886 = vmatprep.subr.mxu0 0.0
  %3887 = vmatpush2.msra.mxu0 0.0
  %3888 = vmatprep.subr.mxu0 0.0
  %3889 = vmatpush2.msra.mxu0 0.0
  %3890 = vmatprep.subr.mxu0 0.0
  %3891 = vmatpush2.msra.mxu0 0.0
  %3892 = vmatprep.subr.mxu0 0.0
  %3893 = vmatpush2.msra.mxu0 0.0
  %3894 = vmatprep.subr.mxu0 0.0
  %3895 = vmatpush2.msra.mxu0 0.0
  %3896 = vmatprep.subr.mxu0 0.0
  %3897 = vmatpush2.msra.mxu0 0.0
  %3898 = vmatprep.subr.mxu0 0.0
  %3899 = vmatpush2.msra.mxu0 0.0
  %3900 = vmatprep.subr.mxu0 0.0
  %3901 = vmatpush2.msra.mxu0 0.0
  %3902 = vmatprep.subr.mxu0 0.0
  %3903 = vmatpush2.msra.mxu0 0.0
  %3904 = vmatprep.subr.mxu0 0.0
  %3905 = vmatpush2.msra.mxu0 0.0
  %3906 = vmatprep.mubr.f32.mxu0 0.0
  %3907 = vmatmul.mubr.f32.gmra.mxu0 %v3831
  %v3908 = vpop.f32.mrf.mxu0
  %v3909 = vadd.f32 %v3828, %v3908
  %v3910 = vpop.f32.mrf.mxu0
  %3911 = vmatprep.mubr.f32.mxu0 0.0
  %3912 = vmatmul.mubr.f32.gmra.mxu0 %v3834
  %v3913 = vpop.f32.mrf.mxu0
  %v3914 = vadd.f32 %v3828, %v3913
  %v3915 = vpop.f32.mrf.mxu0
  %3916 = vmatprep.mubr.f32.mxu0 0.0
  %3917 = vmatmul.mubr.f32.gmra.mxu0 %v3837
  %v3918 = vpop.f32.mrf.mxu0
  %v3919 = vadd.f32 %v3828, %v3918
  %v3920 = vpop.f32.mrf.mxu0
  %3921 = vmatprep.mubr.f32.mxu0 0.0
  %3922 = vmatmul.mubr.f32.gmra.mxu0 %v3840
  %v3923 = vpop.f32.mrf.mxu0
  %v3924 = vadd.f32 %v3828, %v3923
  %v3925 = vpop.f32.mrf.mxu0
  %3926 = vdwg.mxu0
  %v3927 = vadd.f32 %v3271, %v3909
  %v3928 = vadd.f32 %v3272, %v3914
  %v3929 = vadd.f32 %v3273, %v3919
  %v3930 = vadd.f32 %v3274, %v3924
  %v3931 = vld [vmem:[%s47] sm:$0x1]
  %v3932 = vld [vmem:[%s49] sm:$0x1]
  %v3933 = vsel %vm569, %v3927, 0.0
  %3934 = vadd.xlane.f32.xlu0 %v3933
  %v3935 = vpop.xlane.xlu0 %3934
  %v3936 = vsel %vm569, %v3928, 0.0
  %3937 = vadd.xlane.f32.xlu0 %v3936
  %v3938 = vpop.xlane.xlu0 %3937
  %v3939 = vsel %vm569, %v3929, 0.0
  %3940 = vadd.xlane.f32.xlu0 %v3939
  %v3941 = vpop.xlane.xlu0 %3940
  %v3942 = vsel %vm569, %v3930, 0.0
  %3943 = vadd.xlane.f32.xlu0 %v3942
  %v3944 = vpop.xlane.xlu0 %3943
  %v3945 = vmul.f32 %v3935, %v1257
  %v3946 = vmul.f32 %v3938, %v1257
  %v3947 = vmul.f32 %v3941, %v1257
  %v3948 = vmul.f32 %v3944, %v1257
  %v3949 = vsub.f32 %v3927, %v3945
  %v3950 = vsub.f32 %v3928, %v3946
  %v3951 = vsub.f32 %v3929, %v3947
  %v3952 = vsub.f32 %v3930, %v3948
  %v3953 = vmul.f32 %v3949, %v3949
  %v3954 = vmul.f32 %v3950, %v3950
  %v3955 = vmul.f32 %v3951, %v3951
  %v3956 = vmul.f32 %v3952, %v3952
  %v3957 = vsel %vm569, %v3953, 0.0
  %3958 = vadd.xlane.f32.xlu0 %v3957
  %v3959 = vpop.xlane.xlu0 %3958
  %v3960 = vsel %vm569, %v3954, 0.0
  %3961 = vadd.xlane.f32.xlu0 %v3960
  %v3962 = vpop.xlane.xlu0 %3961
  %v3963 = vsel %vm569, %v3955, 0.0
  %3964 = vadd.xlane.f32.xlu0 %v3963
  %v3965 = vpop.xlane.xlu0 %3964
  %v3966 = vsel %vm569, %v3956, 0.0
  %3967 = vadd.xlane.f32.xlu0 %v3966
  %v3968 = vpop.xlane.xlu0 %3967
  %v3969 = vmul.f32 %v3959, %v1257
  %v3970 = vmul.f32 %v3962, %v1257
  %v3971 = vmul.f32 %v3965, %v1257
  %v3972 = vmul.f32 %v3968, %v1257
  %v3973 = vadd.f32 %v3969, 1e-05
  %v3974 = vadd.f32 %v3970, 1e-05
  %v3975 = vadd.f32 %v3971, 1e-05
  %v3976 = vadd.f32 %v3972, 1e-05
  %v3977 = vrsqrt.pop %v3973
  %v3978 = vrsqrt.pop %v3974
  %v3979 = vrsqrt.pop %v3975
  %v3980 = vrsqrt.pop %v3976
  %v3981 = vmul.f32 %v3949, %v3977
  %v3982 = vmul.f32 %v3950, %v3978
  %v3983 = vmul.f32 %v3951, %v3979
  %v3984 = vmul.f32 %v3952, %v3980
  %v3986 = vlaneseq
  %v3987 = vshrl.u32 %v3986, 7
  %v3988 = vsub.s32 0, %v3987
  %v3989 = vrot.slane %v3931, %v3988
  %v3991 = vmul.f32 %v3981, %v3989
  %v3992 = vmul.f32 %v3982, %v3989
  %v3993 = vmul.f32 %v3983, %v3989
  %v3994 = vmul.f32 %v3984, %v3989
  %v3996 = vlaneseq
  %v3997 = vshrl.u32 %v3996, 7
  %v3998 = vsub.s32 0, %v3997
  %v3999 = vrot.slane %v3932, %v3998
  %v4001 = vadd.f32 %v3991, %v3999
  %v4002 = vadd.f32 %v3992, %v3999
  %v4003 = vadd.f32 %v3993, %v3999
  %v4004 = vadd.f32 %v3994, %v3999
  %v4005 = vld [vmem:[%s51] sm:$0xff]
  %v4006 = vld [vmem:[%s51 + $0x8] sm:$0xff]
  %v4007 = vld [vmem:[%s51 + $0x10] sm:$0xff]
  %v4008 = vld [vmem:[%s51 + $0x18] sm:$0xff]
  %v4009 = vld [vmem:[%s51 + $0x20] sm:$0xff]
  %v4010 = vld [vmem:[%s51 + $0x28] sm:$0xff]
  %v4011 = vld [vmem:[%s51 + $0x30] sm:$0xff]
  %v4012 = vld [vmem:[%s51 + $0x38] sm:$0xff]
  %v4013 = vld [vmem:[%s51 + $0x40] sm:$0xff]
  %v4014 = vld [vmem:[%s51 + $0x48] sm:$0xff]
  %v4015 = vld [vmem:[%s51 + $0x50] sm:$0xff]
  %v4016 = vld [vmem:[%s51 + $0x58] sm:$0xff]
  %v4017 = vld [vmem:[%s51 + $0x60] sm:$0xff]
  %v4018 = vld [vmem:[%s51 + $0x68] sm:$0xff]
  %v4019 = vld [vmem:[%s51 + $0x70] sm:$0xff]
  %v4020 = vld [vmem:[%s51 + $0x78] sm:$0xff]
  %v4021 = vld [vmem:[%s51 + $0x80] sm:$0xff]
  %v4022 = vld [vmem:[%s51 + $0x88] sm:$0xff]
  %v4023 = vld [vmem:[%s51 + $0x90] sm:$0xff]
  %v4024 = vld [vmem:[%s51 + $0x98] sm:$0xff]
  %v4025 = vld [vmem:[%s51 + $0xa0] sm:$0xff]
  %v4026 = vld [vmem:[%s51 + $0xa8] sm:$0xff]
  %v4027 = vld [vmem:[%s51 + $0xb0] sm:$0xff]
  %v4028 = vld [vmem:[%s51 + $0xb8] sm:$0xff]
  %v4029 = vld [vmem:[%s51 + $0xc0] sm:$0xff]
  %v4030 = vld [vmem:[%s51 + $0xc8] sm:$0xff]
  %v4031 = vld [vmem:[%s51 + $0xd0] sm:$0xff]
  %v4032 = vld [vmem:[%s51 + $0xd8] sm:$0xff]
  %v4033 = vld [vmem:[%s51 + $0xe0] sm:$0xff]
  %v4034 = vld [vmem:[%s51 + $0xe8] sm:$0xff]
  %v4035 = vld [vmem:[%s51 + $0xf0] sm:$0xff]
  %v4036 = vld [vmem:[%s51 + $0xf8] sm:$0xff]
  %v4037 = vld [vmem:[%s51 + $0x100] sm:$0xff]
  %v4038 = vld [vmem:[%s51 + $0x108] sm:$0xff]
  %v4039 = vld [vmem:[%s51 + $0x110] sm:$0xff]
  %v4040 = vld [vmem:[%s51 + $0x118] sm:$0xff]
  %v4041 = vld [vmem:[%s51 + $0x120] sm:$0xff]
  %v4042 = vld [vmem:[%s51 + $0x128] sm:$0xff]
  %v4043 = vld [vmem:[%s51 + $0x130] sm:$0xff]
  %v4044 = vld [vmem:[%s51 + $0x138] sm:$0xff]
  %v4045 = vld [vmem:[%s51 + $0x140] sm:$0xff]
  %v4046 = vld [vmem:[%s51 + $0x148] sm:$0xff]
  %v4047 = vld [vmem:[%s51 + $0x150] sm:$0xff]
  %v4048 = vld [vmem:[%s51 + $0x158] sm:$0xff]
  %v4049 = vld [vmem:[%s51 + $0x160] sm:$0xff]
  %v4050 = vld [vmem:[%s51 + $0x168] sm:$0xff]
  %v4051 = vld [vmem:[%s51 + $0x170] sm:$0xff]
  %v4052 = vld [vmem:[%s51 + $0x178] sm:$0xff]
  %v4053 = vld [vmem:[%s51 + $0x180] sm:$0xff]
  %v4054 = vld [vmem:[%s51 + $0x188] sm:$0xff]
  %v4055 = vld [vmem:[%s51 + $0x190] sm:$0xff]
  %v4056 = vld [vmem:[%s51 + $0x198] sm:$0xff]
  %v4057 = vld [vmem:[%s51 + $0x1a0] sm:$0xff]
  %v4058 = vld [vmem:[%s51 + $0x1a8] sm:$0xff]
  %v4059 = vld [vmem:[%s51 + $0x1b0] sm:$0xff]
  %v4060 = vld [vmem:[%s51 + $0x1b8] sm:$0xff]
  %v4061 = vld [vmem:[%s51 + $0x1c0] sm:$0xff]
  %v4062 = vld [vmem:[%s51 + $0x1c8] sm:$0xff]
  %v4063 = vld [vmem:[%s51 + $0x1d0] sm:$0xff]
  %v4064 = vld [vmem:[%s51 + $0x1d8] sm:$0xff]
  %v4065 = vld [vmem:[%s51 + $0x1e0] sm:$0xff]
  %v4066 = vld [vmem:[%s51 + $0x1e8] sm:$0xff]
  %v4067 = vld [vmem:[%s51 + $0x1f0] sm:$0xff]
  %v4068 = vld [vmem:[%s51 + $0x1f8] sm:$0xff]
  %v4069 = vld [vmem:[%s53] sm:$0xff]
  %v4070 = vld [vmem:[%s53 + $0x8] sm:$0xff]
  %v4073 = vlaneseq
  %v4074 = vshrl.u32 %v4073, 7
  %v4075 = vsub.s32 0, %v4074
  %v4076 = vrot.slane %v4069, %v4075
  %v4077 = vlaneseq
  %v4078 = vshrl.u32 %v4077, 7
  %v4079 = vsub.s32 1, %v4078
  %v4080 = vrot.slane %v4069, %v4079
  %v4081 = vlaneseq
  %v4082 = vshrl.u32 %v4081, 7
  %v4083 = vsub.s32 2, %v4082
  %v4084 = vrot.slane %v4069, %v4083
  %v4085 = vlaneseq
  %v4086 = vshrl.u32 %v4085, 7
  %v4087 = vsub.s32 3, %v4086
  %v4088 = vrot.slane %v4069, %v4087
  %v4089 = vlaneseq
  %v4090 = vshrl.u32 %v4089, 7
  %v4091 = vsub.s32 4, %v4090
  %v4092 = vrot.slane %v4069, %v4091
  %v4093 = vlaneseq
  %v4094 = vshrl.u32 %v4093, 7
  %v4095 = vsub.s32 5, %v4094
  %v4096 = vrot.slane %v4069, %v4095
  %v4097 = vlaneseq
  %v4098 = vshrl.u32 %v4097, 7
  %v4099 = vsub.s32 6, %v4098
  %v4100 = vrot.slane %v4069, %v4099
  %v4101 = vlaneseq
  %v4102 = vshrl.u32 %v4101, 7
  %v4103 = vsub.s32 7, %v4102
  %v4104 = vrot.slane %v4069, %v4103
  %v4105 = vlaneseq
  %v4106 = vshrl.u32 %v4105, 7
  %v4107 = vsub.s32 0, %v4106
  %v4108 = vrot.slane %v4070, %v4107
  %v4109 = vlaneseq
  %v4110 = vshrl.u32 %v4109, 7
  %v4111 = vsub.s32 1, %v4110
  %v4112 = vrot.slane %v4070, %v4111
  %v4113 = vlaneseq
  %v4114 = vshrl.u32 %v4113, 7
  %v4115 = vsub.s32 2, %v4114
  %v4116 = vrot.slane %v4070, %v4115
  %v4117 = vlaneseq
  %v4118 = vshrl.u32 %v4117, 7
  %v4119 = vsub.s32 3, %v4118
  %v4120 = vrot.slane %v4070, %v4119
  %v4121 = vlaneseq
  %v4122 = vshrl.u32 %v4121, 7
  %v4123 = vsub.s32 4, %v4122
  %v4124 = vrot.slane %v4070, %v4123
  %v4125 = vlaneseq
  %v4126 = vshrl.u32 %v4125, 7
  %v4127 = vsub.s32 5, %v4126
  %v4128 = vrot.slane %v4070, %v4127
  %v4129 = vlaneseq
  %v4130 = vshrl.u32 %v4129, 7
  %v4131 = vsub.s32 6, %v4130
  %v4132 = vrot.slane %v4070, %v4131
  %v4133 = vlaneseq
  %v4134 = vshrl.u32 %v4133, 7
  %v4135 = vsub.s32 7, %v4134
  %v4136 = vrot.slane %v4070, %v4135
  %v4154 = vsel %vm569, %v4001, 0
  %v4157 = vsel %vm569, %v4002, 0
  %v4160 = vsel %vm569, %v4003, 0
  %v4163 = vsel %vm569, %v4004, 0
  %4165 = vmatprep.subr.mxu0 0.0
  %4166 = vmatpush1.msra.mxu0 0.0
  %4167 = vmatprep.subr.mxu0 0.0
  %4168 = vmatpush1.msra.mxu0 0.0
  %4169 = vmatprep.subr.mxu0 0.0
  %4170 = vmatpush1.msra.mxu0 0.0
  %4171 = vmatprep.subr.mxu0 0.0
  %4172 = vmatpush1.msra.mxu0 0.0
  %4173 = vmatprep.subr.mxu0 0.0
  %4174 = vmatpush1.msra.mxu0 0.0
  %4175 = vmatprep.subr.mxu0 0.0
  %4176 = vmatpush1.msra.mxu0 0.0
  %4177 = vmatprep.subr.mxu0 0.0
  %4178 = vmatpush1.msra.mxu0 0.0
  %4179 = vmatprep.subr.mxu0 0.0
  %4180 = vmatpush1.msra.mxu0 0.0
  %4181 = vmatprep.subr.mxu0 0.0
  %4182 = vmatpush1.msra.mxu0 0.0
  %4183 = vmatprep.subr.mxu0 0.0
  %4184 = vmatpush1.msra.mxu0 0.0
  %4185 = vmatprep.subr.mxu0 0.0
  %4186 = vmatpush1.msra.mxu0 0.0
  %4187 = vmatprep.subr.mxu0 0.0
  %4188 = vmatpush1.msra.mxu0 0.0
  %4189 = vmatprep.subr.mxu0 %v4054
  %4190 = vmatpush1.msra.mxu0 %v4053
  %4191 = vmatprep.subr.mxu0 %v4038
  %4192 = vmatpush1.msra.mxu0 %v4037
  %4193 = vmatprep.subr.mxu0 %v4022
  %4194 = vmatpush1.msra.mxu0 %v4021
  %4195 = vmatprep.subr.mxu0 %v4006
  %4196 = vmatpush1.msra.mxu0 %v4005
  %4197 = vmatprep.subr.mxu0 0.0
  %4198 = vmatpush2.msra.mxu0 0.0
  %4199 = vmatprep.subr.mxu0 0.0
  %4200 = vmatpush2.msra.mxu0 0.0
  %4201 = vmatprep.subr.mxu0 0.0
  %4202 = vmatpush2.msra.mxu0 0.0
  %4203 = vmatprep.subr.mxu0 0.0
  %4204 = vmatpush2.msra.mxu0 0.0
  %4205 = vmatprep.subr.mxu0 0.0
  %4206 = vmatpush2.msra.mxu0 0.0
  %4207 = vmatprep.subr.mxu0 0.0
  %4208 = vmatpush2.msra.mxu0 0.0
  %4209 = vmatprep.subr.mxu0 0.0
  %4210 = vmatpush2.msra.mxu0 0.0
  %4211 = vmatprep.subr.mxu0 0.0
  %4212 = vmatpush2.msra.mxu0 0.0
  %4213 = vmatprep.subr.mxu0 0.0
  %4214 = vmatpush2.msra.mxu0 0.0
  %4215 = vmatprep.subr.mxu0 0.0
  %4216 = vmatpush2.msra.mxu0 0.0
  %4217 = vmatprep.subr.mxu0 0.0
  %4218 = vmatpush2.msra.mxu0 0.0
  %4219 = vmatprep.subr.mxu0 0.0
  %4220 = vmatpush2.msra.mxu0 0.0
  %4221 = vmatprep.subr.mxu0 0.0
  %4222 = vmatpush2.msra.mxu0 0.0
  %4223 = vmatprep.subr.mxu0 0.0
  %4224 = vmatpush2.msra.mxu0 0.0
  %4225 = vmatprep.subr.mxu0 0.0
  %4226 = vmatpush2.msra.mxu0 0.0
  %4227 = vmatprep.subr.mxu0 0.0
  %4228 = vmatpush2.msra.mxu0 0.0
  %4229 = vmatprep.mubr.f32.mxu0 0.0
  %4230 = vmatmul.mubr.f32.gmra.mxu0 %v4154
  %v4231 = vpop.f32.mrf.mxu0
  %v4232 = vadd.f32 %v4076, %v4231
  %v4233 = vpop.f32.mrf.mxu0
  %v4234 = vadd.f32 %v4080, %v4233
  %4235 = vmatprep.mubr.f32.mxu0 0.0
  %4236 = vmatmul.mubr.f32.gmra.mxu0 %v4157
  %v4237 = vpop.f32.mrf.mxu0
  %v4238 = vadd.f32 %v4076, %v4237
  %v4239 = vpop.f32.mrf.mxu0
  %v4240 = vadd.f32 %v4080, %v4239
  %4241 = vmatprep.mubr.f32.mxu0 0.0
  %4242 = vmatmul.mubr.f32.gmra.mxu0 %v4160
  %v4243 = vpop.f32.mrf.mxu0
  %v4244 = vadd.f32 %v4076, %v4243
  %v4245 = vpop.f32.mrf.mxu0
  %v4246 = vadd.f32 %v4080, %v4245
  %4247 = vmatprep.mubr.f32.mxu0 0.0
  %4248 = vmatmul.mubr.f32.gmra.mxu0 %v4163
  %v4249 = vpop.f32.mrf.mxu0
  %v4250 = vadd.f32 %v4076, %v4249
  %v4251 = vpop.f32.mrf.mxu0
  %v4252 = vadd.f32 %v4080, %v4251
  %4253 = vdwg.mxu0
  %4254 = vmatprep.subr.mxu0 0.0
  %4255 = vmatpush1.msra.mxu0 0.0
  %4256 = vmatprep.subr.mxu0 0.0
  %4257 = vmatpush1.msra.mxu0 0.0
  %4258 = vmatprep.subr.mxu0 0.0
  %4259 = vmatpush1.msra.mxu0 0.0
  %4260 = vmatprep.subr.mxu0 0.0
  %4261 = vmatpush1.msra.mxu0 0.0
  %4262 = vmatprep.subr.mxu0 0.0
  %4263 = vmatpush1.msra.mxu0 0.0
  %4264 = vmatprep.subr.mxu0 0.0
  %4265 = vmatpush1.msra.mxu0 0.0
  %4266 = vmatprep.subr.mxu0 0.0
  %4267 = vmatpush1.msra.mxu0 0.0
  %4268 = vmatprep.subr.mxu0 0.0
  %4269 = vmatpush1.msra.mxu0 0.0
  %4270 = vmatprep.subr.mxu0 0.0
  %4271 = vmatpush1.msra.mxu0 0.0
  %4272 = vmatprep.subr.mxu0 0.0
  %4273 = vmatpush1.msra.mxu0 0.0
  %4274 = vmatprep.subr.mxu0 0.0
  %4275 = vmatpush1.msra.mxu0 0.0
  %4276 = vmatprep.subr.mxu0 0.0
  %4277 = vmatpush1.msra.mxu0 0.0
  %4278 = vmatprep.subr.mxu0 %v4056
  %4279 = vmatpush1.msra.mxu0 %v4055
  %4280 = vmatprep.subr.mxu0 %v4040
  %4281 = vmatpush1.msra.mxu0 %v4039
  %4282 = vmatprep.subr.mxu0 %v4024
  %4283 = vmatpush1.msra.mxu0 %v4023
  %4284 = vmatprep.subr.mxu0 %v4008
  %4285 = vmatpush1.msra.mxu0 %v4007
  %4286 = vmatprep.subr.mxu0 0.0
  %4287 = vmatpush2.msra.mxu0 0.0
  %4288 = vmatprep.subr.mxu0 0.0
  %4289 = vmatpush2.msra.mxu0 0.0
  %4290 = vmatprep.subr.mxu0 0.0
  %4291 = vmatpush2.msra.mxu0 0.0
  %4292 = vmatprep.subr.mxu0 0.0
  %4293 = vmatpush2.msra.mxu0 0.0
  %4294 = vmatprep.subr.mxu0 0.0
  %4295 = vmatpush2.msra.mxu0 0.0
  %4296 = vmatprep.subr.mxu0 0.0
  %4297 = vmatpush2.msra.mxu0 0.0
  %4298 = vmatprep.subr.mxu0 0.0
  %4299 = vmatpush2.msra.mxu0 0.0
  %4300 = vmatprep.subr.mxu0 0.0
  %4301 = vmatpush2.msra.mxu0 0.0
  %4302 = vmatprep.subr.mxu0 0.0
  %4303 = vmatpush2.msra.mxu0 0.0
  %4304 = vmatprep.subr.mxu0 0.0
  %4305 = vmatpush2.msra.mxu0 0.0
  %4306 = vmatprep.subr.mxu0 0.0
  %4307 = vmatpush2.msra.mxu0 0.0
  %4308 = vmatprep.subr.mxu0 0.0
  %4309 = vmatpush2.msra.mxu0 0.0
  %4310 = vmatprep.subr.mxu0 0.0
  %4311 = vmatpush2.msra.mxu0 0.0
  %4312 = vmatprep.subr.mxu0 0.0
  %4313 = vmatpush2.msra.mxu0 0.0
  %4314 = vmatprep.subr.mxu0 0.0
  %4315 = vmatpush2.msra.mxu0 0.0
  %4316 = vmatprep.subr.mxu0 0.0
  %4317 = vmatpush2.msra.mxu0 0.0
  %4318 = vmatprep.mubr.f32.mxu0 0.0
  %4319 = vmatmul.mubr.f32.gmra.mxu0 %v4154
  %v4320 = vpop.f32.mrf.mxu0
  %v4321 = vadd.f32 %v4084, %v4320
  %v4322 = vpop.f32.mrf.mxu0
  %v4323 = vadd.f32 %v4088, %v4322
  %4324 = vmatprep.mubr.f32.mxu0 0.0
  %4325 = vmatmul.mubr.f32.gmra.mxu0 %v4157
  %v4326 = vpop.f32.mrf.mxu0
  %v4327 = vadd.f32 %v4084, %v4326
  %v4328 = vpop.f32.mrf.mxu0
  %v4329 = vadd.f32 %v4088, %v4328
  %4330 = vmatprep.mubr.f32.mxu0 0.0
  %4331 = vmatmul.mubr.f32.gmra.mxu0 %v4160
  %v4332 = vpop.f32.mrf.mxu0
  %v4333 = vadd.f32 %v4084, %v4332
  %v4334 = vpop.f32.mrf.mxu0
  %v4335 = vadd.f32 %v4088, %v4334
  %4336 = vmatprep.mubr.f32.mxu0 0.0
  %4337 = vmatmul.mubr.f32.gmra.mxu0 %v4163
  %v4338 = vpop.f32.mrf.mxu0
  %v4339 = vadd.f32 %v4084, %v4338
  %v4340 = vpop.f32.mrf.mxu0
  %v4341 = vadd.f32 %v4088, %v4340
  %4342 = vdwg.mxu0
  %4343 = vmatprep.subr.mxu0 0.0
  %4344 = vmatpush1.msra.mxu0 0.0
  %4345 = vmatprep.subr.mxu0 0.0
  %4346 = vmatpush1.msra.mxu0 0.0
  %4347 = vmatprep.subr.mxu0 0.0
  %4348 = vmatpush1.msra.mxu0 0.0
  %4349 = vmatprep.subr.mxu0 0.0
  %4350 = vmatpush1.msra.mxu0 0.0
  %4351 = vmatprep.subr.mxu0 0.0
  %4352 = vmatpush1.msra.mxu0 0.0
  %4353 = vmatprep.subr.mxu0 0.0
  %4354 = vmatpush1.msra.mxu0 0.0
  %4355 = vmatprep.subr.mxu0 0.0
  %4356 = vmatpush1.msra.mxu0 0.0
  %4357 = vmatprep.subr.mxu0 0.0
  %4358 = vmatpush1.msra.mxu0 0.0
  %4359 = vmatprep.subr.mxu0 0.0
  %4360 = vmatpush1.msra.mxu0 0.0
  %4361 = vmatprep.subr.mxu0 0.0
  %4362 = vmatpush1.msra.mxu0 0.0
  %4363 = vmatprep.subr.mxu0 0.0
  %4364 = vmatpush1.msra.mxu0 0.0
  %4365 = vmatprep.subr.mxu0 0.0
  %4366 = vmatpush1.msra.mxu0 0.0
  %4367 = vmatprep.subr.mxu0 %v4058
  %4368 = vmatpush1.msra.mxu0 %v4057
  %4369 = vmatprep.subr.mxu0 %v4042
  %4370 = vmatpush1.msra.mxu0 %v4041
  %4371 = vmatprep.subr.mxu0 %v4026
  %4372 = vmatpush1.msra.mxu0 %v4025
  %4373 = vmatprep.subr.mxu0 %v4010
  %4374 = vmatpush1.msra.mxu0 %v4009
  %4375 = vmatprep.subr.mxu0 0.0
  %4376 = vmatpush2.msra.mxu0 0.0
  %4377 = vmatprep.subr.mxu0 0.0
  %4378 = vmatpush2.msra.mxu0 0.0
  %4379 = vmatprep.subr.mxu0 0.0
  %4380 = vmatpush2.msra.mxu0 0.0
  %4381 = vmatprep.subr.mxu0 0.0
  %4382 = vmatpush2.msra.mxu0 0.0
  %4383 = vmatprep.subr.mxu0 0.0
  %4384 = vmatpush2.msra.mxu0 0.0
  %4385 = vmatprep.subr.mxu0 0.0
  %4386 = vmatpush2.msra.mxu0 0.0
  %4387 = vmatprep.subr.mxu0 0.0
  %4388 = vmatpush2.msra.mxu0 0.0
  %4389 = vmatprep.subr.mxu0 0.0
  %4390 = vmatpush2.msra.mxu0 0.0
  %4391 = vmatprep.subr.mxu0 0.0
  %4392 = vmatpush2.msra.mxu0 0.0
  %4393 = vmatprep.subr.mxu0 0.0
  %4394 = vmatpush2.msra.mxu0 0.0
  %4395 = vmatprep.subr.mxu0 0.0
  %4396 = vmatpush2.msra.mxu0 0.0
  %4397 = vmatprep.subr.mxu0 0.0
  %4398 = vmatpush2.msra.mxu0 0.0
  %4399 = vmatprep.subr.mxu0 0.0
  %4400 = vmatpush2.msra.mxu0 0.0
  %4401 = vmatprep.subr.mxu0 0.0
  %4402 = vmatpush2.msra.mxu0 0.0
  %4403 = vmatprep.subr.mxu0 0.0
  %4404 = vmatpush2.msra.mxu0 0.0
  %4405 = vmatprep.subr.mxu0 0.0
  %4406 = vmatpush2.msra.mxu0 0.0
  %4407 = vmatprep.mubr.f32.mxu0 0.0
  %4408 = vmatmul.mubr.f32.gmra.mxu0 %v4154
  %v4409 = vpop.f32.mrf.mxu0
  %v4410 = vadd.f32 %v4092, %v4409
  %v4411 = vpop.f32.mrf.mxu0
  %v4412 = vadd.f32 %v4096, %v4411
  %4413 = vmatprep.mubr.f32.mxu0 0.0
  %4414 = vmatmul.mubr.f32.gmra.mxu0 %v4157
  %v4415 = vpop.f32.mrf.mxu0
  %v4416 = vadd.f32 %v4092, %v4415
  %v4417 = vpop.f32.mrf.mxu0
  %v4418 = vadd.f32 %v4096, %v4417
  %4419 = vmatprep.mubr.f32.mxu0 0.0
  %4420 = vmatmul.mubr.f32.gmra.mxu0 %v4160
  %v4421 = vpop.f32.mrf.mxu0
  %v4422 = vadd.f32 %v4092, %v4421
  %v4423 = vpop.f32.mrf.mxu0
  %v4424 = vadd.f32 %v4096, %v4423
  %4425 = vmatprep.mubr.f32.mxu0 0.0
  %4426 = vmatmul.mubr.f32.gmra.mxu0 %v4163
  %v4427 = vpop.f32.mrf.mxu0
  %v4428 = vadd.f32 %v4092, %v4427
  %v4429 = vpop.f32.mrf.mxu0
  %v4430 = vadd.f32 %v4096, %v4429
  %4431 = vdwg.mxu0
  %4432 = vmatprep.subr.mxu0 0.0
  %4433 = vmatpush1.msra.mxu0 0.0
  %4434 = vmatprep.subr.mxu0 0.0
  %4435 = vmatpush1.msra.mxu0 0.0
  %4436 = vmatprep.subr.mxu0 0.0
  %4437 = vmatpush1.msra.mxu0 0.0
  %4438 = vmatprep.subr.mxu0 0.0
  %4439 = vmatpush1.msra.mxu0 0.0
  %4440 = vmatprep.subr.mxu0 0.0
  %4441 = vmatpush1.msra.mxu0 0.0
  %4442 = vmatprep.subr.mxu0 0.0
  %4443 = vmatpush1.msra.mxu0 0.0
  %4444 = vmatprep.subr.mxu0 0.0
  %4445 = vmatpush1.msra.mxu0 0.0
  %4446 = vmatprep.subr.mxu0 0.0
  %4447 = vmatpush1.msra.mxu0 0.0
  %4448 = vmatprep.subr.mxu0 0.0
  %4449 = vmatpush1.msra.mxu0 0.0
  %4450 = vmatprep.subr.mxu0 0.0
  %4451 = vmatpush1.msra.mxu0 0.0
  %4452 = vmatprep.subr.mxu0 0.0
  %4453 = vmatpush1.msra.mxu0 0.0
  %4454 = vmatprep.subr.mxu0 0.0
  %4455 = vmatpush1.msra.mxu0 0.0
  %4456 = vmatprep.subr.mxu0 %v4060
  %4457 = vmatpush1.msra.mxu0 %v4059
  %4458 = vmatprep.subr.mxu0 %v4044
  %4459 = vmatpush1.msra.mxu0 %v4043
  %4460 = vmatprep.subr.mxu0 %v4028
  %4461 = vmatpush1.msra.mxu0 %v4027
  %4462 = vmatprep.subr.mxu0 %v4012
  %4463 = vmatpush1.msra.mxu0 %v4011
  %4464 = vmatprep.subr.mxu0 0.0
  %4465 = vmatpush2.msra.mxu0 0.0
  %4466 = vmatprep.subr.mxu0 0.0
  %4467 = vmatpush2.msra.mxu0 0.0
  %4468 = vmatprep.subr.mxu0 0.0
  %4469 = vmatpush2.msra.mxu0 0.0
  %4470 = vmatprep.subr.mxu0 0.0
  %4471 = vmatpush2.msra.mxu0 0.0
  %4472 = vmatprep.subr.mxu0 0.0
  %4473 = vmatpush2.msra.mxu0 0.0
  %4474 = vmatprep.subr.mxu0 0.0
  %4475 = vmatpush2.msra.mxu0 0.0
  %4476 = vmatprep.subr.mxu0 0.0
  %4477 = vmatpush2.msra.mxu0 0.0
  %4478 = vmatprep.subr.mxu0 0.0
  %4479 = vmatpush2.msra.mxu0 0.0
  %4480 = vmatprep.subr.mxu0 0.0
  %4481 = vmatpush2.msra.mxu0 0.0
  %4482 = vmatprep.subr.mxu0 0.0
  %4483 = vmatpush2.msra.mxu0 0.0
  %4484 = vmatprep.subr.mxu0 0.0
  %4485 = vmatpush2.msra.mxu0 0.0
  %4486 = vmatprep.subr.mxu0 0.0
  %4487 = vmatpush2.msra.mxu0 0.0
  %4488 = vmatprep.subr.mxu0 0.0
  %4489 = vmatpush2.msra.mxu0 0.0
  %4490 = vmatprep.subr.mxu0 0.0
  %4491 = vmatpush2.msra.mxu0 0.0
  %4492 = vmatprep.subr.mxu0 0.0
  %4493 = vmatpush2.msra.mxu0 0.0
  %4494 = vmatprep.subr.mxu0 0.0
  %4495 = vmatpush2.msra.mxu0 0.0
  %4496 = vmatprep.mubr.f32.mxu0 0.0
  %4497 = vmatmul.mubr.f32.gmra.mxu0 %v4154
  %v4498 = vpop.f32.mrf.mxu0
  %v4499 = vadd.f32 %v4100, %v4498
  %v4500 = vpop.f32.mrf.mxu0
  %v4501 = vadd.f32 %v4104, %v4500
  %4502 = vmatprep.mubr.f32.mxu0 0.0
  %4503 = vmatmul.mubr.f32.gmra.mxu0 %v4157
  %v4504 = vpop.f32.mrf.mxu0
  %v4505 = vadd.f32 %v4100, %v4504
  %v4506 = vpop.f32.mrf.mxu0
  %v4507 = vadd.f32 %v4104, %v4506
  %4508 = vmatprep.mubr.f32.mxu0 0.0
  %4509 = vmatmul.mubr.f32.gmra.mxu0 %v4160
  %v4510 = vpop.f32.mrf.mxu0
  %v4511 = vadd.f32 %v4100, %v4510
  %v4512 = vpop.f32.mrf.mxu0
  %v4513 = vadd.f32 %v4104, %v4512
  %4514 = vmatprep.mubr.f32.mxu0 0.0
  %4515 = vmatmul.mubr.f32.gmra.mxu0 %v4163
  %v4516 = vpop.f32.mrf.mxu0
  %v4517 = vadd.f32 %v4100, %v4516
  %v4518 = vpop.f32.mrf.mxu0
  %v4519 = vadd.f32 %v4104, %v4518
  %4520 = vdwg.mxu0
  %4521 = vmatprep.subr.mxu0 0.0
  %4522 = vmatpush1.msra.mxu0 0.0
  %4523 = vmatprep.subr.mxu0 0.0
  %4524 = vmatpush1.msra.mxu0 0.0
  %4525 = vmatprep.subr.mxu0 0.0
  %4526 = vmatpush1.msra.mxu0 0.0
  %4527 = vmatprep.subr.mxu0 0.0
  %4528 = vmatpush1.msra.mxu0 0.0
  %4529 = vmatprep.subr.mxu0 0.0
  %4530 = vmatpush1.msra.mxu0 0.0
  %4531 = vmatprep.subr.mxu0 0.0
  %4532 = vmatpush1.msra.mxu0 0.0
  %4533 = vmatprep.subr.mxu0 0.0
  %4534 = vmatpush1.msra.mxu0 0.0
  %4535 = vmatprep.subr.mxu0 0.0
  %4536 = vmatpush1.msra.mxu0 0.0
  %4537 = vmatprep.subr.mxu0 0.0
  %4538 = vmatpush1.msra.mxu0 0.0
  %4539 = vmatprep.subr.mxu0 0.0
  %4540 = vmatpush1.msra.mxu0 0.0
  %4541 = vmatprep.subr.mxu0 0.0
  %4542 = vmatpush1.msra.mxu0 0.0
  %4543 = vmatprep.subr.mxu0 0.0
  %4544 = vmatpush1.msra.mxu0 0.0
  %4545 = vmatprep.subr.mxu0 %v4062
  %4546 = vmatpush1.msra.mxu0 %v4061
  %4547 = vmatprep.subr.mxu0 %v4046
  %4548 = vmatpush1.msra.mxu0 %v4045
  %4549 = vmatprep.subr.mxu0 %v4030
  %4550 = vmatpush1.msra.mxu0 %v4029
  %4551 = vmatprep.subr.mxu0 %v4014
  %4552 = vmatpush1.msra.mxu0 %v4013
  %4553 = vmatprep.subr.mxu0 0.0
  %4554 = vmatpush2.msra.mxu0 0.0
  %4555 = vmatprep.subr.mxu0 0.0
  %4556 = vmatpush2.msra.mxu0 0.0
  %4557 = vmatprep.subr.mxu0 0.0
  %4558 = vmatpush2.msra.mxu0 0.0
  %4559 = vmatprep.subr.mxu0 0.0
  %4560 = vmatpush2.msra.mxu0 0.0
  %4561 = vmatprep.subr.mxu0 0.0
  %4562 = vmatpush2.msra.mxu0 0.0
  %4563 = vmatprep.subr.mxu0 0.0
  %4564 = vmatpush2.msra.mxu0 0.0
  %4565 = vmatprep.subr.mxu0 0.0
  %4566 = vmatpush2.msra.mxu0 0.0
  %4567 = vmatprep.subr.mxu0 0.0
  %4568 = vmatpush2.msra.mxu0 0.0
  %4569 = vmatprep.subr.mxu0 0.0
  %4570 = vmatpush2.msra.mxu0 0.0
  %4571 = vmatprep.subr.mxu0 0.0
  %4572 = vmatpush2.msra.mxu0 0.0
  %4573 = vmatprep.subr.mxu0 0.0
  %4574 = vmatpush2.msra.mxu0 0.0
  %4575 = vmatprep.subr.mxu0 0.0
  %4576 = vmatpush2.msra.mxu0 0.0
  %4577 = vmatprep.subr.mxu0 0.0
  %4578 = vmatpush2.msra.mxu0 0.0
  %4579 = vmatprep.subr.mxu0 0.0
  %4580 = vmatpush2.msra.mxu0 0.0
  %4581 = vmatprep.subr.mxu0 0.0
  %4582 = vmatpush2.msra.mxu0 0.0
  %4583 = vmatprep.subr.mxu0 0.0
  %4584 = vmatpush2.msra.mxu0 0.0
  %4585 = vmatprep.mubr.f32.mxu0 0.0
  %4586 = vmatmul.mubr.f32.gmra.mxu0 %v4154
  %v4587 = vpop.f32.mrf.mxu0
  %v4588 = vadd.f32 %v4108, %v4587
  %v4589 = vpop.f32.mrf.mxu0
  %v4590 = vadd.f32 %v4112, %v4589
  %4591 = vmatprep.mubr.f32.mxu0 0.0
  %4592 = vmatmul.mubr.f32.gmra.mxu0 %v4157
  %v4593 = vpop.f32.mrf.mxu0
  %v4594 = vadd.f32 %v4108, %v4593
  %v4595 = vpop.f32.mrf.mxu0
  %v4596 = vadd.f32 %v4112, %v4595
  %4597 = vmatprep.mubr.f32.mxu0 0.0
  %4598 = vmatmul.mubr.f32.gmra.mxu0 %v4160
  %v4599 = vpop.f32.mrf.mxu0
  %v4600 = vadd.f32 %v4108, %v4599
  %v4601 = vpop.f32.mrf.mxu0
  %v4602 = vadd.f32 %v4112, %v4601
  %4603 = vmatprep.mubr.f32.mxu0 0.0
  %4604 = vmatmul.mubr.f32.gmra.mxu0 %v4163
  %v4605 = vpop.f32.mrf.mxu0
  %v4606 = vadd.f32 %v4108, %v4605
  %v4607 = vpop.f32.mrf.mxu0
  %v4608 = vadd.f32 %v4112, %v4607
  %4609 = vdwg.mxu0
  %4610 = vmatprep.subr.mxu0 0.0
  %4611 = vmatpush1.msra.mxu0 0.0
  %4612 = vmatprep.subr.mxu0 0.0
  %4613 = vmatpush1.msra.mxu0 0.0
  %4614 = vmatprep.subr.mxu0 0.0
  %4615 = vmatpush1.msra.mxu0 0.0
  %4616 = vmatprep.subr.mxu0 0.0
  %4617 = vmatpush1.msra.mxu0 0.0
  %4618 = vmatprep.subr.mxu0 0.0
  %4619 = vmatpush1.msra.mxu0 0.0
  %4620 = vmatprep.subr.mxu0 0.0
  %4621 = vmatpush1.msra.mxu0 0.0
  %4622 = vmatprep.subr.mxu0 0.0
  %4623 = vmatpush1.msra.mxu0 0.0
  %4624 = vmatprep.subr.mxu0 0.0
  %4625 = vmatpush1.msra.mxu0 0.0
  %4626 = vmatprep.subr.mxu0 0.0
  %4627 = vmatpush1.msra.mxu0 0.0
  %4628 = vmatprep.subr.mxu0 0.0
  %4629 = vmatpush1.msra.mxu0 0.0
  %4630 = vmatprep.subr.mxu0 0.0
  %4631 = vmatpush1.msra.mxu0 0.0
  %4632 = vmatprep.subr.mxu0 0.0
  %4633 = vmatpush1.msra.mxu0 0.0
  %4634 = vmatprep.subr.mxu0 %v4064
  %4635 = vmatpush1.msra.mxu0 %v4063
  %4636 = vmatprep.subr.mxu0 %v4048
  %4637 = vmatpush1.msra.mxu0 %v4047
  %4638 = vmatprep.subr.mxu0 %v4032
  %4639 = vmatpush1.msra.mxu0 %v4031
  %4640 = vmatprep.subr.mxu0 %v4016
  %4641 = vmatpush1.msra.mxu0 %v4015
  %4642 = vmatprep.subr.mxu0 0.0
  %4643 = vmatpush2.msra.mxu0 0.0
  %4644 = vmatprep.subr.mxu0 0.0
  %4645 = vmatpush2.msra.mxu0 0.0
  %4646 = vmatprep.subr.mxu0 0.0
  %4647 = vmatpush2.msra.mxu0 0.0
  %4648 = vmatprep.subr.mxu0 0.0
  %4649 = vmatpush2.msra.mxu0 0.0
  %4650 = vmatprep.subr.mxu0 0.0
  %4651 = vmatpush2.msra.mxu0 0.0
  %4652 = vmatprep.subr.mxu0 0.0
  %4653 = vmatpush2.msra.mxu0 0.0
  %4654 = vmatprep.subr.mxu0 0.0
  %4655 = vmatpush2.msra.mxu0 0.0
  %4656 = vmatprep.subr.mxu0 0.0
  %4657 = vmatpush2.msra.mxu0 0.0
  %4658 = vmatprep.subr.mxu0 0.0
  %4659 = vmatpush2.msra.mxu0 0.0
  %4660 = vmatprep.subr.mxu0 0.0
  %4661 = vmatpush2.msra.mxu0 0.0
  %4662 = vmatprep.subr.mxu0 0.0
  %4663 = vmatpush2.msra.mxu0 0.0
  %4664 = vmatprep.subr.mxu0 0.0
  %4665 = vmatpush2.msra.mxu0 0.0
  %4666 = vmatprep.subr.mxu0 0.0
  %4667 = vmatpush2.msra.mxu0 0.0
  %4668 = vmatprep.subr.mxu0 0.0
  %4669 = vmatpush2.msra.mxu0 0.0
  %4670 = vmatprep.subr.mxu0 0.0
  %4671 = vmatpush2.msra.mxu0 0.0
  %4672 = vmatprep.subr.mxu0 0.0
  %4673 = vmatpush2.msra.mxu0 0.0
  %4674 = vmatprep.mubr.f32.mxu0 0.0
  %4675 = vmatmul.mubr.f32.gmra.mxu0 %v4154
  %v4676 = vpop.f32.mrf.mxu0
  %v4677 = vadd.f32 %v4116, %v4676
  %v4678 = vpop.f32.mrf.mxu0
  %v4679 = vadd.f32 %v4120, %v4678
  %4680 = vmatprep.mubr.f32.mxu0 0.0
  %4681 = vmatmul.mubr.f32.gmra.mxu0 %v4157
  %v4682 = vpop.f32.mrf.mxu0
  %v4683 = vadd.f32 %v4116, %v4682
  %v4684 = vpop.f32.mrf.mxu0
  %v4685 = vadd.f32 %v4120, %v4684
  %4686 = vmatprep.mubr.f32.mxu0 0.0
  %4687 = vmatmul.mubr.f32.gmra.mxu0 %v4160
  %v4688 = vpop.f32.mrf.mxu0
  %v4689 = vadd.f32 %v4116, %v4688
  %v4690 = vpop.f32.mrf.mxu0
  %v4691 = vadd.f32 %v4120, %v4690
  %4692 = vmatprep.mubr.f32.mxu0 0.0
  %4693 = vmatmul.mubr.f32.gmra.mxu0 %v4163
  %v4694 = vpop.f32.mrf.mxu0
  %v4695 = vadd.f32 %v4116, %v4694
  %v4696 = vpop.f32.mrf.mxu0
  %v4697 = vadd.f32 %v4120, %v4696
  %4698 = vdwg.mxu0
  %4699 = vmatprep.subr.mxu0 0.0
  %4700 = vmatpush1.msra.mxu0 0.0
  %4701 = vmatprep.subr.mxu0 0.0
  %4702 = vmatpush1.msra.mxu0 0.0
  %4703 = vmatprep.subr.mxu0 0.0
  %4704 = vmatpush1.msra.mxu0 0.0
  %4705 = vmatprep.subr.mxu0 0.0
  %4706 = vmatpush1.msra.mxu0 0.0
  %4707 = vmatprep.subr.mxu0 0.0
  %4708 = vmatpush1.msra.mxu0 0.0
  %4709 = vmatprep.subr.mxu0 0.0
  %4710 = vmatpush1.msra.mxu0 0.0
  %4711 = vmatprep.subr.mxu0 0.0
  %4712 = vmatpush1.msra.mxu0 0.0
  %4713 = vmatprep.subr.mxu0 0.0
  %4714 = vmatpush1.msra.mxu0 0.0
  %4715 = vmatprep.subr.mxu0 0.0
  %4716 = vmatpush1.msra.mxu0 0.0
  %4717 = vmatprep.subr.mxu0 0.0
  %4718 = vmatpush1.msra.mxu0 0.0
  %4719 = vmatprep.subr.mxu0 0.0
  %4720 = vmatpush1.msra.mxu0 0.0
  %4721 = vmatprep.subr.mxu0 0.0
  %4722 = vmatpush1.msra.mxu0 0.0
  %4723 = vmatprep.subr.mxu0 %v4066
  %4724 = vmatpush1.msra.mxu0 %v4065
  %4725 = vmatprep.subr.mxu0 %v4050
  %4726 = vmatpush1.msra.mxu0 %v4049
  %4727 = vmatprep.subr.mxu0 %v4034
  %4728 = vmatpush1.msra.mxu0 %v4033
  %4729 = vmatprep.subr.mxu0 %v4018
  %4730 = vmatpush1.msra.mxu0 %v4017
  %4731 = vmatprep.subr.mxu0 0.0
  %4732 = vmatpush2.msra.mxu0 0.0
  %4733 = vmatprep.subr.mxu0 0.0
  %4734 = vmatpush2.msra.mxu0 0.0
  %4735 = vmatprep.subr.mxu0 0.0
  %4736 = vmatpush2.msra.mxu0 0.0
  %4737 = vmatprep.subr.mxu0 0.0
  %4738 = vmatpush2.msra.mxu0 0.0
  %4739 = vmatprep.subr.mxu0 0.0
  %4740 = vmatpush2.msra.mxu0 0.0
  %4741 = vmatprep.subr.mxu0 0.0
  %4742 = vmatpush2.msra.mxu0 0.0
  %4743 = vmatprep.subr.mxu0 0.0
  %4744 = vmatpush2.msra.mxu0 0.0
  %4745 = vmatprep.subr.mxu0 0.0
  %4746 = vmatpush2.msra.mxu0 0.0
  %4747 = vmatprep.subr.mxu0 0.0
  %4748 = vmatpush2.msra.mxu0 0.0
  %4749 = vmatprep.subr.mxu0 0.0
  %4750 = vmatpush2.msra.mxu0 0.0
  %4751 = vmatprep.subr.mxu0 0.0
  %4752 = vmatpush2.msra.mxu0 0.0
  %4753 = vmatprep.subr.mxu0 0.0
  %4754 = vmatpush2.msra.mxu0 0.0
  %4755 = vmatprep.subr.mxu0 0.0
  %4756 = vmatpush2.msra.mxu0 0.0
  %4757 = vmatprep.subr.mxu0 0.0
  %4758 = vmatpush2.msra.mxu0 0.0
  %4759 = vmatprep.subr.mxu0 0.0
  %4760 = vmatpush2.msra.mxu0 0.0
  %4761 = vmatprep.subr.mxu0 0.0
  %4762 = vmatpush2.msra.mxu0 0.0
  %4763 = vmatprep.mubr.f32.mxu0 0.0
  %4764 = vmatmul.mubr.f32.gmra.mxu0 %v4154
  %v4765 = vpop.f32.mrf.mxu0
  %v4766 = vadd.f32 %v4124, %v4765
  %v4767 = vpop.f32.mrf.mxu0
  %v4768 = vadd.f32 %v4128, %v4767
  %4769 = vmatprep.mubr.f32.mxu0 0.0
  %4770 = vmatmul.mubr.f32.gmra.mxu0 %v4157
  %v4771 = vpop.f32.mrf.mxu0
  %v4772 = vadd.f32 %v4124, %v4771
  %v4773 = vpop.f32.mrf.mxu0
  %v4774 = vadd.f32 %v4128, %v4773
  %4775 = vmatprep.mubr.f32.mxu0 0.0
  %4776 = vmatmul.mubr.f32.gmra.mxu0 %v4160
  %v4777 = vpop.f32.mrf.mxu0
  %v4778 = vadd.f32 %v4124, %v4777
  %v4779 = vpop.f32.mrf.mxu0
  %v4780 = vadd.f32 %v4128, %v4779
  %4781 = vmatprep.mubr.f32.mxu0 0.0
  %4782 = vmatmul.mubr.f32.gmra.mxu0 %v4163
  %v4783 = vpop.f32.mrf.mxu0
  %v4784 = vadd.f32 %v4124, %v4783
  %v4785 = vpop.f32.mrf.mxu0
  %v4786 = vadd.f32 %v4128, %v4785
  %4787 = vdwg.mxu0
  %4788 = vmatprep.subr.mxu0 0.0
  %4789 = vmatpush1.msra.mxu0 0.0
  %4790 = vmatprep.subr.mxu0 0.0
  %4791 = vmatpush1.msra.mxu0 0.0
  %4792 = vmatprep.subr.mxu0 0.0
  %4793 = vmatpush1.msra.mxu0 0.0
  %4794 = vmatprep.subr.mxu0 0.0
  %4795 = vmatpush1.msra.mxu0 0.0
  %4796 = vmatprep.subr.mxu0 0.0
  %4797 = vmatpush1.msra.mxu0 0.0
  %4798 = vmatprep.subr.mxu0 0.0
  %4799 = vmatpush1.msra.mxu0 0.0
  %4800 = vmatprep.subr.mxu0 0.0
  %4801 = vmatpush1.msra.mxu0 0.0
  %4802 = vmatprep.subr.mxu0 0.0
  %4803 = vmatpush1.msra.mxu0 0.0
  %4804 = vmatprep.subr.mxu0 0.0
  %4805 = vmatpush1.msra.mxu0 0.0
  %4806 = vmatprep.subr.mxu0 0.0
  %4807 = vmatpush1.msra.mxu0 0.0
  %4808 = vmatprep.subr.mxu0 0.0
  %4809 = vmatpush1.msra.mxu0 0.0
  %4810 = vmatprep.subr.mxu0 0.0
  %4811 = vmatpush1.msra.mxu0 0.0
  %4812 = vmatprep.subr.mxu0 %v4068
  %4813 = vmatpush1.msra.mxu0 %v4067
  %4814 = vmatprep.subr.mxu0 %v4052
  %4815 = vmatpush1.msra.mxu0 %v4051
  %4816 = vmatprep.subr.mxu0 %v4036
  %4817 = vmatpush1.msra.mxu0 %v4035
  %4818 = vmatprep.subr.mxu0 %v4020
  %4819 = vmatpush1.msra.mxu0 %v4019
  %4820 = vmatprep.subr.mxu0 0.0
  %4821 = vmatpush2.msra.mxu0 0.0
  %4822 = vmatprep.subr.mxu0 0.0
  %4823 = vmatpush2.msra.mxu0 0.0
  %4824 = vmatprep.subr.mxu0 0.0
  %4825 = vmatpush2.msra.mxu0 0.0
  %4826 = vmatprep.subr.mxu0 0.0
  %4827 = vmatpush2.msra.mxu0 0.0
  %4828 = vmatprep.subr.mxu0 0.0
  %4829 = vmatpush2.msra.mxu0 0.0
  %4830 = vmatprep.subr.mxu0 0.0
  %4831 = vmatpush2.msra.mxu0 0.0
  %4832 = vmatprep.subr.mxu0 0.0
  %4833 = vmatpush2.msra.mxu0 0.0
  %4834 = vmatprep.subr.mxu0 0.0
  %4835 = vmatpush2.msra.mxu0 0.0
  %4836 = vmatprep.subr.mxu0 0.0
  %4837 = vmatpush2.msra.mxu0 0.0
  %4838 = vmatprep.subr.mxu0 0.0
  %4839 = vmatpush2.msra.mxu0 0.0
  %4840 = vmatprep.subr.mxu0 0.0
  %4841 = vmatpush2.msra.mxu0 0.0
  %4842 = vmatprep.subr.mxu0 0.0
  %4843 = vmatpush2.msra.mxu0 0.0
  %4844 = vmatprep.subr.mxu0 0.0
  %4845 = vmatpush2.msra.mxu0 0.0
  %4846 = vmatprep.subr.mxu0 0.0
  %4847 = vmatpush2.msra.mxu0 0.0
  %4848 = vmatprep.subr.mxu0 0.0
  %4849 = vmatpush2.msra.mxu0 0.0
  %4850 = vmatprep.subr.mxu0 0.0
  %4851 = vmatpush2.msra.mxu0 0.0
  %4852 = vmatprep.mubr.f32.mxu0 0.0
  %4853 = vmatmul.mubr.f32.gmra.mxu0 %v4154
  %v4854 = vpop.f32.mrf.mxu0
  %v4855 = vadd.f32 %v4132, %v4854
  %v4856 = vpop.f32.mrf.mxu0
  %v4857 = vadd.f32 %v4136, %v4856
  %4858 = vmatprep.mubr.f32.mxu0 0.0
  %4859 = vmatmul.mubr.f32.gmra.mxu0 %v4157
  %v4860 = vpop.f32.mrf.mxu0
  %v4861 = vadd.f32 %v4132, %v4860
  %v4862 = vpop.f32.mrf.mxu0
  %v4863 = vadd.f32 %v4136, %v4862
  %4864 = vmatprep.mubr.f32.mxu0 0.0
  %4865 = vmatmul.mubr.f32.gmra.mxu0 %v4160
  %v4866 = vpop.f32.mrf.mxu0
  %v4867 = vadd.f32 %v4132, %v4866
  %v4868 = vpop.f32.mrf.mxu0
  %v4869 = vadd.f32 %v4136, %v4868
  %4870 = vmatprep.mubr.f32.mxu0 0.0
  %4871 = vmatmul.mubr.f32.gmra.mxu0 %v4163
  %v4872 = vpop.f32.mrf.mxu0
  %v4873 = vadd.f32 %v4132, %v4872
  %v4874 = vpop.f32.mrf.mxu0
  %v4875 = vadd.f32 %v4136, %v4874
  %4876 = vdwg.mxu0
  %v4877 = vmax.f32 %v4232, 0.0
  %v4878 = vmax.f32 %v4234, 0.0
  %v4879 = vmax.f32 %v4321, 0.0
  %v4880 = vmax.f32 %v4323, 0.0
  %v4881 = vmax.f32 %v4410, 0.0
  %v4882 = vmax.f32 %v4412, 0.0
  %v4883 = vmax.f32 %v4499, 0.0
  %v4884 = vmax.f32 %v4501, 0.0
  %v4885 = vmax.f32 %v4588, 0.0
  %v4886 = vmax.f32 %v4590, 0.0
  %v4887 = vmax.f32 %v4677, 0.0
  %v4888 = vmax.f32 %v4679, 0.0
  %v4889 = vmax.f32 %v4766, 0.0
  %v4890 = vmax.f32 %v4768, 0.0
  %v4891 = vmax.f32 %v4855, 0.0
  %v4892 = vmax.f32 %v4857, 0.0
  %v4893 = vmax.f32 %v4238, 0.0
  %v4894 = vmax.f32 %v4240, 0.0
  %v4895 = vmax.f32 %v4327, 0.0
  %v4896 = vmax.f32 %v4329, 0.0
  %v4897 = vmax.f32 %v4416, 0.0
  %v4898 = vmax.f32 %v4418, 0.0
  %v4899 = vmax.f32 %v4505, 0.0
  %v4900 = vmax.f32 %v4507, 0.0
  %v4901 = vmax.f32 %v4594, 0.0
  %v4902 = vmax.f32 %v4596, 0.0
  %v4903 = vmax.f32 %v4683, 0.0
  %v4904 = vmax.f32 %v4685, 0.0
  %v4905 = vmax.f32 %v4772, 0.0
  %v4906 = vmax.f32 %v4774, 0.0
  %v4907 = vmax.f32 %v4861, 0.0
  %v4908 = vmax.f32 %v4863, 0.0
  %v4909 = vmax.f32 %v4244, 0.0
  %v4910 = vmax.f32 %v4246, 0.0
  %v4911 = vmax.f32 %v4333, 0.0
  %v4912 = vmax.f32 %v4335, 0.0
  %v4913 = vmax.f32 %v4422, 0.0
  %v4914 = vmax.f32 %v4424, 0.0
  %v4915 = vmax.f32 %v4511, 0.0
  %v4916 = vmax.f32 %v4513, 0.0
  %v4917 = vmax.f32 %v4600, 0.0
  %v4918 = vmax.f32 %v4602, 0.0
  %v4919 = vmax.f32 %v4689, 0.0
  %v4920 = vmax.f32 %v4691, 0.0
  %v4921 = vmax.f32 %v4778, 0.0
  %v4922 = vmax.f32 %v4780, 0.0
  %v4923 = vmax.f32 %v4867, 0.0
  %v4924 = vmax.f32 %v4869, 0.0
  %v4925 = vmax.f32 %v4250, 0.0
  %v4926 = vmax.f32 %v4252, 0.0
  %v4927 = vmax.f32 %v4339, 0.0
  %v4928 = vmax.f32 %v4341, 0.0
  %v4929 = vmax.f32 %v4428, 0.0
  %v4930 = vmax.f32 %v4430, 0.0
  %v4931 = vmax.f32 %v4517, 0.0
  %v4932 = vmax.f32 %v4519, 0.0
  %v4933 = vmax.f32 %v4606, 0.0
  %v4934 = vmax.f32 %v4608, 0.0
  %v4935 = vmax.f32 %v4695, 0.0
  %v4936 = vmax.f32 %v4697, 0.0
  %v4937 = vmax.f32 %v4784, 0.0
  %v4938 = vmax.f32 %v4786, 0.0
  %v4939 = vmax.f32 %v4873, 0.0
  %v4940 = vmax.f32 %v4875, 0.0
  %v4941 = vld [vmem:[%s55] sm:$0xff]
  %v4942 = vld [vmem:[%s55 + $0x8] sm:$0xff]
  %v4943 = vld [vmem:[%s55 + $0x10] sm:$0xff]
  %v4944 = vld [vmem:[%s55 + $0x18] sm:$0xff]
  %v4945 = vld [vmem:[%s55 + $0x20] sm:$0xff]
  %v4946 = vld [vmem:[%s55 + $0x28] sm:$0xff]
  %v4947 = vld [vmem:[%s55 + $0x30] sm:$0xff]
  %v4948 = vld [vmem:[%s55 + $0x38] sm:$0xff]
  %v4949 = vld [vmem:[%s55 + $0x40] sm:$0xff]
  %v4950 = vld [vmem:[%s55 + $0x48] sm:$0xff]
  %v4951 = vld [vmem:[%s55 + $0x50] sm:$0xff]
  %v4952 = vld [vmem:[%s55 + $0x58] sm:$0xff]
  %v4953 = vld [vmem:[%s55 + $0x60] sm:$0xff]
  %v4954 = vld [vmem:[%s55 + $0x68] sm:$0xff]
  %v4955 = vld [vmem:[%s55 + $0x70] sm:$0xff]
  %v4956 = vld [vmem:[%s55 + $0x78] sm:$0xff]
  %v4957 = vld [vmem:[%s55 + $0x80] sm:$0xff]
  %v4958 = vld [vmem:[%s55 + $0x88] sm:$0xff]
  %v4959 = vld [vmem:[%s55 + $0x90] sm:$0xff]
  %v4960 = vld [vmem:[%s55 + $0x98] sm:$0xff]
  %v4961 = vld [vmem:[%s55 + $0xa0] sm:$0xff]
  %v4962 = vld [vmem:[%s55 + $0xa8] sm:$0xff]
  %v4963 = vld [vmem:[%s55 + $0xb0] sm:$0xff]
  %v4964 = vld [vmem:[%s55 + $0xb8] sm:$0xff]
  %v4965 = vld [vmem:[%s55 + $0xc0] sm:$0xff]
  %v4966 = vld [vmem:[%s55 + $0xc8] sm:$0xff]
  %v4967 = vld [vmem:[%s55 + $0xd0] sm:$0xff]
  %v4968 = vld [vmem:[%s55 + $0xd8] sm:$0xff]
  %v4969 = vld [vmem:[%s55 + $0xe0] sm:$0xff]
  %v4970 = vld [vmem:[%s55 + $0xe8] sm:$0xff]
  %v4971 = vld [vmem:[%s55 + $0xf0] sm:$0xff]
  %v4972 = vld [vmem:[%s55 + $0xf8] sm:$0xff]
  %v4973 = vld [vmem:[%s55 + $0x100] sm:$0xff]
  %v4974 = vld [vmem:[%s55 + $0x108] sm:$0xff]
  %v4975 = vld [vmem:[%s55 + $0x110] sm:$0xff]
  %v4976 = vld [vmem:[%s55 + $0x118] sm:$0xff]
  %v4977 = vld [vmem:[%s55 + $0x120] sm:$0xff]
  %v4978 = vld [vmem:[%s55 + $0x128] sm:$0xff]
  %v4979 = vld [vmem:[%s55 + $0x130] sm:$0xff]
  %v4980 = vld [vmem:[%s55 + $0x138] sm:$0xff]
  %v4981 = vld [vmem:[%s55 + $0x140] sm:$0xff]
  %v4982 = vld [vmem:[%s55 + $0x148] sm:$0xff]
  %v4983 = vld [vmem:[%s55 + $0x150] sm:$0xff]
  %v4984 = vld [vmem:[%s55 + $0x158] sm:$0xff]
  %v4985 = vld [vmem:[%s55 + $0x160] sm:$0xff]
  %v4986 = vld [vmem:[%s55 + $0x168] sm:$0xff]
  %v4987 = vld [vmem:[%s55 + $0x170] sm:$0xff]
  %v4988 = vld [vmem:[%s55 + $0x178] sm:$0xff]
  %v4989 = vld [vmem:[%s55 + $0x180] sm:$0xff]
  %v4990 = vld [vmem:[%s55 + $0x188] sm:$0xff]
  %v4991 = vld [vmem:[%s55 + $0x190] sm:$0xff]
  %v4992 = vld [vmem:[%s55 + $0x198] sm:$0xff]
  %v4993 = vld [vmem:[%s55 + $0x1a0] sm:$0xff]
  %v4994 = vld [vmem:[%s55 + $0x1a8] sm:$0xff]
  %v4995 = vld [vmem:[%s55 + $0x1b0] sm:$0xff]
  %v4996 = vld [vmem:[%s55 + $0x1b8] sm:$0xff]
  %v4997 = vld [vmem:[%s55 + $0x1c0] sm:$0xff]
  %v4998 = vld [vmem:[%s55 + $0x1c8] sm:$0xff]
  %v4999 = vld [vmem:[%s55 + $0x1d0] sm:$0xff]
  %v5000 = vld [vmem:[%s55 + $0x1d8] sm:$0xff]
  %v5001 = vld [vmem:[%s55 + $0x1e0] sm:$0xff]
  %v5002 = vld [vmem:[%s55 + $0x1e8] sm:$0xff]
  %v5003 = vld [vmem:[%s55 + $0x1f0] sm:$0xff]
  %v5004 = vld [vmem:[%s55 + $0x1f8] sm:$0xff]
  %v5005 = vld [vmem:[%s55 + $0x200] sm:$0xff]
  %v5006 = vld [vmem:[%s55 + $0x208] sm:$0xff]
  %v5007 = vld [vmem:[%s55 + $0x210] sm:$0xff]
  %v5008 = vld [vmem:[%s55 + $0x218] sm:$0xff]
  %v5009 = vld [vmem:[%s55 + $0x220] sm:$0xff]
  %v5010 = vld [vmem:[%s55 + $0x228] sm:$0xff]
  %v5011 = vld [vmem:[%s55 + $0x230] sm:$0xff]
  %v5012 = vld [vmem:[%s55 + $0x238] sm:$0xff]
  %v5013 = vld [vmem:[%s55 + $0x240] sm:$0xff]
  %v5014 = vld [vmem:[%s55 + $0x248] sm:$0xff]
  %v5015 = vld [vmem:[%s55 + $0x250] sm:$0xff]
  %v5016 = vld [vmem:[%s55 + $0x258] sm:$0xff]
  %v5017 = vld [vmem:[%s55 + $0x260] sm:$0xff]
  %v5018 = vld [vmem:[%s55 + $0x268] sm:$0xff]
  %v5019 = vld [vmem:[%s55 + $0x270] sm:$0xff]
  %v5020 = vld [vmem:[%s55 + $0x278] sm:$0xff]
  %v5021 = vld [vmem:[%s55 + $0x280] sm:$0xff]
  %v5022 = vld [vmem:[%s55 + $0x288] sm:$0xff]
  %v5023 = vld [vmem:[%s55 + $0x290] sm:$0xff]
  %v5024 = vld [vmem:[%s55 + $0x298] sm:$0xff]
  %v5025 = vld [vmem:[%s55 + $0x2a0] sm:$0xff]
  %v5026 = vld [vmem:[%s55 + $0x2a8] sm:$0xff]
  %v5027 = vld [vmem:[%s55 + $0x2b0] sm:$0xff]
  %v5028 = vld [vmem:[%s55 + $0x2b8] sm:$0xff]
  %v5029 = vld [vmem:[%s55 + $0x2c0] sm:$0xff]
  %v5030 = vld [vmem:[%s55 + $0x2c8] sm:$0xff]
  %v5031 = vld [vmem:[%s55 + $0x2d0] sm:$0xff]
  %v5032 = vld [vmem:[%s55 + $0x2d8] sm:$0xff]
  %v5033 = vld [vmem:[%s55 + $0x2e0] sm:$0xff]
  %v5034 = vld [vmem:[%s55 + $0x2e8] sm:$0xff]
  %v5035 = vld [vmem:[%s55 + $0x2f0] sm:$0xff]
  %v5036 = vld [vmem:[%s55 + $0x2f8] sm:$0xff]
  %v5037 = vld [vmem:[%s55 + $0x300] sm:$0xff]
  %v5038 = vld [vmem:[%s55 + $0x308] sm:$0xff]
  %v5039 = vld [vmem:[%s55 + $0x310] sm:$0xff]
  %v5040 = vld [vmem:[%s55 + $0x318] sm:$0xff]
  %v5041 = vld [vmem:[%s55 + $0x320] sm:$0xff]
  %v5042 = vld [vmem:[%s55 + $0x328] sm:$0xff]
  %v5043 = vld [vmem:[%s55 + $0x330] sm:$0xff]
  %v5044 = vld [vmem:[%s55 + $0x338] sm:$0xff]
  %v5045 = vld [vmem:[%s55 + $0x340] sm:$0xff]
  %v5046 = vld [vmem:[%s55 + $0x348] sm:$0xff]
  %v5047 = vld [vmem:[%s55 + $0x350] sm:$0xff]
  %v5048 = vld [vmem:[%s55 + $0x358] sm:$0xff]
  %v5049 = vld [vmem:[%s55 + $0x360] sm:$0xff]
  %v5050 = vld [vmem:[%s55 + $0x368] sm:$0xff]
  %v5051 = vld [vmem:[%s55 + $0x370] sm:$0xff]
  %v5052 = vld [vmem:[%s55 + $0x378] sm:$0xff]
  %v5053 = vld [vmem:[%s55 + $0x380] sm:$0xff]
  %v5054 = vld [vmem:[%s55 + $0x388] sm:$0xff]
  %v5055 = vld [vmem:[%s55 + $0x390] sm:$0xff]
  %v5056 = vld [vmem:[%s55 + $0x398] sm:$0xff]
  %v5057 = vld [vmem:[%s55 + $0x3a0] sm:$0xff]
  %v5058 = vld [vmem:[%s55 + $0x3a8] sm:$0xff]
  %v5059 = vld [vmem:[%s55 + $0x3b0] sm:$0xff]
  %v5060 = vld [vmem:[%s55 + $0x3b8] sm:$0xff]
  %v5061 = vld [vmem:[%s55 + $0x3c0] sm:$0xff]
  %v5062 = vld [vmem:[%s55 + $0x3c8] sm:$0xff]
  %v5063 = vld [vmem:[%s55 + $0x3d0] sm:$0xff]
  %v5064 = vld [vmem:[%s55 + $0x3d8] sm:$0xff]
  %v5065 = vld [vmem:[%s55 + $0x3e0] sm:$0xff]
  %v5066 = vld [vmem:[%s55 + $0x3e8] sm:$0xff]
  %v5067 = vld [vmem:[%s55 + $0x3f0] sm:$0xff]
  %v5068 = vld [vmem:[%s55 + $0x3f8] sm:$0xff]
  %v5069 = vld [vmem:[%s55 + $0x400] sm:$0xff]
  %v5070 = vld [vmem:[%s55 + $0x408] sm:$0xff]
  %v5071 = vld [vmem:[%s55 + $0x410] sm:$0xff]
  %v5072 = vld [vmem:[%s55 + $0x418] sm:$0xff]
  %v5073 = vld [vmem:[%s55 + $0x420] sm:$0xff]
  %v5074 = vld [vmem:[%s55 + $0x428] sm:$0xff]
  %v5075 = vld [vmem:[%s55 + $0x430] sm:$0xff]
  %v5076 = vld [vmem:[%s55 + $0x438] sm:$0xff]
  %v5077 = vld [vmem:[%s55 + $0x440] sm:$0xff]
  %v5078 = vld [vmem:[%s55 + $0x448] sm:$0xff]
  %v5079 = vld [vmem:[%s55 + $0x450] sm:$0xff]
  %v5080 = vld [vmem:[%s55 + $0x458] sm:$0xff]
  %v5081 = vld [vmem:[%s55 + $0x460] sm:$0xff]
  %v5082 = vld [vmem:[%s55 + $0x468] sm:$0xff]
  %v5083 = vld [vmem:[%s55 + $0x470] sm:$0xff]
  %v5084 = vld [vmem:[%s55 + $0x478] sm:$0xff]
  %v5085 = vld [vmem:[%s55 + $0x480] sm:$0xff]
  %v5086 = vld [vmem:[%s55 + $0x488] sm:$0xff]
  %v5087 = vld [vmem:[%s55 + $0x490] sm:$0xff]
  %v5088 = vld [vmem:[%s55 + $0x498] sm:$0xff]
  %v5089 = vld [vmem:[%s55 + $0x4a0] sm:$0xff]
  %v5090 = vld [vmem:[%s55 + $0x4a8] sm:$0xff]
  %v5091 = vld [vmem:[%s55 + $0x4b0] sm:$0xff]
  %v5092 = vld [vmem:[%s55 + $0x4b8] sm:$0xff]
  %v5093 = vld [vmem:[%s55 + $0x4c0] sm:$0xff]
  %v5094 = vld [vmem:[%s55 + $0x4c8] sm:$0xff]
  %v5095 = vld [vmem:[%s55 + $0x4d0] sm:$0xff]
  %v5096 = vld [vmem:[%s55 + $0x4d8] sm:$0xff]
  %v5097 = vld [vmem:[%s55 + $0x4e0] sm:$0xff]
  %v5098 = vld [vmem:[%s55 + $0x4e8] sm:$0xff]
  %v5099 = vld [vmem:[%s55 + $0x4f0] sm:$0xff]
  %v5100 = vld [vmem:[%s55 + $0x4f8] sm:$0xff]
  %v5101 = vld [vmem:[%s55 + $0x500] sm:$0xff]
  %v5102 = vld [vmem:[%s55 + $0x508] sm:$0xff]
  %v5103 = vld [vmem:[%s55 + $0x510] sm:$0xff]
  %v5104 = vld [vmem:[%s55 + $0x518] sm:$0xff]
  %v5105 = vld [vmem:[%s55 + $0x520] sm:$0xff]
  %v5106 = vld [vmem:[%s55 + $0x528] sm:$0xff]
  %v5107 = vld [vmem:[%s55 + $0x530] sm:$0xff]
  %v5108 = vld [vmem:[%s55 + $0x538] sm:$0xff]
  %v5109 = vld [vmem:[%s55 + $0x540] sm:$0xff]
  %v5110 = vld [vmem:[%s55 + $0x548] sm:$0xff]
  %v5111 = vld [vmem:[%s55 + $0x550] sm:$0xff]
  %v5112 = vld [vmem:[%s55 + $0x558] sm:$0xff]
  %v5113 = vld [vmem:[%s55 + $0x560] sm:$0xff]
  %v5114 = vld [vmem:[%s55 + $0x568] sm:$0xff]
  %v5115 = vld [vmem:[%s55 + $0x570] sm:$0xff]
  %v5116 = vld [vmem:[%s55 + $0x578] sm:$0xff]
  %v5117 = vld [vmem:[%s55 + $0x580] sm:$0xff]
  %v5118 = vld [vmem:[%s55 + $0x588] sm:$0xff]
  %v5119 = vld [vmem:[%s55 + $0x590] sm:$0xff]
  %v5120 = vld [vmem:[%s55 + $0x598] sm:$0xff]
  %v5121 = vld [vmem:[%s55 + $0x5a0] sm:$0xff]
  %v5122 = vld [vmem:[%s55 + $0x5a8] sm:$0xff]
  %v5123 = vld [vmem:[%s55 + $0x5b0] sm:$0xff]
  %v5124 = vld [vmem:[%s55 + $0x5b8] sm:$0xff]
  %v5125 = vld [vmem:[%s55 + $0x5c0] sm:$0xff]
  %v5126 = vld [vmem:[%s55 + $0x5c8] sm:$0xff]
  %v5127 = vld [vmem:[%s55 + $0x5d0] sm:$0xff]
  %v5128 = vld [vmem:[%s55 + $0x5d8] sm:$0xff]
  %v5129 = vld [vmem:[%s55 + $0x5e0] sm:$0xff]
  %v5130 = vld [vmem:[%s55 + $0x5e8] sm:$0xff]
  %v5131 = vld [vmem:[%s55 + $0x5f0] sm:$0xff]
  %v5132 = vld [vmem:[%s55 + $0x5f8] sm:$0xff]
  %v5133 = vld [vmem:[%s55 + $0x600] sm:$0xff]
  %v5134 = vld [vmem:[%s55 + $0x608] sm:$0xff]
  %v5135 = vld [vmem:[%s55 + $0x610] sm:$0xff]
  %v5136 = vld [vmem:[%s55 + $0x618] sm:$0xff]
  %v5137 = vld [vmem:[%s55 + $0x620] sm:$0xff]
  %v5138 = vld [vmem:[%s55 + $0x628] sm:$0xff]
  %v5139 = vld [vmem:[%s55 + $0x630] sm:$0xff]
  %v5140 = vld [vmem:[%s55 + $0x638] sm:$0xff]
  %v5141 = vld [vmem:[%s55 + $0x640] sm:$0xff]
  %v5142 = vld [vmem:[%s55 + $0x648] sm:$0xff]
  %v5143 = vld [vmem:[%s55 + $0x650] sm:$0xff]
  %v5144 = vld [vmem:[%s55 + $0x658] sm:$0xff]
  %v5145 = vld [vmem:[%s55 + $0x660] sm:$0xff]
  %v5146 = vld [vmem:[%s55 + $0x668] sm:$0xff]
  %v5147 = vld [vmem:[%s55 + $0x670] sm:$0xff]
  %v5148 = vld [vmem:[%s55 + $0x678] sm:$0xff]
  %v5149 = vld [vmem:[%s55 + $0x680] sm:$0xff]
  %v5150 = vld [vmem:[%s55 + $0x688] sm:$0xff]
  %v5151 = vld [vmem:[%s55 + $0x690] sm:$0xff]
  %v5152 = vld [vmem:[%s55 + $0x698] sm:$0xff]
  %v5153 = vld [vmem:[%s55 + $0x6a0] sm:$0xff]
  %v5154 = vld [vmem:[%s55 + $0x6a8] sm:$0xff]
  %v5155 = vld [vmem:[%s55 + $0x6b0] sm:$0xff]
  %v5156 = vld [vmem:[%s55 + $0x6b8] sm:$0xff]
  %v5157 = vld [vmem:[%s55 + $0x6c0] sm:$0xff]
  %v5158 = vld [vmem:[%s55 + $0x6c8] sm:$0xff]
  %v5159 = vld [vmem:[%s55 + $0x6d0] sm:$0xff]
  %v5160 = vld [vmem:[%s55 + $0x6d8] sm:$0xff]
  %v5161 = vld [vmem:[%s55 + $0x6e0] sm:$0xff]
  %v5162 = vld [vmem:[%s55 + $0x6e8] sm:$0xff]
  %v5163 = vld [vmem:[%s55 + $0x6f0] sm:$0xff]
  %v5164 = vld [vmem:[%s55 + $0x6f8] sm:$0xff]
  %v5165 = vld [vmem:[%s55 + $0x700] sm:$0xff]
  %v5166 = vld [vmem:[%s55 + $0x708] sm:$0xff]
  %v5167 = vld [vmem:[%s55 + $0x710] sm:$0xff]
  %v5168 = vld [vmem:[%s55 + $0x718] sm:$0xff]
  %v5169 = vld [vmem:[%s55 + $0x720] sm:$0xff]
  %v5170 = vld [vmem:[%s55 + $0x728] sm:$0xff]
  %v5171 = vld [vmem:[%s55 + $0x730] sm:$0xff]
  %v5172 = vld [vmem:[%s55 + $0x738] sm:$0xff]
  %v5173 = vld [vmem:[%s55 + $0x740] sm:$0xff]
  %v5174 = vld [vmem:[%s55 + $0x748] sm:$0xff]
  %v5175 = vld [vmem:[%s55 + $0x750] sm:$0xff]
  %v5176 = vld [vmem:[%s55 + $0x758] sm:$0xff]
  %v5177 = vld [vmem:[%s55 + $0x760] sm:$0xff]
  %v5178 = vld [vmem:[%s55 + $0x768] sm:$0xff]
  %v5179 = vld [vmem:[%s55 + $0x770] sm:$0xff]
  %v5180 = vld [vmem:[%s55 + $0x778] sm:$0xff]
  %v5181 = vld [vmem:[%s55 + $0x780] sm:$0xff]
  %v5182 = vld [vmem:[%s55 + $0x788] sm:$0xff]
  %v5183 = vld [vmem:[%s55 + $0x790] sm:$0xff]
  %v5184 = vld [vmem:[%s55 + $0x798] sm:$0xff]
  %v5185 = vld [vmem:[%s55 + $0x7a0] sm:$0xff]
  %v5186 = vld [vmem:[%s55 + $0x7a8] sm:$0xff]
  %v5187 = vld [vmem:[%s55 + $0x7b0] sm:$0xff]
  %v5188 = vld [vmem:[%s55 + $0x7b8] sm:$0xff]
  %v5189 = vld [vmem:[%s55 + $0x7c0] sm:$0xff]
  %v5190 = vld [vmem:[%s55 + $0x7c8] sm:$0xff]
  %v5191 = vld [vmem:[%s55 + $0x7d0] sm:$0xff]
  %v5192 = vld [vmem:[%s55 + $0x7d8] sm:$0xff]
  %v5193 = vld [vmem:[%s55 + $0x7e0] sm:$0xff]
  %v5194 = vld [vmem:[%s55 + $0x7e8] sm:$0xff]
  %v5195 = vld [vmem:[%s55 + $0x7f0] sm:$0xff]
  %v5196 = vld [vmem:[%s55 + $0x7f8] sm:$0xff]
  %v5197 = vld [vmem:[%s57] sm:$0x1]
  %v5199 = vlaneseq
  %v5200 = vshrl.u32 %v5199, 7
  %v5201 = vsub.s32 0, %v5200
  %v5202 = vrot.slane %v5197, %v5201
  %5204 = vmatprep.subr.mxu0 0.0
  %5205 = vmatpush1.msra.mxu0 %v4956
  %5206 = vmatprep.subr.mxu0 0.0
  %5207 = vmatpush1.msra.mxu0 %v4955
  %5208 = vmatprep.subr.mxu0 0.0
  %5209 = vmatpush1.msra.mxu0 %v4954
  %5210 = vmatprep.subr.mxu0 0.0
  %5211 = vmatpush1.msra.mxu0 %v4953
  %5212 = vmatprep.subr.mxu0 0.0
  %5213 = vmatpush1.msra.mxu0 %v4952
  %5214 = vmatprep.subr.mxu0 0.0
  %5215 = vmatpush1.msra.mxu0 %v4951
  %5216 = vmatprep.subr.mxu0 0.0
  %5217 = vmatpush1.msra.mxu0 %v4950
  %5218 = vmatprep.subr.mxu0 0.0
  %5219 = vmatpush1.msra.mxu0 %v4949
  %5220 = vmatprep.subr.mxu0 0.0
  %5221 = vmatpush1.msra.mxu0 %v4948
  %5222 = vmatprep.subr.mxu0 0.0
  %5223 = vmatpush1.msra.mxu0 %v4947
  %5224 = vmatprep.subr.mxu0 0.0
  %5225 = vmatpush1.msra.mxu0 %v4946
  %5226 = vmatprep.subr.mxu0 0.0
  %5227 = vmatpush1.msra.mxu0 %v4945
  %5228 = vmatprep.subr.mxu0 0.0
  %5229 = vmatpush1.msra.mxu0 %v4944
  %5230 = vmatprep.subr.mxu0 0.0
  %5231 = vmatpush1.msra.mxu0 %v4943
  %5232 = vmatprep.subr.mxu0 0.0
  %5233 = vmatpush1.msra.mxu0 %v4942
  %5234 = vmatprep.subr.mxu0 0.0
  %5235 = vmatpush1.msra.mxu0 %v4941
  %5236 = vmatprep.subr.mxu0 0.0
  %5237 = vmatpush2.msra.mxu0 %v4972
  %5238 = vmatprep.subr.mxu0 0.0
  %5239 = vmatpush2.msra.mxu0 %v4971
  %5240 = vmatprep.subr.mxu0 0.0
  %5241 = vmatpush2.msra.mxu0 %v4970
  %5242 = vmatprep.subr.mxu0 0.0
  %5243 = vmatpush2.msra.mxu0 %v4969
  %5244 = vmatprep.subr.mxu0 0.0
  %5245 = vmatpush2.msra.mxu0 %v4968
  %5246 = vmatprep.subr.mxu0 0.0
  %5247 = vmatpush2.msra.mxu0 %v4967
  %5248 = vmatprep.subr.mxu0 0.0
  %5249 = vmatpush2.msra.mxu0 %v4966
  %5250 = vmatprep.subr.mxu0 0.0
  %5251 = vmatpush2.msra.mxu0 %v4965
  %5252 = vmatprep.subr.mxu0 0.0
  %5253 = vmatpush2.msra.mxu0 %v4964
  %5254 = vmatprep.subr.mxu0 0.0
  %5255 = vmatpush2.msra.mxu0 %v4963
  %5256 = vmatprep.subr.mxu0 0.0
  %5257 = vmatpush2.msra.mxu0 %v4962
  %5258 = vmatprep.subr.mxu0 0.0
  %5259 = vmatpush2.msra.mxu0 %v4961
  %5260 = vmatprep.subr.mxu0 0.0
  %5261 = vmatpush2.msra.mxu0 %v4960
  %5262 = vmatprep.subr.mxu0 0.0
  %5263 = vmatpush2.msra.mxu0 %v4959
  %5264 = vmatprep.subr.mxu0 0.0
  %5265 = vmatpush2.msra.mxu0 %v4958
  %5266 = vmatprep.subr.mxu0 0.0
  %5267 = vmatpush2.msra.mxu0 %v4957
  %5268 = vmatprep.mubr.f32.mxu0 %v4878
  %5269 = vmatmul.mubr.f32.gmra.mxu0 %v4877
  %v5270 = vpop.f32.mrf.mxu0
  %v5271 = vpop.f32.mrf.mxu0
  %5272 = vmatprep.mubr.f32.mxu0 %v4894
  %5273 = vmatmul.mubr.f32.gmra.mxu0 %v4893
  %v5274 = vpop.f32.mrf.mxu0
  %v5275 = vadd.f32 %v5202, %v5274
  %v5276 = vpop.f32.mrf.mxu0
  %5277 = vmatprep.mubr.f32.mxu0 %v4910
  %5278 = vmatmul.mubr.f32.gmra.mxu0 %v4909
  %v5279 = vpop.f32.mrf.mxu0
  %v5280 = vpop.f32.mrf.mxu0
  %5281 = vmatprep.mubr.f32.mxu0 %v4926
  %5282 = vmatmul.mubr.f32.gmra.mxu0 %v4925
  %v5283 = vpop.f32.mrf.mxu0
  %v5284 = vadd.f32 %v5202, %v5283
  %v5285 = vpop.f32.mrf.mxu0
  %5286 = vdwg.mxu0
  %5287 = vmatprep.subr.mxu0 0.0
  %5288 = vmatpush1.msra.mxu0 %v4988
  %5289 = vmatprep.subr.mxu0 0.0
  %5290 = vmatpush1.msra.mxu0 %v4987
  %5291 = vmatprep.subr.mxu0 0.0
  %5292 = vmatpush1.msra.mxu0 %v4986
  %5293 = vmatprep.subr.mxu0 0.0
  %5294 = vmatpush1.msra.mxu0 %v4985
  %5295 = vmatprep.subr.mxu0 0.0
  %5296 = vmatpush1.msra.mxu0 %v4984
  %5297 = vmatprep.subr.mxu0 0.0
  %5298 = vmatpush1.msra.mxu0 %v4983
  %5299 = vmatprep.subr.mxu0 0.0
  %5300 = vmatpush1.msra.mxu0 %v4982
  %5301 = vmatprep.subr.mxu0 0.0
  %5302 = vmatpush1.msra.mxu0 %v4981
  %5303 = vmatprep.subr.mxu0 0.0
  %5304 = vmatpush1.msra.mxu0 %v4980
  %5305 = vmatprep.subr.mxu0 0.0
  %5306 = vmatpush1.msra.mxu0 %v4979
  %5307 = vmatprep.subr.mxu0 0.0
  %5308 = vmatpush1.msra.mxu0 %v4978
  %5309 = vmatprep.subr.mxu0 0.0
  %5310 = vmatpush1.msra.mxu0 %v4977
  %5311 = vmatprep.subr.mxu0 0.0
  %5312 = vmatpush1.msra.mxu0 %v4976
  %5313 = vmatprep.subr.mxu0 0.0
  %5314 = vmatpush1.msra.mxu0 %v4975
  %5315 = vmatprep.subr.mxu0 0.0
  %5316 = vmatpush1.msra.mxu0 %v4974
  %5317 = vmatprep.subr.mxu0 0.0
  %5318 = vmatpush1.msra.mxu0 %v4973
  %5319 = vmatprep.subr.mxu0 0.0
  %5320 = vmatpush2.msra.mxu0 %v5004
  %5321 = vmatprep.subr.mxu0 0.0
  %5322 = vmatpush2.msra.mxu0 %v5003
  %5323 = vmatprep.subr.mxu0 0.0
  %5324 = vmatpush2.msra.mxu0 %v5002
  %5325 = vmatprep.subr.mxu0 0.0
  %5326 = vmatpush2.msra.mxu0 %v5001
  %5327 = vmatprep.subr.mxu0 0.0
  %5328 = vmatpush2.msra.mxu0 %v5000
  %5329 = vmatprep.subr.mxu0 0.0
  %5330 = vmatpush2.msra.mxu0 %v4999
  %5331 = vmatprep.subr.mxu0 0.0
  %5332 = vmatpush2.msra.mxu0 %v4998
  %5333 = vmatprep.subr.mxu0 0.0
  %5334 = vmatpush2.msra.mxu0 %v4997
  %5335 = vmatprep.subr.mxu0 0.0
  %5336 = vmatpush2.msra.mxu0 %v4996
  %5337 = vmatprep.subr.mxu0 0.0
  %5338 = vmatpush2.msra.mxu0 %v4995
  %5339 = vmatprep.subr.mxu0 0.0
  %5340 = vmatpush2.msra.mxu0 %v4994
  %5341 = vmatprep.subr.mxu0 0.0
  %5342 = vmatpush2.msra.mxu0 %v4993
  %5343 = vmatprep.subr.mxu0 0.0
  %5344 = vmatpush2.msra.mxu0 %v4992
  %5345 = vmatprep.subr.mxu0 0.0
  %5346 = vmatpush2.msra.mxu0 %v4991
  %5347 = vmatprep.subr.mxu0 0.0
  %5348 = vmatpush2.msra.mxu0 %v4990
  %5349 = vmatprep.subr.mxu0 0.0
  %5350 = vmatpush2.msra.mxu0 %v4989
  %5351 = vmatprep.mubr.f32.mxu0 %v4880
  %5352 = vmatmul.mubr.f32.gmra.mxu0 %v4879
  %v5353 = vpop.f32.mrf.mxu0
  %v5354 = vpop.f32.mrf.mxu0
  %5355 = vmatprep.mubr.f32.mxu0 %v4896
  %5356 = vmatmul.mubr.f32.gmra.mxu0 %v4895
  %v5357 = vpop.f32.mrf.mxu0
  %v5358 = vadd.f32 %v5275, %v5357
  %v5359 = vpop.f32.mrf.mxu0
  %5360 = vmatprep.mubr.f32.mxu0 %v4912
  %5361 = vmatmul.mubr.f32.gmra.mxu0 %v4911
  %v5362 = vpop.f32.mrf.mxu0
  %v5363 = vpop.f32.mrf.mxu0
  %5364 = vmatprep.mubr.f32.mxu0 %v4928
  %5365 = vmatmul.mubr.f32.gmra.mxu0 %v4927
  %v5366 = vpop.f32.mrf.mxu0
  %v5367 = vadd.f32 %v5284, %v5366
  %v5368 = vpop.f32.mrf.mxu0
  %5369 = vdwg.mxu0
  %5370 = vmatprep.subr.mxu0 0.0
  %5371 = vmatpush1.msra.mxu0 %v5020
  %5372 = vmatprep.subr.mxu0 0.0
  %5373 = vmatpush1.msra.mxu0 %v5019
  %5374 = vmatprep.subr.mxu0 0.0
  %5375 = vmatpush1.msra.mxu0 %v5018
  %5376 = vmatprep.subr.mxu0 0.0
  %5377 = vmatpush1.msra.mxu0 %v5017
  %5378 = vmatprep.subr.mxu0 0.0
  %5379 = vmatpush1.msra.mxu0 %v5016
  %5380 = vmatprep.subr.mxu0 0.0
  %5381 = vmatpush1.msra.mxu0 %v5015
  %5382 = vmatprep.subr.mxu0 0.0
  %5383 = vmatpush1.msra.mxu0 %v5014
  %5384 = vmatprep.subr.mxu0 0.0
  %5385 = vmatpush1.msra.mxu0 %v5013
  %5386 = vmatprep.subr.mxu0 0.0
  %5387 = vmatpush1.msra.mxu0 %v5012
  %5388 = vmatprep.subr.mxu0 0.0
  %5389 = vmatpush1.msra.mxu0 %v5011
  %5390 = vmatprep.subr.mxu0 0.0
  %5391 = vmatpush1.msra.mxu0 %v5010
  %5392 = vmatprep.subr.mxu0 0.0
  %5393 = vmatpush1.msra.mxu0 %v5009
  %5394 = vmatprep.subr.mxu0 0.0
  %5395 = vmatpush1.msra.mxu0 %v5008
  %5396 = vmatprep.subr.mxu0 0.0
  %5397 = vmatpush1.msra.mxu0 %v5007
  %5398 = vmatprep.subr.mxu0 0.0
  %5399 = vmatpush1.msra.mxu0 %v5006
  %5400 = vmatprep.subr.mxu0 0.0
  %5401 = vmatpush1.msra.mxu0 %v5005
  %5402 = vmatprep.subr.mxu0 0.0
  %5403 = vmatpush2.msra.mxu0 %v5036
  %5404 = vmatprep.subr.mxu0 0.0
  %5405 = vmatpush2.msra.mxu0 %v5035
  %5406 = vmatprep.subr.mxu0 0.0
  %5407 = vmatpush2.msra.mxu0 %v5034
  %5408 = vmatprep.subr.mxu0 0.0
  %5409 = vmatpush2.msra.mxu0 %v5033
  %5410 = vmatprep.subr.mxu0 0.0
  %5411 = vmatpush2.msra.mxu0 %v5032
  %5412 = vmatprep.subr.mxu0 0.0
  %5413 = vmatpush2.msra.mxu0 %v5031
  %5414 = vmatprep.subr.mxu0 0.0
  %5415 = vmatpush2.msra.mxu0 %v5030
  %5416 = vmatprep.subr.mxu0 0.0
  %5417 = vmatpush2.msra.mxu0 %v5029
  %5418 = vmatprep.subr.mxu0 0.0
  %5419 = vmatpush2.msra.mxu0 %v5028
  %5420 = vmatprep.subr.mxu0 0.0
  %5421 = vmatpush2.msra.mxu0 %v5027
  %5422 = vmatprep.subr.mxu0 0.0
  %5423 = vmatpush2.msra.mxu0 %v5026
  %5424 = vmatprep.subr.mxu0 0.0
  %5425 = vmatpush2.msra.mxu0 %v5025
  %5426 = vmatprep.subr.mxu0 0.0
  %5427 = vmatpush2.msra.mxu0 %v5024
  %5428 = vmatprep.subr.mxu0 0.0
  %5429 = vmatpush2.msra.mxu0 %v5023
  %5430 = vmatprep.subr.mxu0 0.0
  %5431 = vmatpush2.msra.mxu0 %v5022
  %5432 = vmatprep.subr.mxu0 0.0
  %5433 = vmatpush2.msra.mxu0 %v5021
  %5434 = vmatprep.mubr.f32.mxu0 %v4882
  %5435 = vmatmul.mubr.f32.gmra.mxu0 %v4881
  %v5436 = vpop.f32.mrf.mxu0
  %v5437 = vpop.f32.mrf.mxu0
  %5438 = vmatprep.mubr.f32.mxu0 %v4898
  %5439 = vmatmul.mubr.f32.gmra.mxu0 %v4897
  %v5440 = vpop.f32.mrf.mxu0
  %v5441 = vadd.f32 %v5358, %v5440
  %v5442 = vpop.f32.mrf.mxu0
  %5443 = vmatprep.mubr.f32.mxu0 %v4914
  %5444 = vmatmul.mubr.f32.gmra.mxu0 %v4913
  %v5445 = vpop.f32.mrf.mxu0
  %v5446 = vpop.f32.mrf.mxu0
  %5447 = vmatprep.mubr.f32.mxu0 %v4930
  %5448 = vmatmul.mubr.f32.gmra.mxu0 %v4929
  %v5449 = vpop.f32.mrf.mxu0
  %v5450 = vadd.f32 %v5367, %v5449
  %v5451 = vpop.f32.mrf.mxu0
  %5452 = vdwg.mxu0
  %5453 = vmatprep.subr.mxu0 0.0
  %5454 = vmatpush1.msra.mxu0 %v5052
  %5455 = vmatprep.subr.mxu0 0.0
  %5456 = vmatpush1.msra.mxu0 %v5051
  %5457 = vmatprep.subr.mxu0 0.0
  %5458 = vmatpush1.msra.mxu0 %v5050
  %5459 = vmatprep.subr.mxu0 0.0
  %5460 = vmatpush1.msra.mxu0 %v5049
  %5461 = vmatprep.subr.mxu0 0.0
  %5462 = vmatpush1.msra.mxu0 %v5048
  %5463 = vmatprep.subr.mxu0 0.0
  %5464 = vmatpush1.msra.mxu0 %v5047
  %5465 = vmatprep.subr.mxu0 0.0
  %5466 = vmatpush1.msra.mxu0 %v5046
  %5467 = vmatprep.subr.mxu0 0.0
  %5468 = vmatpush1.msra.mxu0 %v5045
  %5469 = vmatprep.subr.mxu0 0.0
  %5470 = vmatpush1.msra.mxu0 %v5044
  %5471 = vmatprep.subr.mxu0 0.0
  %5472 = vmatpush1.msra.mxu0 %v5043
  %5473 = vmatprep.subr.mxu0 0.0
  %5474 = vmatpush1.msra.mxu0 %v5042
  %5475 = vmatprep.subr.mxu0 0.0
  %5476 = vmatpush1.msra.mxu0 %v5041
  %5477 = vmatprep.subr.mxu0 0.0
  %5478 = vmatpush1.msra.mxu0 %v5040
  %5479 = vmatprep.subr.mxu0 0.0
  %5480 = vmatpush1.msra.mxu0 %v5039
  %5481 = vmatprep.subr.mxu0 0.0
  %5482 = vmatpush1.msra.mxu0 %v5038
  %5483 = vmatprep.subr.mxu0 0.0
  %5484 = vmatpush1.msra.mxu0 %v5037
  %5485 = vmatprep.subr.mxu0 0.0
  %5486 = vmatpush2.msra.mxu0 %v5068
  %5487 = vmatprep.subr.mxu0 0.0
  %5488 = vmatpush2.msra.mxu0 %v5067
  %5489 = vmatprep.subr.mxu0 0.0
  %5490 = vmatpush2.msra.mxu0 %v5066
  %5491 = vmatprep.subr.mxu0 0.0
  %5492 = vmatpush2.msra.mxu0 %v5065
  %5493 = vmatprep.subr.mxu0 0.0
  %5494 = vmatpush2.msra.mxu0 %v5064
  %5495 = vmatprep.subr.mxu0 0.0
  %5496 = vmatpush2.msra.mxu0 %v5063
  %5497 = vmatprep.subr.mxu0 0.0
  %5498 = vmatpush2.msra.mxu0 %v5062
  %5499 = vmatprep.subr.mxu0 0.0
  %5500 = vmatpush2.msra.mxu0 %v5061
  %5501 = vmatprep.subr.mxu0 0.0
  %5502 = vmatpush2.msra.mxu0 %v5060
  %5503 = vmatprep.subr.mxu0 0.0
  %5504 = vmatpush2.msra.mxu0 %v5059
  %5505 = vmatprep.subr.mxu0 0.0
  %5506 = vmatpush2.msra.mxu0 %v5058
  %5507 = vmatprep.subr.mxu0 0.0
  %5508 = vmatpush2.msra.mxu0 %v5057
  %5509 = vmatprep.subr.mxu0 0.0
  %5510 = vmatpush2.msra.mxu0 %v5056
  %5511 = vmatprep.subr.mxu0 0.0
  %5512 = vmatpush2.msra.mxu0 %v5055
  %5513 = vmatprep.subr.mxu0 0.0
  %5514 = vmatpush2.msra.mxu0 %v5054
  %5515 = vmatprep.subr.mxu0 0.0
  %5516 = vmatpush2.msra.mxu0 %v5053
  %5517 = vmatprep.mubr.f32.mxu0 %v4884
  %5518 = vmatmul.mubr.f32.gmra.mxu0 %v4883
  %v5519 = vpop.f32.mrf.mxu0
  %v5520 = vpop.f32.mrf.mxu0
  %5521 = vmatprep.mubr.f32.mxu0 %v4900
  %5522 = vmatmul.mubr.f32.gmra.mxu0 %v4899
  %v5523 = vpop.f32.mrf.mxu0
  %v5524 = vadd.f32 %v5441, %v5523
  %v5525 = vpop.f32.mrf.mxu0
  %5526 = vmatprep.mubr.f32.mxu0 %v4916
  %5527 = vmatmul.mubr.f32.gmra.mxu0 %v4915
  %v5528 = vpop.f32.mrf.mxu0
  %v5529 = vpop.f32.mrf.mxu0
  %5530 = vmatprep.mubr.f32.mxu0 %v4932
  %5531 = vmatmul.mubr.f32.gmra.mxu0 %v4931
  %v5532 = vpop.f32.mrf.mxu0
  %v5533 = vadd.f32 %v5450, %v5532
  %v5534 = vpop.f32.mrf.mxu0
  %5535 = vdwg.mxu0
  %5536 = vmatprep.subr.mxu0 0.0
  %5537 = vmatpush1.msra.mxu0 %v5084
  %5538 = vmatprep.subr.mxu0 0.0
  %5539 = vmatpush1.msra.mxu0 %v5083
  %5540 = vmatprep.subr.mxu0 0.0
  %5541 = vmatpush1.msra.mxu0 %v5082
  %5542 = vmatprep.subr.mxu0 0.0
  %5543 = vmatpush1.msra.mxu0 %v5081
  %5544 = vmatprep.subr.mxu0 0.0
  %5545 = vmatpush1.msra.mxu0 %v5080
  %5546 = vmatprep.subr.mxu0 0.0
  %5547 = vmatpush1.msra.mxu0 %v5079
  %5548 = vmatprep.subr.mxu0 0.0
  %5549 = vmatpush1.msra.mxu0 %v5078
  %5550 = vmatprep.subr.mxu0 0.0
  %5551 = vmatpush1.msra.mxu0 %v5077
  %5552 = vmatprep.subr.mxu0 0.0
  %5553 = vmatpush1.msra.mxu0 %v5076
  %5554 = vmatprep.subr.mxu0 0.0
  %5555 = vmatpush1.msra.mxu0 %v5075
  %5556 = vmatprep.subr.mxu0 0.0
  %5557 = vmatpush1.msra.mxu0 %v5074
  %5558 = vmatprep.subr.mxu0 0.0
  %5559 = vmatpush1.msra.mxu0 %v5073
  %5560 = vmatprep.subr.mxu0 0.0
  %5561 = vmatpush1.msra.mxu0 %v5072
  %5562 = vmatprep.subr.mxu0 0.0
  %5563 = vmatpush1.msra.mxu0 %v5071
  %5564 = vmatprep.subr.mxu0 0.0
  %5565 = vmatpush1.msra.mxu0 %v5070
  %5566 = vmatprep.subr.mxu0 0.0
  %5567 = vmatpush1.msra.mxu0 %v5069
  %5568 = vmatprep.subr.mxu0 0.0
  %5569 = vmatpush2.msra.mxu0 %v5100
  %5570 = vmatprep.subr.mxu0 0.0
  %5571 = vmatpush2.msra.mxu0 %v5099
  %5572 = vmatprep.subr.mxu0 0.0
  %5573 = vmatpush2.msra.mxu0 %v5098
  %5574 = vmatprep.subr.mxu0 0.0
  %5575 = vmatpush2.msra.mxu0 %v5097
  %5576 = vmatprep.subr.mxu0 0.0
  %5577 = vmatpush2.msra.mxu0 %v5096
  %5578 = vmatprep.subr.mxu0 0.0
  %5579 = vmatpush2.msra.mxu0 %v5095
  %5580 = vmatprep.subr.mxu0 0.0
  %5581 = vmatpush2.msra.mxu0 %v5094
  %5582 = vmatprep.subr.mxu0 0.0
  %5583 = vmatpush2.msra.mxu0 %v5093
  %5584 = vmatprep.subr.mxu0 0.0
  %5585 = vmatpush2.msra.mxu0 %v5092
  %5586 = vmatprep.subr.mxu0 0.0
  %5587 = vmatpush2.msra.mxu0 %v5091
  %5588 = vmatprep.subr.mxu0 0.0
  %5589 = vmatpush2.msra.mxu0 %v5090
  %5590 = vmatprep.subr.mxu0 0.0
  %5591 = vmatpush2.msra.mxu0 %v5089
  %5592 = vmatprep.subr.mxu0 0.0
  %5593 = vmatpush2.msra.mxu0 %v5088
  %5594 = vmatprep.subr.mxu0 0.0
  %5595 = vmatpush2.msra.mxu0 %v5087
  %5596 = vmatprep.subr.mxu0 0.0
  %5597 = vmatpush2.msra.mxu0 %v5086
  %5598 = vmatprep.subr.mxu0 0.0
  %5599 = vmatpush2.msra.mxu0 %v5085
  %5600 = vmatprep.mubr.f32.mxu0 %v4886
  %5601 = vmatmul.mubr.f32.gmra.mxu0 %v4885
  %v5602 = vpop.f32.mrf.mxu0
  %v5603 = vpop.f32.mrf.mxu0
  %5604 = vmatprep.mubr.f32.mxu0 %v4902
  %5605 = vmatmul.mubr.f32.gmra.mxu0 %v4901
  %v5606 = vpop.f32.mrf.mxu0
  %v5607 = vadd.f32 %v5524, %v5606
  %v5608 = vpop.f32.mrf.mxu0
  %5609 = vmatprep.mubr.f32.mxu0 %v4918
  %5610 = vmatmul.mubr.f32.gmra.mxu0 %v4917
  %v5611 = vpop.f32.mrf.mxu0
  %v5612 = vpop.f32.mrf.mxu0
  %5613 = vmatprep.mubr.f32.mxu0 %v4934
  %5614 = vmatmul.mubr.f32.gmra.mxu0 %v4933
  %v5615 = vpop.f32.mrf.mxu0
  %v5616 = vadd.f32 %v5533, %v5615
  %v5617 = vpop.f32.mrf.mxu0
  %5618 = vdwg.mxu0
  %5619 = vmatprep.subr.mxu0 0.0
  %5620 = vmatpush1.msra.mxu0 %v5116
  %5621 = vmatprep.subr.mxu0 0.0
  %5622 = vmatpush1.msra.mxu0 %v5115
  %5623 = vmatprep.subr.mxu0 0.0
  %5624 = vmatpush1.msra.mxu0 %v5114
  %5625 = vmatprep.subr.mxu0 0.0
  %5626 = vmatpush1.msra.mxu0 %v5113
  %5627 = vmatprep.subr.mxu0 0.0
  %5628 = vmatpush1.msra.mxu0 %v5112
  %5629 = vmatprep.subr.mxu0 0.0
  %5630 = vmatpush1.msra.mxu0 %v5111
  %5631 = vmatprep.subr.mxu0 0.0
  %5632 = vmatpush1.msra.mxu0 %v5110
  %5633 = vmatprep.subr.mxu0 0.0
  %5634 = vmatpush1.msra.mxu0 %v5109
  %5635 = vmatprep.subr.mxu0 0.0
  %5636 = vmatpush1.msra.mxu0 %v5108
  %5637 = vmatprep.subr.mxu0 0.0
  %5638 = vmatpush1.msra.mxu0 %v5107
  %5639 = vmatprep.subr.mxu0 0.0
  %5640 = vmatpush1.msra.mxu0 %v5106
  %5641 = vmatprep.subr.mxu0 0.0
  %5642 = vmatpush1.msra.mxu0 %v5105
  %5643 = vmatprep.subr.mxu0 0.0
  %5644 = vmatpush1.msra.mxu0 %v5104
  %5645 = vmatprep.subr.mxu0 0.0
  %5646 = vmatpush1.msra.mxu0 %v5103
  %5647 = vmatprep.subr.mxu0 0.0
  %5648 = vmatpush1.msra.mxu0 %v5102
  %5649 = vmatprep.subr.mxu0 0.0
  %5650 = vmatpush1.msra.mxu0 %v5101
  %5651 = vmatprep.subr.mxu0 0.0
  %5652 = vmatpush2.msra.mxu0 %v5132
  %5653 = vmatprep.subr.mxu0 0.0
  %5654 = vmatpush2.msra.mxu0 %v5131
  %5655 = vmatprep.subr.mxu0 0.0
  %5656 = vmatpush2.msra.mxu0 %v5130
  %5657 = vmatprep.subr.mxu0 0.0
  %5658 = vmatpush2.msra.mxu0 %v5129
  %5659 = vmatprep.subr.mxu0 0.0
  %5660 = vmatpush2.msra.mxu0 %v5128
  %5661 = vmatprep.subr.mxu0 0.0
  %5662 = vmatpush2.msra.mxu0 %v5127
  %5663 = vmatprep.subr.mxu0 0.0
  %5664 = vmatpush2.msra.mxu0 %v5126
  %5665 = vmatprep.subr.mxu0 0.0
  %5666 = vmatpush2.msra.mxu0 %v5125
  %5667 = vmatprep.subr.mxu0 0.0
  %5668 = vmatpush2.msra.mxu0 %v5124
  %5669 = vmatprep.subr.mxu0 0.0
  %5670 = vmatpush2.msra.mxu0 %v5123
  %5671 = vmatprep.subr.mxu0 0.0
  %5672 = vmatpush2.msra.mxu0 %v5122
  %5673 = vmatprep.subr.mxu0 0.0
  %5674 = vmatpush2.msra.mxu0 %v5121
  %5675 = vmatprep.subr.mxu0 0.0
  %5676 = vmatpush2.msra.mxu0 %v5120
  %5677 = vmatprep.subr.mxu0 0.0
  %5678 = vmatpush2.msra.mxu0 %v5119
  %5679 = vmatprep.subr.mxu0 0.0
  %5680 = vmatpush2.msra.mxu0 %v5118
  %5681 = vmatprep.subr.mxu0 0.0
  %5682 = vmatpush2.msra.mxu0 %v5117
  %5683 = vmatprep.mubr.f32.mxu0 %v4888
  %5684 = vmatmul.mubr.f32.gmra.mxu0 %v4887
  %v5685 = vpop.f32.mrf.mxu0
  %v5686 = vpop.f32.mrf.mxu0
  %5687 = vmatprep.mubr.f32.mxu0 %v4904
  %5688 = vmatmul.mubr.f32.gmra.mxu0 %v4903
  %v5689 = vpop.f32.mrf.mxu0
  %v5690 = vadd.f32 %v5607, %v5689
  %v5691 = vpop.f32.mrf.mxu0
  %5692 = vmatprep.mubr.f32.mxu0 %v4920
  %5693 = vmatmul.mubr.f32.gmra.mxu0 %v4919
  %v5694 = vpop.f32.mrf.mxu0
  %v5695 = vpop.f32.mrf.mxu0
  %5696 = vmatprep.mubr.f32.mxu0 %v4936
  %5697 = vmatmul.mubr.f32.gmra.mxu0 %v4935
  %v5698 = vpop.f32.mrf.mxu0
  %v5699 = vadd.f32 %v5616, %v5698
  %v5700 = vpop.f32.mrf.mxu0
  %5701 = vdwg.mxu0
  %5702 = vmatprep.subr.mxu0 0.0
  %5703 = vmatpush1.msra.mxu0 %v5148
  %5704 = vmatprep.subr.mxu0 0.0
  %5705 = vmatpush1.msra.mxu0 %v5147
  %5706 = vmatprep.subr.mxu0 0.0
  %5707 = vmatpush1.msra.mxu0 %v5146
  %5708 = vmatprep.subr.mxu0 0.0
  %5709 = vmatpush1.msra.mxu0 %v5145
  %5710 = vmatprep.subr.mxu0 0.0
  %5711 = vmatpush1.msra.mxu0 %v5144
  %5712 = vmatprep.subr.mxu0 0.0
  %5713 = vmatpush1.msra.mxu0 %v5143
  %5714 = vmatprep.subr.mxu0 0.0
  %5715 = vmatpush1.msra.mxu0 %v5142
  %5716 = vmatprep.subr.mxu0 0.0
  %5717 = vmatpush1.msra.mxu0 %v5141
  %5718 = vmatprep.subr.mxu0 0.0
  %5719 = vmatpush1.msra.mxu0 %v5140
  %5720 = vmatprep.subr.mxu0 0.0
  %5721 = vmatpush1.msra.mxu0 %v5139
  %5722 = vmatprep.subr.mxu0 0.0
  %5723 = vmatpush1.msra.mxu0 %v5138
  %5724 = vmatprep.subr.mxu0 0.0
  %5725 = vmatpush1.msra.mxu0 %v5137
  %5726 = vmatprep.subr.mxu0 0.0
  %5727 = vmatpush1.msra.mxu0 %v5136
  %5728 = vmatprep.subr.mxu0 0.0
  %5729 = vmatpush1.msra.mxu0 %v5135
  %5730 = vmatprep.subr.mxu0 0.0
  %5731 = vmatpush1.msra.mxu0 %v5134
  %5732 = vmatprep.subr.mxu0 0.0
  %5733 = vmatpush1.msra.mxu0 %v5133
  %5734 = vmatprep.subr.mxu0 0.0
  %5735 = vmatpush2.msra.mxu0 %v5164
  %5736 = vmatprep.subr.mxu0 0.0
  %5737 = vmatpush2.msra.mxu0 %v5163
  %5738 = vmatprep.subr.mxu0 0.0
  %5739 = vmatpush2.msra.mxu0 %v5162
  %5740 = vmatprep.subr.mxu0 0.0
  %5741 = vmatpush2.msra.mxu0 %v5161
  %5742 = vmatprep.subr.mxu0 0.0
  %5743 = vmatpush2.msra.mxu0 %v5160
  %5744 = vmatprep.subr.mxu0 0.0
  %5745 = vmatpush2.msra.mxu0 %v5159
  %5746 = vmatprep.subr.mxu0 0.0
  %5747 = vmatpush2.msra.mxu0 %v5158
  %5748 = vmatprep.subr.mxu0 0.0
  %5749 = vmatpush2.msra.mxu0 %v5157
  %5750 = vmatprep.subr.mxu0 0.0
  %5751 = vmatpush2.msra.mxu0 %v5156
  %5752 = vmatprep.subr.mxu0 0.0
  %5753 = vmatpush2.msra.mxu0 %v5155
  %5754 = vmatprep.subr.mxu0 0.0
  %5755 = vmatpush2.msra.mxu0 %v5154
  %5756 = vmatprep.subr.mxu0 0.0
  %5757 = vmatpush2.msra.mxu0 %v5153
  %5758 = vmatprep.subr.mxu0 0.0
  %5759 = vmatpush2.msra.mxu0 %v5152
  %5760 = vmatprep.subr.mxu0 0.0
  %5761 = vmatpush2.msra.mxu0 %v5151
  %5762 = vmatprep.subr.mxu0 0.0
  %5763 = vmatpush2.msra.mxu0 %v5150
  %5764 = vmatprep.subr.mxu0 0.0
  %5765 = vmatpush2.msra.mxu0 %v5149
  %5766 = vmatprep.mubr.f32.mxu0 %v4890
  %5767 = vmatmul.mubr.f32.gmra.mxu0 %v4889
  %v5768 = vpop.f32.mrf.mxu0
  %v5769 = vpop.f32.mrf.mxu0
  %5770 = vmatprep.mubr.f32.mxu0 %v4906
  %5771 = vmatmul.mubr.f32.gmra.mxu0 %v4905
  %v5772 = vpop.f32.mrf.mxu0
  %v5773 = vadd.f32 %v5690, %v5772
  %v5774 = vpop.f32.mrf.mxu0
  %5775 = vmatprep.mubr.f32.mxu0 %v4922
  %5776 = vmatmul.mubr.f32.gmra.mxu0 %v4921
  %v5777 = vpop.f32.mrf.mxu0
  %v5778 = vpop.f32.mrf.mxu0
  %5779 = vmatprep.mubr.f32.mxu0 %v4938
  %5780 = vmatmul.mubr.f32.gmra.mxu0 %v4937
  %v5781 = vpop.f32.mrf.mxu0
  %v5782 = vadd.f32 %v5699, %v5781
  %v5783 = vpop.f32.mrf.mxu0
  %5784 = vdwg.mxu0
  %5785 = vmatprep.subr.mxu0 0.0
  %5786 = vmatpush1.msra.mxu0 %v5180
  %5787 = vmatprep.subr.mxu0 0.0
  %5788 = vmatpush1.msra.mxu0 %v5179
  %5789 = vmatprep.subr.mxu0 0.0
  %5790 = vmatpush1.msra.mxu0 %v5178
  %5791 = vmatprep.subr.mxu0 0.0
  %5792 = vmatpush1.msra.mxu0 %v5177
  %5793 = vmatprep.subr.mxu0 0.0
  %5794 = vmatpush1.msra.mxu0 %v5176
  %5795 = vmatprep.subr.mxu0 0.0
  %5796 = vmatpush1.msra.mxu0 %v5175
  %5797 = vmatprep.subr.mxu0 0.0
  %5798 = vmatpush1.msra.mxu0 %v5174
  %5799 = vmatprep.subr.mxu0 0.0
  %5800 = vmatpush1.msra.mxu0 %v5173
  %5801 = vmatprep.subr.mxu0 0.0
  %5802 = vmatpush1.msra.mxu0 %v5172
  %5803 = vmatprep.subr.mxu0 0.0
  %5804 = vmatpush1.msra.mxu0 %v5171
  %5805 = vmatprep.subr.mxu0 0.0
  %5806 = vmatpush1.msra.mxu0 %v5170
  %5807 = vmatprep.subr.mxu0 0.0
  %5808 = vmatpush1.msra.mxu0 %v5169
  %5809 = vmatprep.subr.mxu0 0.0
  %5810 = vmatpush1.msra.mxu0 %v5168
  %5811 = vmatprep.subr.mxu0 0.0
  %5812 = vmatpush1.msra.mxu0 %v5167
  %5813 = vmatprep.subr.mxu0 0.0
  %5814 = vmatpush1.msra.mxu0 %v5166
  %5815 = vmatprep.subr.mxu0 0.0
  %5816 = vmatpush1.msra.mxu0 %v5165
  %5817 = vmatprep.subr.mxu0 0.0
  %5818 = vmatpush2.msra.mxu0 %v5196
  %5819 = vmatprep.subr.mxu0 0.0
  %5820 = vmatpush2.msra.mxu0 %v5195
  %5821 = vmatprep.subr.mxu0 0.0
  %5822 = vmatpush2.msra.mxu0 %v5194
  %5823 = vmatprep.subr.mxu0 0.0
  %5824 = vmatpush2.msra.mxu0 %v5193
  %5825 = vmatprep.subr.mxu0 0.0
  %5826 = vmatpush2.msra.mxu0 %v5192
  %5827 = vmatprep.subr.mxu0 0.0
  %5828 = vmatpush2.msra.mxu0 %v5191
  %5829 = vmatprep.subr.mxu0 0.0
  %5830 = vmatpush2.msra.mxu0 %v5190
  %5831 = vmatprep.subr.mxu0 0.0
  %5832 = vmatpush2.msra.mxu0 %v5189
  %5833 = vmatprep.subr.mxu0 0.0
  %5834 = vmatpush2.msra.mxu0 %v5188
  %5835 = vmatprep.subr.mxu0 0.0
  %5836 = vmatpush2.msra.mxu0 %v5187
  %5837 = vmatprep.subr.mxu0 0.0
  %5838 = vmatpush2.msra.mxu0 %v5186
  %5839 = vmatprep.subr.mxu0 0.0
  %5840 = vmatpush2.msra.mxu0 %v5185
  %5841 = vmatprep.subr.mxu0 0.0
  %5842 = vmatpush2.msra.mxu0 %v5184
  %5843 = vmatprep.subr.mxu0 0.0
  %5844 = vmatpush2.msra.mxu0 %v5183
  %5845 = vmatprep.subr.mxu0 0.0
  %5846 = vmatpush2.msra.mxu0 %v5182
  %5847 = vmatprep.subr.mxu0 0.0
  %5848 = vmatpush2.msra.mxu0 %v5181
  %5849 = vmatprep.mubr.f32.mxu0 %v4892
  %5850 = vmatmul.mubr.f32.gmra.mxu0 %v4891
  %v5851 = vpop.f32.mrf.mxu0
  %v5852 = vpop.f32.mrf.mxu0
  %5853 = vmatprep.mubr.f32.mxu0 %v4908
  %5854 = vmatmul.mubr.f32.gmra.mxu0 %v4907
  %v5855 = vpop.f32.mrf.mxu0
  %v5856 = vadd.f32 %v5773, %v5855
  %v5857 = vpop.f32.mrf.mxu0
  %5858 = vmatprep.mubr.f32.mxu0 %v4924
  %5859 = vmatmul.mubr.f32.gmra.mxu0 %v4923
  %v5860 = vpop.f32.mrf.mxu0
  %v5861 = vpop.f32.mrf.mxu0
  %5862 = vmatprep.mubr.f32.mxu0 %v4940
  %5863 = vmatmul.mubr.f32.gmra.mxu0 %v4939
  %v5864 = vpop.f32.mrf.mxu0
  %v5865 = vadd.f32 %v5782, %v5864
  %v5866 = vpop.f32.mrf.mxu0
  %5867 = vdwg.mxu0
  %v5868 = vadd.f32 %v4002, %v5856
  %v5869 = vadd.f32 %v4004, %v5865
  %v5870 = vld [vmem:[%s59] sm:$0x1]
  %v5871 = vld [vmem:[%s61] sm:$0x1]
  %v5872 = vsel %vm569, %v5868, 0.0
  %5873 = vadd.xlane.f32.xlu0 %v5872
  %v5874 = vpop.xlane.xlu0 %5873
  %v5875 = vsel %vm569, %v5869, 0.0
  %5876 = vadd.xlane.f32.xlu0 %v5875
  %v5877 = vpop.xlane.xlu0 %5876
  %v5878 = vmul.f32 %v5874, %v1257
  %v5879 = vmul.f32 %v5877, %v1257
  %v5880 = vsub.f32 %v5868, %v5878
  %v5881 = vsub.f32 %v5869, %v5879
  %v5882 = vmul.f32 %v5880, %v5880
  %v5883 = vmul.f32 %v5881, %v5881
  %v5884 = vsel %vm569, %v5882, 0.0
  %5885 = vadd.xlane.f32.xlu0 %v5884
  %v5886 = vpop.xlane.xlu0 %5885
  %v5887 = vsel %vm569, %v5883, 0.0
  %5888 = vadd.xlane.f32.xlu0 %v5887
  %v5889 = vpop.xlane.xlu0 %5888
  %v5890 = vmul.f32 %v5886, %v1257
  %v5891 = vmul.f32 %v5889, %v1257
  %v5892 = vadd.f32 %v5890, 1e-05
  %v5893 = vadd.f32 %v5891, 1e-05
  %v5894 = vrsqrt.pop %v5892
  %v5895 = vrsqrt.pop %v5893
  %v5896 = vmul.f32 %v5880, %v5894
  %v5897 = vmul.f32 %v5881, %v5895
  %v5899 = vlaneseq
  %v5900 = vshrl.u32 %v5899, 7
  %v5901 = vsub.s32 0, %v5900
  %v5902 = vrot.slane %v5870, %v5901
  %v5904 = vmul.f32 %v5896, %v5902
  %v5905 = vmul.f32 %v5897, %v5902
  %v5907 = vlaneseq
  %v5908 = vshrl.u32 %v5907, 7
  %v5909 = vsub.s32 0, %v5908
  %v5910 = vrot.slane %v5871, %v5909
  %v5912 = vadd.f32 %v5904, %v5910
  %v5913 = vadd.f32 %v5905, %v5910
  %vm5914 = vcmask 258052
  %5915 = vst.msk [vmem:[#allocation3 - $0x4] sm:$0x10] %vm5914, %v5912
  %5916 = vst.msk [vmem:[#allocation3 - $0x3] sm:$0x10] %vm5914, %v5913
  %v5917 = vld [vmem:[#allocation3] sm:$0x3]
  %v5918 = vld [vmem:[%s63] sm:$0xff]
  %v5919 = vld [vmem:[%s63 + $0x8] sm:$0xff]
  %v5920 = vld [vmem:[%s63 + $0x10] sm:$0xff]
  %v5921 = vld [vmem:[%s63 + $0x18] sm:$0xff]
  %v5922 = vld [vmem:[%s65] sm:$0x1]
  %v5924 = vlaneseq
  %v5925 = vshrl.u32 %v5924, 7
  %v5926 = vsub.s32 0, %v5925
  %v5927 = vrot.slane %v5922, %v5926
  %v5930 = vsel %vm569, %v5917, 0
  %5932 = vmatprep.subr.mxu0 0.0
  %5933 = vmatpush1.msra.mxu0 0.0
  %5934 = vmatprep.subr.mxu0 0.0
  %5935 = vmatpush1.msra.mxu0 0.0
  %5936 = vmatprep.subr.mxu0 0.0
  %5937 = vmatpush1.msra.mxu0 0.0
  %5938 = vmatprep.subr.mxu0 0.0
  %5939 = vmatpush1.msra.mxu0 0.0
  %5940 = vmatprep.subr.mxu0 0.0
  %5941 = vmatpush1.msra.mxu0 0.0
  %5942 = vmatprep.subr.mxu0 0.0
  %5943 = vmatpush1.msra.mxu0 0.0
  %5944 = vmatprep.subr.mxu0 0.0
  %5945 = vmatpush1.msra.mxu0 0.0
  %5946 = vmatprep.subr.mxu0 0.0
  %5947 = vmatpush1.msra.mxu0 0.0
  %5948 = vmatprep.subr.mxu0 0.0
  %5949 = vmatpush1.msra.mxu0 0.0
  %5950 = vmatprep.subr.mxu0 0.0
  %5951 = vmatpush1.msra.mxu0 0.0
  %5952 = vmatprep.subr.mxu0 0.0
  %5953 = vmatpush1.msra.mxu0 0.0
  %5954 = vmatprep.subr.mxu0 0.0
  %5955 = vmatpush1.msra.mxu0 0.0
  %5956 = vmatprep.subr.mxu0 0.0
  %5957 = vmatpush1.msra.mxu0 %v5921
  %5958 = vmatprep.subr.mxu0 0.0
  %5959 = vmatpush1.msra.mxu0 %v5920
  %5960 = vmatprep.subr.mxu0 0.0
  %5961 = vmatpush1.msra.mxu0 %v5919
  %5962 = vmatprep.subr.mxu0 0.0
  %5963 = vmatpush1.msra.mxu0 %v5918
  %5964 = vmatprep.subr.mxu0 0.0
  %5965 = vmatpush2.msra.mxu0 0.0
  %5966 = vmatprep.subr.mxu0 0.0
  %5967 = vmatpush2.msra.mxu0 0.0
  %5968 = vmatprep.subr.mxu0 0.0
  %5969 = vmatpush2.msra.mxu0 0.0
  %5970 = vmatprep.subr.mxu0 0.0
  %5971 = vmatpush2.msra.mxu0 0.0
  %5972 = vmatprep.subr.mxu0 0.0
  %5973 = vmatpush2.msra.mxu0 0.0
  %5974 = vmatprep.subr.mxu0 0.0
  %5975 = vmatpush2.msra.mxu0 0.0
  %5976 = vmatprep.subr.mxu0 0.0
  %5977 = vmatpush2.msra.mxu0 0.0
  %5978 = vmatprep.subr.mxu0 0.0
  %5979 = vmatpush2.msra.mxu0 0.0
  %5980 = vmatprep.subr.mxu0 0.0
  %5981 = vmatpush2.msra.mxu0 0.0
  %5982 = vmatprep.subr.mxu0 0.0
  %5983 = vmatpush2.msra.mxu0 0.0
  %5984 = vmatprep.subr.mxu0 0.0
  %5985 = vmatpush2.msra.mxu0 0.0
  %5986 = vmatprep.subr.mxu0 0.0
  %5987 = vmatpush2.msra.mxu0 0.0
  %5988 = vmatprep.subr.mxu0 0.0
  %5989 = vmatpush2.msra.mxu0 0.0
  %5990 = vmatprep.subr.mxu0 0.0
  %5991 = vmatpush2.msra.mxu0 0.0
  %5992 = vmatprep.subr.mxu0 0.0
  %5993 = vmatpush2.msra.mxu0 0.0
  %5994 = vmatprep.subr.mxu0 0.0
  %5995 = vmatpush2.msra.mxu0 0.0
  %5996 = vmatprep.mubr.f32.mxu0 0.0
  %5997 = vmatmul.mubr.f32.gmra.mxu0 %v5930
  %v5998 = vpop.f32.mrf.mxu0
  %v5999 = vadd.f32 %v5927, %v5998
  %v6000 = vpop.f32.mrf.mxu0
  %6001 = vdwg.mxu0
  %v6002 = vld [vmem:[%s67] sm:$0xff]
  %v6003 = vld [vmem:[%s67 + $0x8] sm:$0xff]
  %v6004 = vld [vmem:[%s67 + $0x10] sm:$0xff]
  %v6005 = vld [vmem:[%s67 + $0x18] sm:$0xff]
  %v6006 = vld [vmem:[%s69] sm:$0x1]
  %v6008 = vlaneseq
  %v6009 = vshrl.u32 %v6008, 7
  %v6010 = vsub.s32 0, %v6009
  %v6011 = vrot.slane %v6006, %v6010
  %v6014 = vsel %vm569, 0.0, 0
  %6016 = vmatprep.subr.mxu0 0.0
  %6017 = vmatpush1.msra.mxu0 0.0
  %6018 = vmatprep.subr.mxu0 0.0
  %6019 = vmatpush1.msra.mxu0 0.0
  %6020 = vmatprep.subr.mxu0 0.0
  %6021 = vmatpush1.msra.mxu0 0.0
  %6022 = vmatprep.subr.mxu0 0.0
  %6023 = vmatpush1.msra.mxu0 0.0
  %6024 = vmatprep.subr.mxu0 0.0
  %6025 = vmatpush1.msra.mxu0 0.0
  %6026 = vmatprep.subr.mxu0 0.0
  %6027 = vmatpush1.msra.mxu0 0.0
  %6028 = vmatprep.subr.mxu0 0.0
  %6029 = vmatpush1.msra.mxu0 0.0
  %6030 = vmatprep.subr.mxu0 0.0
  %6031 = vmatpush1.msra.mxu0 0.0
  %6032 = vmatprep.subr.mxu0 0.0
  %6033 = vmatpush1.msra.mxu0 0.0
  %6034 = vmatprep.subr.mxu0 0.0
  %6035 = vmatpush1.msra.mxu0 0.0
  %6036 = vmatprep.subr.mxu0 0.0
  %6037 = vmatpush1.msra.mxu0 0.0
  %6038 = vmatprep.subr.mxu0 0.0
  %6039 = vmatpush1.msra.mxu0 0.0
  %6040 = vmatprep.subr.mxu0 0.0
  %6041 = vmatpush1.msra.mxu0 %v6005
  %6042 = vmatprep.subr.mxu0 0.0
  %6043 = vmatpush1.msra.mxu0 %v6004
  %6044 = vmatprep.subr.mxu0 0.0
  %6045 = vmatpush1.msra.mxu0 %v6003
  %6046 = vmatprep.subr.mxu0 0.0
  %6047 = vmatpush1.msra.mxu0 %v6002
  %6048 = vmatprep.subr.mxu0 0.0
  %6049 = vmatpush2.msra.mxu0 0.0
  %6050 = vmatprep.subr.mxu0 0.0
  %6051 = vmatpush2.msra.mxu0 0.0
  %6052 = vmatprep.subr.mxu0 0.0
  %6053 = vmatpush2.msra.mxu0 0.0
  %6054 = vmatprep.subr.mxu0 0.0
  %6055 = vmatpush2.msra.mxu0 0.0
  %6056 = vmatprep.subr.mxu0 0.0
  %6057 = vmatpush2.msra.mxu0 0.0
  %6058 = vmatprep.subr.mxu0 0.0
  %6059 = vmatpush2.msra.mxu0 0.0
  %6060 = vmatprep.subr.mxu0 0.0
  %6061 = vmatpush2.msra.mxu0 0.0
  %6062 = vmatprep.subr.mxu0 0.0
  %6063 = vmatpush2.msra.mxu0 0.0
  %6064 = vmatprep.subr.mxu0 0.0
  %6065 = vmatpush2.msra.mxu0 0.0
  %6066 = vmatprep.subr.mxu0 0.0
  %6067 = vmatpush2.msra.mxu0 0.0
  %6068 = vmatprep.subr.mxu0 0.0
  %6069 = vmatpush2.msra.mxu0 0.0
  %6070 = vmatprep.subr.mxu0 0.0
  %6071 = vmatpush2.msra.mxu0 0.0
  %6072 = vmatprep.subr.mxu0 0.0
  %6073 = vmatpush2.msra.mxu0 0.0
  %6074 = vmatprep.subr.mxu0 0.0
  %6075 = vmatpush2.msra.mxu0 0.0
  %6076 = vmatprep.subr.mxu0 0.0
  %6077 = vmatpush2.msra.mxu0 0.0
  %6078 = vmatprep.subr.mxu0 0.0
  %6079 = vmatpush2.msra.mxu0 0.0
  %6080 = vmatprep.mubr.f32.mxu0 0.0
  %6081 = vmatmul.mubr.f32.gmra.mxu0 %v6014
  %v6082 = vpop.f32.mrf.mxu0
  %v6083 = vadd.f32 %v6011, %v6082
  %v6084 = vpop.f32.mrf.mxu0
  %6085 = vdwg.mxu0
  %v6086 = vadd.f32 %v5999, %v6083
  %v6087 = vxor.u32 %v6086, 2147483648
  %v6088 = vmul.f32 %v6087, 1.442695
  %v6089 = vpow.pop %v6088
  %v6090 = vadd.f32 %v6089, 1.0
  %v6091 = vrcp.pop %v6090
  %v6092 = vmul.f32 1.0, %v6091
  %6094 = vrot.lane.b32.xlu0 %v6083, 64
  %v6095 = vpop.permute.xlu0 %6094
  %v6097 = vmul.f32 %v6092, %v6095
  %6099 = vrot.lane.b32.xlu0 %v6097, 64
  %v6100 = vpop.permute.xlu0 %6099
  %v6102 = vadd.f32 %v5999, %v6100
  %v6103 = vtanh.pop %v6102
  %v6104 = vsub.f32 1.0, %v6092
  %6106 = vrot.lane.b32.xlu0 %v6103, 96
  %v6107 = vpop.permute.xlu0 %6106
  %v6109 = vmul.f32 %v6104, %v6107
  %v6110 = vmul.f32 %v6092, 0.0
  %v6111 = vadd.f32 %v6109, %v6110
  %6113 = vrot.lane.b32.xlu0 %v6111, 96
  %v6114 = vpop.permute.xlu0 %6113
  %vm6116 = vcmask 254976
  %6117 = vst.msk [vmem:[#allocation3] sm:$0x3] %vm6116, %v6114
  %v6118 = vsel %vm569, %v6114, 0
  %6120 = vmatprep.subr.mxu0 0.0
  %6121 = vmatpush1.msra.mxu0 0.0
  %6122 = vmatprep.subr.mxu0 0.0
  %6123 = vmatpush1.msra.mxu0 0.0
  %6124 = vmatprep.subr.mxu0 0.0
  %6125 = vmatpush1.msra.mxu0 0.0
  %6126 = vmatprep.subr.mxu0 0.0
  %6127 = vmatpush1.msra.mxu0 0.0
  %6128 = vmatprep.subr.mxu0 0.0
  %6129 = vmatpush1.msra.mxu0 0.0
  %6130 = vmatprep.subr.mxu0 0.0
  %6131 = vmatpush1.msra.mxu0 0.0
  %6132 = vmatprep.subr.mxu0 0.0
  %6133 = vmatpush1.msra.mxu0 0.0
  %6134 = vmatprep.subr.mxu0 0.0
  %6135 = vmatpush1.msra.mxu0 0.0
  %6136 = vmatprep.subr.mxu0 0.0
  %6137 = vmatpush1.msra.mxu0 0.0
  %6138 = vmatprep.subr.mxu0 0.0
  %6139 = vmatpush1.msra.mxu0 0.0
  %6140 = vmatprep.subr.mxu0 0.0
  %6141 = vmatpush1.msra.mxu0 0.0
  %6142 = vmatprep.subr.mxu0 0.0
  %6143 = vmatpush1.msra.mxu0 0.0
  %6144 = vmatprep.subr.mxu0 0.0
  %6145 = vmatpush1.msra.mxu0 %v6005
  %6146 = vmatprep.subr.mxu0 0.0
  %6147 = vmatpush1.msra.mxu0 %v6004
  %6148 = vmatprep.subr.mxu0 0.0
  %6149 = vmatpush1.msra.mxu0 %v6003
  %6150 = vmatprep.subr.mxu0 0.0
  %6151 = vmatpush1.msra.mxu0 %v6002
  %6152 = vmatprep.subr.mxu0 0.0
  %6153 = vmatpush2.msra.mxu0 0.0
  %6154 = vmatprep.subr.mxu0 0.0
  %6155 = vmatpush2.msra.mxu0 0.0
  %6156 = vmatprep.subr.mxu0 0.0
  %6157 = vmatpush2.msra.mxu0 0.0
  %6158 = vmatprep.subr.mxu0 0.0
  %6159 = vmatpush2.msra.mxu0 0.0
  %6160 = vmatprep.subr.mxu0 0.0
  %6161 = vmatpush2.msra.mxu0 0.0
  %6162 = vmatprep.subr.mxu0 0.0
  %6163 = vmatpush2.msra.mxu0 0.0
  %6164 = vmatprep.subr.mxu0 0.0
  %6165 = vmatpush2.msra.mxu0 0.0
  %6166 = vmatprep.subr.mxu0 0.0
  %6167 = vmatpush2.msra.mxu0 0.0
  %6168 = vmatprep.subr.mxu0 0.0
  %6169 = vmatpush2.msra.mxu0 0.0
  %6170 = vmatprep.subr.mxu0 0.0
  %6171 = vmatpush2.msra.mxu0 0.0
  %6172 = vmatprep.subr.mxu0 0.0
  %6173 = vmatpush2.msra.mxu0 0.0
  %6174 = vmatprep.subr.mxu0 0.0
  %6175 = vmatpush2.msra.mxu0 0.0
  %6176 = vmatprep.subr.mxu0 0.0
  %6177 = vmatpush2.msra.mxu0 0.0
  %6178 = vmatprep.subr.mxu0 0.0
  %6179 = vmatpush2.msra.mxu0 0.0
  %6180 = vmatprep.subr.mxu0 0.0
  %6181 = vmatpush2.msra.mxu0 0.0
  %6182 = vmatprep.subr.mxu0 0.0
  %6183 = vmatpush2.msra.mxu0 0.0
  %6184 = vmatprep.mubr.f32.mxu0 0.0
  %6185 = vmatmul.mubr.f32.gmra.mxu0 %v6118
  %v6186 = vpop.f32.mrf.mxu0
  %v6187 = vadd.f32 %v6011, %v6186
  %v6188 = vpop.f32.mrf.mxu0
  %6189 = vdwg.mxu0
  %v6190 = vadd.f32 %v5999, %v6187
  %v6191 = vxor.u32 %v6190, 2147483648
  %v6192 = vmul.f32 %v6191, 1.442695
  %v6193 = vpow.pop %v6192
  %v6194 = vadd.f32 %v6193, 1.0
  %v6195 = vrcp.pop %v6194
  %v6196 = vmul.f32 1.0, %v6195
  %6198 = vrot.lane.b32.xlu0 %v6187, 64
  %v6199 = vpop.permute.xlu0 %6198
  %v6201 = vmul.f32 %v6196, %v6199
  %6203 = vrot.lane.b32.xlu0 %v6201, 64
  %v6204 = vpop.permute.xlu0 %6203
  %v6206 = vadd.f32 %v5999, %v6204
  %v6207 = vtanh.pop %v6206
  %v6208 = vsub.f32 1.0, %v6196
  %6210 = vrot.lane.b32.xlu0 %v6207, 96
  %v6211 = vpop.permute.xlu0 %6210
  %v6213 = vmul.f32 %v6208, %v6211
  %v6214 = vmul.f32 %v6196, %v6111
  %v6215 = vadd.f32 %v6213, %v6214
  %6217 = vrot.lane.b32.xlu0 %v6215, 96
  %v6218 = vpop.permute.xlu0 %6217
  %6220 = vst.msk [vmem:[#allocation3 + $0x2] sm:$0x3] %vm6116, %v6218
  %v6221 = vsel %vm569, %v6218, 0
  %6223 = vmatprep.subr.mxu0 0.0
  %6224 = vmatpush1.msra.mxu0 0.0
  %6225 = vmatprep.subr.mxu0 0.0
  %6226 = vmatpush1.msra.mxu0 0.0
  %6227 = vmatprep.subr.mxu0 0.0
  %6228 = vmatpush1.msra.mxu0 0.0
  %6229 = vmatprep.subr.mxu0 0.0
  %6230 = vmatpush1.msra.mxu0 0.0
  %6231 = vmatprep.subr.mxu0 0.0
  %6232 = vmatpush1.msra.mxu0 0.0
  %6233 = vmatprep.subr.mxu0 0.0
  %6234 = vmatpush1.msra.mxu0 0.0
  %6235 = vmatprep.subr.mxu0 0.0
  %6236 = vmatpush1.msra.mxu0 0.0
  %6237 = vmatprep.subr.mxu0 0.0
  %6238 = vmatpush1.msra.mxu0 0.0
  %6239 = vmatprep.subr.mxu0 0.0
  %6240 = vmatpush1.msra.mxu0 0.0
  %6241 = vmatprep.subr.mxu0 0.0
  %6242 = vmatpush1.msra.mxu0 0.0
  %6243 = vmatprep.subr.mxu0 0.0
  %6244 = vmatpush1.msra.mxu0 0.0
  %6245 = vmatprep.subr.mxu0 0.0
  %6246 = vmatpush1.msra.mxu0 0.0
  %6247 = vmatprep.subr.mxu0 0.0
  %6248 = vmatpush1.msra.mxu0 %v6005
  %6249 = vmatprep.subr.mxu0 0.0
  %6250 = vmatpush1.msra.mxu0 %v6004
  %6251 = vmatprep.subr.mxu0 0.0
  %6252 = vmatpush1.msra.mxu0 %v6003
  %6253 = vmatprep.subr.mxu0 0.0
  %6254 = vmatpush1.msra.mxu0 %v6002
  %6255 = vmatprep.subr.mxu0 0.0
  %6256 = vmatpush2.msra.mxu0 0.0
  %6257 = vmatprep.subr.mxu0 0.0
  %6258 = vmatpush2.msra.mxu0 0.0
  %6259 = vmatprep.subr.mxu0 0.0
  %6260 = vmatpush2.msra.mxu0 0.0
  %6261 = vmatprep.subr.mxu0 0.0
  %6262 = vmatpush2.msra.mxu0 0.0
  %6263 = vmatprep.subr.mxu0 0.0
  %6264 = vmatpush2.msra.mxu0 0.0
  %6265 = vmatprep.subr.mxu0 0.0
  %6266 = vmatpush2.msra.mxu0 0.0
  %6267 = vmatprep.subr.mxu0 0.0
  %6268 = vmatpush2.msra.mxu0 0.0
  %6269 = vmatprep.subr.mxu0 0.0
  %6270 = vmatpush2.msra.mxu0 0.0
  %6271 = vmatprep.subr.mxu0 0.0
  %6272 = vmatpush2.msra.mxu0 0.0
  %6273 = vmatprep.subr.mxu0 0.0
  %6274 = vmatpush2.msra.mxu0 0.0
  %6275 = vmatprep.subr.mxu0 0.0
  %6276 = vmatpush2.msra.mxu0 0.0
  %6277 = vmatprep.subr.mxu0 0.0
  %6278 = vmatpush2.msra.mxu0 0.0
  %6279 = vmatprep.subr.mxu0 0.0
  %6280 = vmatpush2.msra.mxu0 0.0
  %6281 = vmatprep.subr.mxu0 0.0
  %6282 = vmatpush2.msra.mxu0 0.0
  %6283 = vmatprep.subr.mxu0 0.0
  %6284 = vmatpush2.msra.mxu0 0.0
  %6285 = vmatprep.subr.mxu0 0.0
  %6286 = vmatpush2.msra.mxu0 0.0
  %6287 = vmatprep.mubr.f32.mxu0 0.0
  %6288 = vmatmul.mubr.f32.gmra.mxu0 %v6221
  %v6289 = vpop.f32.mrf.mxu0
  %v6290 = vadd.f32 %v6011, %v6289
  %v6291 = vpop.f32.mrf.mxu0
  %6292 = vdwg.mxu0
  %v6293 = vadd.f32 %v5999, %v6290
  %v6294 = vxor.u32 %v6293, 2147483648
  %v6295 = vmul.f32 %v6294, 1.442695
  %v6296 = vpow.pop %v6295
  %v6297 = vadd.f32 %v6296, 1.0
  %v6298 = vrcp.pop %v6297
  %v6299 = vmul.f32 1.0, %v6298
  %6301 = vrot.lane.b32.xlu0 %v6290, 64
  %v6302 = vpop.permute.xlu0 %6301
  %v6304 = vmul.f32 %v6299, %v6302
  %6306 = vrot.lane.b32.xlu0 %v6304, 64
  %v6307 = vpop.permute.xlu0 %6306
  %v6309 = vadd.f32 %v5999, %v6307
  %v6310 = vtanh.pop %v6309
  %v6311 = vsub.f32 1.0, %v6299
  %6313 = vrot.lane.b32.xlu0 %v6310, 96
  %v6314 = vpop.permute.xlu0 %6313
  %v6316 = vmul.f32 %v6311, %v6314
  %v6317 = vmul.f32 %v6299, %v6215
  %v6318 = vadd.f32 %v6316, %v6317
  %6320 = vrot.lane.b32.xlu0 %v6318, 96
  %v6321 = vpop.permute.xlu0 %6320
  %6323 = vst.msk [vmem:[#allocation3 + $0x4] sm:$0x3] %vm6116, %v6321
  %v6324 = vsel %vm569, %v6321, 0
  %6326 = vmatprep.subr.mxu0 0.0
  %6327 = vmatpush1.msra.mxu0 0.0
  %6328 = vmatprep.subr.mxu0 0.0
  %6329 = vmatpush1.msra.mxu0 0.0
  %6330 = vmatprep.subr.mxu0 0.0
  %6331 = vmatpush1.msra.mxu0 0.0
  %6332 = vmatprep.subr.mxu0 0.0
  %6333 = vmatpush1.msra.mxu0 0.0
  %6334 = vmatprep.subr.mxu0 0.0
  %6335 = vmatpush1.msra.mxu0 0.0
  %6336 = vmatprep.subr.mxu0 0.0
  %6337 = vmatpush1.msra.mxu0 0.0
  %6338 = vmatprep.subr.mxu0 0.0
  %6339 = vmatpush1.msra.mxu0 0.0
  %6340 = vmatprep.subr.mxu0 0.0
  %6341 = vmatpush1.msra.mxu0 0.0
  %6342 = vmatprep.subr.mxu0 0.0
  %6343 = vmatpush1.msra.mxu0 0.0
  %6344 = vmatprep.subr.mxu0 0.0
  %6345 = vmatpush1.msra.mxu0 0.0
  %6346 = vmatprep.subr.mxu0 0.0
  %6347 = vmatpush1.msra.mxu0 0.0
  %6348 = vmatprep.subr.mxu0 0.0
  %6349 = vmatpush1.msra.mxu0 0.0
  %6350 = vmatprep.subr.mxu0 0.0
  %6351 = vmatpush1.msra.mxu0 %v6005
  %6352 = vmatprep.subr.mxu0 0.0
  %6353 = vmatpush1.msra.mxu0 %v6004
  %6354 = vmatprep.subr.mxu0 0.0
  %6355 = vmatpush1.msra.mxu0 %v6003
  %6356 = vmatprep.subr.mxu0 0.0
  %6357 = vmatpush1.msra.mxu0 %v6002
  %6358 = vmatprep.subr.mxu0 0.0
  %6359 = vmatpush2.msra.mxu0 0.0
  %6360 = vmatprep.subr.mxu0 0.0
  %6361 = vmatpush2.msra.mxu0 0.0
  %6362 = vmatprep.subr.mxu0 0.0
  %6363 = vmatpush2.msra.mxu0 0.0
  %6364 = vmatprep.subr.mxu0 0.0
  %6365 = vmatpush2.msra.mxu0 0.0
  %6366 = vmatprep.subr.mxu0 0.0
  %6367 = vmatpush2.msra.mxu0 0.0
  %6368 = vmatprep.subr.mxu0 0.0
  %6369 = vmatpush2.msra.mxu0 0.0
  %6370 = vmatprep.subr.mxu0 0.0
  %6371 = vmatpush2.msra.mxu0 0.0
  %6372 = vmatprep.subr.mxu0 0.0
  %6373 = vmatpush2.msra.mxu0 0.0
  %6374 = vmatprep.subr.mxu0 0.0
  %6375 = vmatpush2.msra.mxu0 0.0
  %6376 = vmatprep.subr.mxu0 0.0
  %6377 = vmatpush2.msra.mxu0 0.0
  %6378 = vmatprep.subr.mxu0 0.0
  %6379 = vmatpush2.msra.mxu0 0.0
  %6380 = vmatprep.subr.mxu0 0.0
  %6381 = vmatpush2.msra.mxu0 0.0
  %6382 = vmatprep.subr.mxu0 0.0
  %6383 = vmatpush2.msra.mxu0 0.0
  %6384 = vmatprep.subr.mxu0 0.0
  %6385 = vmatpush2.msra.mxu0 0.0
  %6386 = vmatprep.subr.mxu0 0.0
  %6387 = vmatpush2.msra.mxu0 0.0
  %6388 = vmatprep.subr.mxu0 0.0
  %6389 = vmatpush2.msra.mxu0 0.0
  %6390 = vmatprep.mubr.f32.mxu0 0.0
  %6391 = vmatmul.mubr.f32.gmra.mxu0 %v6324
  %v6392 = vpop.f32.mrf.mxu0
  %v6393 = vadd.f32 %v6011, %v6392
  %v6394 = vpop.f32.mrf.mxu0
  %6395 = vdwg.mxu0
  %v6396 = vadd.f32 %v5999, %v6393
  %v6397 = vxor.u32 %v6396, 2147483648
  %v6398 = vmul.f32 %v6397, 1.442695
  %v6399 = vpow.pop %v6398
  %v6400 = vadd.f32 %v6399, 1.0
  %v6401 = vrcp.pop %v6400
  %v6402 = vmul.f32 1.0, %v6401
  %6404 = vrot.lane.b32.xlu0 %v6393, 64
  %v6405 = vpop.permute.xlu0 %6404
  %v6407 = vmul.f32 %v6402, %v6405
  %6409 = vrot.lane.b32.xlu0 %v6407, 64
  %v6410 = vpop.permute.xlu0 %6409
  %v6412 = vadd.f32 %v5999, %v6410
  %v6413 = vtanh.pop %v6412
  %v6414 = vsub.f32 1.0, %v6402
  %6416 = vrot.lane.b32.xlu0 %v6413, 96
  %v6417 = vpop.permute.xlu0 %6416
  %v6419 = vmul.f32 %v6414, %v6417
  %v6420 = vmul.f32 %v6402, %v6318
  %v6421 = vadd.f32 %v6419, %v6420
  %6423 = vrot.lane.b32.xlu0 %v6421, 96
  %v6424 = vpop.permute.xlu0 %6423
  %6426 = vst.msk [vmem:[#allocation3 + $0x6] sm:$0x3] %vm6116, %v6424
  %v6427 = vld [vmem:[#allocation3] sm:$0xff]
  %v6428 = vld [vmem:[%s71] sm:$0xff]
  %v6429 = vld [vmem:[%s71 + $0x8] sm:$0xff]
  %v6430 = vld [vmem:[%s71 + $0x10] sm:$0xff]
  %v6431 = vld [vmem:[%s71 + $0x18] sm:$0xff]
  %v6432 = vld [vmem:[%s73] sm:$0x1]
  %v6434 = vlaneseq
  %v6435 = vshrl.u32 %v6434, 7
  %v6436 = vsub.s32 0, %v6435
  %v6437 = vrot.slane %v6432, %v6436
  %v6440 = vsel %vm569, %v6427, 0
  %6442 = vmatprep.subr.mxu0 0.0
  %6443 = vmatpush1.msra.mxu0 0.0
  %6444 = vmatprep.subr.mxu0 0.0
  %6445 = vmatpush1.msra.mxu0 0.0
  %6446 = vmatprep.subr.mxu0 0.0
  %6447 = vmatpush1.msra.mxu0 0.0
  %6448 = vmatprep.subr.mxu0 0.0
  %6449 = vmatpush1.msra.mxu0 0.0
  %6450 = vmatprep.subr.mxu0 0.0
  %6451 = vmatpush1.msra.mxu0 0.0
  %6452 = vmatprep.subr.mxu0 0.0
  %6453 = vmatpush1.msra.mxu0 0.0
  %6454 = vmatprep.subr.mxu0 0.0
  %6455 = vmatpush1.msra.mxu0 0.0
  %6456 = vmatprep.subr.mxu0 0.0
  %6457 = vmatpush1.msra.mxu0 0.0
  %6458 = vmatprep.subr.mxu0 0.0
  %6459 = vmatpush1.msra.mxu0 0.0
  %6460 = vmatprep.subr.mxu0 0.0
  %6461 = vmatpush1.msra.mxu0 0.0
  %6462 = vmatprep.subr.mxu0 0.0
  %6463 = vmatpush1.msra.mxu0 0.0
  %6464 = vmatprep.subr.mxu0 0.0
  %6465 = vmatpush1.msra.mxu0 0.0
  %6466 = vmatprep.subr.mxu0 0.0
  %6467 = vmatpush1.msra.mxu0 %v6431
  %6468 = vmatprep.subr.mxu0 0.0
  %6469 = vmatpush1.msra.mxu0 %v6430
  %6470 = vmatprep.subr.mxu0 0.0
  %6471 = vmatpush1.msra.mxu0 %v6429
  %6472 = vmatprep.subr.mxu0 0.0
  %6473 = vmatpush1.msra.mxu0 %v6428
  %6474 = vmatprep.subr.mxu0 0.0
  %6475 = vmatpush2.msra.mxu0 0.0
  %6476 = vmatprep.subr.mxu0 0.0
  %6477 = vmatpush2.msra.mxu0 0.0
  %6478 = vmatprep.subr.mxu0 0.0
  %6479 = vmatpush2.msra.mxu0 0.0
  %6480 = vmatprep.subr.mxu0 0.0
  %6481 = vmatpush2.msra.mxu0 0.0
  %6482 = vmatprep.subr.mxu0 0.0
  %6483 = vmatpush2.msra.mxu0 0.0
  %6484 = vmatprep.subr.mxu0 0.0
  %6485 = vmatpush2.msra.mxu0 0.0
  %6486 = vmatprep.subr.mxu0 0.0
  %6487 = vmatpush2.msra.mxu0 0.0
  %6488 = vmatprep.subr.mxu0 0.0
  %6489 = vmatpush2.msra.mxu0 0.0
  %6490 = vmatprep.subr.mxu0 0.0
  %6491 = vmatpush2.msra.mxu0 0.0
  %6492 = vmatprep.subr.mxu0 0.0
  %6493 = vmatpush2.msra.mxu0 0.0
  %6494 = vmatprep.subr.mxu0 0.0
  %6495 = vmatpush2.msra.mxu0 0.0
  %6496 = vmatprep.subr.mxu0 0.0
  %6497 = vmatpush2.msra.mxu0 0.0
  %6498 = vmatprep.subr.mxu0 0.0
  %6499 = vmatpush2.msra.mxu0 0.0
  %6500 = vmatprep.subr.mxu0 0.0
  %6501 = vmatpush2.msra.mxu0 0.0
  %6502 = vmatprep.subr.mxu0 0.0
  %6503 = vmatpush2.msra.mxu0 0.0
  %6504 = vmatprep.subr.mxu0 0.0
  %6505 = vmatpush2.msra.mxu0 0.0
  %6506 = vmatprep.mubr.f32.mxu0 0.0
  %6507 = vmatmul.mubr.f32.gmra.mxu0 %v6440
  %v6508 = vpop.f32.mrf.mxu0
  %v6509 = vadd.f32 %v6437, %v6508
  %v6510 = vpop.f32.mrf.mxu0
  %6511 = vdwg.mxu0
  %6512 = vst [vmem:[%s75] sm:$0xff] %v6509
  // Predicated region
  $region150: #{_lambda_.1} parent=0 // pred_check
    _
  $region151: #{_lambda_.1} parent=0 // pred_check_branch
    %6514 = sbr.rel (0) target = $region153
  $region152: #{_lambda_.1} parent=0 // pred_region
    _
  $region153: #{_lambda_.1} parent=0 // pred_fallthru
    _
  // Predicated region
  $region154: #{_lambda_.1} parent=0 // pred_check
    _
  $region155: #{_lambda_.1} parent=0 // pred_check_branch
    %6516 = sbr.rel (0) target = $region157
  $region156: #{_lambda_.1} parent=0 // pred_region
    _
  $region157: #{_lambda_.1} parent=0 // pred_fallthru
    _

</llo_original>
